<compile_context>
chip_gen: v6e
topology: v6e:2x2x1
jax: 0.10.0
libtpu: 0.0.40
codegen_flags: <defaults>
</compile_context>

<pallas_src>
import math

import jax
import jax.numpy as jnp
import numpy as np
from jax import lax
from jax.experimental import pallas as pl
from jax.experimental.pallas import tpu as pltpu

HIDDEN = 32          # hidden_dim of ODEFunc (module default 64; small for demo)
NSTEPS = 16          # fixed RK4 sub-steps per interval
EVENT_TOL = 1e-6


def _silu(x):
    return x * jax.nn.sigmoid(x)


def pk_node_kernel(dose_add_ref, dt_ref,
                   w1_ref, b1_ref, w2_ref, b2_ref, w3_ref, b3_ref,
                   w4_ref, b4_ref, pred_ref):
    T = dose_add_ref.shape[0]
    lanes = pred_ref.shape[1]

    # Weights (hoisted loads, layouts chosen so dynamics() needs no transpose):
    w1 = w1_ref[...]; b1 = b1_ref[...]     # (1, H), (1, H)
    w2 = w2_ref[...]; b2 = b2_ref[...]     # (H, H) in (out, in) layout, (H, 1)
    w3 = w3_ref[...]; b3 = b3_ref[...]     # (H, H) in (in, out) layout, (1, H)
    w4 = w4_ref[...]; b4 = b4_ref[...]     # (1, H), (1, 1)

    def dynamics(y):
        # ODEFunc.forward on the VPU/XLU only (no MXU: M=1 matmuls are pure
        # latency).  Activation alternates row (1,H) <-> column (H,1).
        h1 = _silu(y * w1 + b1)                                            # (1, H)
        h2 = _silu(jnp.sum(w2 * h1, axis=1, keepdims=True) + b2)           # (H, 1)
        h3 = _silu(jnp.sum(w3 * h2, axis=0, keepdims=True) + b3)           # (1, H)
        return jnp.sum(w4 * h3, axis=1, keepdims=True) + b4                # (1, 1)

    lane_ids = lax.broadcasted_iota(jnp.int32, (1, lanes), 1)

    def integrate(i, y):
        dt = dt_ref[i]                       # SMEM scalar, precomputed in wrapper
        half_dt = jnp.float32(0.5) * dt      # hoisted: loop-invariant in RK4 loop
        dt6 = dt * jnp.float32(1.0 / 6.0)

        def rk4_step(_, y):
            k1 = dynamics(y)
            k2 = dynamics(y + half_dt * k1)
            k3 = dynamics(y + half_dt * k2)
            k4 = dynamics(y + dt * k3)
            return y + dt6 * (k1 + 2.0 * k2 + 2.0 * k3 + k4)

        return lax.fori_loop(0, NSTEPS, rk4_step, y, unroll=True)

    def interval_body(i, carry):
        state, preds = carry
        state = state + dose_add_ref[i]                       # dose event (precomputed)
        preds = jnp.where(lane_ids == i, state[0, 0], preds)  # predictions[i] = state
        state = integrate(i, state)                           # advance to times[i+1]
        return state, preds

    state0 = jnp.zeros((1, 1), jnp.float32)       # y0 = torch.zeros(1, 1)
    preds0 = jnp.zeros((1, lanes), jnp.float32)
    state, preds = lax.fori_loop(0, T - 1, interval_body, (state0, preds0))

    # Last observation: apply dose + record, no integration after it.
    state = state + dose_add_ref[T - 1]
    preds = jnp.where(lane_ids == (T - 1), state[0, 0], preds)

    pred_ref[...] = preds                         # single lane-dense, unmasked store


def pk_neural_ode_forward(times, dosing_times, dose_amounts, params):
    """Pure-JAX wrapper: event/dose + dt precompute, weight layout glue, pallas_call."""
    times = times.astype(jnp.float32)
    dosing_times = dosing_times.astype(jnp.float32)
    dose_amounts = dose_amounts.astype(jnp.float32)
    T = int(times.shape[0])
    D = int(dosing_times.shape[0])
    H = int(params["w2"].shape[0])

    dose_effect = jnp.exp(params["log_dose_effect"])          # get_dose_effect()

    # --- EventFunc + dose_event_handler hoisted out of the kernel -----------
    diffs = times[:, None] - dosing_times[None, :]                           # (T, D)
    event_val = jnp.prod(diffs, axis=1) * jnp.float32(1.0 / (10.0 ** (D - 1)))
    match = jnp.abs(diffs) < EVENT_TOL                                       # (T, D)
    first_idx = jnp.argmax(match, axis=1)                                    # first match
    amt = jnp.where(jnp.any(match, axis=1), dose_amounts[first_idx], 0.0)
    dose_add = jnp.where(jnp.abs(event_val) < EVENT_TOL,
                         amt * dose_effect, 0.0).astype(jnp.float32)         # (T,)

    # --- per-interval RK4 step size ------------------------------------------
    dt = ((times[1:] - times[:-1]) * jnp.float32(1.0 / NSTEPS)).astype(jnp.float32)

    # --- weight layout glue for the VPU/XLU dynamics --------------------------
    w1 = params["w1"]                     # (1, H)  Linear(1,H).weight.T
    b1 = params["b1"]                     # (1, H)
    w2_pt = params["w2"].T                # (H, H)  (out, in) layout: lane-reduce
    b2_col = params["b2"].reshape(H, 1)   # (H, 1)
    w3_t = params["w3"]                   # (H, H)  (in, out) layout: sublane-reduce
    b3 = params["b3"]                     # (1, H)
    w4 = params["w4"]                     # (1, H)  Linear(H,1).weight
    b4 = params["b4"]                     # (1, 1)

    lanes = pl.cdiv(T, 128) * 128         # lane-dense, unmasked output store

    smem = pl.BlockSpec(memory_space=pltpu.MemorySpace.SMEM)
    vmem = pl.BlockSpec(memory_space=pltpu.MemorySpace.VMEM)

    pred = pl.pallas_call(
        pk_node_kernel,
        out_shape=jax.ShapeDtypeStruct((1, lanes), jnp.float32),
        in_specs=[smem, smem,                      # dose_add, dt
                  vmem, vmem, vmem, vmem,          # w1, b1, w2, b2
                  vmem, vmem, vmem, vmem],         # w3, b3, w4, b4
        out_specs=vmem,
    )(dose_add, dt, w1, b1, w2_pt, b2_col, w3_t, b3, w4, b4)
    return pred[0, :T]


def init_params(key, hidden=HIDDEN):
    """Deterministic init mimicking nn.Linear defaults (uniform +-1/sqrt(fan_in))."""
    ks = jax.random.split(key, 8)

    def unif(k, shape, fan_in):
        b = 1.0 / math.sqrt(fan_in)
        return jax.random.uniform(k, shape, jnp.float32, -b, b)

    return {
        "w1": unif(ks[0], (1, hidden), 1),            # Linear(1, H).weight.T
        "b1": unif(ks[1], (1, hidden), 1),
        "w2": unif(ks[2], (hidden, hidden), hidden),  # (in, out)
        "b2": unif(ks[3], (1, hidden), hidden),
        "w3": unif(ks[4], (hidden, hidden), hidden),  # (in, out)
        "b3": unif(ks[5], (1, hidden), hidden),
        "w4": unif(ks[6], (1, hidden), hidden),       # Linear(H, 1).weight
        "b4": unif(ks[7], (1, 1), hidden),
        "log_dose_effect": jnp.array(math.log(0.2), dtype=jnp.float32),
    }


def reference_forward_numpy(times, dosing_times, dose_amounts, params):
    """Pure-numpy mirror of the kernel math (same fixed-step RK4) for validation."""
    p = {k: np.asarray(v, dtype=np.float64) for k, v in params.items()}
    dose_effect = float(np.exp(p["log_dose_effect"]))
    times = np.asarray(times, dtype=np.float64)
    dts = np.asarray(dosing_times, dtype=np.float64)
    das = np.asarray(dose_amounts, dtype=np.float64)
    D = len(dts)

    def silu(x):
        return x / (1.0 + np.exp(-x))

    def dyn(y):
        h1 = silu(y * p["w1"] + p["b1"])            # (1, H)
        h2 = silu(h1 @ p["w2"] + p["b2"])           # (1, H)
        h3 = silu(h2 @ p["w3"] + p["b3"])           # (1, H)
        return h3 @ p["w4"].T + p["b4"]             # (1, 1)

    state = np.zeros((1, 1))
    preds = np.zeros(len(times))
    for i, t in enumerate(times):
        ev = np.prod(t - dts) / (10.0 ** (D - 1))
        if abs(ev) < EVENT_TOL:
            for j, dtm in enumerate(dts):
                if abs(t - dtm) < EVENT_TOL:
                    state = state + das[j] * dose_effect
                    break
        preds[i] = state[0, 0]
        if i < len(times) - 1:
            h = (times[i + 1] - t) / NSTEPS
            for _ in range(NSTEPS):
                k1 = dyn(state)
                k2 = dyn(state + 0.5 * h * k1)
                k3 = dyn(state + 0.5 * h * k2)
                k4 = dyn(state + h * k3)
                state = state + (h / 6.0) * (k1 + 2.0 * k2 + 2.0 * k3 + k4)
    return preds


if __name__ == "__main__":
    key = jax.random.PRNGKey(0)
    params = init_params(key, HIDDEN)

    # Observation times (seq=8) including the dosing times so events fire.
    times = jnp.array([0.0, 1.0, 2.0, 3.0, 4.0, 5.0, 6.0, 7.0], dtype=jnp.float32)
    dosing_times = jnp.array([0.0, 3.0], dtype=jnp.float32)
    dose_amounts = jnp.array([5.0, 3.0], dtype=jnp.float32)

    preds = pk_neural_ode_forward(times, dosing_times, dose_amounts, params)
    preds = jax.block_until_ready(preds)
    assert preds.shape == (times.shape[0],)
    assert bool(jnp.all(jnp.isfinite(preds)))

    # Validate against a pure-numpy mirror of the same fixed-step integrator.
    ref = reference_forward_numpy(times, dosing_times, dose_amounts, params)
    assert float(np.max(np.abs(np.asarray(preds) - ref))) < 5e-3

    print("KERNEL_OK")
</pallas_src>

<mosaic_0001>
module attributes {stable_mosaic.version = 11 : i64} {
  func.func @pk_node_kernel(%arg0: memref<8xf32, #tpu.memory_space<smem>>, %arg1: memref<7xf32, #tpu.memory_space<smem>>, %arg2: memref<1x32xf32, #tpu.memory_space<vmem>>, %arg3: memref<1x32xf32, #tpu.memory_space<vmem>>, %arg4: memref<32x32xf32, #tpu.memory_space<vmem>>, %arg5: memref<32x1xf32, #tpu.memory_space<vmem>>, %arg6: memref<32x32xf32, #tpu.memory_space<vmem>>, %arg7: memref<1x32xf32, #tpu.memory_space<vmem>>, %arg8: memref<1x32xf32, #tpu.memory_space<vmem>>, %arg9: memref<1x1xf32, #tpu.memory_space<vmem>>, %arg10: memref<1x128xf32, #tpu.memory_space<vmem>>) attributes {dimension_semantics = [], scalar_prefetch = 0 : i64, scratch_operands = 0 : i64, tpu.core_type = #tpu.core_type<tc>} {
    %c0 = arith.constant 0 : index
    %c0_0 = arith.constant 0 : index
    %0 = vector.load %arg2[%c0, %c0_0] : memref<1x32xf32, #tpu.memory_space<vmem>>, vector<1x32xf32>
    %c0_1 = arith.constant 0 : index
    %c0_2 = arith.constant 0 : index
    %1 = vector.load %arg3[%c0_1, %c0_2] : memref<1x32xf32, #tpu.memory_space<vmem>>, vector<1x32xf32>
    %c0_3 = arith.constant 0 : index
    %c0_4 = arith.constant 0 : index
    %2 = vector.load %arg4[%c0_3, %c0_4] : memref<32x32xf32, #tpu.memory_space<vmem>>, vector<32x32xf32>
    %c0_5 = arith.constant 0 : index
    %c0_6 = arith.constant 0 : index
    %3 = vector.load %arg5[%c0_5, %c0_6] : memref<32x1xf32, #tpu.memory_space<vmem>>, vector<32x1xf32>
    %c0_7 = arith.constant 0 : index
    %c0_8 = arith.constant 0 : index
    %4 = vector.load %arg6[%c0_7, %c0_8] : memref<32x32xf32, #tpu.memory_space<vmem>>, vector<32x32xf32>
    %c0_9 = arith.constant 0 : index
    %c0_10 = arith.constant 0 : index
    %5 = vector.load %arg7[%c0_9, %c0_10] : memref<1x32xf32, #tpu.memory_space<vmem>>, vector<1x32xf32>
    %c0_11 = arith.constant 0 : index
    %c0_12 = arith.constant 0 : index
    %6 = vector.load %arg8[%c0_11, %c0_12] : memref<1x32xf32, #tpu.memory_space<vmem>>, vector<1x32xf32>
    %c0_13 = arith.constant 0 : index
    %c0_14 = arith.constant 0 : index
    %7 = vector.load %arg9[%c0_13, %c0_14] : memref<1x1xf32, #tpu.memory_space<vmem>>, vector<1x1xf32>
    %8 = tpu.iota {dimensions = array<i32: 1>} : vector<1x128xi32>
    %cst = arith.constant 0.000000e+00 : f32
    %9 = vector.broadcast %cst : f32 to vector<1x1xf32>
    %cst_15 = arith.constant 0.000000e+00 : f32
    %10 = vector.broadcast %cst_15 : f32 to vector<1x128xf32>
    %c0_i32 = arith.constant 0 : i32
    %c7_i32 = arith.constant 7 : i32
    %11 = arith.addi %c0_i32, %c7_i32 : i32
    %c1_i32 = arith.constant 1 : i32
    %12:2 = scf.for %arg11 = %c0_i32 to %11 step %c1_i32 iter_args(%arg12 = %9, %arg13 = %10) -> (vector<1x1xf32>, vector<1x128xf32>)  : i32 {
      %22 = arith.index_cast %arg11 : i32 to index
      %23 = memref.load %arg0[%22] : memref<8xf32, #tpu.memory_space<smem>>
      %24 = vector.broadcast %23 : f32 to vector<1x1xf32>
      %25 = arith.addf %arg12, %24 : vector<1x1xf32>
      %26 = vector.broadcast %arg11 : i32 to vector<1x128xi32>
      %27 = arith.cmpi eq, %8, %26 : vector<1x128xi32>
      %28 = vector.extract %25[0, 0] : f32 from vector<1x1xf32>
      %29 = vector.broadcast %28 : f32 to vector<1x128xf32>
      %30 = arith.select %27, %29, %arg13 : vector<1x128xi1>, vector<1x128xf32>
      %31 = arith.index_cast %arg11 : i32 to index
      %32 = memref.load %arg1[%31] : memref<7xf32, #tpu.memory_space<smem>>
      %cst_20 = arith.constant 5.000000e-01 : f32
      %33 = arith.mulf %cst_20, %32 : f32
      %cst_21 = arith.constant 0.166666672 : f32
      %34 = arith.mulf %32, %cst_21 : f32
      %c0_i32_22 = arith.constant 0 : i32
      %35 = vector.broadcast %25 : vector<1x1xf32> to vector<1x32xf32>
      %36 = arith.mulf %35, %0 : vector<1x32xf32>
      %37 = arith.addf %36, %1 : vector<1x32xf32>
      %38 = arith.negf %37 : vector<1x32xf32>
      %39 = math.exp %38 : vector<1x32xf32>
      %cst_23 = arith.constant 1.000000e+00 : f32
      %40 = vector.broadcast %cst_23 : f32 to vector<1x32xf32>
      %41 = arith.addf %40, %39 : vector<1x32xf32>
      %42 = arith.divf %40, %41 : vector<1x32xf32>
      %43 = arith.mulf %37, %42 : vector<1x32xf32>
      %44 = vector.broadcast %43 : vector<1x32xf32> to vector<32x32xf32>
      %45 = arith.mulf %2, %44 : vector<32x32xf32>
      %cst_24 = arith.constant dense<0.000000e+00> : vector<32xf32>
      %46 = vector.multi_reduction <add>, %45, %cst_24 [1] : vector<32x32xf32> to vector<32xf32>
      %47 = vector.shape_cast %46 : vector<32xf32> to vector<32x1xf32>
      %48 = arith.addf %47, %3 : vector<32x1xf32>
      %49 = arith.negf %48 : vector<32x1xf32>
      %50 = math.exp %49 : vector<32x1xf32>
      %cst_25 = arith.constant 1.000000e+00 : f32
      %51 = vector.broadcast %cst_25 : f32 to vector<32x1xf32>
      %52 = arith.addf %51, %50 : vector<32x1xf32>
      %53 = arith.divf %51, %52 : vector<32x1xf32>
      %54 = arith.mulf %48, %53 : vector<32x1xf32>
      %55 = vector.broadcast %54 : vector<32x1xf32> to vector<32x32xf32>
      %56 = arith.mulf %4, %55 : vector<32x32xf32>
      %cst_26 = arith.constant dense<0.000000e+00> : vector<32xf32>
      %57 = vector.multi_reduction <add>, %56, %cst_26 [0] : vector<32x32xf32> to vector<32xf32>
      %58 = vector.shape_cast %57 : vector<32xf32> to vector<1x32xf32>
      %59 = arith.addf %58, %5 : vector<1x32xf32>
      %60 = arith.negf %59 : vector<1x32xf32>
      %61 = math.exp %60 : vector<1x32xf32>
      %cst_27 = arith.constant 1.000000e+00 : f32
      %62 = vector.broadcast %cst_27 : f32 to vector<1x32xf32>
      %63 = arith.addf %62, %61 : vector<1x32xf32>
      %64 = arith.divf %62, %63 : vector<1x32xf32>
      %65 = arith.mulf %59, %64 : vector<1x32xf32>
      %66 = arith.mulf %6, %65 : vector<1x32xf32>
      %cst_28 = arith.constant dense<0.000000e+00> : vector<1xf32>
      %67 = vector.multi_reduction <add>, %66, %cst_28 [1] : vector<1x32xf32> to vector<1xf32>
      %68 = vector.shape_cast %67 : vector<1xf32> to vector<1x1xf32>
      %69 = arith.addf %68, %7 : vector<1x1xf32>
      %70 = vector.broadcast %33 : f32 to vector<1x1xf32>
      %71 = arith.mulf %70, %69 : vector<1x1xf32>
      %72 = arith.addf %25, %71 : vector<1x1xf32>
      %73 = vector.broadcast %72 : vector<1x1xf32> to vector<1x32xf32>
      %74 = arith.mulf %73, %0 : vector<1x32xf32>
      %75 = arith.addf %74, %1 : vector<1x32xf32>
      %76 = arith.negf %75 : vector<1x32xf32>
      %77 = math.exp %76 : vector<1x32xf32>
      %cst_29 = arith.constant 1.000000e+00 : f32
      %78 = vector.broadcast %cst_29 : f32 to vector<1x32xf32>
      %79 = arith.addf %78, %77 : vector<1x32xf32>
      %80 = arith.divf %78, %79 : vector<1x32xf32>
      %81 = arith.mulf %75, %80 : vector<1x32xf32>
      %82 = vector.broadcast %81 : vector<1x32xf32> to vector<32x32xf32>
      %83 = arith.mulf %2, %82 : vector<32x32xf32>
      %cst_30 = arith.constant dense<0.000000e+00> : vector<32xf32>
      %84 = vector.multi_reduction <add>, %83, %cst_30 [1] : vector<32x32xf32> to vector<32xf32>
      %85 = vector.shape_cast %84 : vector<32xf32> to vector<32x1xf32>
      %86 = arith.addf %85, %3 : vector<32x1xf32>
      %87 = arith.negf %86 : vector<32x1xf32>
      %88 = math.exp %87 : vector<32x1xf32>
      %cst_31 = arith.constant 1.000000e+00 : f32
      %89 = vector.broadcast %cst_31 : f32 to vector<32x1xf32>
      %90 = arith.addf %89, %88 : vector<32x1xf32>
      %91 = arith.divf %89, %90 : vector<32x1xf32>
      %92 = arith.mulf %86, %91 : vector<32x1xf32>
      %93 = vector.broadcast %92 : vector<32x1xf32> to vector<32x32xf32>
      %94 = arith.mulf %4, %93 : vector<32x32xf32>
      %cst_32 = arith.constant dense<0.000000e+00> : vector<32xf32>
      %95 = vector.multi_reduction <add>, %94, %cst_32 [0] : vector<32x32xf32> to vector<32xf32>
      %96 = vector.shape_cast %95 : vector<32xf32> to vector<1x32xf32>
      %97 = arith.addf %96, %5 : vector<1x32xf32>
      %98 = arith.negf %97 : vector<1x32xf32>
      %99 = math.exp %98 : vector<1x32xf32>
      %cst_33 = arith.constant 1.000000e+00 : f32
      %100 = vector.broadcast %cst_33 : f32 to vector<1x32xf32>
      %101 = arith.addf %100, %99 : vector<1x32xf32>
      %102 = arith.divf %100, %101 : vector<1x32xf32>
      %103 = arith.mulf %97, %102 : vector<1x32xf32>
      %104 = arith.mulf %6, %103 : vector<1x32xf32>
      %cst_34 = arith.constant dense<0.000000e+00> : vector<1xf32>
      %105 = vector.multi_reduction <add>, %104, %cst_34 [1] : vector<1x32xf32> to vector<1xf32>
      %106 = vector.shape_cast %105 : vector<1xf32> to vector<1x1xf32>
      %107 = arith.addf %106, %7 : vector<1x1xf32>
      %108 = vector.broadcast %33 : f32 to vector<1x1xf32>
      %109 = arith.mulf %108, %107 : vector<1x1xf32>
      %110 = arith.addf %25, %109 : vector<1x1xf32>
      %111 = vector.broadcast %110 : vector<1x1xf32> to vector<1x32xf32>
      %112 = arith.mulf %111, %0 : vector<1x32xf32>
      %113 = arith.addf %112, %1 : vector<1x32xf32>
      %114 = arith.negf %113 : vector<1x32xf32>
      %115 = math.exp %114 : vector<1x32xf32>
      %cst_35 = arith.constant 1.000000e+00 : f32
      %116 = vector.broadcast %cst_35 : f32 to vector<1x32xf32>
      %117 = arith.addf %116, %115 : vector<1x32xf32>
      %118 = arith.divf %116, %117 : vector<1x32xf32>
      %119 = arith.mulf %113, %118 : vector<1x32xf32>
      %120 = vector.broadcast %119 : vector<1x32xf32> to vector<32x32xf32>
      %121 = arith.mulf %2, %120 : vector<32x32xf32>
      %cst_36 = arith.constant dense<0.000000e+00> : vector<32xf32>
      %122 = vector.multi_reduction <add>, %121, %cst_36 [1] : vector<32x32xf32> to vector<32xf32>
      %123 = vector.shape_cast %122 : vector<32xf32> to vector<32x1xf32>
      %124 = arith.addf %123, %3 : vector<32x1xf32>
      %125 = arith.negf %124 : vector<32x1xf32>
      %126 = math.exp %125 : vector<32x1xf32>
      %cst_37 = arith.constant 1.000000e+00 : f32
      %127 = vector.broadcast %cst_37 : f32 to vector<32x1xf32>
      %128 = arith.addf %127, %126 : vector<32x1xf32>
      %129 = arith.divf %127, %128 : vector<32x1xf32>
      %130 = arith.mulf %124, %129 : vector<32x1xf32>
      %131 = vector.broadcast %130 : vector<32x1xf32> to vector<32x32xf32>
      %132 = arith.mulf %4, %131 : vector<32x32xf32>
      %cst_38 = arith.constant dense<0.000000e+00> : vector<32xf32>
      %133 = vector.multi_reduction <add>, %132, %cst_38 [0] : vector<32x32xf32> to vector<32xf32>
      %134 = vector.shape_cast %133 : vector<32xf32> to vector<1x32xf32>
      %135 = arith.addf %134, %5 : vector<1x32xf32>
      %136 = arith.negf %135 : vector<1x32xf32>
      %137 = math.exp %136 : vector<1x32xf32>
      %cst_39 = arith.constant 1.000000e+00 : f32
      %138 = vector.broadcast %cst_39 : f32 to vector<1x32xf32>
      %139 = arith.addf %138, %137 : vector<1x32xf32>
      %140 = arith.divf %138, %139 : vector<1x32xf32>
      %141 = arith.mulf %135, %140 : vector<1x32xf32>
      %142 = arith.mulf %6, %141 : vector<1x32xf32>
      %cst_40 = arith.constant dense<0.000000e+00> : vector<1xf32>
      %143 = vector.multi_reduction <add>, %142, %cst_40 [1] : vector<1x32xf32> to vector<1xf32>
      %144 = vector.shape_cast %143 : vector<1xf32> to vector<1x1xf32>
      %145 = arith.addf %144, %7 : vector<1x1xf32>
      %146 = vector.broadcast %32 : f32 to vector<1x1xf32>
      %147 = arith.mulf %146, %145 : vector<1x1xf32>
      %148 = arith.addf %25, %147 : vector<1x1xf32>
      %149 = vector.broadcast %148 : vector<1x1xf32> to vector<1x32xf32>
      %150 = arith.mulf %149, %0 : vector<1x32xf32>
      %151 = arith.addf %150, %1 : vector<1x32xf32>
      %152 = arith.negf %151 : vector<1x32xf32>
      %153 = math.exp %152 : vector<1x32xf32>
      %cst_41 = arith.constant 1.000000e+00 : f32
      %154 = vector.broadcast %cst_41 : f32 to vector<1x32xf32>
      %155 = arith.addf %154, %153 : vector<1x32xf32>
      %156 = arith.divf %154, %155 : vector<1x32xf32>
      %157 = arith.mulf %151, %156 : vector<1x32xf32>
      %158 = vector.broadcast %157 : vector<1x32xf32> to vector<32x32xf32>
      %159 = arith.mulf %2, %158 : vector<32x32xf32>
      %cst_42 = arith.constant dense<0.000000e+00> : vector<32xf32>
      %160 = vector.multi_reduction <add>, %159, %cst_42 [1] : vector<32x32xf32> to vector<32xf32>
      %161 = vector.shape_cast %160 : vector<32xf32> to vector<32x1xf32>
      %162 = arith.addf %161, %3 : vector<32x1xf32>
      %163 = arith.negf %162 : vector<32x1xf32>
      %164 = math.exp %163 : vector<32x1xf32>
      %cst_43 = arith.constant 1.000000e+00 : f32
      %165 = vector.broadcast %cst_43 : f32 to vector<32x1xf32>
      %166 = arith.addf %165, %164 : vector<32x1xf32>
      %167 = arith.divf %165, %166 : vector<32x1xf32>
      %168 = arith.mulf %162, %167 : vector<32x1xf32>
      %169 = vector.broadcast %168 : vector<32x1xf32> to vector<32x32xf32>
      %170 = arith.mulf %4, %169 : vector<32x32xf32>
      %cst_44 = arith.constant dense<0.000000e+00> : vector<32xf32>
      %171 = vector.multi_reduction <add>, %170, %cst_44 [0] : vector<32x32xf32> to vector<32xf32>
      %172 = vector.shape_cast %171 : vector<32xf32> to vector<1x32xf32>
      %173 = arith.addf %172, %5 : vector<1x32xf32>
      %174 = arith.negf %173 : vector<1x32xf32>
      %175 = math.exp %174 : vector<1x32xf32>
      %cst_45 = arith.constant 1.000000e+00 : f32
      %176 = vector.broadcast %cst_45 : f32 to vector<1x32xf32>
      %177 = arith.addf %176, %175 : vector<1x32xf32>
      %178 = arith.divf %176, %177 : vector<1x32xf32>
      %179 = arith.mulf %173, %178 : vector<1x32xf32>
      %180 = arith.mulf %6, %179 : vector<1x32xf32>
      %cst_46 = arith.constant dense<0.000000e+00> : vector<1xf32>
      %181 = vector.multi_reduction <add>, %180, %cst_46 [1] : vector<1x32xf32> to vector<1xf32>
      %182 = vector.shape_cast %181 : vector<1xf32> to vector<1x1xf32>
      %183 = arith.addf %182, %7 : vector<1x1xf32>
      %cst_47 = arith.constant 2.000000e+00 : f32
      %184 = vector.broadcast %cst_47 : f32 to vector<1x1xf32>
      %185 = arith.mulf %184, %107 : vector<1x1xf32>
      %186 = arith.addf %69, %185 : vector<1x1xf32>
      %cst_48 = arith.constant 2.000000e+00 : f32
      %187 = vector.broadcast %cst_48 : f32 to vector<1x1xf32>
      %188 = arith.mulf %187, %145 : vector<1x1xf32>
      %189 = arith.addf %186, %188 : vector<1x1xf32>
      %190 = arith.addf %189, %183 : vector<1x1xf32>
      %191 = vector.broadcast %34 : f32 to vector<1x1xf32>
      %192 = arith.mulf %191, %190 : vector<1x1xf32>
      %193 = arith.addf %25, %192 : vector<1x1xf32>
      %c1_i32_49 = arith.constant 1 : i32
      %194 = vector.broadcast %193 : vector<1x1xf32> to vector<1x32xf32>
      %195 = arith.mulf %194, %0 : vector<1x32xf32>
      %196 = arith.addf %195, %1 : vector<1x32xf32>
      %197 = arith.negf %196 : vector<1x32xf32>
      %198 = math.exp %197 : vector<1x32xf32>
      %cst_50 = arith.constant 1.000000e+00 : f32
      %199 = vector.broadcast %cst_50 : f32 to vector<1x32xf32>
      %200 = arith.addf %199, %198 : vector<1x32xf32>
      %201 = arith.divf %199, %200 : vector<1x32xf32>
      %202 = arith.mulf %196, %201 : vector<1x32xf32>
      %203 = vector.broadcast %202 : vector<1x32xf32> to vector<32x32xf32>
      %204 = arith.mulf %2, %203 : vector<32x32xf32>
      %cst_51 = arith.constant dense<0.000000e+00> : vector<32xf32>
      %205 = vector.multi_reduction <add>, %204, %cst_51 [1] : vector<32x32xf32> to vector<32xf32>
      %206 = vector.shape_cast %205 : vector<32xf32> to vector<32x1xf32>
      %207 = arith.addf %206, %3 : vector<32x1xf32>
      %208 = arith.negf %207 : vector<32x1xf32>
      %209 = math.exp %208 : vector<32x1xf32>
      %cst_52 = arith.constant 1.000000e+00 : f32
      %210 = vector.broadcast %cst_52 : f32 to vector<32x1xf32>
      %211 = arith.addf %210, %209 : vector<32x1xf32>
      %212 = arith.divf %210, %211 : vector<32x1xf32>
      %213 = arith.mulf %207, %212 : vector<32x1xf32>
      %214 = vector.broadcast %213 : vector<32x1xf32> to vector<32x32xf32>
      %215 = arith.mulf %4, %214 : vector<32x32xf32>
      %cst_53 = arith.constant dense<0.000000e+00> : vector<32xf32>
      %216 = vector.multi_reduction <add>, %215, %cst_53 [0] : vector<32x32xf32> to vector<32xf32>
      %217 = vector.shape_cast %216 : vector<32xf32> to vector<1x32xf32>
      %218 = arith.addf %217, %5 : vector<1x32xf32>
      %219 = arith.negf %218 : vector<1x32xf32>
      %220 = math.exp %219 : vector<1x32xf32>
      %cst_54 = arith.constant 1.000000e+00 : f32
      %221 = vector.broadcast %cst_54 : f32 to vector<1x32xf32>
      %222 = arith.addf %221, %220 : vector<1x32xf32>
      %223 = arith.divf %221, %222 : vector<1x32xf32>
      %224 = arith.mulf %218, %223 : vector<1x32xf32>
      %225 = arith.mulf %6, %224 : vector<1x32xf32>
      %cst_55 = arith.constant dense<0.000000e+00> : vector<1xf32>
      %226 = vector.multi_reduction <add>, %225, %cst_55 [1] : vector<1x32xf32> to vector<1xf32>
      %227 = vector.shape_cast %226 : vector<1xf32> to vector<1x1xf32>
      %228 = arith.addf %227, %7 : vector<1x1xf32>
      %229 = vector.broadcast %33 : f32 to vector<1x1xf32>
      %230 = arith.mulf %229, %228 : vector<1x1xf32>
      %231 = arith.addf %193, %230 : vector<1x1xf32>
      %232 = vector.broadcast %231 : vector<1x1xf32> to vector<1x32xf32>
      %233 = arith.mulf %232, %0 : vector<1x32xf32>
      %234 = arith.addf %233, %1 : vector<1x32xf32>
      %235 = arith.negf %234 : vector<1x32xf32>
      %236 = math.exp %235 : vector<1x32xf32>
      %cst_56 = arith.constant 1.000000e+00 : f32
      %237 = vector.broadcast %cst_56 : f32 to vector<1x32xf32>
      %238 = arith.addf %237, %236 : vector<1x32xf32>
      %239 = arith.divf %237, %238 : vector<1x32xf32>
      %240 = arith.mulf %234, %239 : vector<1x32xf32>
      %241 = vector.broadcast %240 : vector<1x32xf32> to vector<32x32xf32>
      %242 = arith.mulf %2, %241 : vector<32x32xf32>
      %cst_57 = arith.constant dense<0.000000e+00> : vector<32xf32>
      %243 = vector.multi_reduction <add>, %242, %cst_57 [1] : vector<32x32xf32> to vector<32xf32>
      %244 = vector.shape_cast %243 : vector<32xf32> to vector<32x1xf32>
      %245 = arith.addf %244, %3 : vector<32x1xf32>
      %246 = arith.negf %245 : vector<32x1xf32>
      %247 = math.exp %246 : vector<32x1xf32>
      %cst_58 = arith.constant 1.000000e+00 : f32
      %248 = vector.broadcast %cst_58 : f32 to vector<32x1xf32>
      %249 = arith.addf %248, %247 : vector<32x1xf32>
      %250 = arith.divf %248, %249 : vector<32x1xf32>
      %251 = arith.mulf %245, %250 : vector<32x1xf32>
      %252 = vector.broadcast %251 : vector<32x1xf32> to vector<32x32xf32>
      %253 = arith.mulf %4, %252 : vector<32x32xf32>
      %cst_59 = arith.constant dense<0.000000e+00> : vector<32xf32>
      %254 = vector.multi_reduction <add>, %253, %cst_59 [0] : vector<32x32xf32> to vector<32xf32>
      %255 = vector.shape_cast %254 : vector<32xf32> to vector<1x32xf32>
      %256 = arith.addf %255, %5 : vector<1x32xf32>
      %257 = arith.negf %256 : vector<1x32xf32>
      %258 = math.exp %257 : vector<1x32xf32>
      %cst_60 = arith.constant 1.000000e+00 : f32
      %259 = vector.broadcast %cst_60 : f32 to vector<1x32xf32>
      %260 = arith.addf %259, %258 : vector<1x32xf32>
      %261 = arith.divf %259, %260 : vector<1x32xf32>
      %262 = arith.mulf %256, %261 : vector<1x32xf32>
      %263 = arith.mulf %6, %262 : vector<1x32xf32>
      %cst_61 = arith.constant dense<0.000000e+00> : vector<1xf32>
      %264 = vector.multi_reduction <add>, %263, %cst_61 [1] : vector<1x32xf32> to vector<1xf32>
      %265 = vector.shape_cast %264 : vector<1xf32> to vector<1x1xf32>
      %266 = arith.addf %265, %7 : vector<1x1xf32>
      %267 = vector.broadcast %33 : f32 to vector<1x1xf32>
      %268 = arith.mulf %267, %266 : vector<1x1xf32>
      %269 = arith.addf %193, %268 : vector<1x1xf32>
      %270 = vector.broadcast %269 : vector<1x1xf32> to vector<1x32xf32>
      %271 = arith.mulf %270, %0 : vector<1x32xf32>
      %272 = arith.addf %271, %1 : vector<1x32xf32>
      %273 = arith.negf %272 : vector<1x32xf32>
      %274 = math.exp %273 : vector<1x32xf32>
      %cst_62 = arith.constant 1.000000e+00 : f32
      %275 = vector.broadcast %cst_62 : f32 to vector<1x32xf32>
      %276 = arith.addf %275, %274 : vector<1x32xf32>
      %277 = arith.divf %275, %276 : vector<1x32xf32>
      %278 = arith.mulf %272, %277 : vector<1x32xf32>
      %279 = vector.broadcast %278 : vector<1x32xf32> to vector<32x32xf32>
      %280 = arith.mulf %2, %279 : vector<32x32xf32>
      %cst_63 = arith.constant dense<0.000000e+00> : vector<32xf32>
      %281 = vector.multi_reduction <add>, %280, %cst_63 [1] : vector<32x32xf32> to vector<32xf32>
      %282 = vector.shape_cast %281 : vector<32xf32> to vector<32x1xf32>
      %283 = arith.addf %282, %3 : vector<32x1xf32>
      %284 = arith.negf %283 : vector<32x1xf32>
      %285 = math.exp %284 : vector<32x1xf32>
      %cst_64 = arith.constant 1.000000e+00 : f32
      %286 = vector.broadcast %cst_64 : f32 to vector<32x1xf32>
      %287 = arith.addf %286, %285 : vector<32x1xf32>
      %288 = arith.divf %286, %287 : vector<32x1xf32>
      %289 = arith.mulf %283, %288 : vector<32x1xf32>
      %290 = vector.broadcast %289 : vector<32x1xf32> to vector<32x32xf32>
      %291 = arith.mulf %4, %290 : vector<32x32xf32>
      %cst_65 = arith.constant dense<0.000000e+00> : vector<32xf32>
      %292 = vector.multi_reduction <add>, %291, %cst_65 [0] : vector<32x32xf32> to vector<32xf32>
      %293 = vector.shape_cast %292 : vector<32xf32> to vector<1x32xf32>
      %294 = arith.addf %293, %5 : vector<1x32xf32>
      %295 = arith.negf %294 : vector<1x32xf32>
      %296 = math.exp %295 : vector<1x32xf32>
      %cst_66 = arith.constant 1.000000e+00 : f32
      %297 = vector.broadcast %cst_66 : f32 to vector<1x32xf32>
      %298 = arith.addf %297, %296 : vector<1x32xf32>
      %299 = arith.divf %297, %298 : vector<1x32xf32>
      %300 = arith.mulf %294, %299 : vector<1x32xf32>
      %301 = arith.mulf %6, %300 : vector<1x32xf32>
      %cst_67 = arith.constant dense<0.000000e+00> : vector<1xf32>
      %302 = vector.multi_reduction <add>, %301, %cst_67 [1] : vector<1x32xf32> to vector<1xf32>
      %303 = vector.shape_cast %302 : vector<1xf32> to vector<1x1xf32>
      %304 = arith.addf %303, %7 : vector<1x1xf32>
      %305 = vector.broadcast %32 : f32 to vector<1x1xf32>
      %306 = arith.mulf %305, %304 : vector<1x1xf32>
      %307 = arith.addf %193, %306 : vector<1x1xf32>
      %308 = vector.broadcast %307 : vector<1x1xf32> to vector<1x32xf32>
      %309 = arith.mulf %308, %0 : vector<1x32xf32>
      %310 = arith.addf %309, %1 : vector<1x32xf32>
      %311 = arith.negf %310 : vector<1x32xf32>
      %312 = math.exp %311 : vector<1x32xf32>
      %cst_68 = arith.constant 1.000000e+00 : f32
      %313 = vector.broadcast %cst_68 : f32 to vector<1x32xf32>
      %314 = arith.addf %313, %312 : vector<1x32xf32>
      %315 = arith.divf %313, %314 : vector<1x32xf32>
      %316 = arith.mulf %310, %315 : vector<1x32xf32>
      %317 = vector.broadcast %316 : vector<1x32xf32> to vector<32x32xf32>
      %318 = arith.mulf %2, %317 : vector<32x32xf32>
      %cst_69 = arith.constant dense<0.000000e+00> : vector<32xf32>
      %319 = vector.multi_reduction <add>, %318, %cst_69 [1] : vector<32x32xf32> to vector<32xf32>
      %320 = vector.shape_cast %319 : vector<32xf32> to vector<32x1xf32>
      %321 = arith.addf %320, %3 : vector<32x1xf32>
      %322 = arith.negf %321 : vector<32x1xf32>
      %323 = math.exp %322 : vector<32x1xf32>
      %cst_70 = arith.constant 1.000000e+00 : f32
      %324 = vector.broadcast %cst_70 : f32 to vector<32x1xf32>
      %325 = arith.addf %324, %323 : vector<32x1xf32>
      %326 = arith.divf %324, %325 : vector<32x1xf32>
      %327 = arith.mulf %321, %326 : vector<32x1xf32>
      %328 = vector.broadcast %327 : vector<32x1xf32> to vector<32x32xf32>
      %329 = arith.mulf %4, %328 : vector<32x32xf32>
      %cst_71 = arith.constant dense<0.000000e+00> : vector<32xf32>
      %330 = vector.multi_reduction <add>, %329, %cst_71 [0] : vector<32x32xf32> to vector<32xf32>
      %331 = vector.shape_cast %330 : vector<32xf32> to vector<1x32xf32>
      %332 = arith.addf %331, %5 : vector<1x32xf32>
      %333 = arith.negf %332 : vector<1x32xf32>
      %334 = math.exp %333 : vector<1x32xf32>
      %cst_72 = arith.constant 1.000000e+00 : f32
      %335 = vector.broadcast %cst_72 : f32 to vector<1x32xf32>
      %336 = arith.addf %335, %334 : vector<1x32xf32>
      %337 = arith.divf %335, %336 : vector<1x32xf32>
      %338 = arith.mulf %332, %337 : vector<1x32xf32>
      %339 = arith.mulf %6, %338 : vector<1x32xf32>
      %cst_73 = arith.constant dense<0.000000e+00> : vector<1xf32>
      %340 = vector.multi_reduction <add>, %339, %cst_73 [1] : vector<1x32xf32> to vector<1xf32>
      %341 = vector.shape_cast %340 : vector<1xf32> to vector<1x1xf32>
      %342 = arith.addf %341, %7 : vector<1x1xf32>
      %cst_74 = arith.constant 2.000000e+00 : f32
      %343 = vector.broadcast %cst_74 : f32 to vector<1x1xf32>
      %344 = arith.mulf %343, %266 : vector<1x1xf32>
      %345 = arith.addf %228, %344 : vector<1x1xf32>
      %cst_75 = arith.constant 2.000000e+00 : f32
      %346 = vector.broadcast %cst_75 : f32 to vector<1x1xf32>
      %347 = arith.mulf %346, %304 : vector<1x1xf32>
      %348 = arith.addf %345, %347 : vector<1x1xf32>
      %349 = arith.addf %348, %342 : vector<1x1xf32>
      %350 = vector.broadcast %34 : f32 to vector<1x1xf32>
      %351 = arith.mulf %350, %349 : vector<1x1xf32>
      %352 = arith.addf %193, %351 : vector<1x1xf32>
      %c2_i32 = arith.constant 2 : i32
      %353 = vector.broadcast %352 : vector<1x1xf32> to vector<1x32xf32>
      %354 = arith.mulf %353, %0 : vector<1x32xf32>
      %355 = arith.addf %354, %1 : vector<1x32xf32>
      %356 = arith.negf %355 : vector<1x32xf32>
      %357 = math.exp %356 : vector<1x32xf32>
      %cst_76 = arith.constant 1.000000e+00 : f32
      %358 = vector.broadcast %cst_76 : f32 to vector<1x32xf32>
      %359 = arith.addf %358, %357 : vector<1x32xf32>
      %360 = arith.divf %358, %359 : vector<1x32xf32>
      %361 = arith.mulf %355, %360 : vector<1x32xf32>
      %362 = vector.broadcast %361 : vector<1x32xf32> to vector<32x32xf32>
      %363 = arith.mulf %2, %362 : vector<32x32xf32>
      %cst_77 = arith.constant dense<0.000000e+00> : vector<32xf32>
      %364 = vector.multi_reduction <add>, %363, %cst_77 [1] : vector<32x32xf32> to vector<32xf32>
      %365 = vector.shape_cast %364 : vector<32xf32> to vector<32x1xf32>
      %366 = arith.addf %365, %3 : vector<32x1xf32>
      %367 = arith.negf %366 : vector<32x1xf32>
      %368 = math.exp %367 : vector<32x1xf32>
      %cst_78 = arith.constant 1.000000e+00 : f32
      %369 = vector.broadcast %cst_78 : f32 to vector<32x1xf32>
      %370 = arith.addf %369, %368 : vector<32x1xf32>
      %371 = arith.divf %369, %370 : vector<32x1xf32>
      %372 = arith.mulf %366, %371 : vector<32x1xf32>
      %373 = vector.broadcast %372 : vector<32x1xf32> to vector<32x32xf32>
      %374 = arith.mulf %4, %373 : vector<32x32xf32>
      %cst_79 = arith.constant dense<0.000000e+00> : vector<32xf32>
      %375 = vector.multi_reduction <add>, %374, %cst_79 [0] : vector<32x32xf32> to vector<32xf32>
      %376 = vector.shape_cast %375 : vector<32xf32> to vector<1x32xf32>
      %377 = arith.addf %376, %5 : vector<1x32xf32>
      %378 = arith.negf %377 : vector<1x32xf32>
      %379 = math.exp %378 : vector<1x32xf32>
      %cst_80 = arith.constant 1.000000e+00 : f32
      %380 = vector.broadcast %cst_80 : f32 to vector<1x32xf32>
      %381 = arith.addf %380, %379 : vector<1x32xf32>
      %382 = arith.divf %380, %381 : vector<1x32xf32>
      %383 = arith.mulf %377, %382 : vector<1x32xf32>
      %384 = arith.mulf %6, %383 : vector<1x32xf32>
      %cst_81 = arith.constant dense<0.000000e+00> : vector<1xf32>
      %385 = vector.multi_reduction <add>, %384, %cst_81 [1] : vector<1x32xf32> to vector<1xf32>
      %386 = vector.shape_cast %385 : vector<1xf32> to vector<1x1xf32>
      %387 = arith.addf %386, %7 : vector<1x1xf32>
      %388 = vector.broadcast %33 : f32 to vector<1x1xf32>
      %389 = arith.mulf %388, %387 : vector<1x1xf32>
      %390 = arith.addf %352, %389 : vector<1x1xf32>
      %391 = vector.broadcast %390 : vector<1x1xf32> to vector<1x32xf32>
      %392 = arith.mulf %391, %0 : vector<1x32xf32>
      %393 = arith.addf %392, %1 : vector<1x32xf32>
      %394 = arith.negf %393 : vector<1x32xf32>
      %395 = math.exp %394 : vector<1x32xf32>
      %cst_82 = arith.constant 1.000000e+00 : f32
      %396 = vector.broadcast %cst_82 : f32 to vector<1x32xf32>
      %397 = arith.addf %396, %395 : vector<1x32xf32>
      %398 = arith.divf %396, %397 : vector<1x32xf32>
      %399 = arith.mulf %393, %398 : vector<1x32xf32>
      %400 = vector.broadcast %399 : vector<1x32xf32> to vector<32x32xf32>
      %401 = arith.mulf %2, %400 : vector<32x32xf32>
      %cst_83 = arith.constant dense<0.000000e+00> : vector<32xf32>
      %402 = vector.multi_reduction <add>, %401, %cst_83 [1] : vector<32x32xf32> to vector<32xf32>
      %403 = vector.shape_cast %402 : vector<32xf32> to vector<32x1xf32>
      %404 = arith.addf %403, %3 : vector<32x1xf32>
      %405 = arith.negf %404 : vector<32x1xf32>
      %406 = math.exp %405 : vector<32x1xf32>
      %cst_84 = arith.constant 1.000000e+00 : f32
      %407 = vector.broadcast %cst_84 : f32 to vector<32x1xf32>
      %408 = arith.addf %407, %406 : vector<32x1xf32>
      %409 = arith.divf %407, %408 : vector<32x1xf32>
      %410 = arith.mulf %404, %409 : vector<32x1xf32>
      %411 = vector.broadcast %410 : vector<32x1xf32> to vector<32x32xf32>
      %412 = arith.mulf %4, %411 : vector<32x32xf32>
      %cst_85 = arith.constant dense<0.000000e+00> : vector<32xf32>
      %413 = vector.multi_reduction <add>, %412, %cst_85 [0] : vector<32x32xf32> to vector<32xf32>
      %414 = vector.shape_cast %413 : vector<32xf32> to vector<1x32xf32>
      %415 = arith.addf %414, %5 : vector<1x32xf32>
      %416 = arith.negf %415 : vector<1x32xf32>
      %417 = math.exp %416 : vector<1x32xf32>
      %cst_86 = arith.constant 1.000000e+00 : f32
      %418 = vector.broadcast %cst_86 : f32 to vector<1x32xf32>
      %419 = arith.addf %418, %417 : vector<1x32xf32>
      %420 = arith.divf %418, %419 : vector<1x32xf32>
      %421 = arith.mulf %415, %420 : vector<1x32xf32>
      %422 = arith.mulf %6, %421 : vector<1x32xf32>
      %cst_87 = arith.constant dense<0.000000e+00> : vector<1xf32>
      %423 = vector.multi_reduction <add>, %422, %cst_87 [1] : vector<1x32xf32> to vector<1xf32>
      %424 = vector.shape_cast %423 : vector<1xf32> to vector<1x1xf32>
      %425 = arith.addf %424, %7 : vector<1x1xf32>
      %426 = vector.broadcast %33 : f32 to vector<1x1xf32>
      %427 = arith.mulf %426, %425 : vector<1x1xf32>
      %428 = arith.addf %352, %427 : vector<1x1xf32>
      %429 = vector.broadcast %428 : vector<1x1xf32> to vector<1x32xf32>
      %430 = arith.mulf %429, %0 : vector<1x32xf32>
      %431 = arith.addf %430, %1 : vector<1x32xf32>
      %432 = arith.negf %431 : vector<1x32xf32>
      %433 = math.exp %432 : vector<1x32xf32>
      %cst_88 = arith.constant 1.000000e+00 : f32
      %434 = vector.broadcast %cst_88 : f32 to vector<1x32xf32>
      %435 = arith.addf %434, %433 : vector<1x32xf32>
      %436 = arith.divf %434, %435 : vector<1x32xf32>
      %437 = arith.mulf %431, %436 : vector<1x32xf32>
      %438 = vector.broadcast %437 : vector<1x32xf32> to vector<32x32xf32>
      %439 = arith.mulf %2, %438 : vector<32x32xf32>
      %cst_89 = arith.constant dense<0.000000e+00> : vector<32xf32>
      %440 = vector.multi_reduction <add>, %439, %cst_89 [1] : vector<32x32xf32> to vector<32xf32>
      %441 = vector.shape_cast %440 : vector<32xf32> to vector<32x1xf32>
      %442 = arith.addf %441, %3 : vector<32x1xf32>
      %443 = arith.negf %442 : vector<32x1xf32>
      %444 = math.exp %443 : vector<32x1xf32>
      %cst_90 = arith.constant 1.000000e+00 : f32
      %445 = vector.broadcast %cst_90 : f32 to vector<32x1xf32>
      %446 = arith.addf %445, %444 : vector<32x1xf32>
      %447 = arith.divf %445, %446 : vector<32x1xf32>
      %448 = arith.mulf %442, %447 : vector<32x1xf32>
      %449 = vector.broadcast %448 : vector<32x1xf32> to vector<32x32xf32>
      %450 = arith.mulf %4, %449 : vector<32x32xf32>
      %cst_91 = arith.constant dense<0.000000e+00> : vector<32xf32>
      %451 = vector.multi_reduction <add>, %450, %cst_91 [0] : vector<32x32xf32> to vector<32xf32>
      %452 = vector.shape_cast %451 : vector<32xf32> to vector<1x32xf32>
      %453 = arith.addf %452, %5 : vector<1x32xf32>
      %454 = arith.negf %453 : vector<1x32xf32>
      %455 = math.exp %454 : vector<1x32xf32>
      %cst_92 = arith.constant 1.000000e+00 : f32
      %456 = vector.broadcast %cst_92 : f32 to vector<1x32xf32>
      %457 = arith.addf %456, %455 : vector<1x32xf32>
      %458 = arith.divf %456, %457 : vector<1x32xf32>
      %459 = arith.mulf %453, %458 : vector<1x32xf32>
      %460 = arith.mulf %6, %459 : vector<1x32xf32>
      %cst_93 = arith.constant dense<0.000000e+00> : vector<1xf32>
      %461 = vector.multi_reduction <add>, %460, %cst_93 [1] : vector<1x32xf32> to vector<1xf32>
      %462 = vector.shape_cast %461 : vector<1xf32> to vector<1x1xf32>
      %463 = arith.addf %462, %7 : vector<1x1xf32>
      %464 = vector.broadcast %32 : f32 to vector<1x1xf32>
      %465 = arith.mulf %464, %463 : vector<1x1xf32>
      %466 = arith.addf %352, %465 : vector<1x1xf32>
      %467 = vector.broadcast %466 : vector<1x1xf32> to vector<1x32xf32>
      %468 = arith.mulf %467, %0 : vector<1x32xf32>
      %469 = arith.addf %468, %1 : vector<1x32xf32>
      %470 = arith.negf %469 : vector<1x32xf32>
      %471 = math.exp %470 : vector<1x32xf32>
      %cst_94 = arith.constant 1.000000e+00 : f32
      %472 = vector.broadcast %cst_94 : f32 to vector<1x32xf32>
      %473 = arith.addf %472, %471 : vector<1x32xf32>
      %474 = arith.divf %472, %473 : vector<1x32xf32>
      %475 = arith.mulf %469, %474 : vector<1x32xf32>
      %476 = vector.broadcast %475 : vector<1x32xf32> to vector<32x32xf32>
      %477 = arith.mulf %2, %476 : vector<32x32xf32>
      %cst_95 = arith.constant dense<0.000000e+00> : vector<32xf32>
      %478 = vector.multi_reduction <add>, %477, %cst_95 [1] : vector<32x32xf32> to vector<32xf32>
      %479 = vector.shape_cast %478 : vector<32xf32> to vector<32x1xf32>
      %480 = arith.addf %479, %3 : vector<32x1xf32>
      %481 = arith.negf %480 : vector<32x1xf32>
      %482 = math.exp %481 : vector<32x1xf32>
      %cst_96 = arith.constant 1.000000e+00 : f32
      %483 = vector.broadcast %cst_96 : f32 to vector<32x1xf32>
      %484 = arith.addf %483, %482 : vector<32x1xf32>
      %485 = arith.divf %483, %484 : vector<32x1xf32>
      %486 = arith.mulf %480, %485 : vector<32x1xf32>
      %487 = vector.broadcast %486 : vector<32x1xf32> to vector<32x32xf32>
      %488 = arith.mulf %4, %487 : vector<32x32xf32>
      %cst_97 = arith.constant dense<0.000000e+00> : vector<32xf32>
      %489 = vector.multi_reduction <add>, %488, %cst_97 [0] : vector<32x32xf32> to vector<32xf32>
      %490 = vector.shape_cast %489 : vector<32xf32> to vector<1x32xf32>
      %491 = arith.addf %490, %5 : vector<1x32xf32>
      %492 = arith.negf %491 : vector<1x32xf32>
      %493 = math.exp %492 : vector<1x32xf32>
      %cst_98 = arith.constant 1.000000e+00 : f32
      %494 = vector.broadcast %cst_98 : f32 to vector<1x32xf32>
      %495 = arith.addf %494, %493 : vector<1x32xf32>
      %496 = arith.divf %494, %495 : vector<1x32xf32>
      %497 = arith.mulf %491, %496 : vector<1x32xf32>
      %498 = arith.mulf %6, %497 : vector<1x32xf32>
      %cst_99 = arith.constant dense<0.000000e+00> : vector<1xf32>
      %499 = vector.multi_reduction <add>, %498, %cst_99 [1] : vector<1x32xf32> to vector<1xf32>
      %500 = vector.shape_cast %499 : vector<1xf32> to vector<1x1xf32>
      %501 = arith.addf %500, %7 : vector<1x1xf32>
      %cst_100 = arith.constant 2.000000e+00 : f32
      %502 = vector.broadcast %cst_100 : f32 to vector<1x1xf32>
      %503 = arith.mulf %502, %425 : vector<1x1xf32>
      %504 = arith.addf %387, %503 : vector<1x1xf32>
      %cst_101 = arith.constant 2.000000e+00 : f32
      %505 = vector.broadcast %cst_101 : f32 to vector<1x1xf32>
      %506 = arith.mulf %505, %463 : vector<1x1xf32>
      %507 = arith.addf %504, %506 : vector<1x1xf32>
      %508 = arith.addf %507, %501 : vector<1x1xf32>
      %509 = vector.broadcast %34 : f32 to vector<1x1xf32>
      %510 = arith.mulf %509, %508 : vector<1x1xf32>
      %511 = arith.addf %352, %510 : vector<1x1xf32>
      %c3_i32 = arith.constant 3 : i32
      %512 = vector.broadcast %511 : vector<1x1xf32> to vector<1x32xf32>
      %513 = arith.mulf %512, %0 : vector<1x32xf32>
      %514 = arith.addf %513, %1 : vector<1x32xf32>
      %515 = arith.negf %514 : vector<1x32xf32>
      %516 = math.exp %515 : vector<1x32xf32>
      %cst_102 = arith.constant 1.000000e+00 : f32
      %517 = vector.broadcast %cst_102 : f32 to vector<1x32xf32>
      %518 = arith.addf %517, %516 : vector<1x32xf32>
      %519 = arith.divf %517, %518 : vector<1x32xf32>
      %520 = arith.mulf %514, %519 : vector<1x32xf32>
      %521 = vector.broadcast %520 : vector<1x32xf32> to vector<32x32xf32>
      %522 = arith.mulf %2, %521 : vector<32x32xf32>
      %cst_103 = arith.constant dense<0.000000e+00> : vector<32xf32>
      %523 = vector.multi_reduction <add>, %522, %cst_103 [1] : vector<32x32xf32> to vector<32xf32>
      %524 = vector.shape_cast %523 : vector<32xf32> to vector<32x1xf32>
      %525 = arith.addf %524, %3 : vector<32x1xf32>
      %526 = arith.negf %525 : vector<32x1xf32>
      %527 = math.exp %526 : vector<32x1xf32>
      %cst_104 = arith.constant 1.000000e+00 : f32
      %528 = vector.broadcast %cst_104 : f32 to vector<32x1xf32>
      %529 = arith.addf %528, %527 : vector<32x1xf32>
      %530 = arith.divf %528, %529 : vector<32x1xf32>
      %531 = arith.mulf %525, %530 : vector<32x1xf32>
      %532 = vector.broadcast %531 : vector<32x1xf32> to vector<32x32xf32>
      %533 = arith.mulf %4, %532 : vector<32x32xf32>
      %cst_105 = arith.constant dense<0.000000e+00> : vector<32xf32>
      %534 = vector.multi_reduction <add>, %533, %cst_105 [0] : vector<32x32xf32> to vector<32xf32>
      %535 = vector.shape_cast %534 : vector<32xf32> to vector<1x32xf32>
      %536 = arith.addf %535, %5 : vector<1x32xf32>
      %537 = arith.negf %536 : vector<1x32xf32>
      %538 = math.exp %537 : vector<1x32xf32>
      %cst_106 = arith.constant 1.000000e+00 : f32
      %539 = vector.broadcast %cst_106 : f32 to vector<1x32xf32>
      %540 = arith.addf %539, %538 : vector<1x32xf32>
      %541 = arith.divf %539, %540 : vector<1x32xf32>
      %542 = arith.mulf %536, %541 : vector<1x32xf32>
      %543 = arith.mulf %6, %542 : vector<1x32xf32>
      %cst_107 = arith.constant dense<0.000000e+00> : vector<1xf32>
      %544 = vector.multi_reduction <add>, %543, %cst_107 [1] : vector<1x32xf32> to vector<1xf32>
      %545 = vector.shape_cast %544 : vector<1xf32> to vector<1x1xf32>
      %546 = arith.addf %545, %7 : vector<1x1xf32>
      %547 = vector.broadcast %33 : f32 to vector<1x1xf32>
      %548 = arith.mulf %547, %546 : vector<1x1xf32>
      %549 = arith.addf %511, %548 : vector<1x1xf32>
      %550 = vector.broadcast %549 : vector<1x1xf32> to vector<1x32xf32>
      %551 = arith.mulf %550, %0 : vector<1x32xf32>
      %552 = arith.addf %551, %1 : vector<1x32xf32>
      %553 = arith.negf %552 : vector<1x32xf32>
      %554 = math.exp %553 : vector<1x32xf32>
      %cst_108 = arith.constant 1.000000e+00 : f32
      %555 = vector.broadcast %cst_108 : f32 to vector<1x32xf32>
      %556 = arith.addf %555, %554 : vector<1x32xf32>
      %557 = arith.divf %555, %556 : vector<1x32xf32>
      %558 = arith.mulf %552, %557 : vector<1x32xf32>
      %559 = vector.broadcast %558 : vector<1x32xf32> to vector<32x32xf32>
      %560 = arith.mulf %2, %559 : vector<32x32xf32>
      %cst_109 = arith.constant dense<0.000000e+00> : vector<32xf32>
      %561 = vector.multi_reduction <add>, %560, %cst_109 [1] : vector<32x32xf32> to vector<32xf32>
      %562 = vector.shape_cast %561 : vector<32xf32> to vector<32x1xf32>
      %563 = arith.addf %562, %3 : vector<32x1xf32>
      %564 = arith.negf %563 : vector<32x1xf32>
      %565 = math.exp %564 : vector<32x1xf32>
      %cst_110 = arith.constant 1.000000e+00 : f32
      %566 = vector.broadcast %cst_110 : f32 to vector<32x1xf32>
      %567 = arith.addf %566, %565 : vector<32x1xf32>
      %568 = arith.divf %566, %567 : vector<32x1xf32>
      %569 = arith.mulf %563, %568 : vector<32x1xf32>
      %570 = vector.broadcast %569 : vector<32x1xf32> to vector<32x32xf32>
      %571 = arith.mulf %4, %570 : vector<32x32xf32>
      %cst_111 = arith.constant dense<0.000000e+00> : vector<32xf32>
      %572 = vector.multi_reduction <add>, %571, %cst_111 [0] : vector<32x32xf32> to vector<32xf32>
      %573 = vector.shape_cast %572 : vector<32xf32> to vector<1x32xf32>
      %574 = arith.addf %573, %5 : vector<1x32xf32>
      %575 = arith.negf %574 : vector<1x32xf32>
      %576 = math.exp %575 : vector<1x32xf32>
      %cst_112 = arith.constant 1.000000e+00 : f32
      %577 = vector.broadcast %cst_112 : f32 to vector<1x32xf32>
      %578 = arith.addf %577, %576 : vector<1x32xf32>
      %579 = arith.divf %577, %578 : vector<1x32xf32>
      %580 = arith.mulf %574, %579 : vector<1x32xf32>
      %581 = arith.mulf %6, %580 : vector<1x32xf32>
      %cst_113 = arith.constant dense<0.000000e+00> : vector<1xf32>
      %582 = vector.multi_reduction <add>, %581, %cst_113 [1] : vector<1x32xf32> to vector<1xf32>
      %583 = vector.shape_cast %582 : vector<1xf32> to vector<1x1xf32>
      %584 = arith.addf %583, %7 : vector<1x1xf32>
      %585 = vector.broadcast %33 : f32 to vector<1x1xf32>
      %586 = arith.mulf %585, %584 : vector<1x1xf32>
      %587 = arith.addf %511, %586 : vector<1x1xf32>
      %588 = vector.broadcast %587 : vector<1x1xf32> to vector<1x32xf32>
      %589 = arith.mulf %588, %0 : vector<1x32xf32>
      %590 = arith.addf %589, %1 : vector<1x32xf32>
      %591 = arith.negf %590 : vector<1x32xf32>
      %592 = math.exp %591 : vector<1x32xf32>
      %cst_114 = arith.constant 1.000000e+00 : f32
      %593 = vector.broadcast %cst_114 : f32 to vector<1x32xf32>
      %594 = arith.addf %593, %592 : vector<1x32xf32>
      %595 = arith.divf %593, %594 : vector<1x32xf32>
      %596 = arith.mulf %590, %595 : vector<1x32xf32>
      %597 = vector.broadcast %596 : vector<1x32xf32> to vector<32x32xf32>
      %598 = arith.mulf %2, %597 : vector<32x32xf32>
      %cst_115 = arith.constant dense<0.000000e+00> : vector<32xf32>
      %599 = vector.multi_reduction <add>, %598, %cst_115 [1] : vector<32x32xf32> to vector<32xf32>
      %600 = vector.shape_cast %599 : vector<32xf32> to vector<32x1xf32>
      %601 = arith.addf %600, %3 : vector<32x1xf32>
      %602 = arith.negf %601 : vector<32x1xf32>
      %603 = math.exp %602 : vector<32x1xf32>
      %cst_116 = arith.constant 1.000000e+00 : f32
      %604 = vector.broadcast %cst_116 : f32 to vector<32x1xf32>
      %605 = arith.addf %604, %603 : vector<32x1xf32>
      %606 = arith.divf %604, %605 : vector<32x1xf32>
      %607 = arith.mulf %601, %606 : vector<32x1xf32>
      %608 = vector.broadcast %607 : vector<32x1xf32> to vector<32x32xf32>
      %609 = arith.mulf %4, %608 : vector<32x32xf32>
      %cst_117 = arith.constant dense<0.000000e+00> : vector<32xf32>
      %610 = vector.multi_reduction <add>, %609, %cst_117 [0] : vector<32x32xf32> to vector<32xf32>
      %611 = vector.shape_cast %610 : vector<32xf32> to vector<1x32xf32>
      %612 = arith.addf %611, %5 : vector<1x32xf32>
      %613 = arith.negf %612 : vector<1x32xf32>
      %614 = math.exp %613 : vector<1x32xf32>
      %cst_118 = arith.constant 1.000000e+00 : f32
      %615 = vector.broadcast %cst_118 : f32 to vector<1x32xf32>
      %616 = arith.addf %615, %614 : vector<1x32xf32>
      %617 = arith.divf %615, %616 : vector<1x32xf32>
      %618 = arith.mulf %612, %617 : vector<1x32xf32>
      %619 = arith.mulf %6, %618 : vector<1x32xf32>
      %cst_119 = arith.constant dense<0.000000e+00> : vector<1xf32>
      %620 = vector.multi_reduction <add>, %619, %cst_119 [1] : vector<1x32xf32> to vector<1xf32>
      %621 = vector.shape_cast %620 : vector<1xf32> to vector<1x1xf32>
      %622 = arith.addf %621, %7 : vector<1x1xf32>
      %623 = vector.broadcast %32 : f32 to vector<1x1xf32>
      %624 = arith.mulf %623, %622 : vector<1x1xf32>
      %625 = arith.addf %511, %624 : vector<1x1xf32>
      %626 = vector.broadcast %625 : vector<1x1xf32> to vector<1x32xf32>
      %627 = arith.mulf %626, %0 : vector<1x32xf32>
      %628 = arith.addf %627, %1 : vector<1x32xf32>
      %629 = arith.negf %628 : vector<1x32xf32>
      %630 = math.exp %629 : vector<1x32xf32>
      %cst_120 = arith.constant 1.000000e+00 : f32
      %631 = vector.broadcast %cst_120 : f32 to vector<1x32xf32>
      %632 = arith.addf %631, %630 : vector<1x32xf32>
      %633 = arith.divf %631, %632 : vector<1x32xf32>
      %634 = arith.mulf %628, %633 : vector<1x32xf32>
      %635 = vector.broadcast %634 : vector<1x32xf32> to vector<32x32xf32>
      %636 = arith.mulf %2, %635 : vector<32x32xf32>
      %cst_121 = arith.constant dense<0.000000e+00> : vector<32xf32>
      %637 = vector.multi_reduction <add>, %636, %cst_121 [1] : vector<32x32xf32> to vector<32xf32>
      %638 = vector.shape_cast %637 : vector<32xf32> to vector<32x1xf32>
      %639 = arith.addf %638, %3 : vector<32x1xf32>
      %640 = arith.negf %639 : vector<32x1xf32>
      %641 = math.exp %640 : vector<32x1xf32>
      %cst_122 = arith.constant 1.000000e+00 : f32
      %642 = vector.broadcast %cst_122 : f32 to vector<32x1xf32>
      %643 = arith.addf %642, %641 : vector<32x1xf32>
      %644 = arith.divf %642, %643 : vector<32x1xf32>
      %645 = arith.mulf %639, %644 : vector<32x1xf32>
      %646 = vector.broadcast %645 : vector<32x1xf32> to vector<32x32xf32>
      %647 = arith.mulf %4, %646 : vector<32x32xf32>
      %cst_123 = arith.constant dense<0.000000e+00> : vector<32xf32>
      %648 = vector.multi_reduction <add>, %647, %cst_123 [0] : vector<32x32xf32> to vector<32xf32>
      %649 = vector.shape_cast %648 : vector<32xf32> to vector<1x32xf32>
      %650 = arith.addf %649, %5 : vector<1x32xf32>
      %651 = arith.negf %650 : vector<1x32xf32>
      %652 = math.exp %651 : vector<1x32xf32>
      %cst_124 = arith.constant 1.000000e+00 : f32
      %653 = vector.broadcast %cst_124 : f32 to vector<1x32xf32>
      %654 = arith.addf %653, %652 : vector<1x32xf32>
      %655 = arith.divf %653, %654 : vector<1x32xf32>
      %656 = arith.mulf %650, %655 : vector<1x32xf32>
      %657 = arith.mulf %6, %656 : vector<1x32xf32>
      %cst_125 = arith.constant dense<0.000000e+00> : vector<1xf32>
      %658 = vector.multi_reduction <add>, %657, %cst_125 [1] : vector<1x32xf32> to vector<1xf32>
      %659 = vector.shape_cast %658 : vector<1xf32> to vector<1x1xf32>
      %660 = arith.addf %659, %7 : vector<1x1xf32>
      %cst_126 = arith.constant 2.000000e+00 : f32
      %661 = vector.broadcast %cst_126 : f32 to vector<1x1xf32>
      %662 = arith.mulf %661, %584 : vector<1x1xf32>
      %663 = arith.addf %546, %662 : vector<1x1xf32>
      %cst_127 = arith.constant 2.000000e+00 : f32
      %664 = vector.broadcast %cst_127 : f32 to vector<1x1xf32>
      %665 = arith.mulf %664, %622 : vector<1x1xf32>
      %666 = arith.addf %663, %665 : vector<1x1xf32>
      %667 = arith.addf %666, %660 : vector<1x1xf32>
      %668 = vector.broadcast %34 : f32 to vector<1x1xf32>
      %669 = arith.mulf %668, %667 : vector<1x1xf32>
      %670 = arith.addf %511, %669 : vector<1x1xf32>
      %c4_i32 = arith.constant 4 : i32
      %671 = vector.broadcast %670 : vector<1x1xf32> to vector<1x32xf32>
      %672 = arith.mulf %671, %0 : vector<1x32xf32>
      %673 = arith.addf %672, %1 : vector<1x32xf32>
      %674 = arith.negf %673 : vector<1x32xf32>
      %675 = math.exp %674 : vector<1x32xf32>
      %cst_128 = arith.constant 1.000000e+00 : f32
      %676 = vector.broadcast %cst_128 : f32 to vector<1x32xf32>
      %677 = arith.addf %676, %675 : vector<1x32xf32>
      %678 = arith.divf %676, %677 : vector<1x32xf32>
      %679 = arith.mulf %673, %678 : vector<1x32xf32>
      %680 = vector.broadcast %679 : vector<1x32xf32> to vector<32x32xf32>
      %681 = arith.mulf %2, %680 : vector<32x32xf32>
      %cst_129 = arith.constant dense<0.000000e+00> : vector<32xf32>
      %682 = vector.multi_reduction <add>, %681, %cst_129 [1] : vector<32x32xf32> to vector<32xf32>
      %683 = vector.shape_cast %682 : vector<32xf32> to vector<32x1xf32>
      %684 = arith.addf %683, %3 : vector<32x1xf32>
      %685 = arith.negf %684 : vector<32x1xf32>
      %686 = math.exp %685 : vector<32x1xf32>
      %cst_130 = arith.constant 1.000000e+00 : f32
      %687 = vector.broadcast %cst_130 : f32 to vector<32x1xf32>
      %688 = arith.addf %687, %686 : vector<32x1xf32>
      %689 = arith.divf %687, %688 : vector<32x1xf32>
      %690 = arith.mulf %684, %689 : vector<32x1xf32>
      %691 = vector.broadcast %690 : vector<32x1xf32> to vector<32x32xf32>
      %692 = arith.mulf %4, %691 : vector<32x32xf32>
      %cst_131 = arith.constant dense<0.000000e+00> : vector<32xf32>
      %693 = vector.multi_reduction <add>, %692, %cst_131 [0] : vector<32x32xf32> to vector<32xf32>
      %694 = vector.shape_cast %693 : vector<32xf32> to vector<1x32xf32>
      %695 = arith.addf %694, %5 : vector<1x32xf32>
      %696 = arith.negf %695 : vector<1x32xf32>
      %697 = math.exp %696 : vector<1x32xf32>
      %cst_132 = arith.constant 1.000000e+00 : f32
      %698 = vector.broadcast %cst_132 : f32 to vector<1x32xf32>
      %699 = arith.addf %698, %697 : vector<1x32xf32>
      %700 = arith.divf %698, %699 : vector<1x32xf32>
      %701 = arith.mulf %695, %700 : vector<1x32xf32>
      %702 = arith.mulf %6, %701 : vector<1x32xf32>
      %cst_133 = arith.constant dense<0.000000e+00> : vector<1xf32>
      %703 = vector.multi_reduction <add>, %702, %cst_133 [1] : vector<1x32xf32> to vector<1xf32>
      %704 = vector.shape_cast %703 : vector<1xf32> to vector<1x1xf32>
      %705 = arith.addf %704, %7 : vector<1x1xf32>
      %706 = vector.broadcast %33 : f32 to vector<1x1xf32>
      %707 = arith.mulf %706, %705 : vector<1x1xf32>
      %708 = arith.addf %670, %707 : vector<1x1xf32>
      %709 = vector.broadcast %708 : vector<1x1xf32> to vector<1x32xf32>
      %710 = arith.mulf %709, %0 : vector<1x32xf32>
      %711 = arith.addf %710, %1 : vector<1x32xf32>
      %712 = arith.negf %711 : vector<1x32xf32>
      %713 = math.exp %712 : vector<1x32xf32>
      %cst_134 = arith.constant 1.000000e+00 : f32
      %714 = vector.broadcast %cst_134 : f32 to vector<1x32xf32>
      %715 = arith.addf %714, %713 : vector<1x32xf32>
      %716 = arith.divf %714, %715 : vector<1x32xf32>
      %717 = arith.mulf %711, %716 : vector<1x32xf32>
      %718 = vector.broadcast %717 : vector<1x32xf32> to vector<32x32xf32>
      %719 = arith.mulf %2, %718 : vector<32x32xf32>
      %cst_135 = arith.constant dense<0.000000e+00> : vector<32xf32>
      %720 = vector.multi_reduction <add>, %719, %cst_135 [1] : vector<32x32xf32> to vector<32xf32>
      %721 = vector.shape_cast %720 : vector<32xf32> to vector<32x1xf32>
      %722 = arith.addf %721, %3 : vector<32x1xf32>
      %723 = arith.negf %722 : vector<32x1xf32>
      %724 = math.exp %723 : vector<32x1xf32>
      %cst_136 = arith.constant 1.000000e+00 : f32
      %725 = vector.broadcast %cst_136 : f32 to vector<32x1xf32>
      %726 = arith.addf %725, %724 : vector<32x1xf32>
      %727 = arith.divf %725, %726 : vector<32x1xf32>
      %728 = arith.mulf %722, %727 : vector<32x1xf32>
      %729 = vector.broadcast %728 : vector<32x1xf32> to vector<32x32xf32>
      %730 = arith.mulf %4, %729 : vector<32x32xf32>
      %cst_137 = arith.constant dense<0.000000e+00> : vector<32xf32>
      %731 = vector.multi_reduction <add>, %730, %cst_137 [0] : vector<32x32xf32> to vector<32xf32>
      %732 = vector.shape_cast %731 : vector<32xf32> to vector<1x32xf32>
      %733 = arith.addf %732, %5 : vector<1x32xf32>
      %734 = arith.negf %733 : vector<1x32xf32>
      %735 = math.exp %734 : vector<1x32xf32>
      %cst_138 = arith.constant 1.000000e+00 : f32
      %736 = vector.broadcast %cst_138 : f32 to vector<1x32xf32>
      %737 = arith.addf %736, %735 : vector<1x32xf32>
      %738 = arith.divf %736, %737 : vector<1x32xf32>
      %739 = arith.mulf %733, %738 : vector<1x32xf32>
      %740 = arith.mulf %6, %739 : vector<1x32xf32>
      %cst_139 = arith.constant dense<0.000000e+00> : vector<1xf32>
      %741 = vector.multi_reduction <add>, %740, %cst_139 [1] : vector<1x32xf32> to vector<1xf32>
      %742 = vector.shape_cast %741 : vector<1xf32> to vector<1x1xf32>
      %743 = arith.addf %742, %7 : vector<1x1xf32>
      %744 = vector.broadcast %33 : f32 to vector<1x1xf32>
      %745 = arith.mulf %744, %743 : vector<1x1xf32>
      %746 = arith.addf %670, %745 : vector<1x1xf32>
      %747 = vector.broadcast %746 : vector<1x1xf32> to vector<1x32xf32>
      %748 = arith.mulf %747, %0 : vector<1x32xf32>
      %749 = arith.addf %748, %1 : vector<1x32xf32>
      %750 = arith.negf %749 : vector<1x32xf32>
      %751 = math.exp %750 : vector<1x32xf32>
      %cst_140 = arith.constant 1.000000e+00 : f32
      %752 = vector.broadcast %cst_140 : f32 to vector<1x32xf32>
      %753 = arith.addf %752, %751 : vector<1x32xf32>
      %754 = arith.divf %752, %753 : vector<1x32xf32>
      %755 = arith.mulf %749, %754 : vector<1x32xf32>
      %756 = vector.broadcast %755 : vector<1x32xf32> to vector<32x32xf32>
      %757 = arith.mulf %2, %756 : vector<32x32xf32>
      %cst_141 = arith.constant dense<0.000000e+00> : vector<32xf32>
      %758 = vector.multi_reduction <add>, %757, %cst_141 [1] : vector<32x32xf32> to vector<32xf32>
      %759 = vector.shape_cast %758 : vector<32xf32> to vector<32x1xf32>
      %760 = arith.addf %759, %3 : vector<32x1xf32>
      %761 = arith.negf %760 : vector<32x1xf32>
      %762 = math.exp %761 : vector<32x1xf32>
      %cst_142 = arith.constant 1.000000e+00 : f32
      %763 = vector.broadcast %cst_142 : f32 to vector<32x1xf32>
      %764 = arith.addf %763, %762 : vector<32x1xf32>
      %765 = arith.divf %763, %764 : vector<32x1xf32>
      %766 = arith.mulf %760, %765 : vector<32x1xf32>
      %767 = vector.broadcast %766 : vector<32x1xf32> to vector<32x32xf32>
      %768 = arith.mulf %4, %767 : vector<32x32xf32>
      %cst_143 = arith.constant dense<0.000000e+00> : vector<32xf32>
      %769 = vector.multi_reduction <add>, %768, %cst_143 [0] : vector<32x32xf32> to vector<32xf32>
      %770 = vector.shape_cast %769 : vector<32xf32> to vector<1x32xf32>
      %771 = arith.addf %770, %5 : vector<1x32xf32>
      %772 = arith.negf %771 : vector<1x32xf32>
      %773 = math.exp %772 : vector<1x32xf32>
      %cst_144 = arith.constant 1.000000e+00 : f32
      %774 = vector.broadcast %cst_144 : f32 to vector<1x32xf32>
      %775 = arith.addf %774, %773 : vector<1x32xf32>
      %776 = arith.divf %774, %775 : vector<1x32xf32>
      %777 = arith.mulf %771, %776 : vector<1x32xf32>
      %778 = arith.mulf %6, %777 : vector<1x32xf32>
      %cst_145 = arith.constant dense<0.000000e+00> : vector<1xf32>
      %779 = vector.multi_reduction <add>, %778, %cst_145 [1] : vector<1x32xf32> to vector<1xf32>
      %780 = vector.shape_cast %779 : vector<1xf32> to vector<1x1xf32>
      %781 = arith.addf %780, %7 : vector<1x1xf32>
      %782 = vector.broadcast %32 : f32 to vector<1x1xf32>
      %783 = arith.mulf %782, %781 : vector<1x1xf32>
      %784 = arith.addf %670, %783 : vector<1x1xf32>
      %785 = vector.broadcast %784 : vector<1x1xf32> to vector<1x32xf32>
      %786 = arith.mulf %785, %0 : vector<1x32xf32>
      %787 = arith.addf %786, %1 : vector<1x32xf32>
      %788 = arith.negf %787 : vector<1x32xf32>
      %789 = math.exp %788 : vector<1x32xf32>
      %cst_146 = arith.constant 1.000000e+00 : f32
      %790 = vector.broadcast %cst_146 : f32 to vector<1x32xf32>
      %791 = arith.addf %790, %789 : vector<1x32xf32>
      %792 = arith.divf %790, %791 : vector<1x32xf32>
      %793 = arith.mulf %787, %792 : vector<1x32xf32>
      %794 = vector.broadcast %793 : vector<1x32xf32> to vector<32x32xf32>
      %795 = arith.mulf %2, %794 : vector<32x32xf32>
      %cst_147 = arith.constant dense<0.000000e+00> : vector<32xf32>
      %796 = vector.multi_reduction <add>, %795, %cst_147 [1] : vector<32x32xf32> to vector<32xf32>
      %797 = vector.shape_cast %796 : vector<32xf32> to vector<32x1xf32>
      %798 = arith.addf %797, %3 : vector<32x1xf32>
      %799 = arith.negf %798 : vector<32x1xf32>
      %800 = math.exp %799 : vector<32x1xf32>
      %cst_148 = arith.constant 1.000000e+00 : f32
      %801 = vector.broadcast %cst_148 : f32 to vector<32x1xf32>
      %802 = arith.addf %801, %800 : vector<32x1xf32>
      %803 = arith.divf %801, %802 : vector<32x1xf32>
      %804 = arith.mulf %798, %803 : vector<32x1xf32>
      %805 = vector.broadcast %804 : vector<32x1xf32> to vector<32x32xf32>
      %806 = arith.mulf %4, %805 : vector<32x32xf32>
      %cst_149 = arith.constant dense<0.000000e+00> : vector<32xf32>
      %807 = vector.multi_reduction <add>, %806, %cst_149 [0] : vector<32x32xf32> to vector<32xf32>
      %808 = vector.shape_cast %807 : vector<32xf32> to vector<1x32xf32>
      %809 = arith.addf %808, %5 : vector<1x32xf32>
      %810 = arith.negf %809 : vector<1x32xf32>
      %811 = math.exp %810 : vector<1x32xf32>
      %cst_150 = arith.constant 1.000000e+00 : f32
      %812 = vector.broadcast %cst_150 : f32 to vector<1x32xf32>
      %813 = arith.addf %812, %811 : vector<1x32xf32>
      %814 = arith.divf %812, %813 : vector<1x32xf32>
      %815 = arith.mulf %809, %814 : vector<1x32xf32>
      %816 = arith.mulf %6, %815 : vector<1x32xf32>
      %cst_151 = arith.constant dense<0.000000e+00> : vector<1xf32>
      %817 = vector.multi_reduction <add>, %816, %cst_151 [1] : vector<1x32xf32> to vector<1xf32>
      %818 = vector.shape_cast %817 : vector<1xf32> to vector<1x1xf32>
      %819 = arith.addf %818, %7 : vector<1x1xf32>
      %cst_152 = arith.constant 2.000000e+00 : f32
      %820 = vector.broadcast %cst_152 : f32 to vector<1x1xf32>
      %821 = arith.mulf %820, %743 : vector<1x1xf32>
      %822 = arith.addf %705, %821 : vector<1x1xf32>
      %cst_153 = arith.constant 2.000000e+00 : f32
      %823 = vector.broadcast %cst_153 : f32 to vector<1x1xf32>
      %824 = arith.mulf %823, %781 : vector<1x1xf32>
      %825 = arith.addf %822, %824 : vector<1x1xf32>
      %826 = arith.addf %825, %819 : vector<1x1xf32>
      %827 = vector.broadcast %34 : f32 to vector<1x1xf32>
      %828 = arith.mulf %827, %826 : vector<1x1xf32>
      %829 = arith.addf %670, %828 : vector<1x1xf32>
      %c5_i32 = arith.constant 5 : i32
      %830 = vector.broadcast %829 : vector<1x1xf32> to vector<1x32xf32>
      %831 = arith.mulf %830, %0 : vector<1x32xf32>
      %832 = arith.addf %831, %1 : vector<1x32xf32>
      %833 = arith.negf %832 : vector<1x32xf32>
      %834 = math.exp %833 : vector<1x32xf32>
      %cst_154 = arith.constant 1.000000e+00 : f32
      %835 = vector.broadcast %cst_154 : f32 to vector<1x32xf32>
      %836 = arith.addf %835, %834 : vector<1x32xf32>
      %837 = arith.divf %835, %836 : vector<1x32xf32>
      %838 = arith.mulf %832, %837 : vector<1x32xf32>
      %839 = vector.broadcast %838 : vector<1x32xf32> to vector<32x32xf32>
      %840 = arith.mulf %2, %839 : vector<32x32xf32>
      %cst_155 = arith.constant dense<0.000000e+00> : vector<32xf32>
      %841 = vector.multi_reduction <add>, %840, %cst_155 [1] : vector<32x32xf32> to vector<32xf32>
      %842 = vector.shape_cast %841 : vector<32xf32> to vector<32x1xf32>
      %843 = arith.addf %842, %3 : vector<32x1xf32>
      %844 = arith.negf %843 : vector<32x1xf32>
      %845 = math.exp %844 : vector<32x1xf32>
      %cst_156 = arith.constant 1.000000e+00 : f32
      %846 = vector.broadcast %cst_156 : f32 to vector<32x1xf32>
      %847 = arith.addf %846, %845 : vector<32x1xf32>
      %848 = arith.divf %846, %847 : vector<32x1xf32>
      %849 = arith.mulf %843, %848 : vector<32x1xf32>
      %850 = vector.broadcast %849 : vector<32x1xf32> to vector<32x32xf32>
      %851 = arith.mulf %4, %850 : vector<32x32xf32>
      %cst_157 = arith.constant dense<0.000000e+00> : vector<32xf32>
      %852 = vector.multi_reduction <add>, %851, %cst_157 [0] : vector<32x32xf32> to vector<32xf32>
      %853 = vector.shape_cast %852 : vector<32xf32> to vector<1x32xf32>
      %854 = arith.addf %853, %5 : vector<1x32xf32>
      %855 = arith.negf %854 : vector<1x32xf32>
      %856 = math.exp %855 : vector<1x32xf32>
      %cst_158 = arith.constant 1.000000e+00 : f32
      %857 = vector.broadcast %cst_158 : f32 to vector<1x32xf32>
      %858 = arith.addf %857, %856 : vector<1x32xf32>
      %859 = arith.divf %857, %858 : vector<1x32xf32>
      %860 = arith.mulf %854, %859 : vector<1x32xf32>
      %861 = arith.mulf %6, %860 : vector<1x32xf32>
      %cst_159 = arith.constant dense<0.000000e+00> : vector<1xf32>
      %862 = vector.multi_reduction <add>, %861, %cst_159 [1] : vector<1x32xf32> to vector<1xf32>
      %863 = vector.shape_cast %862 : vector<1xf32> to vector<1x1xf32>
      %864 = arith.addf %863, %7 : vector<1x1xf32>
      %865 = vector.broadcast %33 : f32 to vector<1x1xf32>
      %866 = arith.mulf %865, %864 : vector<1x1xf32>
      %867 = arith.addf %829, %866 : vector<1x1xf32>
      %868 = vector.broadcast %867 : vector<1x1xf32> to vector<1x32xf32>
      %869 = arith.mulf %868, %0 : vector<1x32xf32>
      %870 = arith.addf %869, %1 : vector<1x32xf32>
      %871 = arith.negf %870 : vector<1x32xf32>
      %872 = math.exp %871 : vector<1x32xf32>
      %cst_160 = arith.constant 1.000000e+00 : f32
      %873 = vector.broadcast %cst_160 : f32 to vector<1x32xf32>
      %874 = arith.addf %873, %872 : vector<1x32xf32>
      %875 = arith.divf %873, %874 : vector<1x32xf32>
      %876 = arith.mulf %870, %875 : vector<1x32xf32>
      %877 = vector.broadcast %876 : vector<1x32xf32> to vector<32x32xf32>
      %878 = arith.mulf %2, %877 : vector<32x32xf32>
      %cst_161 = arith.constant dense<0.000000e+00> : vector<32xf32>
      %879 = vector.multi_reduction <add>, %878, %cst_161 [1] : vector<32x32xf32> to vector<32xf32>
      %880 = vector.shape_cast %879 : vector<32xf32> to vector<32x1xf32>
      %881 = arith.addf %880, %3 : vector<32x1xf32>
      %882 = arith.negf %881 : vector<32x1xf32>
      %883 = math.exp %882 : vector<32x1xf32>
      %cst_162 = arith.constant 1.000000e+00 : f32
      %884 = vector.broadcast %cst_162 : f32 to vector<32x1xf32>
      %885 = arith.addf %884, %883 : vector<32x1xf32>
      %886 = arith.divf %884, %885 : vector<32x1xf32>
      %887 = arith.mulf %881, %886 : vector<32x1xf32>
      %888 = vector.broadcast %887 : vector<32x1xf32> to vector<32x32xf32>
      %889 = arith.mulf %4, %888 : vector<32x32xf32>
      %cst_163 = arith.constant dense<0.000000e+00> : vector<32xf32>
      %890 = vector.multi_reduction <add>, %889, %cst_163 [0] : vector<32x32xf32> to vector<32xf32>
      %891 = vector.shape_cast %890 : vector<32xf32> to vector<1x32xf32>
      %892 = arith.addf %891, %5 : vector<1x32xf32>
      %893 = arith.negf %892 : vector<1x32xf32>
      %894 = math.exp %893 : vector<1x32xf32>
      %cst_164 = arith.constant 1.000000e+00 : f32
      %895 = vector.broadcast %cst_164 : f32 to vector<1x32xf32>
      %896 = arith.addf %895, %894 : vector<1x32xf32>
      %897 = arith.divf %895, %896 : vector<1x32xf32>
      %898 = arith.mulf %892, %897 : vector<1x32xf32>
      %899 = arith.mulf %6, %898 : vector<1x32xf32>
      %cst_165 = arith.constant dense<0.000000e+00> : vector<1xf32>
      %900 = vector.multi_reduction <add>, %899, %cst_165 [1] : vector<1x32xf32> to vector<1xf32>
      %901 = vector.shape_cast %900 : vector<1xf32> to vector<1x1xf32>
      %902 = arith.addf %901, %7 : vector<1x1xf32>
      %903 = vector.broadcast %33 : f32 to vector<1x1xf32>
      %904 = arith.mulf %903, %902 : vector<1x1xf32>
      %905 = arith.addf %829, %904 : vector<1x1xf32>
      %906 = vector.broadcast %905 : vector<1x1xf32> to vector<1x32xf32>
      %907 = arith.mulf %906, %0 : vector<1x32xf32>
      %908 = arith.addf %907, %1 : vector<1x32xf32>
      %909 = arith.negf %908 : vector<1x32xf32>
      %910 = math.exp %909 : vector<1x32xf32>
      %cst_166 = arith.constant 1.000000e+00 : f32
      %911 = vector.broadcast %cst_166 : f32 to vector<1x32xf32>
      %912 = arith.addf %911, %910 : vector<1x32xf32>
      %913 = arith.divf %911, %912 : vector<1x32xf32>
      %914 = arith.mulf %908, %913 : vector<1x32xf32>
      %915 = vector.broadcast %914 : vector<1x32xf32> to vector<32x32xf32>
      %916 = arith.mulf %2, %915 : vector<32x32xf32>
      %cst_167 = arith.constant dense<0.000000e+00> : vector<32xf32>
      %917 = vector.multi_reduction <add>, %916, %cst_167 [1] : vector<32x32xf32> to vector<32xf32>
      %918 = vector.shape_cast %917 : vector<32xf32> to vector<32x1xf32>
      %919 = arith.addf %918, %3 : vector<32x1xf32>
      %920 = arith.negf %919 : vector<32x1xf32>
      %921 = math.exp %920 : vector<32x1xf32>
      %cst_168 = arith.constant 1.000000e+00 : f32
      %922 = vector.broadcast %cst_168 : f32 to vector<32x1xf32>
      %923 = arith.addf %922, %921 : vector<32x1xf32>
      %924 = arith.divf %922, %923 : vector<32x1xf32>
      %925 = arith.mulf %919, %924 : vector<32x1xf32>
      %926 = vector.broadcast %925 : vector<32x1xf32> to vector<32x32xf32>
      %927 = arith.mulf %4, %926 : vector<32x32xf32>
      %cst_169 = arith.constant dense<0.000000e+00> : vector<32xf32>
      %928 = vector.multi_reduction <add>, %927, %cst_169 [0] : vector<32x32xf32> to vector<32xf32>
      %929 = vector.shape_cast %928 : vector<32xf32> to vector<1x32xf32>
      %930 = arith.addf %929, %5 : vector<1x32xf32>
      %931 = arith.negf %930 : vector<1x32xf32>
      %932 = math.exp %931 : vector<1x32xf32>
      %cst_170 = arith.constant 1.000000e+00 : f32
      %933 = vector.broadcast %cst_170 : f32 to vector<1x32xf32>
      %934 = arith.addf %933, %932 : vector<1x32xf32>
      %935 = arith.divf %933, %934 : vector<1x32xf32>
      %936 = arith.mulf %930, %935 : vector<1x32xf32>
      %937 = arith.mulf %6, %936 : vector<1x32xf32>
      %cst_171 = arith.constant dense<0.000000e+00> : vector<1xf32>
      %938 = vector.multi_reduction <add>, %937, %cst_171 [1] : vector<1x32xf32> to vector<1xf32>
      %939 = vector.shape_cast %938 : vector<1xf32> to vector<1x1xf32>
      %940 = arith.addf %939, %7 : vector<1x1xf32>
      %941 = vector.broadcast %32 : f32 to vector<1x1xf32>
      %942 = arith.mulf %941, %940 : vector<1x1xf32>
      %943 = arith.addf %829, %942 : vector<1x1xf32>
      %944 = vector.broadcast %943 : vector<1x1xf32> to vector<1x32xf32>
      %945 = arith.mulf %944, %0 : vector<1x32xf32>
      %946 = arith.addf %945, %1 : vector<1x32xf32>
      %947 = arith.negf %946 : vector<1x32xf32>
      %948 = math.exp %947 : vector<1x32xf32>
      %cst_172 = arith.constant 1.000000e+00 : f32
      %949 = vector.broadcast %cst_172 : f32 to vector<1x32xf32>
      %950 = arith.addf %949, %948 : vector<1x32xf32>
      %951 = arith.divf %949, %950 : vector<1x32xf32>
      %952 = arith.mulf %946, %951 : vector<1x32xf32>
      %953 = vector.broadcast %952 : vector<1x32xf32> to vector<32x32xf32>
      %954 = arith.mulf %2, %953 : vector<32x32xf32>
      %cst_173 = arith.constant dense<0.000000e+00> : vector<32xf32>
      %955 = vector.multi_reduction <add>, %954, %cst_173 [1] : vector<32x32xf32> to vector<32xf32>
      %956 = vector.shape_cast %955 : vector<32xf32> to vector<32x1xf32>
      %957 = arith.addf %956, %3 : vector<32x1xf32>
      %958 = arith.negf %957 : vector<32x1xf32>
      %959 = math.exp %958 : vector<32x1xf32>
      %cst_174 = arith.constant 1.000000e+00 : f32
      %960 = vector.broadcast %cst_174 : f32 to vector<32x1xf32>
      %961 = arith.addf %960, %959 : vector<32x1xf32>
      %962 = arith.divf %960, %961 : vector<32x1xf32>
      %963 = arith.mulf %957, %962 : vector<32x1xf32>
      %964 = vector.broadcast %963 : vector<32x1xf32> to vector<32x32xf32>
      %965 = arith.mulf %4, %964 : vector<32x32xf32>
      %cst_175 = arith.constant dense<0.000000e+00> : vector<32xf32>
      %966 = vector.multi_reduction <add>, %965, %cst_175 [0] : vector<32x32xf32> to vector<32xf32>
      %967 = vector.shape_cast %966 : vector<32xf32> to vector<1x32xf32>
      %968 = arith.addf %967, %5 : vector<1x32xf32>
      %969 = arith.negf %968 : vector<1x32xf32>
      %970 = math.exp %969 : vector<1x32xf32>
      %cst_176 = arith.constant 1.000000e+00 : f32
      %971 = vector.broadcast %cst_176 : f32 to vector<1x32xf32>
      %972 = arith.addf %971, %970 : vector<1x32xf32>
      %973 = arith.divf %971, %972 : vector<1x32xf32>
      %974 = arith.mulf %968, %973 : vector<1x32xf32>
      %975 = arith.mulf %6, %974 : vector<1x32xf32>
      %cst_177 = arith.constant dense<0.000000e+00> : vector<1xf32>
      %976 = vector.multi_reduction <add>, %975, %cst_177 [1] : vector<1x32xf32> to vector<1xf32>
      %977 = vector.shape_cast %976 : vector<1xf32> to vector<1x1xf32>
      %978 = arith.addf %977, %7 : vector<1x1xf32>
      %cst_178 = arith.constant 2.000000e+00 : f32
      %979 = vector.broadcast %cst_178 : f32 to vector<1x1xf32>
      %980 = arith.mulf %979, %902 : vector<1x1xf32>
      %981 = arith.addf %864, %980 : vector<1x1xf32>
      %cst_179 = arith.constant 2.000000e+00 : f32
      %982 = vector.broadcast %cst_179 : f32 to vector<1x1xf32>
      %983 = arith.mulf %982, %940 : vector<1x1xf32>
      %984 = arith.addf %981, %983 : vector<1x1xf32>
      %985 = arith.addf %984, %978 : vector<1x1xf32>
      %986 = vector.broadcast %34 : f32 to vector<1x1xf32>
      %987 = arith.mulf %986, %985 : vector<1x1xf32>
      %988 = arith.addf %829, %987 : vector<1x1xf32>
      %c6_i32 = arith.constant 6 : i32
      %989 = vector.broadcast %988 : vector<1x1xf32> to vector<1x32xf32>
      %990 = arith.mulf %989, %0 : vector<1x32xf32>
      %991 = arith.addf %990, %1 : vector<1x32xf32>
      %992 = arith.negf %991 : vector<1x32xf32>
      %993 = math.exp %992 : vector<1x32xf32>
      %cst_180 = arith.constant 1.000000e+00 : f32
      %994 = vector.broadcast %cst_180 : f32 to vector<1x32xf32>
      %995 = arith.addf %994, %993 : vector<1x32xf32>
      %996 = arith.divf %994, %995 : vector<1x32xf32>
      %997 = arith.mulf %991, %996 : vector<1x32xf32>
      %998 = vector.broadcast %997 : vector<1x32xf32> to vector<32x32xf32>
      %999 = arith.mulf %2, %998 : vector<32x32xf32>
      %cst_181 = arith.constant dense<0.000000e+00> : vector<32xf32>
      %1000 = vector.multi_reduction <add>, %999, %cst_181 [1] : vector<32x32xf32> to vector<32xf32>
      %1001 = vector.shape_cast %1000 : vector<32xf32> to vector<32x1xf32>
      %1002 = arith.addf %1001, %3 : vector<32x1xf32>
      %1003 = arith.negf %1002 : vector<32x1xf32>
      %1004 = math.exp %1003 : vector<32x1xf32>
      %cst_182 = arith.constant 1.000000e+00 : f32
      %1005 = vector.broadcast %cst_182 : f32 to vector<32x1xf32>
      %1006 = arith.addf %1005, %1004 : vector<32x1xf32>
      %1007 = arith.divf %1005, %1006 : vector<32x1xf32>
      %1008 = arith.mulf %1002, %1007 : vector<32x1xf32>
      %1009 = vector.broadcast %1008 : vector<32x1xf32> to vector<32x32xf32>
      %1010 = arith.mulf %4, %1009 : vector<32x32xf32>
      %cst_183 = arith.constant dense<0.000000e+00> : vector<32xf32>
      %1011 = vector.multi_reduction <add>, %1010, %cst_183 [0] : vector<32x32xf32> to vector<32xf32>
      %1012 = vector.shape_cast %1011 : vector<32xf32> to vector<1x32xf32>
      %1013 = arith.addf %1012, %5 : vector<1x32xf32>
      %1014 = arith.negf %1013 : vector<1x32xf32>
      %1015 = math.exp %1014 : vector<1x32xf32>
      %cst_184 = arith.constant 1.000000e+00 : f32
      %1016 = vector.broadcast %cst_184 : f32 to vector<1x32xf32>
      %1017 = arith.addf %1016, %1015 : vector<1x32xf32>
      %1018 = arith.divf %1016, %1017 : vector<1x32xf32>
      %1019 = arith.mulf %1013, %1018 : vector<1x32xf32>
      %1020 = arith.mulf %6, %1019 : vector<1x32xf32>
      %cst_185 = arith.constant dense<0.000000e+00> : vector<1xf32>
      %1021 = vector.multi_reduction <add>, %1020, %cst_185 [1] : vector<1x32xf32> to vector<1xf32>
      %1022 = vector.shape_cast %1021 : vector<1xf32> to vector<1x1xf32>
      %1023 = arith.addf %1022, %7 : vector<1x1xf32>
      %1024 = vector.broadcast %33 : f32 to vector<1x1xf32>
      %1025 = arith.mulf %1024, %1023 : vector<1x1xf32>
      %1026 = arith.addf %988, %1025 : vector<1x1xf32>
      %1027 = vector.broadcast %1026 : vector<1x1xf32> to vector<1x32xf32>
      %1028 = arith.mulf %1027, %0 : vector<1x32xf32>
      %1029 = arith.addf %1028, %1 : vector<1x32xf32>
      %1030 = arith.negf %1029 : vector<1x32xf32>
      %1031 = math.exp %1030 : vector<1x32xf32>
      %cst_186 = arith.constant 1.000000e+00 : f32
      %1032 = vector.broadcast %cst_186 : f32 to vector<1x32xf32>
      %1033 = arith.addf %1032, %1031 : vector<1x32xf32>
      %1034 = arith.divf %1032, %1033 : vector<1x32xf32>
      %1035 = arith.mulf %1029, %1034 : vector<1x32xf32>
      %1036 = vector.broadcast %1035 : vector<1x32xf32> to vector<32x32xf32>
      %1037 = arith.mulf %2, %1036 : vector<32x32xf32>
      %cst_187 = arith.constant dense<0.000000e+00> : vector<32xf32>
      %1038 = vector.multi_reduction <add>, %1037, %cst_187 [1] : vector<32x32xf32> to vector<32xf32>
      %1039 = vector.shape_cast %1038 : vector<32xf32> to vector<32x1xf32>
      %1040 = arith.addf %1039, %3 : vector<32x1xf32>
      %1041 = arith.negf %1040 : vector<32x1xf32>
      %1042 = math.exp %1041 : vector<32x1xf32>
      %cst_188 = arith.constant 1.000000e+00 : f32
      %1043 = vector.broadcast %cst_188 : f32 to vector<32x1xf32>
      %1044 = arith.addf %1043, %1042 : vector<32x1xf32>
      %1045 = arith.divf %1043, %1044 : vector<32x1xf32>
      %1046 = arith.mulf %1040, %1045 : vector<32x1xf32>
      %1047 = vector.broadcast %1046 : vector<32x1xf32> to vector<32x32xf32>
      %1048 = arith.mulf %4, %1047 : vector<32x32xf32>
      %cst_189 = arith.constant dense<0.000000e+00> : vector<32xf32>
      %1049 = vector.multi_reduction <add>, %1048, %cst_189 [0] : vector<32x32xf32> to vector<32xf32>
      %1050 = vector.shape_cast %1049 : vector<32xf32> to vector<1x32xf32>
      %1051 = arith.addf %1050, %5 : vector<1x32xf32>
      %1052 = arith.negf %1051 : vector<1x32xf32>
      %1053 = math.exp %1052 : vector<1x32xf32>
      %cst_190 = arith.constant 1.000000e+00 : f32
      %1054 = vector.broadcast %cst_190 : f32 to vector<1x32xf32>
      %1055 = arith.addf %1054, %1053 : vector<1x32xf32>
      %1056 = arith.divf %1054, %1055 : vector<1x32xf32>
      %1057 = arith.mulf %1051, %1056 : vector<1x32xf32>
      %1058 = arith.mulf %6, %1057 : vector<1x32xf32>
      %cst_191 = arith.constant dense<0.000000e+00> : vector<1xf32>
      %1059 = vector.multi_reduction <add>, %1058, %cst_191 [1] : vector<1x32xf32> to vector<1xf32>
      %1060 = vector.shape_cast %1059 : vector<1xf32> to vector<1x1xf32>
      %1061 = arith.addf %1060, %7 : vector<1x1xf32>
      %1062 = vector.broadcast %33 : f32 to vector<1x1xf32>
      %1063 = arith.mulf %1062, %1061 : vector<1x1xf32>
      %1064 = arith.addf %988, %1063 : vector<1x1xf32>
      %1065 = vector.broadcast %1064 : vector<1x1xf32> to vector<1x32xf32>
      %1066 = arith.mulf %1065, %0 : vector<1x32xf32>
      %1067 = arith.addf %1066, %1 : vector<1x32xf32>
      %1068 = arith.negf %1067 : vector<1x32xf32>
      %1069 = math.exp %1068 : vector<1x32xf32>
      %cst_192 = arith.constant 1.000000e+00 : f32
      %1070 = vector.broadcast %cst_192 : f32 to vector<1x32xf32>
      %1071 = arith.addf %1070, %1069 : vector<1x32xf32>
      %1072 = arith.divf %1070, %1071 : vector<1x32xf32>
      %1073 = arith.mulf %1067, %1072 : vector<1x32xf32>
      %1074 = vector.broadcast %1073 : vector<1x32xf32> to vector<32x32xf32>
      %1075 = arith.mulf %2, %1074 : vector<32x32xf32>
      %cst_193 = arith.constant dense<0.000000e+00> : vector<32xf32>
      %1076 = vector.multi_reduction <add>, %1075, %cst_193 [1] : vector<32x32xf32> to vector<32xf32>
      %1077 = vector.shape_cast %1076 : vector<32xf32> to vector<32x1xf32>
      %1078 = arith.addf %1077, %3 : vector<32x1xf32>
      %1079 = arith.negf %1078 : vector<32x1xf32>
      %1080 = math.exp %1079 : vector<32x1xf32>
      %cst_194 = arith.constant 1.000000e+00 : f32
      %1081 = vector.broadcast %cst_194 : f32 to vector<32x1xf32>
      %1082 = arith.addf %1081, %1080 : vector<32x1xf32>
      %1083 = arith.divf %1081, %1082 : vector<32x1xf32>
      %1084 = arith.mulf %1078, %1083 : vector<32x1xf32>
      %1085 = vector.broadcast %1084 : vector<32x1xf32> to vector<32x32xf32>
      %1086 = arith.mulf %4, %1085 : vector<32x32xf32>
      %cst_195 = arith.constant dense<0.000000e+00> : vector<32xf32>
      %1087 = vector.multi_reduction <add>, %1086, %cst_195 [0] : vector<32x32xf32> to vector<32xf32>
      %1088 = vector.shape_cast %1087 : vector<32xf32> to vector<1x32xf32>
      %1089 = arith.addf %1088, %5 : vector<1x32xf32>
      %1090 = arith.negf %1089 : vector<1x32xf32>
      %1091 = math.exp %1090 : vector<1x32xf32>
      %cst_196 = arith.constant 1.000000e+00 : f32
      %1092 = vector.broadcast %cst_196 : f32 to vector<1x32xf32>
      %1093 = arith.addf %1092, %1091 : vector<1x32xf32>
      %1094 = arith.divf %1092, %1093 : vector<1x32xf32>
      %1095 = arith.mulf %1089, %1094 : vector<1x32xf32>
      %1096 = arith.mulf %6, %1095 : vector<1x32xf32>
      %cst_197 = arith.constant dense<0.000000e+00> : vector<1xf32>
      %1097 = vector.multi_reduction <add>, %1096, %cst_197 [1] : vector<1x32xf32> to vector<1xf32>
      %1098 = vector.shape_cast %1097 : vector<1xf32> to vector<1x1xf32>
      %1099 = arith.addf %1098, %7 : vector<1x1xf32>
      %1100 = vector.broadcast %32 : f32 to vector<1x1xf32>
      %1101 = arith.mulf %1100, %1099 : vector<1x1xf32>
      %1102 = arith.addf %988, %1101 : vector<1x1xf32>
      %1103 = vector.broadcast %1102 : vector<1x1xf32> to vector<1x32xf32>
      %1104 = arith.mulf %1103, %0 : vector<1x32xf32>
      %1105 = arith.addf %1104, %1 : vector<1x32xf32>
      %1106 = arith.negf %1105 : vector<1x32xf32>
      %1107 = math.exp %1106 : vector<1x32xf32>
      %cst_198 = arith.constant 1.000000e+00 : f32
      %1108 = vector.broadcast %cst_198 : f32 to vector<1x32xf32>
      %1109 = arith.addf %1108, %1107 : vector<1x32xf32>
      %1110 = arith.divf %1108, %1109 : vector<1x32xf32>
      %1111 = arith.mulf %1105, %1110 : vector<1x32xf32>
      %1112 = vector.broadcast %1111 : vector<1x32xf32> to vector<32x32xf32>
      %1113 = arith.mulf %2, %1112 : vector<32x32xf32>
      %cst_199 = arith.constant dense<0.000000e+00> : vector<32xf32>
      %1114 = vector.multi_reduction <add>, %1113, %cst_199 [1] : vector<32x32xf32> to vector<32xf32>
      %1115 = vector.shape_cast %1114 : vector<32xf32> to vector<32x1xf32>
      %1116 = arith.addf %1115, %3 : vector<32x1xf32>
      %1117 = arith.negf %1116 : vector<32x1xf32>
      %1118 = math.exp %1117 : vector<32x1xf32>
      %cst_200 = arith.constant 1.000000e+00 : f32
      %1119 = vector.broadcast %cst_200 : f32 to vector<32x1xf32>
      %1120 = arith.addf %1119, %1118 : vector<32x1xf32>
      %1121 = arith.divf %1119, %1120 : vector<32x1xf32>
      %1122 = arith.mulf %1116, %1121 : vector<32x1xf32>
      %1123 = vector.broadcast %1122 : vector<32x1xf32> to vector<32x32xf32>
      %1124 = arith.mulf %4, %1123 : vector<32x32xf32>
      %cst_201 = arith.constant dense<0.000000e+00> : vector<32xf32>
      %1125 = vector.multi_reduction <add>, %1124, %cst_201 [0] : vector<32x32xf32> to vector<32xf32>
      %1126 = vector.shape_cast %1125 : vector<32xf32> to vector<1x32xf32>
      %1127 = arith.addf %1126, %5 : vector<1x32xf32>
      %1128 = arith.negf %1127 : vector<1x32xf32>
      %1129 = math.exp %1128 : vector<1x32xf32>
      %cst_202 = arith.constant 1.000000e+00 : f32
      %1130 = vector.broadcast %cst_202 : f32 to vector<1x32xf32>
      %1131 = arith.addf %1130, %1129 : vector<1x32xf32>
      %1132 = arith.divf %1130, %1131 : vector<1x32xf32>
      %1133 = arith.mulf %1127, %1132 : vector<1x32xf32>
      %1134 = arith.mulf %6, %1133 : vector<1x32xf32>
      %cst_203 = arith.constant dense<0.000000e+00> : vector<1xf32>
      %1135 = vector.multi_reduction <add>, %1134, %cst_203 [1] : vector<1x32xf32> to vector<1xf32>
      %1136 = vector.shape_cast %1135 : vector<1xf32> to vector<1x1xf32>
      %1137 = arith.addf %1136, %7 : vector<1x1xf32>
      %cst_204 = arith.constant 2.000000e+00 : f32
      %1138 = vector.broadcast %cst_204 : f32 to vector<1x1xf32>
      %1139 = arith.mulf %1138, %1061 : vector<1x1xf32>
      %1140 = arith.addf %1023, %1139 : vector<1x1xf32>
      %cst_205 = arith.constant 2.000000e+00 : f32
      %1141 = vector.broadcast %cst_205 : f32 to vector<1x1xf32>
      %1142 = arith.mulf %1141, %1099 : vector<1x1xf32>
      %1143 = arith.addf %1140, %1142 : vector<1x1xf32>
      %1144 = arith.addf %1143, %1137 : vector<1x1xf32>
      %1145 = vector.broadcast %34 : f32 to vector<1x1xf32>
      %1146 = arith.mulf %1145, %1144 : vector<1x1xf32>
      %1147 = arith.addf %988, %1146 : vector<1x1xf32>
      %c7_i32_206 = arith.constant 7 : i32
      %1148 = vector.broadcast %1147 : vector<1x1xf32> to vector<1x32xf32>
      %1149 = arith.mulf %1148, %0 : vector<1x32xf32>
      %1150 = arith.addf %1149, %1 : vector<1x32xf32>
      %1151 = arith.negf %1150 : vector<1x32xf32>
      %1152 = math.exp %1151 : vector<1x32xf32>
      %cst_207 = arith.constant 1.000000e+00 : f32
      %1153 = vector.broadcast %cst_207 : f32 to vector<1x32xf32>
      %1154 = arith.addf %1153, %1152 : vector<1x32xf32>
      %1155 = arith.divf %1153, %1154 : vector<1x32xf32>
      %1156 = arith.mulf %1150, %1155 : vector<1x32xf32>
      %1157 = vector.broadcast %1156 : vector<1x32xf32> to vector<32x32xf32>
      %1158 = arith.mulf %2, %1157 : vector<32x32xf32>
      %cst_208 = arith.constant dense<0.000000e+00> : vector<32xf32>
      %1159 = vector.multi_reduction <add>, %1158, %cst_208 [1] : vector<32x32xf32> to vector<32xf32>
      %1160 = vector.shape_cast %1159 : vector<32xf32> to vector<32x1xf32>
      %1161 = arith.addf %1160, %3 : vector<32x1xf32>
      %1162 = arith.negf %1161 : vector<32x1xf32>
      %1163 = math.exp %1162 : vector<32x1xf32>
      %cst_209 = arith.constant 1.000000e+00 : f32
      %1164 = vector.broadcast %cst_209 : f32 to vector<32x1xf32>
      %1165 = arith.addf %1164, %1163 : vector<32x1xf32>
      %1166 = arith.divf %1164, %1165 : vector<32x1xf32>
      %1167 = arith.mulf %1161, %1166 : vector<32x1xf32>
      %1168 = vector.broadcast %1167 : vector<32x1xf32> to vector<32x32xf32>
      %1169 = arith.mulf %4, %1168 : vector<32x32xf32>
      %cst_210 = arith.constant dense<0.000000e+00> : vector<32xf32>
      %1170 = vector.multi_reduction <add>, %1169, %cst_210 [0] : vector<32x32xf32> to vector<32xf32>
      %1171 = vector.shape_cast %1170 : vector<32xf32> to vector<1x32xf32>
      %1172 = arith.addf %1171, %5 : vector<1x32xf32>
      %1173 = arith.negf %1172 : vector<1x32xf32>
      %1174 = math.exp %1173 : vector<1x32xf32>
      %cst_211 = arith.constant 1.000000e+00 : f32
      %1175 = vector.broadcast %cst_211 : f32 to vector<1x32xf32>
      %1176 = arith.addf %1175, %1174 : vector<1x32xf32>
      %1177 = arith.divf %1175, %1176 : vector<1x32xf32>
      %1178 = arith.mulf %1172, %1177 : vector<1x32xf32>
      %1179 = arith.mulf %6, %1178 : vector<1x32xf32>
      %cst_212 = arith.constant dense<0.000000e+00> : vector<1xf32>
      %1180 = vector.multi_reduction <add>, %1179, %cst_212 [1] : vector<1x32xf32> to vector<1xf32>
      %1181 = vector.shape_cast %1180 : vector<1xf32> to vector<1x1xf32>
      %1182 = arith.addf %1181, %7 : vector<1x1xf32>
      %1183 = vector.broadcast %33 : f32 to vector<1x1xf32>
      %1184 = arith.mulf %1183, %1182 : vector<1x1xf32>
      %1185 = arith.addf %1147, %1184 : vector<1x1xf32>
      %1186 = vector.broadcast %1185 : vector<1x1xf32> to vector<1x32xf32>
      %1187 = arith.mulf %1186, %0 : vector<1x32xf32>
      %1188 = arith.addf %1187, %1 : vector<1x32xf32>
      %1189 = arith.negf %1188 : vector<1x32xf32>
      %1190 = math.exp %1189 : vector<1x32xf32>
      %cst_213 = arith.constant 1.000000e+00 : f32
      %1191 = vector.broadcast %cst_213 : f32 to vector<1x32xf32>
      %1192 = arith.addf %1191, %1190 : vector<1x32xf32>
      %1193 = arith.divf %1191, %1192 : vector<1x32xf32>
      %1194 = arith.mulf %1188, %1193 : vector<1x32xf32>
      %1195 = vector.broadcast %1194 : vector<1x32xf32> to vector<32x32xf32>
      %1196 = arith.mulf %2, %1195 : vector<32x32xf32>
      %cst_214 = arith.constant dense<0.000000e+00> : vector<32xf32>
      %1197 = vector.multi_reduction <add>, %1196, %cst_214 [1] : vector<32x32xf32> to vector<32xf32>
      %1198 = vector.shape_cast %1197 : vector<32xf32> to vector<32x1xf32>
      %1199 = arith.addf %1198, %3 : vector<32x1xf32>
      %1200 = arith.negf %1199 : vector<32x1xf32>
      %1201 = math.exp %1200 : vector<32x1xf32>
      %cst_215 = arith.constant 1.000000e+00 : f32
      %1202 = vector.broadcast %cst_215 : f32 to vector<32x1xf32>
      %1203 = arith.addf %1202, %1201 : vector<32x1xf32>
      %1204 = arith.divf %1202, %1203 : vector<32x1xf32>
      %1205 = arith.mulf %1199, %1204 : vector<32x1xf32>
      %1206 = vector.broadcast %1205 : vector<32x1xf32> to vector<32x32xf32>
      %1207 = arith.mulf %4, %1206 : vector<32x32xf32>
      %cst_216 = arith.constant dense<0.000000e+00> : vector<32xf32>
      %1208 = vector.multi_reduction <add>, %1207, %cst_216 [0] : vector<32x32xf32> to vector<32xf32>
      %1209 = vector.shape_cast %1208 : vector<32xf32> to vector<1x32xf32>
      %1210 = arith.addf %1209, %5 : vector<1x32xf32>
      %1211 = arith.negf %1210 : vector<1x32xf32>
      %1212 = math.exp %1211 : vector<1x32xf32>
      %cst_217 = arith.constant 1.000000e+00 : f32
      %1213 = vector.broadcast %cst_217 : f32 to vector<1x32xf32>
      %1214 = arith.addf %1213, %1212 : vector<1x32xf32>
      %1215 = arith.divf %1213, %1214 : vector<1x32xf32>
      %1216 = arith.mulf %1210, %1215 : vector<1x32xf32>
      %1217 = arith.mulf %6, %1216 : vector<1x32xf32>
      %cst_218 = arith.constant dense<0.000000e+00> : vector<1xf32>
      %1218 = vector.multi_reduction <add>, %1217, %cst_218 [1] : vector<1x32xf32> to vector<1xf32>
      %1219 = vector.shape_cast %1218 : vector<1xf32> to vector<1x1xf32>
      %1220 = arith.addf %1219, %7 : vector<1x1xf32>
      %1221 = vector.broadcast %33 : f32 to vector<1x1xf32>
      %1222 = arith.mulf %1221, %1220 : vector<1x1xf32>
      %1223 = arith.addf %1147, %1222 : vector<1x1xf32>
      %1224 = vector.broadcast %1223 : vector<1x1xf32> to vector<1x32xf32>
      %1225 = arith.mulf %1224, %0 : vector<1x32xf32>
      %1226 = arith.addf %1225, %1 : vector<1x32xf32>
      %1227 = arith.negf %1226 : vector<1x32xf32>
      %1228 = math.exp %1227 : vector<1x32xf32>
      %cst_219 = arith.constant 1.000000e+00 : f32
      %1229 = vector.broadcast %cst_219 : f32 to vector<1x32xf32>
      %1230 = arith.addf %1229, %1228 : vector<1x32xf32>
      %1231 = arith.divf %1229, %1230 : vector<1x32xf32>
      %1232 = arith.mulf %1226, %1231 : vector<1x32xf32>
      %1233 = vector.broadcast %1232 : vector<1x32xf32> to vector<32x32xf32>
      %1234 = arith.mulf %2, %1233 : vector<32x32xf32>
      %cst_220 = arith.constant dense<0.000000e+00> : vector<32xf32>
      %1235 = vector.multi_reduction <add>, %1234, %cst_220 [1] : vector<32x32xf32> to vector<32xf32>
      %1236 = vector.shape_cast %1235 : vector<32xf32> to vector<32x1xf32>
      %1237 = arith.addf %1236, %3 : vector<32x1xf32>
      %1238 = arith.negf %1237 : vector<32x1xf32>
      %1239 = math.exp %1238 : vector<32x1xf32>
      %cst_221 = arith.constant 1.000000e+00 : f32
      %1240 = vector.broadcast %cst_221 : f32 to vector<32x1xf32>
      %1241 = arith.addf %1240, %1239 : vector<32x1xf32>
      %1242 = arith.divf %1240, %1241 : vector<32x1xf32>
      %1243 = arith.mulf %1237, %1242 : vector<32x1xf32>
      %1244 = vector.broadcast %1243 : vector<32x1xf32> to vector<32x32xf32>
      %1245 = arith.mulf %4, %1244 : vector<32x32xf32>
      %cst_222 = arith.constant dense<0.000000e+00> : vector<32xf32>
      %1246 = vector.multi_reduction <add>, %1245, %cst_222 [0] : vector<32x32xf32> to vector<32xf32>
      %1247 = vector.shape_cast %1246 : vector<32xf32> to vector<1x32xf32>
      %1248 = arith.addf %1247, %5 : vector<1x32xf32>
      %1249 = arith.negf %1248 : vector<1x32xf32>
      %1250 = math.exp %1249 : vector<1x32xf32>
      %cst_223 = arith.constant 1.000000e+00 : f32
      %1251 = vector.broadcast %cst_223 : f32 to vector<1x32xf32>
      %1252 = arith.addf %1251, %1250 : vector<1x32xf32>
      %1253 = arith.divf %1251, %1252 : vector<1x32xf32>
      %1254 = arith.mulf %1248, %1253 : vector<1x32xf32>
      %1255 = arith.mulf %6, %1254 : vector<1x32xf32>
      %cst_224 = arith.constant dense<0.000000e+00> : vector<1xf32>
      %1256 = vector.multi_reduction <add>, %1255, %cst_224 [1] : vector<1x32xf32> to vector<1xf32>
      %1257 = vector.shape_cast %1256 : vector<1xf32> to vector<1x1xf32>
      %1258 = arith.addf %1257, %7 : vector<1x1xf32>
      %1259 = vector.broadcast %32 : f32 to vector<1x1xf32>
      %1260 = arith.mulf %1259, %1258 : vector<1x1xf32>
      %1261 = arith.addf %1147, %1260 : vector<1x1xf32>
      %1262 = vector.broadcast %1261 : vector<1x1xf32> to vector<1x32xf32>
      %1263 = arith.mulf %1262, %0 : vector<1x32xf32>
      %1264 = arith.addf %1263, %1 : vector<1x32xf32>
      %1265 = arith.negf %1264 : vector<1x32xf32>
      %1266 = math.exp %1265 : vector<1x32xf32>
      %cst_225 = arith.constant 1.000000e+00 : f32
      %1267 = vector.broadcast %cst_225 : f32 to vector<1x32xf32>
      %1268 = arith.addf %1267, %1266 : vector<1x32xf32>
      %1269 = arith.divf %1267, %1268 : vector<1x32xf32>
      %1270 = arith.mulf %1264, %1269 : vector<1x32xf32>
      %1271 = vector.broadcast %1270 : vector<1x32xf32> to vector<32x32xf32>
      %1272 = arith.mulf %2, %1271 : vector<32x32xf32>
      %cst_226 = arith.constant dense<0.000000e+00> : vector<32xf32>
      %1273 = vector.multi_reduction <add>, %1272, %cst_226 [1] : vector<32x32xf32> to vector<32xf32>
      %1274 = vector.shape_cast %1273 : vector<32xf32> to vector<32x1xf32>
      %1275 = arith.addf %1274, %3 : vector<32x1xf32>
      %1276 = arith.negf %1275 : vector<32x1xf32>
      %1277 = math.exp %1276 : vector<32x1xf32>
      %cst_227 = arith.constant 1.000000e+00 : f32
      %1278 = vector.broadcast %cst_227 : f32 to vector<32x1xf32>
      %1279 = arith.addf %1278, %1277 : vector<32x1xf32>
      %1280 = arith.divf %1278, %1279 : vector<32x1xf32>
      %1281 = arith.mulf %1275, %1280 : vector<32x1xf32>
      %1282 = vector.broadcast %1281 : vector<32x1xf32> to vector<32x32xf32>
      %1283 = arith.mulf %4, %1282 : vector<32x32xf32>
      %cst_228 = arith.constant dense<0.000000e+00> : vector<32xf32>
      %1284 = vector.multi_reduction <add>, %1283, %cst_228 [0] : vector<32x32xf32> to vector<32xf32>
      %1285 = vector.shape_cast %1284 : vector<32xf32> to vector<1x32xf32>
      %1286 = arith.addf %1285, %5 : vector<1x32xf32>
      %1287 = arith.negf %1286 : vector<1x32xf32>
      %1288 = math.exp %1287 : vector<1x32xf32>
      %cst_229 = arith.constant 1.000000e+00 : f32
      %1289 = vector.broadcast %cst_229 : f32 to vector<1x32xf32>
      %1290 = arith.addf %1289, %1288 : vector<1x32xf32>
      %1291 = arith.divf %1289, %1290 : vector<1x32xf32>
      %1292 = arith.mulf %1286, %1291 : vector<1x32xf32>
      %1293 = arith.mulf %6, %1292 : vector<1x32xf32>
      %cst_230 = arith.constant dense<0.000000e+00> : vector<1xf32>
      %1294 = vector.multi_reduction <add>, %1293, %cst_230 [1] : vector<1x32xf32> to vector<1xf32>
      %1295 = vector.shape_cast %1294 : vector<1xf32> to vector<1x1xf32>
      %1296 = arith.addf %1295, %7 : vector<1x1xf32>
      %cst_231 = arith.constant 2.000000e+00 : f32
      %1297 = vector.broadcast %cst_231 : f32 to vector<1x1xf32>
      %1298 = arith.mulf %1297, %1220 : vector<1x1xf32>
      %1299 = arith.addf %1182, %1298 : vector<1x1xf32>
      %cst_232 = arith.constant 2.000000e+00 : f32
      %1300 = vector.broadcast %cst_232 : f32 to vector<1x1xf32>
      %1301 = arith.mulf %1300, %1258 : vector<1x1xf32>
      %1302 = arith.addf %1299, %1301 : vector<1x1xf32>
      %1303 = arith.addf %1302, %1296 : vector<1x1xf32>
      %1304 = vector.broadcast %34 : f32 to vector<1x1xf32>
      %1305 = arith.mulf %1304, %1303 : vector<1x1xf32>
      %1306 = arith.addf %1147, %1305 : vector<1x1xf32>
      %c8_i32 = arith.constant 8 : i32
      %1307 = vector.broadcast %1306 : vector<1x1xf32> to vector<1x32xf32>
      %1308 = arith.mulf %1307, %0 : vector<1x32xf32>
      %1309 = arith.addf %1308, %1 : vector<1x32xf32>
      %1310 = arith.negf %1309 : vector<1x32xf32>
      %1311 = math.exp %1310 : vector<1x32xf32>
      %cst_233 = arith.constant 1.000000e+00 : f32
      %1312 = vector.broadcast %cst_233 : f32 to vector<1x32xf32>
      %1313 = arith.addf %1312, %1311 : vector<1x32xf32>
      %1314 = arith.divf %1312, %1313 : vector<1x32xf32>
      %1315 = arith.mulf %1309, %1314 : vector<1x32xf32>
      %1316 = vector.broadcast %1315 : vector<1x32xf32> to vector<32x32xf32>
      %1317 = arith.mulf %2, %1316 : vector<32x32xf32>
      %cst_234 = arith.constant dense<0.000000e+00> : vector<32xf32>
      %1318 = vector.multi_reduction <add>, %1317, %cst_234 [1] : vector<32x32xf32> to vector<32xf32>
      %1319 = vector.shape_cast %1318 : vector<32xf32> to vector<32x1xf32>
      %1320 = arith.addf %1319, %3 : vector<32x1xf32>
      %1321 = arith.negf %1320 : vector<32x1xf32>
      %1322 = math.exp %1321 : vector<32x1xf32>
      %cst_235 = arith.constant 1.000000e+00 : f32
      %1323 = vector.broadcast %cst_235 : f32 to vector<32x1xf32>
      %1324 = arith.addf %1323, %1322 : vector<32x1xf32>
      %1325 = arith.divf %1323, %1324 : vector<32x1xf32>
      %1326 = arith.mulf %1320, %1325 : vector<32x1xf32>
      %1327 = vector.broadcast %1326 : vector<32x1xf32> to vector<32x32xf32>
      %1328 = arith.mulf %4, %1327 : vector<32x32xf32>
      %cst_236 = arith.constant dense<0.000000e+00> : vector<32xf32>
      %1329 = vector.multi_reduction <add>, %1328, %cst_236 [0] : vector<32x32xf32> to vector<32xf32>
      %1330 = vector.shape_cast %1329 : vector<32xf32> to vector<1x32xf32>
      %1331 = arith.addf %1330, %5 : vector<1x32xf32>
      %1332 = arith.negf %1331 : vector<1x32xf32>
      %1333 = math.exp %1332 : vector<1x32xf32>
      %cst_237 = arith.constant 1.000000e+00 : f32
      %1334 = vector.broadcast %cst_237 : f32 to vector<1x32xf32>
      %1335 = arith.addf %1334, %1333 : vector<1x32xf32>
      %1336 = arith.divf %1334, %1335 : vector<1x32xf32>
      %1337 = arith.mulf %1331, %1336 : vector<1x32xf32>
      %1338 = arith.mulf %6, %1337 : vector<1x32xf32>
      %cst_238 = arith.constant dense<0.000000e+00> : vector<1xf32>
      %1339 = vector.multi_reduction <add>, %1338, %cst_238 [1] : vector<1x32xf32> to vector<1xf32>
      %1340 = vector.shape_cast %1339 : vector<1xf32> to vector<1x1xf32>
      %1341 = arith.addf %1340, %7 : vector<1x1xf32>
      %1342 = vector.broadcast %33 : f32 to vector<1x1xf32>
      %1343 = arith.mulf %1342, %1341 : vector<1x1xf32>
      %1344 = arith.addf %1306, %1343 : vector<1x1xf32>
      %1345 = vector.broadcast %1344 : vector<1x1xf32> to vector<1x32xf32>
      %1346 = arith.mulf %1345, %0 : vector<1x32xf32>
      %1347 = arith.addf %1346, %1 : vector<1x32xf32>
      %1348 = arith.negf %1347 : vector<1x32xf32>
      %1349 = math.exp %1348 : vector<1x32xf32>
      %cst_239 = arith.constant 1.000000e+00 : f32
      %1350 = vector.broadcast %cst_239 : f32 to vector<1x32xf32>
      %1351 = arith.addf %1350, %1349 : vector<1x32xf32>
      %1352 = arith.divf %1350, %1351 : vector<1x32xf32>
      %1353 = arith.mulf %1347, %1352 : vector<1x32xf32>
      %1354 = vector.broadcast %1353 : vector<1x32xf32> to vector<32x32xf32>
      %1355 = arith.mulf %2, %1354 : vector<32x32xf32>
      %cst_240 = arith.constant dense<0.000000e+00> : vector<32xf32>
      %1356 = vector.multi_reduction <add>, %1355, %cst_240 [1] : vector<32x32xf32> to vector<32xf32>
      %1357 = vector.shape_cast %1356 : vector<32xf32> to vector<32x1xf32>
      %1358 = arith.addf %1357, %3 : vector<32x1xf32>
      %1359 = arith.negf %1358 : vector<32x1xf32>
      %1360 = math.exp %1359 : vector<32x1xf32>
      %cst_241 = arith.constant 1.000000e+00 : f32
      %1361 = vector.broadcast %cst_241 : f32 to vector<32x1xf32>
      %1362 = arith.addf %1361, %1360 : vector<32x1xf32>
      %1363 = arith.divf %1361, %1362 : vector<32x1xf32>
      %1364 = arith.mulf %1358, %1363 : vector<32x1xf32>
      %1365 = vector.broadcast %1364 : vector<32x1xf32> to vector<32x32xf32>
      %1366 = arith.mulf %4, %1365 : vector<32x32xf32>
      %cst_242 = arith.constant dense<0.000000e+00> : vector<32xf32>
      %1367 = vector.multi_reduction <add>, %1366, %cst_242 [0] : vector<32x32xf32> to vector<32xf32>
      %1368 = vector.shape_cast %1367 : vector<32xf32> to vector<1x32xf32>
      %1369 = arith.addf %1368, %5 : vector<1x32xf32>
      %1370 = arith.negf %1369 : vector<1x32xf32>
      %1371 = math.exp %1370 : vector<1x32xf32>
      %cst_243 = arith.constant 1.000000e+00 : f32
      %1372 = vector.broadcast %cst_243 : f32 to vector<1x32xf32>
      %1373 = arith.addf %1372, %1371 : vector<1x32xf32>
      %1374 = arith.divf %1372, %1373 : vector<1x32xf32>
      %1375 = arith.mulf %1369, %1374 : vector<1x32xf32>
      %1376 = arith.mulf %6, %1375 : vector<1x32xf32>
      %cst_244 = arith.constant dense<0.000000e+00> : vector<1xf32>
      %1377 = vector.multi_reduction <add>, %1376, %cst_244 [1] : vector<1x32xf32> to vector<1xf32>
      %1378 = vector.shape_cast %1377 : vector<1xf32> to vector<1x1xf32>
      %1379 = arith.addf %1378, %7 : vector<1x1xf32>
      %1380 = vector.broadcast %33 : f32 to vector<1x1xf32>
      %1381 = arith.mulf %1380, %1379 : vector<1x1xf32>
      %1382 = arith.addf %1306, %1381 : vector<1x1xf32>
      %1383 = vector.broadcast %1382 : vector<1x1xf32> to vector<1x32xf32>
      %1384 = arith.mulf %1383, %0 : vector<1x32xf32>
      %1385 = arith.addf %1384, %1 : vector<1x32xf32>
      %1386 = arith.negf %1385 : vector<1x32xf32>
      %1387 = math.exp %1386 : vector<1x32xf32>
      %cst_245 = arith.constant 1.000000e+00 : f32
      %1388 = vector.broadcast %cst_245 : f32 to vector<1x32xf32>
      %1389 = arith.addf %1388, %1387 : vector<1x32xf32>
      %1390 = arith.divf %1388, %1389 : vector<1x32xf32>
      %1391 = arith.mulf %1385, %1390 : vector<1x32xf32>
      %1392 = vector.broadcast %1391 : vector<1x32xf32> to vector<32x32xf32>
      %1393 = arith.mulf %2, %1392 : vector<32x32xf32>
      %cst_246 = arith.constant dense<0.000000e+00> : vector<32xf32>
      %1394 = vector.multi_reduction <add>, %1393, %cst_246 [1] : vector<32x32xf32> to vector<32xf32>
      %1395 = vector.shape_cast %1394 : vector<32xf32> to vector<32x1xf32>
      %1396 = arith.addf %1395, %3 : vector<32x1xf32>
      %1397 = arith.negf %1396 : vector<32x1xf32>
      %1398 = math.exp %1397 : vector<32x1xf32>
      %cst_247 = arith.constant 1.000000e+00 : f32
      %1399 = vector.broadcast %cst_247 : f32 to vector<32x1xf32>
      %1400 = arith.addf %1399, %1398 : vector<32x1xf32>
      %1401 = arith.divf %1399, %1400 : vector<32x1xf32>
      %1402 = arith.mulf %1396, %1401 : vector<32x1xf32>
      %1403 = vector.broadcast %1402 : vector<32x1xf32> to vector<32x32xf32>
      %1404 = arith.mulf %4, %1403 : vector<32x32xf32>
      %cst_248 = arith.constant dense<0.000000e+00> : vector<32xf32>
      %1405 = vector.multi_reduction <add>, %1404, %cst_248 [0] : vector<32x32xf32> to vector<32xf32>
      %1406 = vector.shape_cast %1405 : vector<32xf32> to vector<1x32xf32>
      %1407 = arith.addf %1406, %5 : vector<1x32xf32>
      %1408 = arith.negf %1407 : vector<1x32xf32>
      %1409 = math.exp %1408 : vector<1x32xf32>
      %cst_249 = arith.constant 1.000000e+00 : f32
      %1410 = vector.broadcast %cst_249 : f32 to vector<1x32xf32>
      %1411 = arith.addf %1410, %1409 : vector<1x32xf32>
      %1412 = arith.divf %1410, %1411 : vector<1x32xf32>
      %1413 = arith.mulf %1407, %1412 : vector<1x32xf32>
      %1414 = arith.mulf %6, %1413 : vector<1x32xf32>
      %cst_250 = arith.constant dense<0.000000e+00> : vector<1xf32>
      %1415 = vector.multi_reduction <add>, %1414, %cst_250 [1] : vector<1x32xf32> to vector<1xf32>
      %1416 = vector.shape_cast %1415 : vector<1xf32> to vector<1x1xf32>
      %1417 = arith.addf %1416, %7 : vector<1x1xf32>
      %1418 = vector.broadcast %32 : f32 to vector<1x1xf32>
      %1419 = arith.mulf %1418, %1417 : vector<1x1xf32>
      %1420 = arith.addf %1306, %1419 : vector<1x1xf32>
      %1421 = vector.broadcast %1420 : vector<1x1xf32> to vector<1x32xf32>
      %1422 = arith.mulf %1421, %0 : vector<1x32xf32>
      %1423 = arith.addf %1422, %1 : vector<1x32xf32>
      %1424 = arith.negf %1423 : vector<1x32xf32>
      %1425 = math.exp %1424 : vector<1x32xf32>
      %cst_251 = arith.constant 1.000000e+00 : f32
      %1426 = vector.broadcast %cst_251 : f32 to vector<1x32xf32>
      %1427 = arith.addf %1426, %1425 : vector<1x32xf32>
      %1428 = arith.divf %1426, %1427 : vector<1x32xf32>
      %1429 = arith.mulf %1423, %1428 : vector<1x32xf32>
      %1430 = vector.broadcast %1429 : vector<1x32xf32> to vector<32x32xf32>
      %1431 = arith.mulf %2, %1430 : vector<32x32xf32>
      %cst_252 = arith.constant dense<0.000000e+00> : vector<32xf32>
      %1432 = vector.multi_reduction <add>, %1431, %cst_252 [1] : vector<32x32xf32> to vector<32xf32>
      %1433 = vector.shape_cast %1432 : vector<32xf32> to vector<32x1xf32>
      %1434 = arith.addf %1433, %3 : vector<32x1xf32>
      %1435 = arith.negf %1434 : vector<32x1xf32>
      %1436 = math.exp %1435 : vector<32x1xf32>
      %cst_253 = arith.constant 1.000000e+00 : f32
      %1437 = vector.broadcast %cst_253 : f32 to vector<32x1xf32>
      %1438 = arith.addf %1437, %1436 : vector<32x1xf32>
      %1439 = arith.divf %1437, %1438 : vector<32x1xf32>
      %1440 = arith.mulf %1434, %1439 : vector<32x1xf32>
      %1441 = vector.broadcast %1440 : vector<32x1xf32> to vector<32x32xf32>
      %1442 = arith.mulf %4, %1441 : vector<32x32xf32>
      %cst_254 = arith.constant dense<0.000000e+00> : vector<32xf32>
      %1443 = vector.multi_reduction <add>, %1442, %cst_254 [0] : vector<32x32xf32> to vector<32xf32>
      %1444 = vector.shape_cast %1443 : vector<32xf32> to vector<1x32xf32>
      %1445 = arith.addf %1444, %5 : vector<1x32xf32>
      %1446 = arith.negf %1445 : vector<1x32xf32>
      %1447 = math.exp %1446 : vector<1x32xf32>
      %cst_255 = arith.constant 1.000000e+00 : f32
      %1448 = vector.broadcast %cst_255 : f32 to vector<1x32xf32>
      %1449 = arith.addf %1448, %1447 : vector<1x32xf32>
      %1450 = arith.divf %1448, %1449 : vector<1x32xf32>
      %1451 = arith.mulf %1445, %1450 : vector<1x32xf32>
      %1452 = arith.mulf %6, %1451 : vector<1x32xf32>
      %cst_256 = arith.constant dense<0.000000e+00> : vector<1xf32>
      %1453 = vector.multi_reduction <add>, %1452, %cst_256 [1] : vector<1x32xf32> to vector<1xf32>
      %1454 = vector.shape_cast %1453 : vector<1xf32> to vector<1x1xf32>
      %1455 = arith.addf %1454, %7 : vector<1x1xf32>
      %cst_257 = arith.constant 2.000000e+00 : f32
      %1456 = vector.broadcast %cst_257 : f32 to vector<1x1xf32>
      %1457 = arith.mulf %1456, %1379 : vector<1x1xf32>
      %1458 = arith.addf %1341, %1457 : vector<1x1xf32>
      %cst_258 = arith.constant 2.000000e+00 : f32
      %1459 = vector.broadcast %cst_258 : f32 to vector<1x1xf32>
      %1460 = arith.mulf %1459, %1417 : vector<1x1xf32>
      %1461 = arith.addf %1458, %1460 : vector<1x1xf32>
      %1462 = arith.addf %1461, %1455 : vector<1x1xf32>
      %1463 = vector.broadcast %34 : f32 to vector<1x1xf32>
      %1464 = arith.mulf %1463, %1462 : vector<1x1xf32>
      %1465 = arith.addf %1306, %1464 : vector<1x1xf32>
      %c9_i32 = arith.constant 9 : i32
      %1466 = vector.broadcast %1465 : vector<1x1xf32> to vector<1x32xf32>
      %1467 = arith.mulf %1466, %0 : vector<1x32xf32>
      %1468 = arith.addf %1467, %1 : vector<1x32xf32>
      %1469 = arith.negf %1468 : vector<1x32xf32>
      %1470 = math.exp %1469 : vector<1x32xf32>
      %cst_259 = arith.constant 1.000000e+00 : f32
      %1471 = vector.broadcast %cst_259 : f32 to vector<1x32xf32>
      %1472 = arith.addf %1471, %1470 : vector<1x32xf32>
      %1473 = arith.divf %1471, %1472 : vector<1x32xf32>
      %1474 = arith.mulf %1468, %1473 : vector<1x32xf32>
      %1475 = vector.broadcast %1474 : vector<1x32xf32> to vector<32x32xf32>
      %1476 = arith.mulf %2, %1475 : vector<32x32xf32>
      %cst_260 = arith.constant dense<0.000000e+00> : vector<32xf32>
      %1477 = vector.multi_reduction <add>, %1476, %cst_260 [1] : vector<32x32xf32> to vector<32xf32>
      %1478 = vector.shape_cast %1477 : vector<32xf32> to vector<32x1xf32>
      %1479 = arith.addf %1478, %3 : vector<32x1xf32>
      %1480 = arith.negf %1479 : vector<32x1xf32>
      %1481 = math.exp %1480 : vector<32x1xf32>
      %cst_261 = arith.constant 1.000000e+00 : f32
      %1482 = vector.broadcast %cst_261 : f32 to vector<32x1xf32>
      %1483 = arith.addf %1482, %1481 : vector<32x1xf32>
      %1484 = arith.divf %1482, %1483 : vector<32x1xf32>
      %1485 = arith.mulf %1479, %1484 : vector<32x1xf32>
      %1486 = vector.broadcast %1485 : vector<32x1xf32> to vector<32x32xf32>
      %1487 = arith.mulf %4, %1486 : vector<32x32xf32>
      %cst_262 = arith.constant dense<0.000000e+00> : vector<32xf32>
      %1488 = vector.multi_reduction <add>, %1487, %cst_262 [0] : vector<32x32xf32> to vector<32xf32>
      %1489 = vector.shape_cast %1488 : vector<32xf32> to vector<1x32xf32>
      %1490 = arith.addf %1489, %5 : vector<1x32xf32>
      %1491 = arith.negf %1490 : vector<1x32xf32>
      %1492 = math.exp %1491 : vector<1x32xf32>
      %cst_263 = arith.constant 1.000000e+00 : f32
      %1493 = vector.broadcast %cst_263 : f32 to vector<1x32xf32>
      %1494 = arith.addf %1493, %1492 : vector<1x32xf32>
      %1495 = arith.divf %1493, %1494 : vector<1x32xf32>
      %1496 = arith.mulf %1490, %1495 : vector<1x32xf32>
      %1497 = arith.mulf %6, %1496 : vector<1x32xf32>
      %cst_264 = arith.constant dense<0.000000e+00> : vector<1xf32>
      %1498 = vector.multi_reduction <add>, %1497, %cst_264 [1] : vector<1x32xf32> to vector<1xf32>
      %1499 = vector.shape_cast %1498 : vector<1xf32> to vector<1x1xf32>
      %1500 = arith.addf %1499, %7 : vector<1x1xf32>
      %1501 = vector.broadcast %33 : f32 to vector<1x1xf32>
      %1502 = arith.mulf %1501, %1500 : vector<1x1xf32>
      %1503 = arith.addf %1465, %1502 : vector<1x1xf32>
      %1504 = vector.broadcast %1503 : vector<1x1xf32> to vector<1x32xf32>
      %1505 = arith.mulf %1504, %0 : vector<1x32xf32>
      %1506 = arith.addf %1505, %1 : vector<1x32xf32>
      %1507 = arith.negf %1506 : vector<1x32xf32>
      %1508 = math.exp %1507 : vector<1x32xf32>
      %cst_265 = arith.constant 1.000000e+00 : f32
      %1509 = vector.broadcast %cst_265 : f32 to vector<1x32xf32>
      %1510 = arith.addf %1509, %1508 : vector<1x32xf32>
      %1511 = arith.divf %1509, %1510 : vector<1x32xf32>
      %1512 = arith.mulf %1506, %1511 : vector<1x32xf32>
      %1513 = vector.broadcast %1512 : vector<1x32xf32> to vector<32x32xf32>
      %1514 = arith.mulf %2, %1513 : vector<32x32xf32>
      %cst_266 = arith.constant dense<0.000000e+00> : vector<32xf32>
      %1515 = vector.multi_reduction <add>, %1514, %cst_266 [1] : vector<32x32xf32> to vector<32xf32>
      %1516 = vector.shape_cast %1515 : vector<32xf32> to vector<32x1xf32>
      %1517 = arith.addf %1516, %3 : vector<32x1xf32>
      %1518 = arith.negf %1517 : vector<32x1xf32>
      %1519 = math.exp %1518 : vector<32x1xf32>
      %cst_267 = arith.constant 1.000000e+00 : f32
      %1520 = vector.broadcast %cst_267 : f32 to vector<32x1xf32>
      %1521 = arith.addf %1520, %1519 : vector<32x1xf32>
      %1522 = arith.divf %1520, %1521 : vector<32x1xf32>
      %1523 = arith.mulf %1517, %1522 : vector<32x1xf32>
      %1524 = vector.broadcast %1523 : vector<32x1xf32> to vector<32x32xf32>
      %1525 = arith.mulf %4, %1524 : vector<32x32xf32>
      %cst_268 = arith.constant dense<0.000000e+00> : vector<32xf32>
      %1526 = vector.multi_reduction <add>, %1525, %cst_268 [0] : vector<32x32xf32> to vector<32xf32>
      %1527 = vector.shape_cast %1526 : vector<32xf32> to vector<1x32xf32>
      %1528 = arith.addf %1527, %5 : vector<1x32xf32>
      %1529 = arith.negf %1528 : vector<1x32xf32>
      %1530 = math.exp %1529 : vector<1x32xf32>
      %cst_269 = arith.constant 1.000000e+00 : f32
      %1531 = vector.broadcast %cst_269 : f32 to vector<1x32xf32>
      %1532 = arith.addf %1531, %1530 : vector<1x32xf32>
      %1533 = arith.divf %1531, %1532 : vector<1x32xf32>
      %1534 = arith.mulf %1528, %1533 : vector<1x32xf32>
      %1535 = arith.mulf %6, %1534 : vector<1x32xf32>
      %cst_270 = arith.constant dense<0.000000e+00> : vector<1xf32>
      %1536 = vector.multi_reduction <add>, %1535, %cst_270 [1] : vector<1x32xf32> to vector<1xf32>
      %1537 = vector.shape_cast %1536 : vector<1xf32> to vector<1x1xf32>
      %1538 = arith.addf %1537, %7 : vector<1x1xf32>
      %1539 = vector.broadcast %33 : f32 to vector<1x1xf32>
      %1540 = arith.mulf %1539, %1538 : vector<1x1xf32>
      %1541 = arith.addf %1465, %1540 : vector<1x1xf32>
      %1542 = vector.broadcast %1541 : vector<1x1xf32> to vector<1x32xf32>
      %1543 = arith.mulf %1542, %0 : vector<1x32xf32>
      %1544 = arith.addf %1543, %1 : vector<1x32xf32>
      %1545 = arith.negf %1544 : vector<1x32xf32>
      %1546 = math.exp %1545 : vector<1x32xf32>
      %cst_271 = arith.constant 1.000000e+00 : f32
      %1547 = vector.broadcast %cst_271 : f32 to vector<1x32xf32>
      %1548 = arith.addf %1547, %1546 : vector<1x32xf32>
      %1549 = arith.divf %1547, %1548 : vector<1x32xf32>
      %1550 = arith.mulf %1544, %1549 : vector<1x32xf32>
      %1551 = vector.broadcast %1550 : vector<1x32xf32> to vector<32x32xf32>
      %1552 = arith.mulf %2, %1551 : vector<32x32xf32>
      %cst_272 = arith.constant dense<0.000000e+00> : vector<32xf32>
      %1553 = vector.multi_reduction <add>, %1552, %cst_272 [1] : vector<32x32xf32> to vector<32xf32>
      %1554 = vector.shape_cast %1553 : vector<32xf32> to vector<32x1xf32>
      %1555 = arith.addf %1554, %3 : vector<32x1xf32>
      %1556 = arith.negf %1555 : vector<32x1xf32>
      %1557 = math.exp %1556 : vector<32x1xf32>
      %cst_273 = arith.constant 1.000000e+00 : f32
      %1558 = vector.broadcast %cst_273 : f32 to vector<32x1xf32>
      %1559 = arith.addf %1558, %1557 : vector<32x1xf32>
      %1560 = arith.divf %1558, %1559 : vector<32x1xf32>
      %1561 = arith.mulf %1555, %1560 : vector<32x1xf32>
      %1562 = vector.broadcast %1561 : vector<32x1xf32> to vector<32x32xf32>
      %1563 = arith.mulf %4, %1562 : vector<32x32xf32>
      %cst_274 = arith.constant dense<0.000000e+00> : vector<32xf32>
      %1564 = vector.multi_reduction <add>, %1563, %cst_274 [0] : vector<32x32xf32> to vector<32xf32>
      %1565 = vector.shape_cast %1564 : vector<32xf32> to vector<1x32xf32>
      %1566 = arith.addf %1565, %5 : vector<1x32xf32>
      %1567 = arith.negf %1566 : vector<1x32xf32>
      %1568 = math.exp %1567 : vector<1x32xf32>
      %cst_275 = arith.constant 1.000000e+00 : f32
      %1569 = vector.broadcast %cst_275 : f32 to vector<1x32xf32>
      %1570 = arith.addf %1569, %1568 : vector<1x32xf32>
      %1571 = arith.divf %1569, %1570 : vector<1x32xf32>
      %1572 = arith.mulf %1566, %1571 : vector<1x32xf32>
      %1573 = arith.mulf %6, %1572 : vector<1x32xf32>
      %cst_276 = arith.constant dense<0.000000e+00> : vector<1xf32>
      %1574 = vector.multi_reduction <add>, %1573, %cst_276 [1] : vector<1x32xf32> to vector<1xf32>
      %1575 = vector.shape_cast %1574 : vector<1xf32> to vector<1x1xf32>
      %1576 = arith.addf %1575, %7 : vector<1x1xf32>
      %1577 = vector.broadcast %32 : f32 to vector<1x1xf32>
      %1578 = arith.mulf %1577, %1576 : vector<1x1xf32>
      %1579 = arith.addf %1465, %1578 : vector<1x1xf32>
      %1580 = vector.broadcast %1579 : vector<1x1xf32> to vector<1x32xf32>
      %1581 = arith.mulf %1580, %0 : vector<1x32xf32>
      %1582 = arith.addf %1581, %1 : vector<1x32xf32>
      %1583 = arith.negf %1582 : vector<1x32xf32>
      %1584 = math.exp %1583 : vector<1x32xf32>
      %cst_277 = arith.constant 1.000000e+00 : f32
      %1585 = vector.broadcast %cst_277 : f32 to vector<1x32xf32>
      %1586 = arith.addf %1585, %1584 : vector<1x32xf32>
      %1587 = arith.divf %1585, %1586 : vector<1x32xf32>
      %1588 = arith.mulf %1582, %1587 : vector<1x32xf32>
      %1589 = vector.broadcast %1588 : vector<1x32xf32> to vector<32x32xf32>
      %1590 = arith.mulf %2, %1589 : vector<32x32xf32>
      %cst_278 = arith.constant dense<0.000000e+00> : vector<32xf32>
      %1591 = vector.multi_reduction <add>, %1590, %cst_278 [1] : vector<32x32xf32> to vector<32xf32>
      %1592 = vector.shape_cast %1591 : vector<32xf32> to vector<32x1xf32>
      %1593 = arith.addf %1592, %3 : vector<32x1xf32>
      %1594 = arith.negf %1593 : vector<32x1xf32>
      %1595 = math.exp %1594 : vector<32x1xf32>
      %cst_279 = arith.constant 1.000000e+00 : f32
      %1596 = vector.broadcast %cst_279 : f32 to vector<32x1xf32>
      %1597 = arith.addf %1596, %1595 : vector<32x1xf32>
      %1598 = arith.divf %1596, %1597 : vector<32x1xf32>
      %1599 = arith.mulf %1593, %1598 : vector<32x1xf32>
      %1600 = vector.broadcast %1599 : vector<32x1xf32> to vector<32x32xf32>
      %1601 = arith.mulf %4, %1600 : vector<32x32xf32>
      %cst_280 = arith.constant dense<0.000000e+00> : vector<32xf32>
      %1602 = vector.multi_reduction <add>, %1601, %cst_280 [0] : vector<32x32xf32> to vector<32xf32>
      %1603 = vector.shape_cast %1602 : vector<32xf32> to vector<1x32xf32>
      %1604 = arith.addf %1603, %5 : vector<1x32xf32>
      %1605 = arith.negf %1604 : vector<1x32xf32>
      %1606 = math.exp %1605 : vector<1x32xf32>
      %cst_281 = arith.constant 1.000000e+00 : f32
      %1607 = vector.broadcast %cst_281 : f32 to vector<1x32xf32>
      %1608 = arith.addf %1607, %1606 : vector<1x32xf32>
      %1609 = arith.divf %1607, %1608 : vector<1x32xf32>
      %1610 = arith.mulf %1604, %1609 : vector<1x32xf32>
      %1611 = arith.mulf %6, %1610 : vector<1x32xf32>
      %cst_282 = arith.constant dense<0.000000e+00> : vector<1xf32>
      %1612 = vector.multi_reduction <add>, %1611, %cst_282 [1] : vector<1x32xf32> to vector<1xf32>
      %1613 = vector.shape_cast %1612 : vector<1xf32> to vector<1x1xf32>
      %1614 = arith.addf %1613, %7 : vector<1x1xf32>
      %cst_283 = arith.constant 2.000000e+00 : f32
      %1615 = vector.broadcast %cst_283 : f32 to vector<1x1xf32>
      %1616 = arith.mulf %1615, %1538 : vector<1x1xf32>
      %1617 = arith.addf %1500, %1616 : vector<1x1xf32>
      %cst_284 = arith.constant 2.000000e+00 : f32
      %1618 = vector.broadcast %cst_284 : f32 to vector<1x1xf32>
      %1619 = arith.mulf %1618, %1576 : vector<1x1xf32>
      %1620 = arith.addf %1617, %1619 : vector<1x1xf32>
      %1621 = arith.addf %1620, %1614 : vector<1x1xf32>
      %1622 = vector.broadcast %34 : f32 to vector<1x1xf32>
      %1623 = arith.mulf %1622, %1621 : vector<1x1xf32>
      %1624 = arith.addf %1465, %1623 : vector<1x1xf32>
      %c10_i32 = arith.constant 10 : i32
      %1625 = vector.broadcast %1624 : vector<1x1xf32> to vector<1x32xf32>
      %1626 = arith.mulf %1625, %0 : vector<1x32xf32>
      %1627 = arith.addf %1626, %1 : vector<1x32xf32>
      %1628 = arith.negf %1627 : vector<1x32xf32>
      %1629 = math.exp %1628 : vector<1x32xf32>
      %cst_285 = arith.constant 1.000000e+00 : f32
      %1630 = vector.broadcast %cst_285 : f32 to vector<1x32xf32>
      %1631 = arith.addf %1630, %1629 : vector<1x32xf32>
      %1632 = arith.divf %1630, %1631 : vector<1x32xf32>
      %1633 = arith.mulf %1627, %1632 : vector<1x32xf32>
      %1634 = vector.broadcast %1633 : vector<1x32xf32> to vector<32x32xf32>
      %1635 = arith.mulf %2, %1634 : vector<32x32xf32>
      %cst_286 = arith.constant dense<0.000000e+00> : vector<32xf32>
      %1636 = vector.multi_reduction <add>, %1635, %cst_286 [1] : vector<32x32xf32> to vector<32xf32>
      %1637 = vector.shape_cast %1636 : vector<32xf32> to vector<32x1xf32>
      %1638 = arith.addf %1637, %3 : vector<32x1xf32>
      %1639 = arith.negf %1638 : vector<32x1xf32>
      %1640 = math.exp %1639 : vector<32x1xf32>
      %cst_287 = arith.constant 1.000000e+00 : f32
      %1641 = vector.broadcast %cst_287 : f32 to vector<32x1xf32>
      %1642 = arith.addf %1641, %1640 : vector<32x1xf32>
      %1643 = arith.divf %1641, %1642 : vector<32x1xf32>
      %1644 = arith.mulf %1638, %1643 : vector<32x1xf32>
      %1645 = vector.broadcast %1644 : vector<32x1xf32> to vector<32x32xf32>
      %1646 = arith.mulf %4, %1645 : vector<32x32xf32>
      %cst_288 = arith.constant dense<0.000000e+00> : vector<32xf32>
      %1647 = vector.multi_reduction <add>, %1646, %cst_288 [0] : vector<32x32xf32> to vector<32xf32>
      %1648 = vector.shape_cast %1647 : vector<32xf32> to vector<1x32xf32>
      %1649 = arith.addf %1648, %5 : vector<1x32xf32>
      %1650 = arith.negf %1649 : vector<1x32xf32>
      %1651 = math.exp %1650 : vector<1x32xf32>
      %cst_289 = arith.constant 1.000000e+00 : f32
      %1652 = vector.broadcast %cst_289 : f32 to vector<1x32xf32>
      %1653 = arith.addf %1652, %1651 : vector<1x32xf32>
      %1654 = arith.divf %1652, %1653 : vector<1x32xf32>
      %1655 = arith.mulf %1649, %1654 : vector<1x32xf32>
      %1656 = arith.mulf %6, %1655 : vector<1x32xf32>
      %cst_290 = arith.constant dense<0.000000e+00> : vector<1xf32>
      %1657 = vector.multi_reduction <add>, %1656, %cst_290 [1] : vector<1x32xf32> to vector<1xf32>
      %1658 = vector.shape_cast %1657 : vector<1xf32> to vector<1x1xf32>
      %1659 = arith.addf %1658, %7 : vector<1x1xf32>
      %1660 = vector.broadcast %33 : f32 to vector<1x1xf32>
      %1661 = arith.mulf %1660, %1659 : vector<1x1xf32>
      %1662 = arith.addf %1624, %1661 : vector<1x1xf32>
      %1663 = vector.broadcast %1662 : vector<1x1xf32> to vector<1x32xf32>
      %1664 = arith.mulf %1663, %0 : vector<1x32xf32>
      %1665 = arith.addf %1664, %1 : vector<1x32xf32>
      %1666 = arith.negf %1665 : vector<1x32xf32>
      %1667 = math.exp %1666 : vector<1x32xf32>
      %cst_291 = arith.constant 1.000000e+00 : f32
      %1668 = vector.broadcast %cst_291 : f32 to vector<1x32xf32>
      %1669 = arith.addf %1668, %1667 : vector<1x32xf32>
      %1670 = arith.divf %1668, %1669 : vector<1x32xf32>
      %1671 = arith.mulf %1665, %1670 : vector<1x32xf32>
      %1672 = vector.broadcast %1671 : vector<1x32xf32> to vector<32x32xf32>
      %1673 = arith.mulf %2, %1672 : vector<32x32xf32>
      %cst_292 = arith.constant dense<0.000000e+00> : vector<32xf32>
      %1674 = vector.multi_reduction <add>, %1673, %cst_292 [1] : vector<32x32xf32> to vector<32xf32>
      %1675 = vector.shape_cast %1674 : vector<32xf32> to vector<32x1xf32>
      %1676 = arith.addf %1675, %3 : vector<32x1xf32>
      %1677 = arith.negf %1676 : vector<32x1xf32>
      %1678 = math.exp %1677 : vector<32x1xf32>
      %cst_293 = arith.constant 1.000000e+00 : f32
      %1679 = vector.broadcast %cst_293 : f32 to vector<32x1xf32>
      %1680 = arith.addf %1679, %1678 : vector<32x1xf32>
      %1681 = arith.divf %1679, %1680 : vector<32x1xf32>
      %1682 = arith.mulf %1676, %1681 : vector<32x1xf32>
      %1683 = vector.broadcast %1682 : vector<32x1xf32> to vector<32x32xf32>
      %1684 = arith.mulf %4, %1683 : vector<32x32xf32>
      %cst_294 = arith.constant dense<0.000000e+00> : vector<32xf32>
      %1685 = vector.multi_reduction <add>, %1684, %cst_294 [0] : vector<32x32xf32> to vector<32xf32>
      %1686 = vector.shape_cast %1685 : vector<32xf32> to vector<1x32xf32>
      %1687 = arith.addf %1686, %5 : vector<1x32xf32>
      %1688 = arith.negf %1687 : vector<1x32xf32>
      %1689 = math.exp %1688 : vector<1x32xf32>
      %cst_295 = arith.constant 1.000000e+00 : f32
      %1690 = vector.broadcast %cst_295 : f32 to vector<1x32xf32>
      %1691 = arith.addf %1690, %1689 : vector<1x32xf32>
      %1692 = arith.divf %1690, %1691 : vector<1x32xf32>
      %1693 = arith.mulf %1687, %1692 : vector<1x32xf32>
      %1694 = arith.mulf %6, %1693 : vector<1x32xf32>
      %cst_296 = arith.constant dense<0.000000e+00> : vector<1xf32>
      %1695 = vector.multi_reduction <add>, %1694, %cst_296 [1] : vector<1x32xf32> to vector<1xf32>
      %1696 = vector.shape_cast %1695 : vector<1xf32> to vector<1x1xf32>
      %1697 = arith.addf %1696, %7 : vector<1x1xf32>
      %1698 = vector.broadcast %33 : f32 to vector<1x1xf32>
      %1699 = arith.mulf %1698, %1697 : vector<1x1xf32>
      %1700 = arith.addf %1624, %1699 : vector<1x1xf32>
      %1701 = vector.broadcast %1700 : vector<1x1xf32> to vector<1x32xf32>
      %1702 = arith.mulf %1701, %0 : vector<1x32xf32>
      %1703 = arith.addf %1702, %1 : vector<1x32xf32>
      %1704 = arith.negf %1703 : vector<1x32xf32>
      %1705 = math.exp %1704 : vector<1x32xf32>
      %cst_297 = arith.constant 1.000000e+00 : f32
      %1706 = vector.broadcast %cst_297 : f32 to vector<1x32xf32>
      %1707 = arith.addf %1706, %1705 : vector<1x32xf32>
      %1708 = arith.divf %1706, %1707 : vector<1x32xf32>
      %1709 = arith.mulf %1703, %1708 : vector<1x32xf32>
      %1710 = vector.broadcast %1709 : vector<1x32xf32> to vector<32x32xf32>
      %1711 = arith.mulf %2, %1710 : vector<32x32xf32>
      %cst_298 = arith.constant dense<0.000000e+00> : vector<32xf32>
      %1712 = vector.multi_reduction <add>, %1711, %cst_298 [1] : vector<32x32xf32> to vector<32xf32>
      %1713 = vector.shape_cast %1712 : vector<32xf32> to vector<32x1xf32>
      %1714 = arith.addf %1713, %3 : vector<32x1xf32>
      %1715 = arith.negf %1714 : vector<32x1xf32>
      %1716 = math.exp %1715 : vector<32x1xf32>
      %cst_299 = arith.constant 1.000000e+00 : f32
      %1717 = vector.broadcast %cst_299 : f32 to vector<32x1xf32>
      %1718 = arith.addf %1717, %1716 : vector<32x1xf32>
      %1719 = arith.divf %1717, %1718 : vector<32x1xf32>
      %1720 = arith.mulf %1714, %1719 : vector<32x1xf32>
      %1721 = vector.broadcast %1720 : vector<32x1xf32> to vector<32x32xf32>
      %1722 = arith.mulf %4, %1721 : vector<32x32xf32>
      %cst_300 = arith.constant dense<0.000000e+00> : vector<32xf32>
      %1723 = vector.multi_reduction <add>, %1722, %cst_300 [0] : vector<32x32xf32> to vector<32xf32>
      %1724 = vector.shape_cast %1723 : vector<32xf32> to vector<1x32xf32>
      %1725 = arith.addf %1724, %5 : vector<1x32xf32>
      %1726 = arith.negf %1725 : vector<1x32xf32>
      %1727 = math.exp %1726 : vector<1x32xf32>
      %cst_301 = arith.constant 1.000000e+00 : f32
      %1728 = vector.broadcast %cst_301 : f32 to vector<1x32xf32>
      %1729 = arith.addf %1728, %1727 : vector<1x32xf32>
      %1730 = arith.divf %1728, %1729 : vector<1x32xf32>
      %1731 = arith.mulf %1725, %1730 : vector<1x32xf32>
      %1732 = arith.mulf %6, %1731 : vector<1x32xf32>
      %cst_302 = arith.constant dense<0.000000e+00> : vector<1xf32>
      %1733 = vector.multi_reduction <add>, %1732, %cst_302 [1] : vector<1x32xf32> to vector<1xf32>
      %1734 = vector.shape_cast %1733 : vector<1xf32> to vector<1x1xf32>
      %1735 = arith.addf %1734, %7 : vector<1x1xf32>
      %1736 = vector.broadcast %32 : f32 to vector<1x1xf32>
      %1737 = arith.mulf %1736, %1735 : vector<1x1xf32>
      %1738 = arith.addf %1624, %1737 : vector<1x1xf32>
      %1739 = vector.broadcast %1738 : vector<1x1xf32> to vector<1x32xf32>
      %1740 = arith.mulf %1739, %0 : vector<1x32xf32>
      %1741 = arith.addf %1740, %1 : vector<1x32xf32>
      %1742 = arith.negf %1741 : vector<1x32xf32>
      %1743 = math.exp %1742 : vector<1x32xf32>
      %cst_303 = arith.constant 1.000000e+00 : f32
      %1744 = vector.broadcast %cst_303 : f32 to vector<1x32xf32>
      %1745 = arith.addf %1744, %1743 : vector<1x32xf32>
      %1746 = arith.divf %1744, %1745 : vector<1x32xf32>
      %1747 = arith.mulf %1741, %1746 : vector<1x32xf32>
      %1748 = vector.broadcast %1747 : vector<1x32xf32> to vector<32x32xf32>
      %1749 = arith.mulf %2, %1748 : vector<32x32xf32>
      %cst_304 = arith.constant dense<0.000000e+00> : vector<32xf32>
      %1750 = vector.multi_reduction <add>, %1749, %cst_304 [1] : vector<32x32xf32> to vector<32xf32>
      %1751 = vector.shape_cast %1750 : vector<32xf32> to vector<32x1xf32>
      %1752 = arith.addf %1751, %3 : vector<32x1xf32>
      %1753 = arith.negf %1752 : vector<32x1xf32>
      %1754 = math.exp %1753 : vector<32x1xf32>
      %cst_305 = arith.constant 1.000000e+00 : f32
      %1755 = vector.broadcast %cst_305 : f32 to vector<32x1xf32>
      %1756 = arith.addf %1755, %1754 : vector<32x1xf32>
      %1757 = arith.divf %1755, %1756 : vector<32x1xf32>
      %1758 = arith.mulf %1752, %1757 : vector<32x1xf32>
      %1759 = vector.broadcast %1758 : vector<32x1xf32> to vector<32x32xf32>
      %1760 = arith.mulf %4, %1759 : vector<32x32xf32>
      %cst_306 = arith.constant dense<0.000000e+00> : vector<32xf32>
      %1761 = vector.multi_reduction <add>, %1760, %cst_306 [0] : vector<32x32xf32> to vector<32xf32>
      %1762 = vector.shape_cast %1761 : vector<32xf32> to vector<1x32xf32>
      %1763 = arith.addf %1762, %5 : vector<1x32xf32>
      %1764 = arith.negf %1763 : vector<1x32xf32>
      %1765 = math.exp %1764 : vector<1x32xf32>
      %cst_307 = arith.constant 1.000000e+00 : f32
      %1766 = vector.broadcast %cst_307 : f32 to vector<1x32xf32>
      %1767 = arith.addf %1766, %1765 : vector<1x32xf32>
      %1768 = arith.divf %1766, %1767 : vector<1x32xf32>
      %1769 = arith.mulf %1763, %1768 : vector<1x32xf32>
      %1770 = arith.mulf %6, %1769 : vector<1x32xf32>
      %cst_308 = arith.constant dense<0.000000e+00> : vector<1xf32>
      %1771 = vector.multi_reduction <add>, %1770, %cst_308 [1] : vector<1x32xf32> to vector<1xf32>
      %1772 = vector.shape_cast %1771 : vector<1xf32> to vector<1x1xf32>
      %1773 = arith.addf %1772, %7 : vector<1x1xf32>
      %cst_309 = arith.constant 2.000000e+00 : f32
      %1774 = vector.broadcast %cst_309 : f32 to vector<1x1xf32>
      %1775 = arith.mulf %1774, %1697 : vector<1x1xf32>
      %1776 = arith.addf %1659, %1775 : vector<1x1xf32>
      %cst_310 = arith.constant 2.000000e+00 : f32
      %1777 = vector.broadcast %cst_310 : f32 to vector<1x1xf32>
      %1778 = arith.mulf %1777, %1735 : vector<1x1xf32>
      %1779 = arith.addf %1776, %1778 : vector<1x1xf32>
      %1780 = arith.addf %1779, %1773 : vector<1x1xf32>
      %1781 = vector.broadcast %34 : f32 to vector<1x1xf32>
      %1782 = arith.mulf %1781, %1780 : vector<1x1xf32>
      %1783 = arith.addf %1624, %1782 : vector<1x1xf32>
      %c11_i32 = arith.constant 11 : i32
      %1784 = vector.broadcast %1783 : vector<1x1xf32> to vector<1x32xf32>
      %1785 = arith.mulf %1784, %0 : vector<1x32xf32>
      %1786 = arith.addf %1785, %1 : vector<1x32xf32>
      %1787 = arith.negf %1786 : vector<1x32xf32>
      %1788 = math.exp %1787 : vector<1x32xf32>
      %cst_311 = arith.constant 1.000000e+00 : f32
      %1789 = vector.broadcast %cst_311 : f32 to vector<1x32xf32>
      %1790 = arith.addf %1789, %1788 : vector<1x32xf32>
      %1791 = arith.divf %1789, %1790 : vector<1x32xf32>
      %1792 = arith.mulf %1786, %1791 : vector<1x32xf32>
      %1793 = vector.broadcast %1792 : vector<1x32xf32> to vector<32x32xf32>
      %1794 = arith.mulf %2, %1793 : vector<32x32xf32>
      %cst_312 = arith.constant dense<0.000000e+00> : vector<32xf32>
      %1795 = vector.multi_reduction <add>, %1794, %cst_312 [1] : vector<32x32xf32> to vector<32xf32>
      %1796 = vector.shape_cast %1795 : vector<32xf32> to vector<32x1xf32>
      %1797 = arith.addf %1796, %3 : vector<32x1xf32>
      %1798 = arith.negf %1797 : vector<32x1xf32>
      %1799 = math.exp %1798 : vector<32x1xf32>
      %cst_313 = arith.constant 1.000000e+00 : f32
      %1800 = vector.broadcast %cst_313 : f32 to vector<32x1xf32>
      %1801 = arith.addf %1800, %1799 : vector<32x1xf32>
      %1802 = arith.divf %1800, %1801 : vector<32x1xf32>
      %1803 = arith.mulf %1797, %1802 : vector<32x1xf32>
      %1804 = vector.broadcast %1803 : vector<32x1xf32> to vector<32x32xf32>
      %1805 = arith.mulf %4, %1804 : vector<32x32xf32>
      %cst_314 = arith.constant dense<0.000000e+00> : vector<32xf32>
      %1806 = vector.multi_reduction <add>, %1805, %cst_314 [0] : vector<32x32xf32> to vector<32xf32>
      %1807 = vector.shape_cast %1806 : vector<32xf32> to vector<1x32xf32>
      %1808 = arith.addf %1807, %5 : vector<1x32xf32>
      %1809 = arith.negf %1808 : vector<1x32xf32>
      %1810 = math.exp %1809 : vector<1x32xf32>
      %cst_315 = arith.constant 1.000000e+00 : f32
      %1811 = vector.broadcast %cst_315 : f32 to vector<1x32xf32>
      %1812 = arith.addf %1811, %1810 : vector<1x32xf32>
      %1813 = arith.divf %1811, %1812 : vector<1x32xf32>
      %1814 = arith.mulf %1808, %1813 : vector<1x32xf32>
      %1815 = arith.mulf %6, %1814 : vector<1x32xf32>
      %cst_316 = arith.constant dense<0.000000e+00> : vector<1xf32>
      %1816 = vector.multi_reduction <add>, %1815, %cst_316 [1] : vector<1x32xf32> to vector<1xf32>
      %1817 = vector.shape_cast %1816 : vector<1xf32> to vector<1x1xf32>
      %1818 = arith.addf %1817, %7 : vector<1x1xf32>
      %1819 = vector.broadcast %33 : f32 to vector<1x1xf32>
      %1820 = arith.mulf %1819, %1818 : vector<1x1xf32>
      %1821 = arith.addf %1783, %1820 : vector<1x1xf32>
      %1822 = vector.broadcast %1821 : vector<1x1xf32> to vector<1x32xf32>
      %1823 = arith.mulf %1822, %0 : vector<1x32xf32>
      %1824 = arith.addf %1823, %1 : vector<1x32xf32>
      %1825 = arith.negf %1824 : vector<1x32xf32>
      %1826 = math.exp %1825 : vector<1x32xf32>
      %cst_317 = arith.constant 1.000000e+00 : f32
      %1827 = vector.broadcast %cst_317 : f32 to vector<1x32xf32>
      %1828 = arith.addf %1827, %1826 : vector<1x32xf32>
      %1829 = arith.divf %1827, %1828 : vector<1x32xf32>
      %1830 = arith.mulf %1824, %1829 : vector<1x32xf32>
      %1831 = vector.broadcast %1830 : vector<1x32xf32> to vector<32x32xf32>
      %1832 = arith.mulf %2, %1831 : vector<32x32xf32>
      %cst_318 = arith.constant dense<0.000000e+00> : vector<32xf32>
      %1833 = vector.multi_reduction <add>, %1832, %cst_318 [1] : vector<32x32xf32> to vector<32xf32>
      %1834 = vector.shape_cast %1833 : vector<32xf32> to vector<32x1xf32>
      %1835 = arith.addf %1834, %3 : vector<32x1xf32>
      %1836 = arith.negf %1835 : vector<32x1xf32>
      %1837 = math.exp %1836 : vector<32x1xf32>
      %cst_319 = arith.constant 1.000000e+00 : f32
      %1838 = vector.broadcast %cst_319 : f32 to vector<32x1xf32>
      %1839 = arith.addf %1838, %1837 : vector<32x1xf32>
      %1840 = arith.divf %1838, %1839 : vector<32x1xf32>
      %1841 = arith.mulf %1835, %1840 : vector<32x1xf32>
      %1842 = vector.broadcast %1841 : vector<32x1xf32> to vector<32x32xf32>
      %1843 = arith.mulf %4, %1842 : vector<32x32xf32>
      %cst_320 = arith.constant dense<0.000000e+00> : vector<32xf32>
      %1844 = vector.multi_reduction <add>, %1843, %cst_320 [0] : vector<32x32xf32> to vector<32xf32>
      %1845 = vector.shape_cast %1844 : vector<32xf32> to vector<1x32xf32>
      %1846 = arith.addf %1845, %5 : vector<1x32xf32>
      %1847 = arith.negf %1846 : vector<1x32xf32>
      %1848 = math.exp %1847 : vector<1x32xf32>
      %cst_321 = arith.constant 1.000000e+00 : f32
      %1849 = vector.broadcast %cst_321 : f32 to vector<1x32xf32>
      %1850 = arith.addf %1849, %1848 : vector<1x32xf32>
      %1851 = arith.divf %1849, %1850 : vector<1x32xf32>
      %1852 = arith.mulf %1846, %1851 : vector<1x32xf32>
      %1853 = arith.mulf %6, %1852 : vector<1x32xf32>
      %cst_322 = arith.constant dense<0.000000e+00> : vector<1xf32>
      %1854 = vector.multi_reduction <add>, %1853, %cst_322 [1] : vector<1x32xf32> to vector<1xf32>
      %1855 = vector.shape_cast %1854 : vector<1xf32> to vector<1x1xf32>
      %1856 = arith.addf %1855, %7 : vector<1x1xf32>
      %1857 = vector.broadcast %33 : f32 to vector<1x1xf32>
      %1858 = arith.mulf %1857, %1856 : vector<1x1xf32>
      %1859 = arith.addf %1783, %1858 : vector<1x1xf32>
      %1860 = vector.broadcast %1859 : vector<1x1xf32> to vector<1x32xf32>
      %1861 = arith.mulf %1860, %0 : vector<1x32xf32>
      %1862 = arith.addf %1861, %1 : vector<1x32xf32>
      %1863 = arith.negf %1862 : vector<1x32xf32>
      %1864 = math.exp %1863 : vector<1x32xf32>
      %cst_323 = arith.constant 1.000000e+00 : f32
      %1865 = vector.broadcast %cst_323 : f32 to vector<1x32xf32>
      %1866 = arith.addf %1865, %1864 : vector<1x32xf32>
      %1867 = arith.divf %1865, %1866 : vector<1x32xf32>
      %1868 = arith.mulf %1862, %1867 : vector<1x32xf32>
      %1869 = vector.broadcast %1868 : vector<1x32xf32> to vector<32x32xf32>
      %1870 = arith.mulf %2, %1869 : vector<32x32xf32>
      %cst_324 = arith.constant dense<0.000000e+00> : vector<32xf32>
      %1871 = vector.multi_reduction <add>, %1870, %cst_324 [1] : vector<32x32xf32> to vector<32xf32>
      %1872 = vector.shape_cast %1871 : vector<32xf32> to vector<32x1xf32>
      %1873 = arith.addf %1872, %3 : vector<32x1xf32>
      %1874 = arith.negf %1873 : vector<32x1xf32>
      %1875 = math.exp %1874 : vector<32x1xf32>
      %cst_325 = arith.constant 1.000000e+00 : f32
      %1876 = vector.broadcast %cst_325 : f32 to vector<32x1xf32>
      %1877 = arith.addf %1876, %1875 : vector<32x1xf32>
      %1878 = arith.divf %1876, %1877 : vector<32x1xf32>
      %1879 = arith.mulf %1873, %1878 : vector<32x1xf32>
      %1880 = vector.broadcast %1879 : vector<32x1xf32> to vector<32x32xf32>
      %1881 = arith.mulf %4, %1880 : vector<32x32xf32>
      %cst_326 = arith.constant dense<0.000000e+00> : vector<32xf32>
      %1882 = vector.multi_reduction <add>, %1881, %cst_326 [0] : vector<32x32xf32> to vector<32xf32>
      %1883 = vector.shape_cast %1882 : vector<32xf32> to vector<1x32xf32>
      %1884 = arith.addf %1883, %5 : vector<1x32xf32>
      %1885 = arith.negf %1884 : vector<1x32xf32>
      %1886 = math.exp %1885 : vector<1x32xf32>
      %cst_327 = arith.constant 1.000000e+00 : f32
      %1887 = vector.broadcast %cst_327 : f32 to vector<1x32xf32>
      %1888 = arith.addf %1887, %1886 : vector<1x32xf32>
      %1889 = arith.divf %1887, %1888 : vector<1x32xf32>
      %1890 = arith.mulf %1884, %1889 : vector<1x32xf32>
      %1891 = arith.mulf %6, %1890 : vector<1x32xf32>
      %cst_328 = arith.constant dense<0.000000e+00> : vector<1xf32>
      %1892 = vector.multi_reduction <add>, %1891, %cst_328 [1] : vector<1x32xf32> to vector<1xf32>
      %1893 = vector.shape_cast %1892 : vector<1xf32> to vector<1x1xf32>
      %1894 = arith.addf %1893, %7 : vector<1x1xf32>
      %1895 = vector.broadcast %32 : f32 to vector<1x1xf32>
      %1896 = arith.mulf %1895, %1894 : vector<1x1xf32>
      %1897 = arith.addf %1783, %1896 : vector<1x1xf32>
      %1898 = vector.broadcast %1897 : vector<1x1xf32> to vector<1x32xf32>
      %1899 = arith.mulf %1898, %0 : vector<1x32xf32>
      %1900 = arith.addf %1899, %1 : vector<1x32xf32>
      %1901 = arith.negf %1900 : vector<1x32xf32>
      %1902 = math.exp %1901 : vector<1x32xf32>
      %cst_329 = arith.constant 1.000000e+00 : f32
      %1903 = vector.broadcast %cst_329 : f32 to vector<1x32xf32>
      %1904 = arith.addf %1903, %1902 : vector<1x32xf32>
      %1905 = arith.divf %1903, %1904 : vector<1x32xf32>
      %1906 = arith.mulf %1900, %1905 : vector<1x32xf32>
      %1907 = vector.broadcast %1906 : vector<1x32xf32> to vector<32x32xf32>
      %1908 = arith.mulf %2, %1907 : vector<32x32xf32>
      %cst_330 = arith.constant dense<0.000000e+00> : vector<32xf32>
      %1909 = vector.multi_reduction <add>, %1908, %cst_330 [1] : vector<32x32xf32> to vector<32xf32>
      %1910 = vector.shape_cast %1909 : vector<32xf32> to vector<32x1xf32>
      %1911 = arith.addf %1910, %3 : vector<32x1xf32>
      %1912 = arith.negf %1911 : vector<32x1xf32>
      %1913 = math.exp %1912 : vector<32x1xf32>
      %cst_331 = arith.constant 1.000000e+00 : f32
      %1914 = vector.broadcast %cst_331 : f32 to vector<32x1xf32>
      %1915 = arith.addf %1914, %1913 : vector<32x1xf32>
      %1916 = arith.divf %1914, %1915 : vector<32x1xf32>
      %1917 = arith.mulf %1911, %1916 : vector<32x1xf32>
      %1918 = vector.broadcast %1917 : vector<32x1xf32> to vector<32x32xf32>
      %1919 = arith.mulf %4, %1918 : vector<32x32xf32>
      %cst_332 = arith.constant dense<0.000000e+00> : vector<32xf32>
      %1920 = vector.multi_reduction <add>, %1919, %cst_332 [0] : vector<32x32xf32> to vector<32xf32>
      %1921 = vector.shape_cast %1920 : vector<32xf32> to vector<1x32xf32>
      %1922 = arith.addf %1921, %5 : vector<1x32xf32>
      %1923 = arith.negf %1922 : vector<1x32xf32>
      %1924 = math.exp %1923 : vector<1x32xf32>
      %cst_333 = arith.constant 1.000000e+00 : f32
      %1925 = vector.broadcast %cst_333 : f32 to vector<1x32xf32>
      %1926 = arith.addf %1925, %1924 : vector<1x32xf32>
      %1927 = arith.divf %1925, %1926 : vector<1x32xf32>
      %1928 = arith.mulf %1922, %1927 : vector<1x32xf32>
      %1929 = arith.mulf %6, %1928 : vector<1x32xf32>
      %cst_334 = arith.constant dense<0.000000e+00> : vector<1xf32>
      %1930 = vector.multi_reduction <add>, %1929, %cst_334 [1] : vector<1x32xf32> to vector<1xf32>
      %1931 = vector.shape_cast %1930 : vector<1xf32> to vector<1x1xf32>
      %1932 = arith.addf %1931, %7 : vector<1x1xf32>
      %cst_335 = arith.constant 2.000000e+00 : f32
      %1933 = vector.broadcast %cst_335 : f32 to vector<1x1xf32>
      %1934 = arith.mulf %1933, %1856 : vector<1x1xf32>
      %1935 = arith.addf %1818, %1934 : vector<1x1xf32>
      %cst_336 = arith.constant 2.000000e+00 : f32
      %1936 = vector.broadcast %cst_336 : f32 to vector<1x1xf32>
      %1937 = arith.mulf %1936, %1894 : vector<1x1xf32>
      %1938 = arith.addf %1935, %1937 : vector<1x1xf32>
      %1939 = arith.addf %1938, %1932 : vector<1x1xf32>
      %1940 = vector.broadcast %34 : f32 to vector<1x1xf32>
      %1941 = arith.mulf %1940, %1939 : vector<1x1xf32>
      %1942 = arith.addf %1783, %1941 : vector<1x1xf32>
      %c12_i32 = arith.constant 12 : i32
      %1943 = vector.broadcast %1942 : vector<1x1xf32> to vector<1x32xf32>
      %1944 = arith.mulf %1943, %0 : vector<1x32xf32>
      %1945 = arith.addf %1944, %1 : vector<1x32xf32>
      %1946 = arith.negf %1945 : vector<1x32xf32>
      %1947 = math.exp %1946 : vector<1x32xf32>
      %cst_337 = arith.constant 1.000000e+00 : f32
      %1948 = vector.broadcast %cst_337 : f32 to vector<1x32xf32>
      %1949 = arith.addf %1948, %1947 : vector<1x32xf32>
      %1950 = arith.divf %1948, %1949 : vector<1x32xf32>
      %1951 = arith.mulf %1945, %1950 : vector<1x32xf32>
      %1952 = vector.broadcast %1951 : vector<1x32xf32> to vector<32x32xf32>
      %1953 = arith.mulf %2, %1952 : vector<32x32xf32>
      %cst_338 = arith.constant dense<0.000000e+00> : vector<32xf32>
      %1954 = vector.multi_reduction <add>, %1953, %cst_338 [1] : vector<32x32xf32> to vector<32xf32>
      %1955 = vector.shape_cast %1954 : vector<32xf32> to vector<32x1xf32>
      %1956 = arith.addf %1955, %3 : vector<32x1xf32>
      %1957 = arith.negf %1956 : vector<32x1xf32>
      %1958 = math.exp %1957 : vector<32x1xf32>
      %cst_339 = arith.constant 1.000000e+00 : f32
      %1959 = vector.broadcast %cst_339 : f32 to vector<32x1xf32>
      %1960 = arith.addf %1959, %1958 : vector<32x1xf32>
      %1961 = arith.divf %1959, %1960 : vector<32x1xf32>
      %1962 = arith.mulf %1956, %1961 : vector<32x1xf32>
      %1963 = vector.broadcast %1962 : vector<32x1xf32> to vector<32x32xf32>
      %1964 = arith.mulf %4, %1963 : vector<32x32xf32>
      %cst_340 = arith.constant dense<0.000000e+00> : vector<32xf32>
      %1965 = vector.multi_reduction <add>, %1964, %cst_340 [0] : vector<32x32xf32> to vector<32xf32>
      %1966 = vector.shape_cast %1965 : vector<32xf32> to vector<1x32xf32>
      %1967 = arith.addf %1966, %5 : vector<1x32xf32>
      %1968 = arith.negf %1967 : vector<1x32xf32>
      %1969 = math.exp %1968 : vector<1x32xf32>
      %cst_341 = arith.constant 1.000000e+00 : f32
      %1970 = vector.broadcast %cst_341 : f32 to vector<1x32xf32>
      %1971 = arith.addf %1970, %1969 : vector<1x32xf32>
      %1972 = arith.divf %1970, %1971 : vector<1x32xf32>
      %1973 = arith.mulf %1967, %1972 : vector<1x32xf32>
      %1974 = arith.mulf %6, %1973 : vector<1x32xf32>
      %cst_342 = arith.constant dense<0.000000e+00> : vector<1xf32>
      %1975 = vector.multi_reduction <add>, %1974, %cst_342 [1] : vector<1x32xf32> to vector<1xf32>
      %1976 = vector.shape_cast %1975 : vector<1xf32> to vector<1x1xf32>
      %1977 = arith.addf %1976, %7 : vector<1x1xf32>
      %1978 = vector.broadcast %33 : f32 to vector<1x1xf32>
      %1979 = arith.mulf %1978, %1977 : vector<1x1xf32>
      %1980 = arith.addf %1942, %1979 : vector<1x1xf32>
      %1981 = vector.broadcast %1980 : vector<1x1xf32> to vector<1x32xf32>
      %1982 = arith.mulf %1981, %0 : vector<1x32xf32>
      %1983 = arith.addf %1982, %1 : vector<1x32xf32>
      %1984 = arith.negf %1983 : vector<1x32xf32>
      %1985 = math.exp %1984 : vector<1x32xf32>
      %cst_343 = arith.constant 1.000000e+00 : f32
      %1986 = vector.broadcast %cst_343 : f32 to vector<1x32xf32>
      %1987 = arith.addf %1986, %1985 : vector<1x32xf32>
      %1988 = arith.divf %1986, %1987 : vector<1x32xf32>
      %1989 = arith.mulf %1983, %1988 : vector<1x32xf32>
      %1990 = vector.broadcast %1989 : vector<1x32xf32> to vector<32x32xf32>
      %1991 = arith.mulf %2, %1990 : vector<32x32xf32>
      %cst_344 = arith.constant dense<0.000000e+00> : vector<32xf32>
      %1992 = vector.multi_reduction <add>, %1991, %cst_344 [1] : vector<32x32xf32> to vector<32xf32>
      %1993 = vector.shape_cast %1992 : vector<32xf32> to vector<32x1xf32>
      %1994 = arith.addf %1993, %3 : vector<32x1xf32>
      %1995 = arith.negf %1994 : vector<32x1xf32>
      %1996 = math.exp %1995 : vector<32x1xf32>
      %cst_345 = arith.constant 1.000000e+00 : f32
      %1997 = vector.broadcast %cst_345 : f32 to vector<32x1xf32>
      %1998 = arith.addf %1997, %1996 : vector<32x1xf32>
      %1999 = arith.divf %1997, %1998 : vector<32x1xf32>
      %2000 = arith.mulf %1994, %1999 : vector<32x1xf32>
      %2001 = vector.broadcast %2000 : vector<32x1xf32> to vector<32x32xf32>
      %2002 = arith.mulf %4, %2001 : vector<32x32xf32>
      %cst_346 = arith.constant dense<0.000000e+00> : vector<32xf32>
      %2003 = vector.multi_reduction <add>, %2002, %cst_346 [0] : vector<32x32xf32> to vector<32xf32>
      %2004 = vector.shape_cast %2003 : vector<32xf32> to vector<1x32xf32>
      %2005 = arith.addf %2004, %5 : vector<1x32xf32>
      %2006 = arith.negf %2005 : vector<1x32xf32>
      %2007 = math.exp %2006 : vector<1x32xf32>
      %cst_347 = arith.constant 1.000000e+00 : f32
      %2008 = vector.broadcast %cst_347 : f32 to vector<1x32xf32>
      %2009 = arith.addf %2008, %2007 : vector<1x32xf32>
      %2010 = arith.divf %2008, %2009 : vector<1x32xf32>
      %2011 = arith.mulf %2005, %2010 : vector<1x32xf32>
      %2012 = arith.mulf %6, %2011 : vector<1x32xf32>
      %cst_348 = arith.constant dense<0.000000e+00> : vector<1xf32>
      %2013 = vector.multi_reduction <add>, %2012, %cst_348 [1] : vector<1x32xf32> to vector<1xf32>
      %2014 = vector.shape_cast %2013 : vector<1xf32> to vector<1x1xf32>
      %2015 = arith.addf %2014, %7 : vector<1x1xf32>
      %2016 = vector.broadcast %33 : f32 to vector<1x1xf32>
      %2017 = arith.mulf %2016, %2015 : vector<1x1xf32>
      %2018 = arith.addf %1942, %2017 : vector<1x1xf32>
      %2019 = vector.broadcast %2018 : vector<1x1xf32> to vector<1x32xf32>
      %2020 = arith.mulf %2019, %0 : vector<1x32xf32>
      %2021 = arith.addf %2020, %1 : vector<1x32xf32>
      %2022 = arith.negf %2021 : vector<1x32xf32>
      %2023 = math.exp %2022 : vector<1x32xf32>
      %cst_349 = arith.constant 1.000000e+00 : f32
      %2024 = vector.broadcast %cst_349 : f32 to vector<1x32xf32>
      %2025 = arith.addf %2024, %2023 : vector<1x32xf32>
      %2026 = arith.divf %2024, %2025 : vector<1x32xf32>
      %2027 = arith.mulf %2021, %2026 : vector<1x32xf32>
      %2028 = vector.broadcast %2027 : vector<1x32xf32> to vector<32x32xf32>
      %2029 = arith.mulf %2, %2028 : vector<32x32xf32>
      %cst_350 = arith.constant dense<0.000000e+00> : vector<32xf32>
      %2030 = vector.multi_reduction <add>, %2029, %cst_350 [1] : vector<32x32xf32> to vector<32xf32>
      %2031 = vector.shape_cast %2030 : vector<32xf32> to vector<32x1xf32>
      %2032 = arith.addf %2031, %3 : vector<32x1xf32>
      %2033 = arith.negf %2032 : vector<32x1xf32>
      %2034 = math.exp %2033 : vector<32x1xf32>
      %cst_351 = arith.constant 1.000000e+00 : f32
      %2035 = vector.broadcast %cst_351 : f32 to vector<32x1xf32>
      %2036 = arith.addf %2035, %2034 : vector<32x1xf32>
      %2037 = arith.divf %2035, %2036 : vector<32x1xf32>
      %2038 = arith.mulf %2032, %2037 : vector<32x1xf32>
      %2039 = vector.broadcast %2038 : vector<32x1xf32> to vector<32x32xf32>
      %2040 = arith.mulf %4, %2039 : vector<32x32xf32>
      %cst_352 = arith.constant dense<0.000000e+00> : vector<32xf32>
      %2041 = vector.multi_reduction <add>, %2040, %cst_352 [0] : vector<32x32xf32> to vector<32xf32>
      %2042 = vector.shape_cast %2041 : vector<32xf32> to vector<1x32xf32>
      %2043 = arith.addf %2042, %5 : vector<1x32xf32>
      %2044 = arith.negf %2043 : vector<1x32xf32>
      %2045 = math.exp %2044 : vector<1x32xf32>
      %cst_353 = arith.constant 1.000000e+00 : f32
      %2046 = vector.broadcast %cst_353 : f32 to vector<1x32xf32>
      %2047 = arith.addf %2046, %2045 : vector<1x32xf32>
      %2048 = arith.divf %2046, %2047 : vector<1x32xf32>
      %2049 = arith.mulf %2043, %2048 : vector<1x32xf32>
      %2050 = arith.mulf %6, %2049 : vector<1x32xf32>
      %cst_354 = arith.constant dense<0.000000e+00> : vector<1xf32>
      %2051 = vector.multi_reduction <add>, %2050, %cst_354 [1] : vector<1x32xf32> to vector<1xf32>
      %2052 = vector.shape_cast %2051 : vector<1xf32> to vector<1x1xf32>
      %2053 = arith.addf %2052, %7 : vector<1x1xf32>
      %2054 = vector.broadcast %32 : f32 to vector<1x1xf32>
      %2055 = arith.mulf %2054, %2053 : vector<1x1xf32>
      %2056 = arith.addf %1942, %2055 : vector<1x1xf32>
      %2057 = vector.broadcast %2056 : vector<1x1xf32> to vector<1x32xf32>
      %2058 = arith.mulf %2057, %0 : vector<1x32xf32>
      %2059 = arith.addf %2058, %1 : vector<1x32xf32>
      %2060 = arith.negf %2059 : vector<1x32xf32>
      %2061 = math.exp %2060 : vector<1x32xf32>
      %cst_355 = arith.constant 1.000000e+00 : f32
      %2062 = vector.broadcast %cst_355 : f32 to vector<1x32xf32>
      %2063 = arith.addf %2062, %2061 : vector<1x32xf32>
      %2064 = arith.divf %2062, %2063 : vector<1x32xf32>
      %2065 = arith.mulf %2059, %2064 : vector<1x32xf32>
      %2066 = vector.broadcast %2065 : vector<1x32xf32> to vector<32x32xf32>
      %2067 = arith.mulf %2, %2066 : vector<32x32xf32>
      %cst_356 = arith.constant dense<0.000000e+00> : vector<32xf32>
      %2068 = vector.multi_reduction <add>, %2067, %cst_356 [1] : vector<32x32xf32> to vector<32xf32>
      %2069 = vector.shape_cast %2068 : vector<32xf32> to vector<32x1xf32>
      %2070 = arith.addf %2069, %3 : vector<32x1xf32>
      %2071 = arith.negf %2070 : vector<32x1xf32>
      %2072 = math.exp %2071 : vector<32x1xf32>
      %cst_357 = arith.constant 1.000000e+00 : f32
      %2073 = vector.broadcast %cst_357 : f32 to vector<32x1xf32>
      %2074 = arith.addf %2073, %2072 : vector<32x1xf32>
      %2075 = arith.divf %2073, %2074 : vector<32x1xf32>
      %2076 = arith.mulf %2070, %2075 : vector<32x1xf32>
      %2077 = vector.broadcast %2076 : vector<32x1xf32> to vector<32x32xf32>
      %2078 = arith.mulf %4, %2077 : vector<32x32xf32>
      %cst_358 = arith.constant dense<0.000000e+00> : vector<32xf32>
      %2079 = vector.multi_reduction <add>, %2078, %cst_358 [0] : vector<32x32xf32> to vector<32xf32>
      %2080 = vector.shape_cast %2079 : vector<32xf32> to vector<1x32xf32>
      %2081 = arith.addf %2080, %5 : vector<1x32xf32>
      %2082 = arith.negf %2081 : vector<1x32xf32>
      %2083 = math.exp %2082 : vector<1x32xf32>
      %cst_359 = arith.constant 1.000000e+00 : f32
      %2084 = vector.broadcast %cst_359 : f32 to vector<1x32xf32>
      %2085 = arith.addf %2084, %2083 : vector<1x32xf32>
      %2086 = arith.divf %2084, %2085 : vector<1x32xf32>
      %2087 = arith.mulf %2081, %2086 : vector<1x32xf32>
      %2088 = arith.mulf %6, %2087 : vector<1x32xf32>
      %cst_360 = arith.constant dense<0.000000e+00> : vector<1xf32>
      %2089 = vector.multi_reduction <add>, %2088, %cst_360 [1] : vector<1x32xf32> to vector<1xf32>
      %2090 = vector.shape_cast %2089 : vector<1xf32> to vector<1x1xf32>
      %2091 = arith.addf %2090, %7 : vector<1x1xf32>
      %cst_361 = arith.constant 2.000000e+00 : f32
      %2092 = vector.broadcast %cst_361 : f32 to vector<1x1xf32>
      %2093 = arith.mulf %2092, %2015 : vector<1x1xf32>
      %2094 = arith.addf %1977, %2093 : vector<1x1xf32>
      %cst_362 = arith.constant 2.000000e+00 : f32
      %2095 = vector.broadcast %cst_362 : f32 to vector<1x1xf32>
      %2096 = arith.mulf %2095, %2053 : vector<1x1xf32>
      %2097 = arith.addf %2094, %2096 : vector<1x1xf32>
      %2098 = arith.addf %2097, %2091 : vector<1x1xf32>
      %2099 = vector.broadcast %34 : f32 to vector<1x1xf32>
      %2100 = arith.mulf %2099, %2098 : vector<1x1xf32>
      %2101 = arith.addf %1942, %2100 : vector<1x1xf32>
      %c13_i32 = arith.constant 13 : i32
      %2102 = vector.broadcast %2101 : vector<1x1xf32> to vector<1x32xf32>
      %2103 = arith.mulf %2102, %0 : vector<1x32xf32>
      %2104 = arith.addf %2103, %1 : vector<1x32xf32>
      %2105 = arith.negf %2104 : vector<1x32xf32>
      %2106 = math.exp %2105 : vector<1x32xf32>
      %cst_363 = arith.constant 1.000000e+00 : f32
      %2107 = vector.broadcast %cst_363 : f32 to vector<1x32xf32>
      %2108 = arith.addf %2107, %2106 : vector<1x32xf32>
      %2109 = arith.divf %2107, %2108 : vector<1x32xf32>
      %2110 = arith.mulf %2104, %2109 : vector<1x32xf32>
      %2111 = vector.broadcast %2110 : vector<1x32xf32> to vector<32x32xf32>
      %2112 = arith.mulf %2, %2111 : vector<32x32xf32>
      %cst_364 = arith.constant dense<0.000000e+00> : vector<32xf32>
      %2113 = vector.multi_reduction <add>, %2112, %cst_364 [1] : vector<32x32xf32> to vector<32xf32>
      %2114 = vector.shape_cast %2113 : vector<32xf32> to vector<32x1xf32>
      %2115 = arith.addf %2114, %3 : vector<32x1xf32>
      %2116 = arith.negf %2115 : vector<32x1xf32>
      %2117 = math.exp %2116 : vector<32x1xf32>
      %cst_365 = arith.constant 1.000000e+00 : f32
      %2118 = vector.broadcast %cst_365 : f32 to vector<32x1xf32>
      %2119 = arith.addf %2118, %2117 : vector<32x1xf32>
      %2120 = arith.divf %2118, %2119 : vector<32x1xf32>
      %2121 = arith.mulf %2115, %2120 : vector<32x1xf32>
      %2122 = vector.broadcast %2121 : vector<32x1xf32> to vector<32x32xf32>
      %2123 = arith.mulf %4, %2122 : vector<32x32xf32>
      %cst_366 = arith.constant dense<0.000000e+00> : vector<32xf32>
      %2124 = vector.multi_reduction <add>, %2123, %cst_366 [0] : vector<32x32xf32> to vector<32xf32>
      %2125 = vector.shape_cast %2124 : vector<32xf32> to vector<1x32xf32>
      %2126 = arith.addf %2125, %5 : vector<1x32xf32>
      %2127 = arith.negf %2126 : vector<1x32xf32>
      %2128 = math.exp %2127 : vector<1x32xf32>
      %cst_367 = arith.constant 1.000000e+00 : f32
      %2129 = vector.broadcast %cst_367 : f32 to vector<1x32xf32>
      %2130 = arith.addf %2129, %2128 : vector<1x32xf32>
      %2131 = arith.divf %2129, %2130 : vector<1x32xf32>
      %2132 = arith.mulf %2126, %2131 : vector<1x32xf32>
      %2133 = arith.mulf %6, %2132 : vector<1x32xf32>
      %cst_368 = arith.constant dense<0.000000e+00> : vector<1xf32>
      %2134 = vector.multi_reduction <add>, %2133, %cst_368 [1] : vector<1x32xf32> to vector<1xf32>
      %2135 = vector.shape_cast %2134 : vector<1xf32> to vector<1x1xf32>
      %2136 = arith.addf %2135, %7 : vector<1x1xf32>
      %2137 = vector.broadcast %33 : f32 to vector<1x1xf32>
      %2138 = arith.mulf %2137, %2136 : vector<1x1xf32>
      %2139 = arith.addf %2101, %2138 : vector<1x1xf32>
      %2140 = vector.broadcast %2139 : vector<1x1xf32> to vector<1x32xf32>
      %2141 = arith.mulf %2140, %0 : vector<1x32xf32>
      %2142 = arith.addf %2141, %1 : vector<1x32xf32>
      %2143 = arith.negf %2142 : vector<1x32xf32>
      %2144 = math.exp %2143 : vector<1x32xf32>
      %cst_369 = arith.constant 1.000000e+00 : f32
      %2145 = vector.broadcast %cst_369 : f32 to vector<1x32xf32>
      %2146 = arith.addf %2145, %2144 : vector<1x32xf32>
      %2147 = arith.divf %2145, %2146 : vector<1x32xf32>
      %2148 = arith.mulf %2142, %2147 : vector<1x32xf32>
      %2149 = vector.broadcast %2148 : vector<1x32xf32> to vector<32x32xf32>
      %2150 = arith.mulf %2, %2149 : vector<32x32xf32>
      %cst_370 = arith.constant dense<0.000000e+00> : vector<32xf32>
      %2151 = vector.multi_reduction <add>, %2150, %cst_370 [1] : vector<32x32xf32> to vector<32xf32>
      %2152 = vector.shape_cast %2151 : vector<32xf32> to vector<32x1xf32>
      %2153 = arith.addf %2152, %3 : vector<32x1xf32>
      %2154 = arith.negf %2153 : vector<32x1xf32>
      %2155 = math.exp %2154 : vector<32x1xf32>
      %cst_371 = arith.constant 1.000000e+00 : f32
      %2156 = vector.broadcast %cst_371 : f32 to vector<32x1xf32>
      %2157 = arith.addf %2156, %2155 : vector<32x1xf32>
      %2158 = arith.divf %2156, %2157 : vector<32x1xf32>
      %2159 = arith.mulf %2153, %2158 : vector<32x1xf32>
      %2160 = vector.broadcast %2159 : vector<32x1xf32> to vector<32x32xf32>
      %2161 = arith.mulf %4, %2160 : vector<32x32xf32>
      %cst_372 = arith.constant dense<0.000000e+00> : vector<32xf32>
      %2162 = vector.multi_reduction <add>, %2161, %cst_372 [0] : vector<32x32xf32> to vector<32xf32>
      %2163 = vector.shape_cast %2162 : vector<32xf32> to vector<1x32xf32>
      %2164 = arith.addf %2163, %5 : vector<1x32xf32>
      %2165 = arith.negf %2164 : vector<1x32xf32>
      %2166 = math.exp %2165 : vector<1x32xf32>
      %cst_373 = arith.constant 1.000000e+00 : f32
      %2167 = vector.broadcast %cst_373 : f32 to vector<1x32xf32>
      %2168 = arith.addf %2167, %2166 : vector<1x32xf32>
      %2169 = arith.divf %2167, %2168 : vector<1x32xf32>
      %2170 = arith.mulf %2164, %2169 : vector<1x32xf32>
      %2171 = arith.mulf %6, %2170 : vector<1x32xf32>
      %cst_374 = arith.constant dense<0.000000e+00> : vector<1xf32>
      %2172 = vector.multi_reduction <add>, %2171, %cst_374 [1] : vector<1x32xf32> to vector<1xf32>
      %2173 = vector.shape_cast %2172 : vector<1xf32> to vector<1x1xf32>
      %2174 = arith.addf %2173, %7 : vector<1x1xf32>
      %2175 = vector.broadcast %33 : f32 to vector<1x1xf32>
      %2176 = arith.mulf %2175, %2174 : vector<1x1xf32>
      %2177 = arith.addf %2101, %2176 : vector<1x1xf32>
      %2178 = vector.broadcast %2177 : vector<1x1xf32> to vector<1x32xf32>
      %2179 = arith.mulf %2178, %0 : vector<1x32xf32>
      %2180 = arith.addf %2179, %1 : vector<1x32xf32>
      %2181 = arith.negf %2180 : vector<1x32xf32>
      %2182 = math.exp %2181 : vector<1x32xf32>
      %cst_375 = arith.constant 1.000000e+00 : f32
      %2183 = vector.broadcast %cst_375 : f32 to vector<1x32xf32>
      %2184 = arith.addf %2183, %2182 : vector<1x32xf32>
      %2185 = arith.divf %2183, %2184 : vector<1x32xf32>
      %2186 = arith.mulf %2180, %2185 : vector<1x32xf32>
      %2187 = vector.broadcast %2186 : vector<1x32xf32> to vector<32x32xf32>
      %2188 = arith.mulf %2, %2187 : vector<32x32xf32>
      %cst_376 = arith.constant dense<0.000000e+00> : vector<32xf32>
      %2189 = vector.multi_reduction <add>, %2188, %cst_376 [1] : vector<32x32xf32> to vector<32xf32>
      %2190 = vector.shape_cast %2189 : vector<32xf32> to vector<32x1xf32>
      %2191 = arith.addf %2190, %3 : vector<32x1xf32>
      %2192 = arith.negf %2191 : vector<32x1xf32>
      %2193 = math.exp %2192 : vector<32x1xf32>
      %cst_377 = arith.constant 1.000000e+00 : f32
      %2194 = vector.broadcast %cst_377 : f32 to vector<32x1xf32>
      %2195 = arith.addf %2194, %2193 : vector<32x1xf32>
      %2196 = arith.divf %2194, %2195 : vector<32x1xf32>
      %2197 = arith.mulf %2191, %2196 : vector<32x1xf32>
      %2198 = vector.broadcast %2197 : vector<32x1xf32> to vector<32x32xf32>
      %2199 = arith.mulf %4, %2198 : vector<32x32xf32>
      %cst_378 = arith.constant dense<0.000000e+00> : vector<32xf32>
      %2200 = vector.multi_reduction <add>, %2199, %cst_378 [0] : vector<32x32xf32> to vector<32xf32>
      %2201 = vector.shape_cast %2200 : vector<32xf32> to vector<1x32xf32>
      %2202 = arith.addf %2201, %5 : vector<1x32xf32>
      %2203 = arith.negf %2202 : vector<1x32xf32>
      %2204 = math.exp %2203 : vector<1x32xf32>
      %cst_379 = arith.constant 1.000000e+00 : f32
      %2205 = vector.broadcast %cst_379 : f32 to vector<1x32xf32>
      %2206 = arith.addf %2205, %2204 : vector<1x32xf32>
      %2207 = arith.divf %2205, %2206 : vector<1x32xf32>
      %2208 = arith.mulf %2202, %2207 : vector<1x32xf32>
      %2209 = arith.mulf %6, %2208 : vector<1x32xf32>
      %cst_380 = arith.constant dense<0.000000e+00> : vector<1xf32>
      %2210 = vector.multi_reduction <add>, %2209, %cst_380 [1] : vector<1x32xf32> to vector<1xf32>
      %2211 = vector.shape_cast %2210 : vector<1xf32> to vector<1x1xf32>
      %2212 = arith.addf %2211, %7 : vector<1x1xf32>
      %2213 = vector.broadcast %32 : f32 to vector<1x1xf32>
      %2214 = arith.mulf %2213, %2212 : vector<1x1xf32>
      %2215 = arith.addf %2101, %2214 : vector<1x1xf32>
      %2216 = vector.broadcast %2215 : vector<1x1xf32> to vector<1x32xf32>
      %2217 = arith.mulf %2216, %0 : vector<1x32xf32>
      %2218 = arith.addf %2217, %1 : vector<1x32xf32>
      %2219 = arith.negf %2218 : vector<1x32xf32>
      %2220 = math.exp %2219 : vector<1x32xf32>
      %cst_381 = arith.constant 1.000000e+00 : f32
      %2221 = vector.broadcast %cst_381 : f32 to vector<1x32xf32>
      %2222 = arith.addf %2221, %2220 : vector<1x32xf32>
      %2223 = arith.divf %2221, %2222 : vector<1x32xf32>
      %2224 = arith.mulf %2218, %2223 : vector<1x32xf32>
      %2225 = vector.broadcast %2224 : vector<1x32xf32> to vector<32x32xf32>
      %2226 = arith.mulf %2, %2225 : vector<32x32xf32>
      %cst_382 = arith.constant dense<0.000000e+00> : vector<32xf32>
      %2227 = vector.multi_reduction <add>, %2226, %cst_382 [1] : vector<32x32xf32> to vector<32xf32>
      %2228 = vector.shape_cast %2227 : vector<32xf32> to vector<32x1xf32>
      %2229 = arith.addf %2228, %3 : vector<32x1xf32>
      %2230 = arith.negf %2229 : vector<32x1xf32>
      %2231 = math.exp %2230 : vector<32x1xf32>
      %cst_383 = arith.constant 1.000000e+00 : f32
      %2232 = vector.broadcast %cst_383 : f32 to vector<32x1xf32>
      %2233 = arith.addf %2232, %2231 : vector<32x1xf32>
      %2234 = arith.divf %2232, %2233 : vector<32x1xf32>
      %2235 = arith.mulf %2229, %2234 : vector<32x1xf32>
      %2236 = vector.broadcast %2235 : vector<32x1xf32> to vector<32x32xf32>
      %2237 = arith.mulf %4, %2236 : vector<32x32xf32>
      %cst_384 = arith.constant dense<0.000000e+00> : vector<32xf32>
      %2238 = vector.multi_reduction <add>, %2237, %cst_384 [0] : vector<32x32xf32> to vector<32xf32>
      %2239 = vector.shape_cast %2238 : vector<32xf32> to vector<1x32xf32>
      %2240 = arith.addf %2239, %5 : vector<1x32xf32>
      %2241 = arith.negf %2240 : vector<1x32xf32>
      %2242 = math.exp %2241 : vector<1x32xf32>
      %cst_385 = arith.constant 1.000000e+00 : f32
      %2243 = vector.broadcast %cst_385 : f32 to vector<1x32xf32>
      %2244 = arith.addf %2243, %2242 : vector<1x32xf32>
      %2245 = arith.divf %2243, %2244 : vector<1x32xf32>
      %2246 = arith.mulf %2240, %2245 : vector<1x32xf32>
      %2247 = arith.mulf %6, %2246 : vector<1x32xf32>
      %cst_386 = arith.constant dense<0.000000e+00> : vector<1xf32>
      %2248 = vector.multi_reduction <add>, %2247, %cst_386 [1] : vector<1x32xf32> to vector<1xf32>
      %2249 = vector.shape_cast %2248 : vector<1xf32> to vector<1x1xf32>
      %2250 = arith.addf %2249, %7 : vector<1x1xf32>
      %cst_387 = arith.constant 2.000000e+00 : f32
      %2251 = vector.broadcast %cst_387 : f32 to vector<1x1xf32>
      %2252 = arith.mulf %2251, %2174 : vector<1x1xf32>
      %2253 = arith.addf %2136, %2252 : vector<1x1xf32>
      %cst_388 = arith.constant 2.000000e+00 : f32
      %2254 = vector.broadcast %cst_388 : f32 to vector<1x1xf32>
      %2255 = arith.mulf %2254, %2212 : vector<1x1xf32>
      %2256 = arith.addf %2253, %2255 : vector<1x1xf32>
      %2257 = arith.addf %2256, %2250 : vector<1x1xf32>
      %2258 = vector.broadcast %34 : f32 to vector<1x1xf32>
      %2259 = arith.mulf %2258, %2257 : vector<1x1xf32>
      %2260 = arith.addf %2101, %2259 : vector<1x1xf32>
      %c14_i32 = arith.constant 14 : i32
      %2261 = vector.broadcast %2260 : vector<1x1xf32> to vector<1x32xf32>
      %2262 = arith.mulf %2261, %0 : vector<1x32xf32>
      %2263 = arith.addf %2262, %1 : vector<1x32xf32>
      %2264 = arith.negf %2263 : vector<1x32xf32>
      %2265 = math.exp %2264 : vector<1x32xf32>
      %cst_389 = arith.constant 1.000000e+00 : f32
      %2266 = vector.broadcast %cst_389 : f32 to vector<1x32xf32>
      %2267 = arith.addf %2266, %2265 : vector<1x32xf32>
      %2268 = arith.divf %2266, %2267 : vector<1x32xf32>
      %2269 = arith.mulf %2263, %2268 : vector<1x32xf32>
      %2270 = vector.broadcast %2269 : vector<1x32xf32> to vector<32x32xf32>
      %2271 = arith.mulf %2, %2270 : vector<32x32xf32>
      %cst_390 = arith.constant dense<0.000000e+00> : vector<32xf32>
      %2272 = vector.multi_reduction <add>, %2271, %cst_390 [1] : vector<32x32xf32> to vector<32xf32>
      %2273 = vector.shape_cast %2272 : vector<32xf32> to vector<32x1xf32>
      %2274 = arith.addf %2273, %3 : vector<32x1xf32>
      %2275 = arith.negf %2274 : vector<32x1xf32>
      %2276 = math.exp %2275 : vector<32x1xf32>
      %cst_391 = arith.constant 1.000000e+00 : f32
      %2277 = vector.broadcast %cst_391 : f32 to vector<32x1xf32>
      %2278 = arith.addf %2277, %2276 : vector<32x1xf32>
      %2279 = arith.divf %2277, %2278 : vector<32x1xf32>
      %2280 = arith.mulf %2274, %2279 : vector<32x1xf32>
      %2281 = vector.broadcast %2280 : vector<32x1xf32> to vector<32x32xf32>
      %2282 = arith.mulf %4, %2281 : vector<32x32xf32>
      %cst_392 = arith.constant dense<0.000000e+00> : vector<32xf32>
      %2283 = vector.multi_reduction <add>, %2282, %cst_392 [0] : vector<32x32xf32> to vector<32xf32>
      %2284 = vector.shape_cast %2283 : vector<32xf32> to vector<1x32xf32>
      %2285 = arith.addf %2284, %5 : vector<1x32xf32>
      %2286 = arith.negf %2285 : vector<1x32xf32>
      %2287 = math.exp %2286 : vector<1x32xf32>
      %cst_393 = arith.constant 1.000000e+00 : f32
      %2288 = vector.broadcast %cst_393 : f32 to vector<1x32xf32>
      %2289 = arith.addf %2288, %2287 : vector<1x32xf32>
      %2290 = arith.divf %2288, %2289 : vector<1x32xf32>
      %2291 = arith.mulf %2285, %2290 : vector<1x32xf32>
      %2292 = arith.mulf %6, %2291 : vector<1x32xf32>
      %cst_394 = arith.constant dense<0.000000e+00> : vector<1xf32>
      %2293 = vector.multi_reduction <add>, %2292, %cst_394 [1] : vector<1x32xf32> to vector<1xf32>
      %2294 = vector.shape_cast %2293 : vector<1xf32> to vector<1x1xf32>
      %2295 = arith.addf %2294, %7 : vector<1x1xf32>
      %2296 = vector.broadcast %33 : f32 to vector<1x1xf32>
      %2297 = arith.mulf %2296, %2295 : vector<1x1xf32>
      %2298 = arith.addf %2260, %2297 : vector<1x1xf32>
      %2299 = vector.broadcast %2298 : vector<1x1xf32> to vector<1x32xf32>
      %2300 = arith.mulf %2299, %0 : vector<1x32xf32>
      %2301 = arith.addf %2300, %1 : vector<1x32xf32>
      %2302 = arith.negf %2301 : vector<1x32xf32>
      %2303 = math.exp %2302 : vector<1x32xf32>
      %cst_395 = arith.constant 1.000000e+00 : f32
      %2304 = vector.broadcast %cst_395 : f32 to vector<1x32xf32>
      %2305 = arith.addf %2304, %2303 : vector<1x32xf32>
      %2306 = arith.divf %2304, %2305 : vector<1x32xf32>
      %2307 = arith.mulf %2301, %2306 : vector<1x32xf32>
      %2308 = vector.broadcast %2307 : vector<1x32xf32> to vector<32x32xf32>
      %2309 = arith.mulf %2, %2308 : vector<32x32xf32>
      %cst_396 = arith.constant dense<0.000000e+00> : vector<32xf32>
      %2310 = vector.multi_reduction <add>, %2309, %cst_396 [1] : vector<32x32xf32> to vector<32xf32>
      %2311 = vector.shape_cast %2310 : vector<32xf32> to vector<32x1xf32>
      %2312 = arith.addf %2311, %3 : vector<32x1xf32>
      %2313 = arith.negf %2312 : vector<32x1xf32>
      %2314 = math.exp %2313 : vector<32x1xf32>
      %cst_397 = arith.constant 1.000000e+00 : f32
      %2315 = vector.broadcast %cst_397 : f32 to vector<32x1xf32>
      %2316 = arith.addf %2315, %2314 : vector<32x1xf32>
      %2317 = arith.divf %2315, %2316 : vector<32x1xf32>
      %2318 = arith.mulf %2312, %2317 : vector<32x1xf32>
      %2319 = vector.broadcast %2318 : vector<32x1xf32> to vector<32x32xf32>
      %2320 = arith.mulf %4, %2319 : vector<32x32xf32>
      %cst_398 = arith.constant dense<0.000000e+00> : vector<32xf32>
      %2321 = vector.multi_reduction <add>, %2320, %cst_398 [0] : vector<32x32xf32> to vector<32xf32>
      %2322 = vector.shape_cast %2321 : vector<32xf32> to vector<1x32xf32>
      %2323 = arith.addf %2322, %5 : vector<1x32xf32>
      %2324 = arith.negf %2323 : vector<1x32xf32>
      %2325 = math.exp %2324 : vector<1x32xf32>
      %cst_399 = arith.constant 1.000000e+00 : f32
      %2326 = vector.broadcast %cst_399 : f32 to vector<1x32xf32>
      %2327 = arith.addf %2326, %2325 : vector<1x32xf32>
      %2328 = arith.divf %2326, %2327 : vector<1x32xf32>
      %2329 = arith.mulf %2323, %2328 : vector<1x32xf32>
      %2330 = arith.mulf %6, %2329 : vector<1x32xf32>
      %cst_400 = arith.constant dense<0.000000e+00> : vector<1xf32>
      %2331 = vector.multi_reduction <add>, %2330, %cst_400 [1] : vector<1x32xf32> to vector<1xf32>
      %2332 = vector.shape_cast %2331 : vector<1xf32> to vector<1x1xf32>
      %2333 = arith.addf %2332, %7 : vector<1x1xf32>
      %2334 = vector.broadcast %33 : f32 to vector<1x1xf32>
      %2335 = arith.mulf %2334, %2333 : vector<1x1xf32>
      %2336 = arith.addf %2260, %2335 : vector<1x1xf32>
      %2337 = vector.broadcast %2336 : vector<1x1xf32> to vector<1x32xf32>
      %2338 = arith.mulf %2337, %0 : vector<1x32xf32>
      %2339 = arith.addf %2338, %1 : vector<1x32xf32>
      %2340 = arith.negf %2339 : vector<1x32xf32>
      %2341 = math.exp %2340 : vector<1x32xf32>
      %cst_401 = arith.constant 1.000000e+00 : f32
      %2342 = vector.broadcast %cst_401 : f32 to vector<1x32xf32>
      %2343 = arith.addf %2342, %2341 : vector<1x32xf32>
      %2344 = arith.divf %2342, %2343 : vector<1x32xf32>
      %2345 = arith.mulf %2339, %2344 : vector<1x32xf32>
      %2346 = vector.broadcast %2345 : vector<1x32xf32> to vector<32x32xf32>
      %2347 = arith.mulf %2, %2346 : vector<32x32xf32>
      %cst_402 = arith.constant dense<0.000000e+00> : vector<32xf32>
      %2348 = vector.multi_reduction <add>, %2347, %cst_402 [1] : vector<32x32xf32> to vector<32xf32>
      %2349 = vector.shape_cast %2348 : vector<32xf32> to vector<32x1xf32>
      %2350 = arith.addf %2349, %3 : vector<32x1xf32>
      %2351 = arith.negf %2350 : vector<32x1xf32>
      %2352 = math.exp %2351 : vector<32x1xf32>
      %cst_403 = arith.constant 1.000000e+00 : f32
      %2353 = vector.broadcast %cst_403 : f32 to vector<32x1xf32>
      %2354 = arith.addf %2353, %2352 : vector<32x1xf32>
      %2355 = arith.divf %2353, %2354 : vector<32x1xf32>
      %2356 = arith.mulf %2350, %2355 : vector<32x1xf32>
      %2357 = vector.broadcast %2356 : vector<32x1xf32> to vector<32x32xf32>
      %2358 = arith.mulf %4, %2357 : vector<32x32xf32>
      %cst_404 = arith.constant dense<0.000000e+00> : vector<32xf32>
      %2359 = vector.multi_reduction <add>, %2358, %cst_404 [0] : vector<32x32xf32> to vector<32xf32>
      %2360 = vector.shape_cast %2359 : vector<32xf32> to vector<1x32xf32>
      %2361 = arith.addf %2360, %5 : vector<1x32xf32>
      %2362 = arith.negf %2361 : vector<1x32xf32>
      %2363 = math.exp %2362 : vector<1x32xf32>
      %cst_405 = arith.constant 1.000000e+00 : f32
      %2364 = vector.broadcast %cst_405 : f32 to vector<1x32xf32>
      %2365 = arith.addf %2364, %2363 : vector<1x32xf32>
      %2366 = arith.divf %2364, %2365 : vector<1x32xf32>
      %2367 = arith.mulf %2361, %2366 : vector<1x32xf32>
      %2368 = arith.mulf %6, %2367 : vector<1x32xf32>
      %cst_406 = arith.constant dense<0.000000e+00> : vector<1xf32>
      %2369 = vector.multi_reduction <add>, %2368, %cst_406 [1] : vector<1x32xf32> to vector<1xf32>
      %2370 = vector.shape_cast %2369 : vector<1xf32> to vector<1x1xf32>
      %2371 = arith.addf %2370, %7 : vector<1x1xf32>
      %2372 = vector.broadcast %32 : f32 to vector<1x1xf32>
      %2373 = arith.mulf %2372, %2371 : vector<1x1xf32>
      %2374 = arith.addf %2260, %2373 : vector<1x1xf32>
      %2375 = vector.broadcast %2374 : vector<1x1xf32> to vector<1x32xf32>
      %2376 = arith.mulf %2375, %0 : vector<1x32xf32>
      %2377 = arith.addf %2376, %1 : vector<1x32xf32>
      %2378 = arith.negf %2377 : vector<1x32xf32>
      %2379 = math.exp %2378 : vector<1x32xf32>
      %cst_407 = arith.constant 1.000000e+00 : f32
      %2380 = vector.broadcast %cst_407 : f32 to vector<1x32xf32>
      %2381 = arith.addf %2380, %2379 : vector<1x32xf32>
      %2382 = arith.divf %2380, %2381 : vector<1x32xf32>
      %2383 = arith.mulf %2377, %2382 : vector<1x32xf32>
      %2384 = vector.broadcast %2383 : vector<1x32xf32> to vector<32x32xf32>
      %2385 = arith.mulf %2, %2384 : vector<32x32xf32>
      %cst_408 = arith.constant dense<0.000000e+00> : vector<32xf32>
      %2386 = vector.multi_reduction <add>, %2385, %cst_408 [1] : vector<32x32xf32> to vector<32xf32>
      %2387 = vector.shape_cast %2386 : vector<32xf32> to vector<32x1xf32>
      %2388 = arith.addf %2387, %3 : vector<32x1xf32>
      %2389 = arith.negf %2388 : vector<32x1xf32>
      %2390 = math.exp %2389 : vector<32x1xf32>
      %cst_409 = arith.constant 1.000000e+00 : f32
      %2391 = vector.broadcast %cst_409 : f32 to vector<32x1xf32>
      %2392 = arith.addf %2391, %2390 : vector<32x1xf32>
      %2393 = arith.divf %2391, %2392 : vector<32x1xf32>
      %2394 = arith.mulf %2388, %2393 : vector<32x1xf32>
      %2395 = vector.broadcast %2394 : vector<32x1xf32> to vector<32x32xf32>
      %2396 = arith.mulf %4, %2395 : vector<32x32xf32>
      %cst_410 = arith.constant dense<0.000000e+00> : vector<32xf32>
      %2397 = vector.multi_reduction <add>, %2396, %cst_410 [0] : vector<32x32xf32> to vector<32xf32>
      %2398 = vector.shape_cast %2397 : vector<32xf32> to vector<1x32xf32>
      %2399 = arith.addf %2398, %5 : vector<1x32xf32>
      %2400 = arith.negf %2399 : vector<1x32xf32>
      %2401 = math.exp %2400 : vector<1x32xf32>
      %cst_411 = arith.constant 1.000000e+00 : f32
      %2402 = vector.broadcast %cst_411 : f32 to vector<1x32xf32>
      %2403 = arith.addf %2402, %2401 : vector<1x32xf32>
      %2404 = arith.divf %2402, %2403 : vector<1x32xf32>
      %2405 = arith.mulf %2399, %2404 : vector<1x32xf32>
      %2406 = arith.mulf %6, %2405 : vector<1x32xf32>
      %cst_412 = arith.constant dense<0.000000e+00> : vector<1xf32>
      %2407 = vector.multi_reduction <add>, %2406, %cst_412 [1] : vector<1x32xf32> to vector<1xf32>
      %2408 = vector.shape_cast %2407 : vector<1xf32> to vector<1x1xf32>
      %2409 = arith.addf %2408, %7 : vector<1x1xf32>
      %cst_413 = arith.constant 2.000000e+00 : f32
      %2410 = vector.broadcast %cst_413 : f32 to vector<1x1xf32>
      %2411 = arith.mulf %2410, %2333 : vector<1x1xf32>
      %2412 = arith.addf %2295, %2411 : vector<1x1xf32>
      %cst_414 = arith.constant 2.000000e+00 : f32
      %2413 = vector.broadcast %cst_414 : f32 to vector<1x1xf32>
      %2414 = arith.mulf %2413, %2371 : vector<1x1xf32>
      %2415 = arith.addf %2412, %2414 : vector<1x1xf32>
      %2416 = arith.addf %2415, %2409 : vector<1x1xf32>
      %2417 = vector.broadcast %34 : f32 to vector<1x1xf32>
      %2418 = arith.mulf %2417, %2416 : vector<1x1xf32>
      %2419 = arith.addf %2260, %2418 : vector<1x1xf32>
      %c15_i32 = arith.constant 15 : i32
      %2420 = vector.broadcast %2419 : vector<1x1xf32> to vector<1x32xf32>
      %2421 = arith.mulf %2420, %0 : vector<1x32xf32>
      %2422 = arith.addf %2421, %1 : vector<1x32xf32>
      %2423 = arith.negf %2422 : vector<1x32xf32>
      %2424 = math.exp %2423 : vector<1x32xf32>
      %cst_415 = arith.constant 1.000000e+00 : f32
      %2425 = vector.broadcast %cst_415 : f32 to vector<1x32xf32>
      %2426 = arith.addf %2425, %2424 : vector<1x32xf32>
      %2427 = arith.divf %2425, %2426 : vector<1x32xf32>
      %2428 = arith.mulf %2422, %2427 : vector<1x32xf32>
      %2429 = vector.broadcast %2428 : vector<1x32xf32> to vector<32x32xf32>
      %2430 = arith.mulf %2, %2429 : vector<32x32xf32>
      %cst_416 = arith.constant dense<0.000000e+00> : vector<32xf32>
      %2431 = vector.multi_reduction <add>, %2430, %cst_416 [1] : vector<32x32xf32> to vector<32xf32>
      %2432 = vector.shape_cast %2431 : vector<32xf32> to vector<32x1xf32>
      %2433 = arith.addf %2432, %3 : vector<32x1xf32>
      %2434 = arith.negf %2433 : vector<32x1xf32>
      %2435 = math.exp %2434 : vector<32x1xf32>
      %cst_417 = arith.constant 1.000000e+00 : f32
      %2436 = vector.broadcast %cst_417 : f32 to vector<32x1xf32>
      %2437 = arith.addf %2436, %2435 : vector<32x1xf32>
      %2438 = arith.divf %2436, %2437 : vector<32x1xf32>
      %2439 = arith.mulf %2433, %2438 : vector<32x1xf32>
      %2440 = vector.broadcast %2439 : vector<32x1xf32> to vector<32x32xf32>
      %2441 = arith.mulf %4, %2440 : vector<32x32xf32>
      %cst_418 = arith.constant dense<0.000000e+00> : vector<32xf32>
      %2442 = vector.multi_reduction <add>, %2441, %cst_418 [0] : vector<32x32xf32> to vector<32xf32>
      %2443 = vector.shape_cast %2442 : vector<32xf32> to vector<1x32xf32>
      %2444 = arith.addf %2443, %5 : vector<1x32xf32>
      %2445 = arith.negf %2444 : vector<1x32xf32>
      %2446 = math.exp %2445 : vector<1x32xf32>
      %cst_419 = arith.constant 1.000000e+00 : f32
      %2447 = vector.broadcast %cst_419 : f32 to vector<1x32xf32>
      %2448 = arith.addf %2447, %2446 : vector<1x32xf32>
      %2449 = arith.divf %2447, %2448 : vector<1x32xf32>
      %2450 = arith.mulf %2444, %2449 : vector<1x32xf32>
      %2451 = arith.mulf %6, %2450 : vector<1x32xf32>
      %cst_420 = arith.constant dense<0.000000e+00> : vector<1xf32>
      %2452 = vector.multi_reduction <add>, %2451, %cst_420 [1] : vector<1x32xf32> to vector<1xf32>
      %2453 = vector.shape_cast %2452 : vector<1xf32> to vector<1x1xf32>
      %2454 = arith.addf %2453, %7 : vector<1x1xf32>
      %2455 = vector.broadcast %33 : f32 to vector<1x1xf32>
      %2456 = arith.mulf %2455, %2454 : vector<1x1xf32>
      %2457 = arith.addf %2419, %2456 : vector<1x1xf32>
      %2458 = vector.broadcast %2457 : vector<1x1xf32> to vector<1x32xf32>
      %2459 = arith.mulf %2458, %0 : vector<1x32xf32>
      %2460 = arith.addf %2459, %1 : vector<1x32xf32>
      %2461 = arith.negf %2460 : vector<1x32xf32>
      %2462 = math.exp %2461 : vector<1x32xf32>
      %cst_421 = arith.constant 1.000000e+00 : f32
      %2463 = vector.broadcast %cst_421 : f32 to vector<1x32xf32>
      %2464 = arith.addf %2463, %2462 : vector<1x32xf32>
      %2465 = arith.divf %2463, %2464 : vector<1x32xf32>
      %2466 = arith.mulf %2460, %2465 : vector<1x32xf32>
      %2467 = vector.broadcast %2466 : vector<1x32xf32> to vector<32x32xf32>
      %2468 = arith.mulf %2, %2467 : vector<32x32xf32>
      %cst_422 = arith.constant dense<0.000000e+00> : vector<32xf32>
      %2469 = vector.multi_reduction <add>, %2468, %cst_422 [1] : vector<32x32xf32> to vector<32xf32>
      %2470 = vector.shape_cast %2469 : vector<32xf32> to vector<32x1xf32>
      %2471 = arith.addf %2470, %3 : vector<32x1xf32>
      %2472 = arith.negf %2471 : vector<32x1xf32>
      %2473 = math.exp %2472 : vector<32x1xf32>
      %cst_423 = arith.constant 1.000000e+00 : f32
      %2474 = vector.broadcast %cst_423 : f32 to vector<32x1xf32>
      %2475 = arith.addf %2474, %2473 : vector<32x1xf32>
      %2476 = arith.divf %2474, %2475 : vector<32x1xf32>
      %2477 = arith.mulf %2471, %2476 : vector<32x1xf32>
      %2478 = vector.broadcast %2477 : vector<32x1xf32> to vector<32x32xf32>
      %2479 = arith.mulf %4, %2478 : vector<32x32xf32>
      %cst_424 = arith.constant dense<0.000000e+00> : vector<32xf32>
      %2480 = vector.multi_reduction <add>, %2479, %cst_424 [0] : vector<32x32xf32> to vector<32xf32>
      %2481 = vector.shape_cast %2480 : vector<32xf32> to vector<1x32xf32>
      %2482 = arith.addf %2481, %5 : vector<1x32xf32>
      %2483 = arith.negf %2482 : vector<1x32xf32>
      %2484 = math.exp %2483 : vector<1x32xf32>
      %cst_425 = arith.constant 1.000000e+00 : f32
      %2485 = vector.broadcast %cst_425 : f32 to vector<1x32xf32>
      %2486 = arith.addf %2485, %2484 : vector<1x32xf32>
      %2487 = arith.divf %2485, %2486 : vector<1x32xf32>
      %2488 = arith.mulf %2482, %2487 : vector<1x32xf32>
      %2489 = arith.mulf %6, %2488 : vector<1x32xf32>
      %cst_426 = arith.constant dense<0.000000e+00> : vector<1xf32>
      %2490 = vector.multi_reduction <add>, %2489, %cst_426 [1] : vector<1x32xf32> to vector<1xf32>
      %2491 = vector.shape_cast %2490 : vector<1xf32> to vector<1x1xf32>
      %2492 = arith.addf %2491, %7 : vector<1x1xf32>
      %2493 = vector.broadcast %33 : f32 to vector<1x1xf32>
      %2494 = arith.mulf %2493, %2492 : vector<1x1xf32>
      %2495 = arith.addf %2419, %2494 : vector<1x1xf32>
      %2496 = vector.broadcast %2495 : vector<1x1xf32> to vector<1x32xf32>
      %2497 = arith.mulf %2496, %0 : vector<1x32xf32>
      %2498 = arith.addf %2497, %1 : vector<1x32xf32>
      %2499 = arith.negf %2498 : vector<1x32xf32>
      %2500 = math.exp %2499 : vector<1x32xf32>
      %cst_427 = arith.constant 1.000000e+00 : f32
      %2501 = vector.broadcast %cst_427 : f32 to vector<1x32xf32>
      %2502 = arith.addf %2501, %2500 : vector<1x32xf32>
      %2503 = arith.divf %2501, %2502 : vector<1x32xf32>
      %2504 = arith.mulf %2498, %2503 : vector<1x32xf32>
      %2505 = vector.broadcast %2504 : vector<1x32xf32> to vector<32x32xf32>
      %2506 = arith.mulf %2, %2505 : vector<32x32xf32>
      %cst_428 = arith.constant dense<0.000000e+00> : vector<32xf32>
      %2507 = vector.multi_reduction <add>, %2506, %cst_428 [1] : vector<32x32xf32> to vector<32xf32>
      %2508 = vector.shape_cast %2507 : vector<32xf32> to vector<32x1xf32>
      %2509 = arith.addf %2508, %3 : vector<32x1xf32>
      %2510 = arith.negf %2509 : vector<32x1xf32>
      %2511 = math.exp %2510 : vector<32x1xf32>
      %cst_429 = arith.constant 1.000000e+00 : f32
      %2512 = vector.broadcast %cst_429 : f32 to vector<32x1xf32>
      %2513 = arith.addf %2512, %2511 : vector<32x1xf32>
      %2514 = arith.divf %2512, %2513 : vector<32x1xf32>
      %2515 = arith.mulf %2509, %2514 : vector<32x1xf32>
      %2516 = vector.broadcast %2515 : vector<32x1xf32> to vector<32x32xf32>
      %2517 = arith.mulf %4, %2516 : vector<32x32xf32>
      %cst_430 = arith.constant dense<0.000000e+00> : vector<32xf32>
      %2518 = vector.multi_reduction <add>, %2517, %cst_430 [0] : vector<32x32xf32> to vector<32xf32>
      %2519 = vector.shape_cast %2518 : vector<32xf32> to vector<1x32xf32>
      %2520 = arith.addf %2519, %5 : vector<1x32xf32>
      %2521 = arith.negf %2520 : vector<1x32xf32>
      %2522 = math.exp %2521 : vector<1x32xf32>
      %cst_431 = arith.constant 1.000000e+00 : f32
      %2523 = vector.broadcast %cst_431 : f32 to vector<1x32xf32>
      %2524 = arith.addf %2523, %2522 : vector<1x32xf32>
      %2525 = arith.divf %2523, %2524 : vector<1x32xf32>
      %2526 = arith.mulf %2520, %2525 : vector<1x32xf32>
      %2527 = arith.mulf %6, %2526 : vector<1x32xf32>
      %cst_432 = arith.constant dense<0.000000e+00> : vector<1xf32>
      %2528 = vector.multi_reduction <add>, %2527, %cst_432 [1] : vector<1x32xf32> to vector<1xf32>
      %2529 = vector.shape_cast %2528 : vector<1xf32> to vector<1x1xf32>
      %2530 = arith.addf %2529, %7 : vector<1x1xf32>
      %2531 = vector.broadcast %32 : f32 to vector<1x1xf32>
      %2532 = arith.mulf %2531, %2530 : vector<1x1xf32>
      %2533 = arith.addf %2419, %2532 : vector<1x1xf32>
      %2534 = vector.broadcast %2533 : vector<1x1xf32> to vector<1x32xf32>
      %2535 = arith.mulf %2534, %0 : vector<1x32xf32>
      %2536 = arith.addf %2535, %1 : vector<1x32xf32>
      %2537 = arith.negf %2536 : vector<1x32xf32>
      %2538 = math.exp %2537 : vector<1x32xf32>
      %cst_433 = arith.constant 1.000000e+00 : f32
      %2539 = vector.broadcast %cst_433 : f32 to vector<1x32xf32>
      %2540 = arith.addf %2539, %2538 : vector<1x32xf32>
      %2541 = arith.divf %2539, %2540 : vector<1x32xf32>
      %2542 = arith.mulf %2536, %2541 : vector<1x32xf32>
      %2543 = vector.broadcast %2542 : vector<1x32xf32> to vector<32x32xf32>
      %2544 = arith.mulf %2, %2543 : vector<32x32xf32>
      %cst_434 = arith.constant dense<0.000000e+00> : vector<32xf32>
      %2545 = vector.multi_reduction <add>, %2544, %cst_434 [1] : vector<32x32xf32> to vector<32xf32>
      %2546 = vector.shape_cast %2545 : vector<32xf32> to vector<32x1xf32>
      %2547 = arith.addf %2546, %3 : vector<32x1xf32>
      %2548 = arith.negf %2547 : vector<32x1xf32>
      %2549 = math.exp %2548 : vector<32x1xf32>
      %cst_435 = arith.constant 1.000000e+00 : f32
      %2550 = vector.broadcast %cst_435 : f32 to vector<32x1xf32>
      %2551 = arith.addf %2550, %2549 : vector<32x1xf32>
      %2552 = arith.divf %2550, %2551 : vector<32x1xf32>
      %2553 = arith.mulf %2547, %2552 : vector<32x1xf32>
      %2554 = vector.broadcast %2553 : vector<32x1xf32> to vector<32x32xf32>
      %2555 = arith.mulf %4, %2554 : vector<32x32xf32>
      %cst_436 = arith.constant dense<0.000000e+00> : vector<32xf32>
      %2556 = vector.multi_reduction <add>, %2555, %cst_436 [0] : vector<32x32xf32> to vector<32xf32>
      %2557 = vector.shape_cast %2556 : vector<32xf32> to vector<1x32xf32>
      %2558 = arith.addf %2557, %5 : vector<1x32xf32>
      %2559 = arith.negf %2558 : vector<1x32xf32>
      %2560 = math.exp %2559 : vector<1x32xf32>
      %cst_437 = arith.constant 1.000000e+00 : f32
      %2561 = vector.broadcast %cst_437 : f32 to vector<1x32xf32>
      %2562 = arith.addf %2561, %2560 : vector<1x32xf32>
      %2563 = arith.divf %2561, %2562 : vector<1x32xf32>
      %2564 = arith.mulf %2558, %2563 : vector<1x32xf32>
      %2565 = arith.mulf %6, %2564 : vector<1x32xf32>
      %cst_438 = arith.constant dense<0.000000e+00> : vector<1xf32>
      %2566 = vector.multi_reduction <add>, %2565, %cst_438 [1] : vector<1x32xf32> to vector<1xf32>
      %2567 = vector.shape_cast %2566 : vector<1xf32> to vector<1x1xf32>
      %2568 = arith.addf %2567, %7 : vector<1x1xf32>
      %cst_439 = arith.constant 2.000000e+00 : f32
      %2569 = vector.broadcast %cst_439 : f32 to vector<1x1xf32>
      %2570 = arith.mulf %2569, %2492 : vector<1x1xf32>
      %2571 = arith.addf %2454, %2570 : vector<1x1xf32>
      %cst_440 = arith.constant 2.000000e+00 : f32
      %2572 = vector.broadcast %cst_440 : f32 to vector<1x1xf32>
      %2573 = arith.mulf %2572, %2530 : vector<1x1xf32>
      %2574 = arith.addf %2571, %2573 : vector<1x1xf32>
      %2575 = arith.addf %2574, %2568 : vector<1x1xf32>
      %2576 = vector.broadcast %34 : f32 to vector<1x1xf32>
      %2577 = arith.mulf %2576, %2575 : vector<1x1xf32>
      %2578 = arith.addf %2419, %2577 : vector<1x1xf32>
      scf.yield %2578, %30 : vector<1x1xf32>, vector<1x128xf32>
    }
    %c7_i32_16 = arith.constant 7 : i32
    %c7 = arith.constant 7 : index
    %13 = memref.load %arg0[%c7] : memref<8xf32, #tpu.memory_space<smem>>
    %14 = vector.broadcast %13 : f32 to vector<1x1xf32>
    %15 = arith.addf %12#0, %14 : vector<1x1xf32>
    %c7_i32_17 = arith.constant 7 : i32
    %16 = vector.broadcast %c7_i32_17 : i32 to vector<1x128xi32>
    %17 = arith.cmpi eq, %8, %16 : vector<1x128xi32>
    %18 = vector.extract %15[0, 0] : f32 from vector<1x1xf32>
    %19 = vector.broadcast %18 : f32 to vector<1x128xf32>
    %20 = arith.select %17, %19, %12#1 : vector<1x128xi1>, vector<1x128xf32>
    %c0_18 = arith.constant 0 : index
    %c0_19 = arith.constant 0 : index
    %21 = vector.load %arg10[%c0_18, %c0_19] : memref<1x128xf32, #tpu.memory_space<vmem>>, vector<1x128xf32>
    tpu.vector_store %arg10[%c0_18, %c0_19], %20 {strides = array<i32>} : memref<1x128xf32, #tpu.memory_space<vmem>>, vector<1x128xf32>,
    return
  }
}

</mosaic_0001>

<llo_original>
// kernel: tpu_custom_call.1
$region0: #{tpu_custom_call.1}
  #allocation0 [shape = 'u32[]', space=smem, size = 0x4, offset = 0x4, fixed_abs, tag = 'smem constant byte address 0x4 - core index']
  #allocation1 [shape = 'u32[144,128]{1,0:T(1,128)}', space=vmem, size = 0x12000, scoped, tag = 'internal scratch']
  #allocation2 [shape = 'f32[1,1]{1,0:T(1,128)S(1)}', space=vmem, size = 0x200, scoped, tag = 'scoped memory for tpu_custom_call.1']
  %s0 = inlined_call_operand.vmem [shape: f32[8], index: 0, kind: input, shape index: {}]
  %s1 = inlined_call_operand.vmem [shape: f32[7], index: 1, kind: input, shape index: {}]
  %s2 = inlined_call_operand.vmem [shape: f32[1,32], index: 2, kind: input, shape index: {}]
  %s3 = inlined_call_operand.vmem [shape: f32[1,32], index: 3, kind: input, shape index: {}]
  %s4 = inlined_call_operand.vmem [shape: f32[32,32], index: 4, kind: input, shape index: {}]
  %s5 = inlined_call_operand.vmem [shape: f32[32,1], index: 5, kind: input, shape index: {}]
  %s6 = inlined_call_operand.hbm [shape: f32[32,32], index: 6, kind: input, shape index: {}]
  %s7 = inlined_call_operand.vmem [shape: f32[1,32], index: 7, kind: input, shape index: {}]
  %s8 = inlined_call_operand.vmem [shape: f32[1,32], index: 8, kind: input, shape index: {}]
  %s9 = inlined_call_operand.<no memory space> [shape: f32[1,1], index: 9, kind: input, shape index: {}]
  %s10 = inlined_call_operand.hbm [shape: f32[1,128], index: 10, kind: output, shape index: {}]
  %s11 = sld [smem:[#allocation0]]
  $region69: #{tpu_custom_call.1} parent=0
    _
  %s13 = ssub.s32 1, %s11
  %s14 = scalar_select 0, %s13, %s11
  %v15 = vstv %s9
  %16 = vst [vmem:[#allocation2] sm:$0x1] %v15
  $region1: #{tpu_custom_call.1} parent=0
    #allocation3 [shape = 'u8[512]{0}', space=smem, size = 0x200, scoped, tag = 'input window, operand 0, single buffered']
    #allocation4 [shape = 's32[1]{0}', space=sflag, size = 0x4, scoped, tag = 'scoped memory for tpu_custom_call.1']
    #allocation5 [shape = 's32[1]{0}', space=sflag, size = 0x4, scoped, tag = 'scoped memory for tpu_custom_call.1']
    #allocation6 [shape = 's32[1]{0}', space=sflag, size = 0x4, scoped, tag = 'scoped memory for tpu_custom_call.1']
    #allocation7 [shape = 'u8[512]{0}', space=smem, size = 0x200, scoped, tag = 'input window, operand 1, single buffered']
    #allocation8 [shape = 's32[1]{0}', space=sflag, size = 0x4, scoped, tag = 'scoped memory for tpu_custom_call.1']
    #allocation9 [shape = 'u8[16384]{0}', space=vmem, size = 0x4000, scoped, tag = 'input window, operand 6, single buffered']
    #allocation10 [shape = 'u8[512]{0}', space=vmem, size = 0x400, scoped, tag = 'output window, operand 0, single buffered']
    %17 = vsyncpa [#allocation6], 0
    %18 = vsyncpa [#allocation8], 0
    %19 = vsyncpa [#allocation4], 0
    %20 = vsyncpa [#allocation5], 0
    // Predicated region
    $region2: #{tpu_custom_call.1} parent=1 // pred_check
      _
    $region3: #{tpu_custom_call.1} parent=1 // pred_check_branch
      %22 = sbr.rel (0) target = $region5
    $region4: #{tpu_custom_call.1} parent=1 // pred_region
      %s24 = ssub.s32 16, 16
      %25 = vsyncadd [#allocation6], %s24
      %s27 = sshll.u32 %s0, 4
      %s28 = int_to_ptr.vmem [resolvable:$true] %s27
      %30 = dma.vmem_to_smem %s28, 16, [#allocation3], [#allocation6]
    $region5: #{tpu_custom_call.1} parent=1 // pred_fallthru
      _
    // Predicated region
    $region6: #{tpu_custom_call.1} parent=1 // pred_check
      _
    $region7: #{tpu_custom_call.1} parent=1 // pred_check_branch
      %32 = sbr.rel (0) target = $region9
    $region8: #{tpu_custom_call.1} parent=1 // pred_region
      %s34 = ssub.s32 16, 16
      %35 = vsyncadd [#allocation8], %s34
      %s37 = sshll.u32 %s1, 4
      %s38 = int_to_ptr.vmem [resolvable:$true] %s37
      %40 = dma.vmem_to_smem %s38, 16, [#allocation7], [#allocation8]
    $region9: #{tpu_custom_call.1} parent=1 // pred_fallthru
      _
    // Predicated region
    $region10: #{tpu_custom_call.1} parent=1 // pred_check
      _
    $region11: #{tpu_custom_call.1} parent=1 // pred_check_branch
      %42 = sbr.rel (0) target = $region13
    $region12: #{tpu_custom_call.1} parent=1 // pred_region
      _
    $region13: #{tpu_custom_call.1} parent=1 // pred_fallthru
      _
    // Predicated region
    $region14: #{tpu_custom_call.1} parent=1 // pred_check
      _
    $region15: #{tpu_custom_call.1} parent=1 // pred_check_branch
      %44 = sbr.rel (0) target = $region17
    $region16: #{tpu_custom_call.1} parent=1 // pred_region
      _
    $region17: #{tpu_custom_call.1} parent=1 // pred_fallthru
      _
    // Predicated region
    $region18: #{tpu_custom_call.1} parent=1 // pred_check
      _
    $region19: #{tpu_custom_call.1} parent=1 // pred_check_branch
      %46 = sbr.rel (0) target = $region21
    $region20: #{tpu_custom_call.1} parent=1 // pred_region
      _
    $region21: #{tpu_custom_call.1} parent=1 // pred_fallthru
      _
    // Predicated region
    $region22: #{tpu_custom_call.1} parent=1 // pred_check
      _
    $region23: #{tpu_custom_call.1} parent=1 // pred_check_branch
      %48 = sbr.rel (0) target = $region25
    $region24: #{tpu_custom_call.1} parent=1 // pred_region
      _
    $region25: #{tpu_custom_call.1} parent=1 // pred_fallthru
      _
    // Predicated region
    $region26: #{tpu_custom_call.1} parent=1 // pred_check
      _
    $region27: #{tpu_custom_call.1} parent=1 // pred_check_branch
      %50 = sbr.rel (0) target = $region29
    $region28: #{tpu_custom_call.1} parent=1 // pred_region
      %s52 = ssub.s32 512, 512
      %53 = vsyncadd [#allocation4], %s52
      %s54 = sshll.u32 [#allocation9], 4
      %s55 = int_to_ptr.vmem [resolvable:$true] %s54
      %60 = dma.hbm_to_vmem [thread:$0]  %s6, 512, %s55, [#allocation4], 128, 128, 8
    $region29: #{tpu_custom_call.1} parent=1 // pred_fallthru
      _
    // Predicated region
    $region30: #{tpu_custom_call.1} parent=1 // pred_check
      _
    $region31: #{tpu_custom_call.1} parent=1 // pred_check_branch
      %62 = sbr.rel (0) target = $region33
    $region32: #{tpu_custom_call.1} parent=1 // pred_region
      _
    $region33: #{tpu_custom_call.1} parent=1 // pred_fallthru
      _
    // Predicated region
    $region34: #{tpu_custom_call.1} parent=1 // pred_check
      _
    $region35: #{tpu_custom_call.1} parent=1 // pred_check_branch
      %64 = sbr.rel (0) target = $region37
    $region36: #{tpu_custom_call.1} parent=1 // pred_region
      _
    $region37: #{tpu_custom_call.1} parent=1 // pred_fallthru
      _
    // Predicated region
    $region38: #{tpu_custom_call.1} parent=1 // pred_check
      _
    $region39: #{tpu_custom_call.1} parent=1 // pred_check_branch
      %66 = sbr.rel (0) target = $region41
    $region40: #{tpu_custom_call.1} parent=1 // pred_region
      _
    $region41: #{tpu_custom_call.1} parent=1 // pred_fallthru
      _
    // Predicated region
    $region42: #{tpu_custom_call.1} parent=1 // pred_check
      _
    $region43: #{tpu_custom_call.1} parent=1 // pred_check_branch
      %68 = sbr.rel (0) target = $region45
    $region44: #{tpu_custom_call.1} parent=1 // pred_region
      %69 = dma.done [#allocation6], 16
    $region45: #{tpu_custom_call.1} parent=1 // pred_fallthru
      _
    // Predicated region
    $region46: #{tpu_custom_call.1} parent=1 // pred_check
      _
    $region47: #{tpu_custom_call.1} parent=1 // pred_check_branch
      %71 = sbr.rel (0) target = $region49
    $region48: #{tpu_custom_call.1} parent=1 // pred_region
      %72 = dma.done [#allocation8], 16
    $region49: #{tpu_custom_call.1} parent=1 // pred_fallthru
      _
    // Predicated region
    $region50: #{tpu_custom_call.1} parent=1 // pred_check
      _
    $region51: #{tpu_custom_call.1} parent=1 // pred_check_branch
      %74 = sbr.rel (0) target = $region53
    $region52: #{tpu_custom_call.1} parent=1 // pred_region
      %75 = dma.done [#allocation4], 512
    $region53: #{tpu_custom_call.1} parent=1 // pred_fallthru
      _
    %76 = sfence
    %v77 = vld [vmem:[%s2] sm:$0x1]
    %v78 = vld [vmem:[%s3] sm:$0x1]
    %v79 = vld [vmem:[%s4] sm:$0xff]
    %v80 = vld [vmem:[%s4 + $0x8] sm:$0xff]
    %v81 = vld [vmem:[%s4 + $0x10] sm:$0xff]
    %v82 = vld [vmem:[%s4 + $0x18] sm:$0xff]
    %v83 = vld [vmem:[%s5] sm:$0xff]
    %v84 = vld [vmem:[%s5 + $0x8] sm:$0xff]
    %v85 = vld [vmem:[%s5 + $0x10] sm:$0xff]
    %v86 = vld [vmem:[%s5 + $0x18] sm:$0xff]
    %v87 = vld [vmem:[#allocation9] sm:$0xff]
    %v88 = vld [vmem:[#allocation9 + $0x8] sm:$0xff]
    %v89 = vld [vmem:[#allocation9 + $0x10] sm:$0xff]
    %v90 = vld [vmem:[#allocation9 + $0x18] sm:$0xff]
    %v91 = vld [vmem:[%s7] sm:$0x1]
    %v92 = vld [vmem:[%s8] sm:$0x1]
    %v93 = vld [vmem:[#allocation2] sm:$0x1]
    %v94 = vlaneseq
    %v95 = vand.u32 %v94, 127
    loop: start=0, step=1, limit=7
    $region54: #{tpu_custom_call.1} parent=1 // loop_pre_header
      _
    $region55: #{tpu_custom_call.1} parent=1 // loop_header
      %s97 = sphi 0, %s101
      %p98 = scmp.ge.s32.totalorder %s97, 7
      %v102 = vphi 0.0, %v7751
      %v103 = vphi 0.0, %v111
    $region56: #{tpu_custom_call.1} parent=1 // loop_header_branch
      %100 = sbr.rel (%p98) target = $region60
    $region57: #{tpu_custom_call.1} parent=1 // loop_body
      %s104 = sld [smem:[#allocation3 + %s97]]
      %v105 = vstv %s104
      %v106 = vadd.f32 %v102, %v105
      %v107 = vstv %s97
      %vm108 = vcmp.eq.s32.totalorder %v95, %v107
      %s109 = vtos %v106
      %v110 = vstv %s109
      %v111 = vsel %vm108, %v110, %v103
      %s112 = sld [smem:[#allocation7 + %s97]]
      %s113 = smul.f32 %s112, 0.5
      %s114 = smul.f32 %s112, 0.16666667
      %116 = vset.pattern.permute.xlu0 0
      %117 = vperm.xlu0 %116, %v106
      %v118 = vpop.permute.xlu0 %117
      %v120 = vmul.f32 %v118, %v77
      %v121 = vadd.f32 %v120, %v78
      %v122 = vxor.u32 %v121, 2147483648
      %v123 = vmul.f32 %v122, 1.442695
      %v124 = vpow.pop %v123
      %v125 = vadd.f32 %v124, 1.0
      %v126 = vrcp.pop %v125
      %v127 = vmul.f32 1.0, %v126
      %v128 = vmul.f32 %v121, %v127
      %v129 = vlaneseq
      %v130 = vshrl.u32 %v129, 7
      %v131 = vsub.s32 0, %v130
      %v132 = vrot.slane %v128, %v131
      %v133 = vmul.f32 %v79, %v132
      %v134 = vmul.f32 %v80, %v132
      %v135 = vmul.f32 %v81, %v132
      %v136 = vmul.f32 %v82, %v132
      %vm137 = vcmask 261120
      %v138 = vsel %vm137, %v133, 0.0
      %139 = vadd.xlane.f32.xlu0 %v138
      %v140 = vpop.xlane.xlu0 %139
      %v141 = vsel %vm137, %v134, 0.0
      %142 = vadd.xlane.f32.xlu0 %v141
      %v143 = vpop.xlane.xlu0 %142
      %v144 = vsel %vm137, %v135, 0.0
      %145 = vadd.xlane.f32.xlu0 %v144
      %v146 = vpop.xlane.xlu0 %145
      %v147 = vsel %vm137, %v136, 0.0
      %148 = vadd.xlane.f32.xlu0 %v147
      %v149 = vpop.xlane.xlu0 %148
      %v150 = vadd.f32 %v140, %v83
      %v151 = vadd.f32 %v143, %v84
      %v152 = vadd.f32 %v146, %v85
      %v153 = vadd.f32 %v149, %v86
      %v154 = vxor.u32 %v150, 2147483648
      %v155 = vxor.u32 %v151, 2147483648
      %v156 = vxor.u32 %v152, 2147483648
      %v157 = vxor.u32 %v153, 2147483648
      %v158 = vmul.f32 %v154, 1.442695
      %v159 = vpow.pop %v158
      %v160 = vmul.f32 %v155, 1.442695
      %v161 = vpow.pop %v160
      %v162 = vmul.f32 %v156, 1.442695
      %v163 = vpow.pop %v162
      %v164 = vmul.f32 %v157, 1.442695
      %v165 = vpow.pop %v164
      %v166 = vadd.f32 %v159, 1.0
      %v167 = vadd.f32 %v161, 1.0
      %v168 = vadd.f32 %v163, 1.0
      %v169 = vadd.f32 %v165, 1.0
      %v170 = vrcp.pop %v166
      %v171 = vmul.f32 1.0, %v170
      %v172 = vrcp.pop %v167
      %v173 = vmul.f32 1.0, %v172
      %v174 = vrcp.pop %v168
      %v175 = vmul.f32 1.0, %v174
      %v176 = vrcp.pop %v169
      %v177 = vmul.f32 1.0, %v176
      %v178 = vmul.f32 %v150, %v171
      %v179 = vmul.f32 %v151, %v173
      %v180 = vmul.f32 %v152, %v175
      %v181 = vmul.f32 %v153, %v177
      %183 = vset.pattern.permute.xlu0 0
      %184 = vperm.xlu0 %183, %v178
      %v185 = vpop.permute.xlu0 %184
      %188 = vset.pattern.permute.xlu0 0
      %189 = vperm.xlu0 %188, %v179
      %v190 = vpop.permute.xlu0 %189
      %193 = vset.pattern.permute.xlu0 0
      %194 = vperm.xlu0 %193, %v180
      %v195 = vpop.permute.xlu0 %194
      %198 = vset.pattern.permute.xlu0 0
      %199 = vperm.xlu0 %198, %v181
      %v200 = vpop.permute.xlu0 %199
      %v202 = vmul.f32 %v87, %v185
      %v203 = vmul.f32 %v88, %v190
      %v204 = vmul.f32 %v89, %v195
      %v205 = vmul.f32 %v90, %v200
      %v206 = vsel %vm137, %v202, 0.0
      %v207 = vsel %vm137, %v203, 0.0
      %v208 = vadd.f32 %v206, %v207
      %v209 = vsel %vm137, %v204, 0.0
      %v210 = vadd.f32 %v208, %v209
      %v211 = vsel %vm137, %v205, 0.0
      %v212 = vadd.f32 %v210, %v211
      %v213 = vrot.slane %v212, 4
      %v214 = vadd.f32 %v212, %v213
      %v215 = vrot.slane %v214, 2
      %v216 = vadd.f32 %v214, %v215
      %v217 = vrot.slane %v216, 1
      %v218 = vadd.f32 %v216, %v217
      %v219 = vadd.f32 %v218, %v91
      %v220 = vxor.u32 %v219, 2147483648
      %v221 = vmul.f32 %v220, 1.442695
      %v222 = vpow.pop %v221
      %v223 = vadd.f32 %v222, 1.0
      %v224 = vrcp.pop %v223
      %v225 = vmul.f32 1.0, %v224
      %v226 = vmul.f32 %v219, %v225
      %v227 = vmul.f32 %v92, %v226
      %vm228 = vcmask 253952
      %v229 = vsel %vm228, %v227, 0.0
      %230 = vadd.xlane.f32.xlu0 %v229
      %v231 = vpop.xlane.xlu0 %230
      %v232 = vadd.f32 %v231, %v93
      %v233 = vstv %s113
      %v234 = vmul.f32 %v233, %v232
      %v235 = vadd.f32 %v106, %v234
      %237 = vset.pattern.permute.xlu0 0
      %238 = vperm.xlu0 %237, %v235
      %v239 = vpop.permute.xlu0 %238
      %v241 = vmul.f32 %v239, %v77
      %v242 = vadd.f32 %v241, %v78
      %v243 = vxor.u32 %v242, 2147483648
      %v244 = vmul.f32 %v243, 1.442695
      %v245 = vpow.pop %v244
      %v246 = vadd.f32 %v245, 1.0
      %v247 = vrcp.pop %v246
      %v248 = vmul.f32 1.0, %v247
      %v249 = vmul.f32 %v242, %v248
      %v250 = vlaneseq
      %v251 = vshrl.u32 %v250, 7
      %v252 = vsub.s32 0, %v251
      %v253 = vrot.slane %v249, %v252
      %v254 = vmul.f32 %v79, %v253
      %v255 = vmul.f32 %v80, %v253
      %v256 = vmul.f32 %v81, %v253
      %v257 = vmul.f32 %v82, %v253
      %v258 = vsel %vm137, %v254, 0.0
      %259 = vadd.xlane.f32.xlu0 %v258
      %v260 = vpop.xlane.xlu0 %259
      %v261 = vsel %vm137, %v255, 0.0
      %262 = vadd.xlane.f32.xlu0 %v261
      %v263 = vpop.xlane.xlu0 %262
      %v264 = vsel %vm137, %v256, 0.0
      %265 = vadd.xlane.f32.xlu0 %v264
      %v266 = vpop.xlane.xlu0 %265
      %v267 = vsel %vm137, %v257, 0.0
      %268 = vadd.xlane.f32.xlu0 %v267
      %v269 = vpop.xlane.xlu0 %268
      %v270 = vadd.f32 %v260, %v83
      %v271 = vadd.f32 %v263, %v84
      %v272 = vadd.f32 %v266, %v85
      %v273 = vadd.f32 %v269, %v86
      %v274 = vxor.u32 %v270, 2147483648
      %v275 = vxor.u32 %v271, 2147483648
      %v276 = vxor.u32 %v272, 2147483648
      %v277 = vxor.u32 %v273, 2147483648
      %v278 = vmul.f32 %v274, 1.442695
      %v279 = vpow.pop %v278
      %v280 = vmul.f32 %v275, 1.442695
      %v281 = vpow.pop %v280
      %v282 = vmul.f32 %v276, 1.442695
      %v283 = vpow.pop %v282
      %v284 = vmul.f32 %v277, 1.442695
      %v285 = vpow.pop %v284
      %v286 = vadd.f32 %v279, 1.0
      %v287 = vadd.f32 %v281, 1.0
      %v288 = vadd.f32 %v283, 1.0
      %v289 = vadd.f32 %v285, 1.0
      %v290 = vrcp.pop %v286
      %v291 = vmul.f32 1.0, %v290
      %v292 = vrcp.pop %v287
      %v293 = vmul.f32 1.0, %v292
      %v294 = vrcp.pop %v288
      %v295 = vmul.f32 1.0, %v294
      %v296 = vrcp.pop %v289
      %v297 = vmul.f32 1.0, %v296
      %v298 = vmul.f32 %v270, %v291
      %v299 = vmul.f32 %v271, %v293
      %v300 = vmul.f32 %v272, %v295
      %v301 = vmul.f32 %v273, %v297
      %303 = vset.pattern.permute.xlu0 0
      %304 = vperm.xlu0 %303, %v298
      %v305 = vpop.permute.xlu0 %304
      %308 = vset.pattern.permute.xlu0 0
      %309 = vperm.xlu0 %308, %v299
      %v310 = vpop.permute.xlu0 %309
      %313 = vset.pattern.permute.xlu0 0
      %314 = vperm.xlu0 %313, %v300
      %v315 = vpop.permute.xlu0 %314
      %318 = vset.pattern.permute.xlu0 0
      %319 = vperm.xlu0 %318, %v301
      %v320 = vpop.permute.xlu0 %319
      %v322 = vmul.f32 %v87, %v305
      %v323 = vmul.f32 %v88, %v310
      %v324 = vmul.f32 %v89, %v315
      %v325 = vmul.f32 %v90, %v320
      %v326 = vsel %vm137, %v322, 0.0
      %v327 = vsel %vm137, %v323, 0.0
      %v328 = vadd.f32 %v326, %v327
      %v329 = vsel %vm137, %v324, 0.0
      %v330 = vadd.f32 %v328, %v329
      %v331 = vsel %vm137, %v325, 0.0
      %v332 = vadd.f32 %v330, %v331
      %v333 = vrot.slane %v332, 4
      %v334 = vadd.f32 %v332, %v333
      %v335 = vrot.slane %v334, 2
      %v336 = vadd.f32 %v334, %v335
      %v337 = vrot.slane %v336, 1
      %v338 = vadd.f32 %v336, %v337
      %v339 = vadd.f32 %v338, %v91
      %v340 = vxor.u32 %v339, 2147483648
      %v341 = vmul.f32 %v340, 1.442695
      %v342 = vpow.pop %v341
      %v343 = vadd.f32 %v342, 1.0
      %v344 = vrcp.pop %v343
      %v345 = vmul.f32 1.0, %v344
      %v346 = vmul.f32 %v339, %v345
      %v347 = vmul.f32 %v92, %v346
      %v348 = vsel %vm228, %v347, 0.0
      %349 = vadd.xlane.f32.xlu0 %v348
      %v350 = vpop.xlane.xlu0 %349
      %v351 = vadd.f32 %v350, %v93
      %v352 = vmul.f32 %v233, %v351
      %v353 = vadd.f32 %v106, %v352
      %355 = vset.pattern.permute.xlu0 0
      %356 = vperm.xlu0 %355, %v353
      %v357 = vpop.permute.xlu0 %356
      %v359 = vmul.f32 %v357, %v77
      %v360 = vadd.f32 %v359, %v78
      %v361 = vxor.u32 %v360, 2147483648
      %v362 = vmul.f32 %v361, 1.442695
      %v363 = vpow.pop %v362
      %v364 = vadd.f32 %v363, 1.0
      %v365 = vrcp.pop %v364
      %v366 = vmul.f32 1.0, %v365
      %v367 = vmul.f32 %v360, %v366
      %v368 = vlaneseq
      %v369 = vshrl.u32 %v368, 7
      %v370 = vsub.s32 0, %v369
      %v371 = vrot.slane %v367, %v370
      %v372 = vmul.f32 %v79, %v371
      %v373 = vmul.f32 %v80, %v371
      %v374 = vmul.f32 %v81, %v371
      %v375 = vmul.f32 %v82, %v371
      %v376 = vsel %vm137, %v372, 0.0
      %377 = vadd.xlane.f32.xlu0 %v376
      %v378 = vpop.xlane.xlu0 %377
      %v379 = vsel %vm137, %v373, 0.0
      %380 = vadd.xlane.f32.xlu0 %v379
      %v381 = vpop.xlane.xlu0 %380
      %v382 = vsel %vm137, %v374, 0.0
      %383 = vadd.xlane.f32.xlu0 %v382
      %v384 = vpop.xlane.xlu0 %383
      %v385 = vsel %vm137, %v375, 0.0
      %386 = vadd.xlane.f32.xlu0 %v385
      %v387 = vpop.xlane.xlu0 %386
      %v388 = vadd.f32 %v378, %v83
      %v389 = vadd.f32 %v381, %v84
      %v390 = vadd.f32 %v384, %v85
      %v391 = vadd.f32 %v387, %v86
      %v392 = vxor.u32 %v388, 2147483648
      %v393 = vxor.u32 %v389, 2147483648
      %v394 = vxor.u32 %v390, 2147483648
      %v395 = vxor.u32 %v391, 2147483648
      %v396 = vmul.f32 %v392, 1.442695
      %v397 = vpow.pop %v396
      %v398 = vmul.f32 %v393, 1.442695
      %v399 = vpow.pop %v398
      %v400 = vmul.f32 %v394, 1.442695
      %v401 = vpow.pop %v400
      %v402 = vmul.f32 %v395, 1.442695
      %v403 = vpow.pop %v402
      %v404 = vadd.f32 %v397, 1.0
      %v405 = vadd.f32 %v399, 1.0
      %v406 = vadd.f32 %v401, 1.0
      %v407 = vadd.f32 %v403, 1.0
      %v408 = vrcp.pop %v404
      %v409 = vmul.f32 1.0, %v408
      %v410 = vrcp.pop %v405
      %v411 = vmul.f32 1.0, %v410
      %v412 = vrcp.pop %v406
      %v413 = vmul.f32 1.0, %v412
      %v414 = vrcp.pop %v407
      %v415 = vmul.f32 1.0, %v414
      %v416 = vmul.f32 %v388, %v409
      %v417 = vmul.f32 %v389, %v411
      %v418 = vmul.f32 %v390, %v413
      %v419 = vmul.f32 %v391, %v415
      %421 = vset.pattern.permute.xlu0 0
      %422 = vperm.xlu0 %421, %v416
      %v423 = vpop.permute.xlu0 %422
      %426 = vset.pattern.permute.xlu0 0
      %427 = vperm.xlu0 %426, %v417
      %v428 = vpop.permute.xlu0 %427
      %431 = vset.pattern.permute.xlu0 0
      %432 = vperm.xlu0 %431, %v418
      %v433 = vpop.permute.xlu0 %432
      %436 = vset.pattern.permute.xlu0 0
      %437 = vperm.xlu0 %436, %v419
      %v438 = vpop.permute.xlu0 %437
      %v440 = vmul.f32 %v87, %v423
      %v441 = vmul.f32 %v88, %v428
      %v442 = vmul.f32 %v89, %v433
      %v443 = vmul.f32 %v90, %v438
      %v444 = vsel %vm137, %v440, 0.0
      %v445 = vsel %vm137, %v441, 0.0
      %v446 = vadd.f32 %v444, %v445
      %v447 = vsel %vm137, %v442, 0.0
      %v448 = vadd.f32 %v446, %v447
      %v449 = vsel %vm137, %v443, 0.0
      %v450 = vadd.f32 %v448, %v449
      %v451 = vrot.slane %v450, 4
      %v452 = vadd.f32 %v450, %v451
      %v453 = vrot.slane %v452, 2
      %v454 = vadd.f32 %v452, %v453
      %v455 = vrot.slane %v454, 1
      %v456 = vadd.f32 %v454, %v455
      %v457 = vadd.f32 %v456, %v91
      %v458 = vxor.u32 %v457, 2147483648
      %v459 = vmul.f32 %v458, 1.442695
      %v460 = vpow.pop %v459
      %v461 = vadd.f32 %v460, 1.0
      %v462 = vrcp.pop %v461
      %v463 = vmul.f32 1.0, %v462
      %v464 = vmul.f32 %v457, %v463
      %v465 = vmul.f32 %v92, %v464
      %v466 = vsel %vm228, %v465, 0.0
      %467 = vadd.xlane.f32.xlu0 %v466
      %v468 = vpop.xlane.xlu0 %467
      %v469 = vadd.f32 %v468, %v93
      %v470 = vstv %s112
      %v471 = vmul.f32 %v470, %v469
      %v472 = vadd.f32 %v106, %v471
      %474 = vset.pattern.permute.xlu0 0
      %475 = vperm.xlu0 %474, %v472
      %v476 = vpop.permute.xlu0 %475
      %v478 = vmul.f32 %v476, %v77
      %v479 = vadd.f32 %v478, %v78
      %v480 = vxor.u32 %v479, 2147483648
      %v481 = vmul.f32 %v480, 1.442695
      %v482 = vpow.pop %v481
      %v483 = vadd.f32 %v482, 1.0
      %v484 = vrcp.pop %v483
      %v485 = vmul.f32 1.0, %v484
      %v486 = vmul.f32 %v479, %v485
      %v487 = vlaneseq
      %v488 = vshrl.u32 %v487, 7
      %v489 = vsub.s32 0, %v488
      %v490 = vrot.slane %v486, %v489
      %v491 = vmul.f32 %v79, %v490
      %v492 = vmul.f32 %v80, %v490
      %v493 = vmul.f32 %v81, %v490
      %v494 = vmul.f32 %v82, %v490
      %v495 = vsel %vm137, %v491, 0.0
      %496 = vadd.xlane.f32.xlu0 %v495
      %v497 = vpop.xlane.xlu0 %496
      %v498 = vsel %vm137, %v492, 0.0
      %499 = vadd.xlane.f32.xlu0 %v498
      %v500 = vpop.xlane.xlu0 %499
      %v501 = vsel %vm137, %v493, 0.0
      %502 = vadd.xlane.f32.xlu0 %v501
      %v503 = vpop.xlane.xlu0 %502
      %v504 = vsel %vm137, %v494, 0.0
      %505 = vadd.xlane.f32.xlu0 %v504
      %v506 = vpop.xlane.xlu0 %505
      %v507 = vadd.f32 %v497, %v83
      %v508 = vadd.f32 %v500, %v84
      %v509 = vadd.f32 %v503, %v85
      %v510 = vadd.f32 %v506, %v86
      %v511 = vxor.u32 %v507, 2147483648
      %v512 = vxor.u32 %v508, 2147483648
      %v513 = vxor.u32 %v509, 2147483648
      %v514 = vxor.u32 %v510, 2147483648
      %v515 = vmul.f32 %v511, 1.442695
      %v516 = vpow.pop %v515
      %v517 = vmul.f32 %v512, 1.442695
      %v518 = vpow.pop %v517
      %v519 = vmul.f32 %v513, 1.442695
      %v520 = vpow.pop %v519
      %v521 = vmul.f32 %v514, 1.442695
      %v522 = vpow.pop %v521
      %v523 = vadd.f32 %v516, 1.0
      %v524 = vadd.f32 %v518, 1.0
      %v525 = vadd.f32 %v520, 1.0
      %v526 = vadd.f32 %v522, 1.0
      %v527 = vrcp.pop %v523
      %v528 = vmul.f32 1.0, %v527
      %v529 = vrcp.pop %v524
      %v530 = vmul.f32 1.0, %v529
      %v531 = vrcp.pop %v525
      %v532 = vmul.f32 1.0, %v531
      %v533 = vrcp.pop %v526
      %v534 = vmul.f32 1.0, %v533
      %v535 = vmul.f32 %v507, %v528
      %v536 = vmul.f32 %v508, %v530
      %v537 = vmul.f32 %v509, %v532
      %v538 = vmul.f32 %v510, %v534
      %540 = vset.pattern.permute.xlu0 0
      %541 = vperm.xlu0 %540, %v535
      %v542 = vpop.permute.xlu0 %541
      %545 = vset.pattern.permute.xlu0 0
      %546 = vperm.xlu0 %545, %v536
      %v547 = vpop.permute.xlu0 %546
      %550 = vset.pattern.permute.xlu0 0
      %551 = vperm.xlu0 %550, %v537
      %v552 = vpop.permute.xlu0 %551
      %555 = vset.pattern.permute.xlu0 0
      %556 = vperm.xlu0 %555, %v538
      %v557 = vpop.permute.xlu0 %556
      %v559 = vmul.f32 %v87, %v542
      %v560 = vmul.f32 %v88, %v547
      %v561 = vmul.f32 %v89, %v552
      %v562 = vmul.f32 %v90, %v557
      %v563 = vsel %vm137, %v559, 0.0
      %v564 = vsel %vm137, %v560, 0.0
      %v565 = vadd.f32 %v563, %v564
      %v566 = vsel %vm137, %v561, 0.0
      %v567 = vadd.f32 %v565, %v566
      %v568 = vsel %vm137, %v562, 0.0
      %v569 = vadd.f32 %v567, %v568
      %v570 = vrot.slane %v569, 4
      %v571 = vadd.f32 %v569, %v570
      %v572 = vrot.slane %v571, 2
      %v573 = vadd.f32 %v571, %v572
      %v574 = vrot.slane %v573, 1
      %v575 = vadd.f32 %v573, %v574
      %v576 = vadd.f32 %v575, %v91
      %v577 = vxor.u32 %v576, 2147483648
      %v578 = vmul.f32 %v577, 1.442695
      %v579 = vpow.pop %v578
      %v580 = vadd.f32 %v579, 1.0
      %v581 = vrcp.pop %v580
      %v582 = vmul.f32 1.0, %v581
      %v583 = vmul.f32 %v576, %v582
      %v584 = vmul.f32 %v92, %v583
      %v585 = vsel %vm228, %v584, 0.0
      %586 = vadd.xlane.f32.xlu0 %v585
      %v587 = vpop.xlane.xlu0 %586
      %v588 = vadd.f32 %v587, %v93
      %v589 = vmul.f32 %v351, 2.0
      %v590 = vadd.f32 %v232, %v589
      %v591 = vmul.f32 %v469, 2.0
      %v592 = vadd.f32 %v590, %v591
      %v593 = vadd.f32 %v592, %v588
      %v594 = vstv %s114
      %v595 = vmul.f32 %v594, %v593
      %v596 = vadd.f32 %v106, %v595
      %598 = vset.pattern.permute.xlu0 0
      %599 = vperm.xlu0 %598, %v596
      %v600 = vpop.permute.xlu0 %599
      %v602 = vmul.f32 %v600, %v77
      %v603 = vadd.f32 %v602, %v78
      %v604 = vxor.u32 %v603, 2147483648
      %v605 = vmul.f32 %v604, 1.442695
      %v606 = vpow.pop %v605
      %v607 = vadd.f32 %v606, 1.0
      %v608 = vrcp.pop %v607
      %v609 = vmul.f32 1.0, %v608
      %v610 = vmul.f32 %v603, %v609
      %v611 = vlaneseq
      %v612 = vshrl.u32 %v611, 7
      %v613 = vsub.s32 0, %v612
      %v614 = vrot.slane %v610, %v613
      %v615 = vmul.f32 %v79, %v614
      %v616 = vmul.f32 %v80, %v614
      %v617 = vmul.f32 %v81, %v614
      %v618 = vmul.f32 %v82, %v614
      %v619 = vsel %vm137, %v615, 0.0
      %620 = vadd.xlane.f32.xlu0 %v619
      %v621 = vpop.xlane.xlu0 %620
      %v622 = vsel %vm137, %v616, 0.0
      %623 = vadd.xlane.f32.xlu0 %v622
      %v624 = vpop.xlane.xlu0 %623
      %v625 = vsel %vm137, %v617, 0.0
      %626 = vadd.xlane.f32.xlu0 %v625
      %v627 = vpop.xlane.xlu0 %626
      %v628 = vsel %vm137, %v618, 0.0
      %629 = vadd.xlane.f32.xlu0 %v628
      %v630 = vpop.xlane.xlu0 %629
      %v631 = vadd.f32 %v621, %v83
      %v632 = vadd.f32 %v624, %v84
      %v633 = vadd.f32 %v627, %v85
      %v634 = vadd.f32 %v630, %v86
      %v635 = vxor.u32 %v631, 2147483648
      %v636 = vxor.u32 %v632, 2147483648
      %v637 = vxor.u32 %v633, 2147483648
      %v638 = vxor.u32 %v634, 2147483648
      %v639 = vmul.f32 %v635, 1.442695
      %v640 = vpow.pop %v639
      %v641 = vmul.f32 %v636, 1.442695
      %v642 = vpow.pop %v641
      %v643 = vmul.f32 %v637, 1.442695
      %v644 = vpow.pop %v643
      %v645 = vmul.f32 %v638, 1.442695
      %v646 = vpow.pop %v645
      %v647 = vadd.f32 %v640, 1.0
      %v648 = vadd.f32 %v642, 1.0
      %v649 = vadd.f32 %v644, 1.0
      %v650 = vadd.f32 %v646, 1.0
      %v651 = vrcp.pop %v647
      %v652 = vmul.f32 1.0, %v651
      %v653 = vrcp.pop %v648
      %v654 = vmul.f32 1.0, %v653
      %v655 = vrcp.pop %v649
      %v656 = vmul.f32 1.0, %v655
      %v657 = vrcp.pop %v650
      %v658 = vmul.f32 1.0, %v657
      %v659 = vmul.f32 %v631, %v652
      %v660 = vmul.f32 %v632, %v654
      %v661 = vmul.f32 %v633, %v656
      %v662 = vmul.f32 %v634, %v658
      %664 = vset.pattern.permute.xlu0 0
      %665 = vperm.xlu0 %664, %v659
      %v666 = vpop.permute.xlu0 %665
      %669 = vset.pattern.permute.xlu0 0
      %670 = vperm.xlu0 %669, %v660
      %v671 = vpop.permute.xlu0 %670
      %674 = vset.pattern.permute.xlu0 0
      %675 = vperm.xlu0 %674, %v661
      %v676 = vpop.permute.xlu0 %675
      %679 = vset.pattern.permute.xlu0 0
      %680 = vperm.xlu0 %679, %v662
      %v681 = vpop.permute.xlu0 %680
      %v683 = vmul.f32 %v87, %v666
      %v684 = vmul.f32 %v88, %v671
      %v685 = vmul.f32 %v89, %v676
      %v686 = vmul.f32 %v90, %v681
      %v687 = vsel %vm137, %v683, 0.0
      %v688 = vsel %vm137, %v684, 0.0
      %v689 = vadd.f32 %v687, %v688
      %v690 = vsel %vm137, %v685, 0.0
      %v691 = vadd.f32 %v689, %v690
      %v692 = vsel %vm137, %v686, 0.0
      %v693 = vadd.f32 %v691, %v692
      %v694 = vrot.slane %v693, 4
      %v695 = vadd.f32 %v693, %v694
      %v696 = vrot.slane %v695, 2
      %v697 = vadd.f32 %v695, %v696
      %v698 = vrot.slane %v697, 1
      %v699 = vadd.f32 %v697, %v698
      %v700 = vadd.f32 %v699, %v91
      %v701 = vxor.u32 %v700, 2147483648
      %v702 = vmul.f32 %v701, 1.442695
      %v703 = vpow.pop %v702
      %v704 = vadd.f32 %v703, 1.0
      %v705 = vrcp.pop %v704
      %v706 = vmul.f32 1.0, %v705
      %v707 = vmul.f32 %v700, %v706
      %v708 = vmul.f32 %v92, %v707
      %v709 = vsel %vm228, %v708, 0.0
      %710 = vadd.xlane.f32.xlu0 %v709
      %v711 = vpop.xlane.xlu0 %710
      %v712 = vadd.f32 %v711, %v93
      %v713 = vmul.f32 %v233, %v712
      %v714 = vadd.f32 %v596, %v713
      %716 = vset.pattern.permute.xlu0 0
      %717 = vperm.xlu0 %716, %v714
      %v718 = vpop.permute.xlu0 %717
      %v720 = vmul.f32 %v718, %v77
      %v721 = vadd.f32 %v720, %v78
      %v722 = vxor.u32 %v721, 2147483648
      %v723 = vmul.f32 %v722, 1.442695
      %v724 = vpow.pop %v723
      %v725 = vadd.f32 %v724, 1.0
      %v726 = vrcp.pop %v725
      %v727 = vmul.f32 1.0, %v726
      %v728 = vmul.f32 %v721, %v727
      %v729 = vlaneseq
      %v730 = vshrl.u32 %v729, 7
      %v731 = vsub.s32 0, %v730
      %v732 = vrot.slane %v728, %v731
      %v733 = vmul.f32 %v79, %v732
      %v734 = vmul.f32 %v80, %v732
      %v735 = vmul.f32 %v81, %v732
      %v736 = vmul.f32 %v82, %v732
      %v737 = vsel %vm137, %v733, 0.0
      %738 = vadd.xlane.f32.xlu0 %v737
      %v739 = vpop.xlane.xlu0 %738
      %v740 = vsel %vm137, %v734, 0.0
      %741 = vadd.xlane.f32.xlu0 %v740
      %v742 = vpop.xlane.xlu0 %741
      %v743 = vsel %vm137, %v735, 0.0
      %744 = vadd.xlane.f32.xlu0 %v743
      %v745 = vpop.xlane.xlu0 %744
      %v746 = vsel %vm137, %v736, 0.0
      %747 = vadd.xlane.f32.xlu0 %v746
      %v748 = vpop.xlane.xlu0 %747
      %v749 = vadd.f32 %v739, %v83
      %v750 = vadd.f32 %v742, %v84
      %v751 = vadd.f32 %v745, %v85
      %v752 = vadd.f32 %v748, %v86
      %v753 = vxor.u32 %v749, 2147483648
      %v754 = vxor.u32 %v750, 2147483648
      %v755 = vxor.u32 %v751, 2147483648
      %v756 = vxor.u32 %v752, 2147483648
      %v757 = vmul.f32 %v753, 1.442695
      %v758 = vpow.pop %v757
      %v759 = vmul.f32 %v754, 1.442695
      %v760 = vpow.pop %v759
      %v761 = vmul.f32 %v755, 1.442695
      %v762 = vpow.pop %v761
      %v763 = vmul.f32 %v756, 1.442695
      %v764 = vpow.pop %v763
      %v765 = vadd.f32 %v758, 1.0
      %v766 = vadd.f32 %v760, 1.0
      %v767 = vadd.f32 %v762, 1.0
      %v768 = vadd.f32 %v764, 1.0
      %v769 = vrcp.pop %v765
      %v770 = vmul.f32 1.0, %v769
      %v771 = vrcp.pop %v766
      %v772 = vmul.f32 1.0, %v771
      %v773 = vrcp.pop %v767
      %v774 = vmul.f32 1.0, %v773
      %v775 = vrcp.pop %v768
      %v776 = vmul.f32 1.0, %v775
      %v777 = vmul.f32 %v749, %v770
      %v778 = vmul.f32 %v750, %v772
      %v779 = vmul.f32 %v751, %v774
      %v780 = vmul.f32 %v752, %v776
      %782 = vset.pattern.permute.xlu0 0
      %783 = vperm.xlu0 %782, %v777
      %v784 = vpop.permute.xlu0 %783
      %787 = vset.pattern.permute.xlu0 0
      %788 = vperm.xlu0 %787, %v778
      %v789 = vpop.permute.xlu0 %788
      %792 = vset.pattern.permute.xlu0 0
      %793 = vperm.xlu0 %792, %v779
      %v794 = vpop.permute.xlu0 %793
      %797 = vset.pattern.permute.xlu0 0
      %798 = vperm.xlu0 %797, %v780
      %v799 = vpop.permute.xlu0 %798
      %v801 = vmul.f32 %v87, %v784
      %v802 = vmul.f32 %v88, %v789
      %v803 = vmul.f32 %v89, %v794
      %v804 = vmul.f32 %v90, %v799
      %v805 = vsel %vm137, %v801, 0.0
      %v806 = vsel %vm137, %v802, 0.0
      %v807 = vadd.f32 %v805, %v806
      %v808 = vsel %vm137, %v803, 0.0
      %v809 = vadd.f32 %v807, %v808
      %v810 = vsel %vm137, %v804, 0.0
      %v811 = vadd.f32 %v809, %v810
      %v812 = vrot.slane %v811, 4
      %v813 = vadd.f32 %v811, %v812
      %v814 = vrot.slane %v813, 2
      %v815 = vadd.f32 %v813, %v814
      %v816 = vrot.slane %v815, 1
      %v817 = vadd.f32 %v815, %v816
      %v818 = vadd.f32 %v817, %v91
      %v819 = vxor.u32 %v818, 2147483648
      %v820 = vmul.f32 %v819, 1.442695
      %v821 = vpow.pop %v820
      %v822 = vadd.f32 %v821, 1.0
      %v823 = vrcp.pop %v822
      %v824 = vmul.f32 1.0, %v823
      %v825 = vmul.f32 %v818, %v824
      %v826 = vmul.f32 %v92, %v825
      %v827 = vsel %vm228, %v826, 0.0
      %828 = vadd.xlane.f32.xlu0 %v827
      %v829 = vpop.xlane.xlu0 %828
      %v830 = vadd.f32 %v829, %v93
      %v831 = vmul.f32 %v233, %v830
      %v832 = vadd.f32 %v596, %v831
      %834 = vset.pattern.permute.xlu0 0
      %835 = vperm.xlu0 %834, %v832
      %v836 = vpop.permute.xlu0 %835
      %v838 = vmul.f32 %v836, %v77
      %v839 = vadd.f32 %v838, %v78
      %v840 = vxor.u32 %v839, 2147483648
      %v841 = vmul.f32 %v840, 1.442695
      %v842 = vpow.pop %v841
      %v843 = vadd.f32 %v842, 1.0
      %v844 = vrcp.pop %v843
      %v845 = vmul.f32 1.0, %v844
      %v846 = vmul.f32 %v839, %v845
      %v847 = vlaneseq
      %v848 = vshrl.u32 %v847, 7
      %v849 = vsub.s32 0, %v848
      %v850 = vrot.slane %v846, %v849
      %v851 = vmul.f32 %v79, %v850
      %v852 = vmul.f32 %v80, %v850
      %v853 = vmul.f32 %v81, %v850
      %v854 = vmul.f32 %v82, %v850
      %v855 = vsel %vm137, %v851, 0.0
      %856 = vadd.xlane.f32.xlu0 %v855
      %v857 = vpop.xlane.xlu0 %856
      %v858 = vsel %vm137, %v852, 0.0
      %859 = vadd.xlane.f32.xlu0 %v858
      %v860 = vpop.xlane.xlu0 %859
      %v861 = vsel %vm137, %v853, 0.0
      %862 = vadd.xlane.f32.xlu0 %v861
      %v863 = vpop.xlane.xlu0 %862
      %v864 = vsel %vm137, %v854, 0.0
      %865 = vadd.xlane.f32.xlu0 %v864
      %v866 = vpop.xlane.xlu0 %865
      %v867 = vadd.f32 %v857, %v83
      %v868 = vadd.f32 %v860, %v84
      %v869 = vadd.f32 %v863, %v85
      %v870 = vadd.f32 %v866, %v86
      %v871 = vxor.u32 %v867, 2147483648
      %v872 = vxor.u32 %v868, 2147483648
      %v873 = vxor.u32 %v869, 2147483648
      %v874 = vxor.u32 %v870, 2147483648
      %v875 = vmul.f32 %v871, 1.442695
      %v876 = vpow.pop %v875
      %v877 = vmul.f32 %v872, 1.442695
      %v878 = vpow.pop %v877
      %v879 = vmul.f32 %v873, 1.442695
      %v880 = vpow.pop %v879
      %v881 = vmul.f32 %v874, 1.442695
      %v882 = vpow.pop %v881
      %v883 = vadd.f32 %v876, 1.0
      %v884 = vadd.f32 %v878, 1.0
      %v885 = vadd.f32 %v880, 1.0
      %v886 = vadd.f32 %v882, 1.0
      %v887 = vrcp.pop %v883
      %v888 = vmul.f32 1.0, %v887
      %v889 = vrcp.pop %v884
      %v890 = vmul.f32 1.0, %v889
      %v891 = vrcp.pop %v885
      %v892 = vmul.f32 1.0, %v891
      %v893 = vrcp.pop %v886
      %v894 = vmul.f32 1.0, %v893
      %v895 = vmul.f32 %v867, %v888
      %v896 = vmul.f32 %v868, %v890
      %v897 = vmul.f32 %v869, %v892
      %v898 = vmul.f32 %v870, %v894
      %900 = vset.pattern.permute.xlu0 0
      %901 = vperm.xlu0 %900, %v895
      %v902 = vpop.permute.xlu0 %901
      %905 = vset.pattern.permute.xlu0 0
      %906 = vperm.xlu0 %905, %v896
      %v907 = vpop.permute.xlu0 %906
      %910 = vset.pattern.permute.xlu0 0
      %911 = vperm.xlu0 %910, %v897
      %v912 = vpop.permute.xlu0 %911
      %915 = vset.pattern.permute.xlu0 0
      %916 = vperm.xlu0 %915, %v898
      %v917 = vpop.permute.xlu0 %916
      %v919 = vmul.f32 %v87, %v902
      %v920 = vmul.f32 %v88, %v907
      %v921 = vmul.f32 %v89, %v912
      %v922 = vmul.f32 %v90, %v917
      %v923 = vsel %vm137, %v919, 0.0
      %v924 = vsel %vm137, %v920, 0.0
      %v925 = vadd.f32 %v923, %v924
      %v926 = vsel %vm137, %v921, 0.0
      %v927 = vadd.f32 %v925, %v926
      %v928 = vsel %vm137, %v922, 0.0
      %v929 = vadd.f32 %v927, %v928
      %v930 = vrot.slane %v929, 4
      %v931 = vadd.f32 %v929, %v930
      %v932 = vrot.slane %v931, 2
      %v933 = vadd.f32 %v931, %v932
      %v934 = vrot.slane %v933, 1
      %v935 = vadd.f32 %v933, %v934
      %v936 = vadd.f32 %v935, %v91
      %v937 = vxor.u32 %v936, 2147483648
      %v938 = vmul.f32 %v937, 1.442695
      %v939 = vpow.pop %v938
      %v940 = vadd.f32 %v939, 1.0
      %v941 = vrcp.pop %v940
      %v942 = vmul.f32 1.0, %v941
      %v943 = vmul.f32 %v936, %v942
      %v944 = vmul.f32 %v92, %v943
      %v945 = vsel %vm228, %v944, 0.0
      %946 = vadd.xlane.f32.xlu0 %v945
      %v947 = vpop.xlane.xlu0 %946
      %v948 = vadd.f32 %v947, %v93
      %v949 = vmul.f32 %v470, %v948
      %v950 = vadd.f32 %v596, %v949
      %952 = vset.pattern.permute.xlu0 0
      %953 = vperm.xlu0 %952, %v950
      %v954 = vpop.permute.xlu0 %953
      %v956 = vmul.f32 %v954, %v77
      %v957 = vadd.f32 %v956, %v78
      %v958 = vxor.u32 %v957, 2147483648
      %v959 = vmul.f32 %v958, 1.442695
      %v960 = vpow.pop %v959
      %v961 = vadd.f32 %v960, 1.0
      %v962 = vrcp.pop %v961
      %v963 = vmul.f32 1.0, %v962
      %v964 = vmul.f32 %v957, %v963
      %v965 = vlaneseq
      %v966 = vshrl.u32 %v965, 7
      %v967 = vsub.s32 0, %v966
      %v968 = vrot.slane %v964, %v967
      %v969 = vmul.f32 %v79, %v968
      %v970 = vmul.f32 %v80, %v968
      %v971 = vmul.f32 %v81, %v968
      %v972 = vmul.f32 %v82, %v968
      %v973 = vsel %vm137, %v969, 0.0
      %974 = vadd.xlane.f32.xlu0 %v973
      %v975 = vpop.xlane.xlu0 %974
      %v976 = vsel %vm137, %v970, 0.0
      %977 = vadd.xlane.f32.xlu0 %v976
      %v978 = vpop.xlane.xlu0 %977
      %v979 = vsel %vm137, %v971, 0.0
      %980 = vadd.xlane.f32.xlu0 %v979
      %v981 = vpop.xlane.xlu0 %980
      %v982 = vsel %vm137, %v972, 0.0
      %983 = vadd.xlane.f32.xlu0 %v982
      %v984 = vpop.xlane.xlu0 %983
      %v985 = vadd.f32 %v975, %v83
      %v986 = vadd.f32 %v978, %v84
      %v987 = vadd.f32 %v981, %v85
      %v988 = vadd.f32 %v984, %v86
      %v989 = vxor.u32 %v985, 2147483648
      %v990 = vxor.u32 %v986, 2147483648
      %v991 = vxor.u32 %v987, 2147483648
      %v992 = vxor.u32 %v988, 2147483648
      %v993 = vmul.f32 %v989, 1.442695
      %v994 = vpow.pop %v993
      %v995 = vmul.f32 %v990, 1.442695
      %v996 = vpow.pop %v995
      %v997 = vmul.f32 %v991, 1.442695
      %v998 = vpow.pop %v997
      %v999 = vmul.f32 %v992, 1.442695
      %v1000 = vpow.pop %v999
      %v1001 = vadd.f32 %v994, 1.0
      %v1002 = vadd.f32 %v996, 1.0
      %v1003 = vadd.f32 %v998, 1.0
      %v1004 = vadd.f32 %v1000, 1.0
      %v1005 = vrcp.pop %v1001
      %v1006 = vmul.f32 1.0, %v1005
      %v1007 = vrcp.pop %v1002
      %v1008 = vmul.f32 1.0, %v1007
      %v1009 = vrcp.pop %v1003
      %v1010 = vmul.f32 1.0, %v1009
      %v1011 = vrcp.pop %v1004
      %v1012 = vmul.f32 1.0, %v1011
      %v1013 = vmul.f32 %v985, %v1006
      %v1014 = vmul.f32 %v986, %v1008
      %v1015 = vmul.f32 %v987, %v1010
      %v1016 = vmul.f32 %v988, %v1012
      %1018 = vset.pattern.permute.xlu0 0
      %1019 = vperm.xlu0 %1018, %v1013
      %v1020 = vpop.permute.xlu0 %1019
      %1023 = vset.pattern.permute.xlu0 0
      %1024 = vperm.xlu0 %1023, %v1014
      %v1025 = vpop.permute.xlu0 %1024
      %1028 = vset.pattern.permute.xlu0 0
      %1029 = vperm.xlu0 %1028, %v1015
      %v1030 = vpop.permute.xlu0 %1029
      %1033 = vset.pattern.permute.xlu0 0
      %1034 = vperm.xlu0 %1033, %v1016
      %v1035 = vpop.permute.xlu0 %1034
      %v1037 = vmul.f32 %v87, %v1020
      %v1038 = vmul.f32 %v88, %v1025
      %v1039 = vmul.f32 %v89, %v1030
      %v1040 = vmul.f32 %v90, %v1035
      %v1041 = vsel %vm137, %v1037, 0.0
      %v1042 = vsel %vm137, %v1038, 0.0
      %v1043 = vadd.f32 %v1041, %v1042
      %v1044 = vsel %vm137, %v1039, 0.0
      %v1045 = vadd.f32 %v1043, %v1044
      %v1046 = vsel %vm137, %v1040, 0.0
      %v1047 = vadd.f32 %v1045, %v1046
      %v1048 = vrot.slane %v1047, 4
      %v1049 = vadd.f32 %v1047, %v1048
      %v1050 = vrot.slane %v1049, 2
      %v1051 = vadd.f32 %v1049, %v1050
      %v1052 = vrot.slane %v1051, 1
      %v1053 = vadd.f32 %v1051, %v1052
      %v1054 = vadd.f32 %v1053, %v91
      %v1055 = vxor.u32 %v1054, 2147483648
      %v1056 = vmul.f32 %v1055, 1.442695
      %v1057 = vpow.pop %v1056
      %v1058 = vadd.f32 %v1057, 1.0
      %v1059 = vrcp.pop %v1058
      %v1060 = vmul.f32 1.0, %v1059
      %v1061 = vmul.f32 %v1054, %v1060
      %v1062 = vmul.f32 %v92, %v1061
      %v1063 = vsel %vm228, %v1062, 0.0
      %1064 = vadd.xlane.f32.xlu0 %v1063
      %v1065 = vpop.xlane.xlu0 %1064
      %v1066 = vadd.f32 %v1065, %v93
      %v1067 = vmul.f32 %v830, 2.0
      %v1068 = vadd.f32 %v712, %v1067
      %v1069 = vmul.f32 %v948, 2.0
      %v1070 = vadd.f32 %v1068, %v1069
      %v1071 = vadd.f32 %v1070, %v1066
      %v1072 = vmul.f32 %v594, %v1071
      %v1073 = vadd.f32 %v596, %v1072
      %1075 = vset.pattern.permute.xlu0 0
      %1076 = vperm.xlu0 %1075, %v1073
      %v1077 = vpop.permute.xlu0 %1076
      %v1079 = vmul.f32 %v1077, %v77
      %v1080 = vadd.f32 %v1079, %v78
      %v1081 = vxor.u32 %v1080, 2147483648
      %v1082 = vmul.f32 %v1081, 1.442695
      %v1083 = vpow.pop %v1082
      %v1084 = vadd.f32 %v1083, 1.0
      %v1085 = vrcp.pop %v1084
      %v1086 = vmul.f32 1.0, %v1085
      %v1087 = vmul.f32 %v1080, %v1086
      %v1088 = vlaneseq
      %v1089 = vshrl.u32 %v1088, 7
      %v1090 = vsub.s32 0, %v1089
      %v1091 = vrot.slane %v1087, %v1090
      %v1092 = vmul.f32 %v79, %v1091
      %v1093 = vmul.f32 %v80, %v1091
      %v1094 = vmul.f32 %v81, %v1091
      %v1095 = vmul.f32 %v82, %v1091
      %v1096 = vsel %vm137, %v1092, 0.0
      %1097 = vadd.xlane.f32.xlu0 %v1096
      %v1098 = vpop.xlane.xlu0 %1097
      %v1099 = vsel %vm137, %v1093, 0.0
      %1100 = vadd.xlane.f32.xlu0 %v1099
      %v1101 = vpop.xlane.xlu0 %1100
      %v1102 = vsel %vm137, %v1094, 0.0
      %1103 = vadd.xlane.f32.xlu0 %v1102
      %v1104 = vpop.xlane.xlu0 %1103
      %v1105 = vsel %vm137, %v1095, 0.0
      %1106 = vadd.xlane.f32.xlu0 %v1105
      %v1107 = vpop.xlane.xlu0 %1106
      %v1108 = vadd.f32 %v1098, %v83
      %v1109 = vadd.f32 %v1101, %v84
      %v1110 = vadd.f32 %v1104, %v85
      %v1111 = vadd.f32 %v1107, %v86
      %v1112 = vxor.u32 %v1108, 2147483648
      %v1113 = vxor.u32 %v1109, 2147483648
      %v1114 = vxor.u32 %v1110, 2147483648
      %v1115 = vxor.u32 %v1111, 2147483648
      %v1116 = vmul.f32 %v1112, 1.442695
      %v1117 = vpow.pop %v1116
      %v1118 = vmul.f32 %v1113, 1.442695
      %v1119 = vpow.pop %v1118
      %v1120 = vmul.f32 %v1114, 1.442695
      %v1121 = vpow.pop %v1120
      %v1122 = vmul.f32 %v1115, 1.442695
      %v1123 = vpow.pop %v1122
      %v1124 = vadd.f32 %v1117, 1.0
      %v1125 = vadd.f32 %v1119, 1.0
      %v1126 = vadd.f32 %v1121, 1.0
      %v1127 = vadd.f32 %v1123, 1.0
      %v1128 = vrcp.pop %v1124
      %v1129 = vmul.f32 1.0, %v1128
      %v1130 = vrcp.pop %v1125
      %v1131 = vmul.f32 1.0, %v1130
      %v1132 = vrcp.pop %v1126
      %v1133 = vmul.f32 1.0, %v1132
      %v1134 = vrcp.pop %v1127
      %v1135 = vmul.f32 1.0, %v1134
      %v1136 = vmul.f32 %v1108, %v1129
      %v1137 = vmul.f32 %v1109, %v1131
      %v1138 = vmul.f32 %v1110, %v1133
      %v1139 = vmul.f32 %v1111, %v1135
      %1141 = vset.pattern.permute.xlu0 0
      %1142 = vperm.xlu0 %1141, %v1136
      %v1143 = vpop.permute.xlu0 %1142
      %1146 = vset.pattern.permute.xlu0 0
      %1147 = vperm.xlu0 %1146, %v1137
      %v1148 = vpop.permute.xlu0 %1147
      %1151 = vset.pattern.permute.xlu0 0
      %1152 = vperm.xlu0 %1151, %v1138
      %v1153 = vpop.permute.xlu0 %1152
      %1156 = vset.pattern.permute.xlu0 0
      %1157 = vperm.xlu0 %1156, %v1139
      %v1158 = vpop.permute.xlu0 %1157
      %v1160 = vmul.f32 %v87, %v1143
      %v1161 = vmul.f32 %v88, %v1148
      %v1162 = vmul.f32 %v89, %v1153
      %v1163 = vmul.f32 %v90, %v1158
      %v1164 = vsel %vm137, %v1160, 0.0
      %v1165 = vsel %vm137, %v1161, 0.0
      %v1166 = vadd.f32 %v1164, %v1165
      %v1167 = vsel %vm137, %v1162, 0.0
      %v1168 = vadd.f32 %v1166, %v1167
      %v1169 = vsel %vm137, %v1163, 0.0
      %v1170 = vadd.f32 %v1168, %v1169
      %v1171 = vrot.slane %v1170, 4
      %v1172 = vadd.f32 %v1170, %v1171
      %v1173 = vrot.slane %v1172, 2
      %v1174 = vadd.f32 %v1172, %v1173
      %v1175 = vrot.slane %v1174, 1
      %v1176 = vadd.f32 %v1174, %v1175
      %v1177 = vadd.f32 %v1176, %v91
      %v1178 = vxor.u32 %v1177, 2147483648
      %v1179 = vmul.f32 %v1178, 1.442695
      %v1180 = vpow.pop %v1179
      %v1181 = vadd.f32 %v1180, 1.0
      %v1182 = vrcp.pop %v1181
      %v1183 = vmul.f32 1.0, %v1182
      %v1184 = vmul.f32 %v1177, %v1183
      %v1185 = vmul.f32 %v92, %v1184
      %v1186 = vsel %vm228, %v1185, 0.0
      %1187 = vadd.xlane.f32.xlu0 %v1186
      %v1188 = vpop.xlane.xlu0 %1187
      %v1189 = vadd.f32 %v1188, %v93
      %v1190 = vmul.f32 %v233, %v1189
      %v1191 = vadd.f32 %v1073, %v1190
      %1193 = vset.pattern.permute.xlu0 0
      %1194 = vperm.xlu0 %1193, %v1191
      %v1195 = vpop.permute.xlu0 %1194
      %v1197 = vmul.f32 %v1195, %v77
      %v1198 = vadd.f32 %v1197, %v78
      %v1199 = vxor.u32 %v1198, 2147483648
      %v1200 = vmul.f32 %v1199, 1.442695
      %v1201 = vpow.pop %v1200
      %v1202 = vadd.f32 %v1201, 1.0
      %v1203 = vrcp.pop %v1202
      %v1204 = vmul.f32 1.0, %v1203
      %v1205 = vmul.f32 %v1198, %v1204
      %v1206 = vlaneseq
      %v1207 = vshrl.u32 %v1206, 7
      %v1208 = vsub.s32 0, %v1207
      %v1209 = vrot.slane %v1205, %v1208
      %v1210 = vmul.f32 %v79, %v1209
      %v1211 = vmul.f32 %v80, %v1209
      %v1212 = vmul.f32 %v81, %v1209
      %v1213 = vmul.f32 %v82, %v1209
      %v1214 = vsel %vm137, %v1210, 0.0
      %1215 = vadd.xlane.f32.xlu0 %v1214
      %v1216 = vpop.xlane.xlu0 %1215
      %v1217 = vsel %vm137, %v1211, 0.0
      %1218 = vadd.xlane.f32.xlu0 %v1217
      %v1219 = vpop.xlane.xlu0 %1218
      %v1220 = vsel %vm137, %v1212, 0.0
      %1221 = vadd.xlane.f32.xlu0 %v1220
      %v1222 = vpop.xlane.xlu0 %1221
      %v1223 = vsel %vm137, %v1213, 0.0
      %1224 = vadd.xlane.f32.xlu0 %v1223
      %v1225 = vpop.xlane.xlu0 %1224
      %v1226 = vadd.f32 %v1216, %v83
      %v1227 = vadd.f32 %v1219, %v84
      %v1228 = vadd.f32 %v1222, %v85
      %v1229 = vadd.f32 %v1225, %v86
      %v1230 = vxor.u32 %v1226, 2147483648
      %v1231 = vxor.u32 %v1227, 2147483648
      %v1232 = vxor.u32 %v1228, 2147483648
      %v1233 = vxor.u32 %v1229, 2147483648
      %v1234 = vmul.f32 %v1230, 1.442695
      %v1235 = vpow.pop %v1234
      %v1236 = vmul.f32 %v1231, 1.442695
      %v1237 = vpow.pop %v1236
      %v1238 = vmul.f32 %v1232, 1.442695
      %v1239 = vpow.pop %v1238
      %v1240 = vmul.f32 %v1233, 1.442695
      %v1241 = vpow.pop %v1240
      %v1242 = vadd.f32 %v1235, 1.0
      %v1243 = vadd.f32 %v1237, 1.0
      %v1244 = vadd.f32 %v1239, 1.0
      %v1245 = vadd.f32 %v1241, 1.0
      %v1246 = vrcp.pop %v1242
      %v1247 = vmul.f32 1.0, %v1246
      %v1248 = vrcp.pop %v1243
      %v1249 = vmul.f32 1.0, %v1248
      %v1250 = vrcp.pop %v1244
      %v1251 = vmul.f32 1.0, %v1250
      %v1252 = vrcp.pop %v1245
      %v1253 = vmul.f32 1.0, %v1252
      %v1254 = vmul.f32 %v1226, %v1247
      %v1255 = vmul.f32 %v1227, %v1249
      %v1256 = vmul.f32 %v1228, %v1251
      %v1257 = vmul.f32 %v1229, %v1253
      %1259 = vset.pattern.permute.xlu0 0
      %1260 = vperm.xlu0 %1259, %v1254
      %v1261 = vpop.permute.xlu0 %1260
      %1264 = vset.pattern.permute.xlu0 0
      %1265 = vperm.xlu0 %1264, %v1255
      %v1266 = vpop.permute.xlu0 %1265
      %1269 = vset.pattern.permute.xlu0 0
      %1270 = vperm.xlu0 %1269, %v1256
      %v1271 = vpop.permute.xlu0 %1270
      %1274 = vset.pattern.permute.xlu0 0
      %1275 = vperm.xlu0 %1274, %v1257
      %v1276 = vpop.permute.xlu0 %1275
      %v1278 = vmul.f32 %v87, %v1261
      %v1279 = vmul.f32 %v88, %v1266
      %v1280 = vmul.f32 %v89, %v1271
      %v1281 = vmul.f32 %v90, %v1276
      %v1282 = vsel %vm137, %v1278, 0.0
      %v1283 = vsel %vm137, %v1279, 0.0
      %v1284 = vadd.f32 %v1282, %v1283
      %v1285 = vsel %vm137, %v1280, 0.0
      %v1286 = vadd.f32 %v1284, %v1285
      %v1287 = vsel %vm137, %v1281, 0.0
      %v1288 = vadd.f32 %v1286, %v1287
      %v1289 = vrot.slane %v1288, 4
      %v1290 = vadd.f32 %v1288, %v1289
      %v1291 = vrot.slane %v1290, 2
      %v1292 = vadd.f32 %v1290, %v1291
      %v1293 = vrot.slane %v1292, 1
      %v1294 = vadd.f32 %v1292, %v1293
      %v1295 = vadd.f32 %v1294, %v91
      %v1296 = vxor.u32 %v1295, 2147483648
      %v1297 = vmul.f32 %v1296, 1.442695
      %v1298 = vpow.pop %v1297
      %v1299 = vadd.f32 %v1298, 1.0
      %v1300 = vrcp.pop %v1299
      %v1301 = vmul.f32 1.0, %v1300
      %v1302 = vmul.f32 %v1295, %v1301
      %v1303 = vmul.f32 %v92, %v1302
      %v1304 = vsel %vm228, %v1303, 0.0
      %1305 = vadd.xlane.f32.xlu0 %v1304
      %v1306 = vpop.xlane.xlu0 %1305
      %v1307 = vadd.f32 %v1306, %v93
      %v1308 = vmul.f32 %v233, %v1307
      %v1309 = vadd.f32 %v1073, %v1308
      %1311 = vset.pattern.permute.xlu0 0
      %1312 = vperm.xlu0 %1311, %v1309
      %v1313 = vpop.permute.xlu0 %1312
      %v1315 = vmul.f32 %v1313, %v77
      %v1316 = vadd.f32 %v1315, %v78
      %v1317 = vxor.u32 %v1316, 2147483648
      %v1318 = vmul.f32 %v1317, 1.442695
      %v1319 = vpow.pop %v1318
      %v1320 = vadd.f32 %v1319, 1.0
      %v1321 = vrcp.pop %v1320
      %v1322 = vmul.f32 1.0, %v1321
      %v1323 = vmul.f32 %v1316, %v1322
      %v1324 = vlaneseq
      %v1325 = vshrl.u32 %v1324, 7
      %v1326 = vsub.s32 0, %v1325
      %v1327 = vrot.slane %v1323, %v1326
      %v1328 = vmul.f32 %v79, %v1327
      %v1329 = vmul.f32 %v80, %v1327
      %v1330 = vmul.f32 %v81, %v1327
      %v1331 = vmul.f32 %v82, %v1327
      %v1332 = vsel %vm137, %v1328, 0.0
      %1333 = vadd.xlane.f32.xlu0 %v1332
      %v1334 = vpop.xlane.xlu0 %1333
      %v1335 = vsel %vm137, %v1329, 0.0
      %1336 = vadd.xlane.f32.xlu0 %v1335
      %v1337 = vpop.xlane.xlu0 %1336
      %v1338 = vsel %vm137, %v1330, 0.0
      %1339 = vadd.xlane.f32.xlu0 %v1338
      %v1340 = vpop.xlane.xlu0 %1339
      %v1341 = vsel %vm137, %v1331, 0.0
      %1342 = vadd.xlane.f32.xlu0 %v1341
      %v1343 = vpop.xlane.xlu0 %1342
      %v1344 = vadd.f32 %v1334, %v83
      %v1345 = vadd.f32 %v1337, %v84
      %v1346 = vadd.f32 %v1340, %v85
      %v1347 = vadd.f32 %v1343, %v86
      %v1348 = vxor.u32 %v1344, 2147483648
      %v1349 = vxor.u32 %v1345, 2147483648
      %v1350 = vxor.u32 %v1346, 2147483648
      %v1351 = vxor.u32 %v1347, 2147483648
      %v1352 = vmul.f32 %v1348, 1.442695
      %v1353 = vpow.pop %v1352
      %v1354 = vmul.f32 %v1349, 1.442695
      %v1355 = vpow.pop %v1354
      %v1356 = vmul.f32 %v1350, 1.442695
      %v1357 = vpow.pop %v1356
      %v1358 = vmul.f32 %v1351, 1.442695
      %v1359 = vpow.pop %v1358
      %v1360 = vadd.f32 %v1353, 1.0
      %v1361 = vadd.f32 %v1355, 1.0
      %v1362 = vadd.f32 %v1357, 1.0
      %v1363 = vadd.f32 %v1359, 1.0
      %v1364 = vrcp.pop %v1360
      %v1365 = vmul.f32 1.0, %v1364
      %v1366 = vrcp.pop %v1361
      %v1367 = vmul.f32 1.0, %v1366
      %v1368 = vrcp.pop %v1362
      %v1369 = vmul.f32 1.0, %v1368
      %v1370 = vrcp.pop %v1363
      %v1371 = vmul.f32 1.0, %v1370
      %v1372 = vmul.f32 %v1344, %v1365
      %v1373 = vmul.f32 %v1345, %v1367
      %v1374 = vmul.f32 %v1346, %v1369
      %v1375 = vmul.f32 %v1347, %v1371
      %1377 = vset.pattern.permute.xlu0 0
      %1378 = vperm.xlu0 %1377, %v1372
      %v1379 = vpop.permute.xlu0 %1378
      %1382 = vset.pattern.permute.xlu0 0
      %1383 = vperm.xlu0 %1382, %v1373
      %v1384 = vpop.permute.xlu0 %1383
      %1387 = vset.pattern.permute.xlu0 0
      %1388 = vperm.xlu0 %1387, %v1374
      %v1389 = vpop.permute.xlu0 %1388
      %1392 = vset.pattern.permute.xlu0 0
      %1393 = vperm.xlu0 %1392, %v1375
      %v1394 = vpop.permute.xlu0 %1393
      %v1396 = vmul.f32 %v87, %v1379
      %v1397 = vmul.f32 %v88, %v1384
      %v1398 = vmul.f32 %v89, %v1389
      %v1399 = vmul.f32 %v90, %v1394
      %v1400 = vsel %vm137, %v1396, 0.0
      %v1401 = vsel %vm137, %v1397, 0.0
      %v1402 = vadd.f32 %v1400, %v1401
      %v1403 = vsel %vm137, %v1398, 0.0
      %v1404 = vadd.f32 %v1402, %v1403
      %v1405 = vsel %vm137, %v1399, 0.0
      %v1406 = vadd.f32 %v1404, %v1405
      %v1407 = vrot.slane %v1406, 4
      %v1408 = vadd.f32 %v1406, %v1407
      %v1409 = vrot.slane %v1408, 2
      %v1410 = vadd.f32 %v1408, %v1409
      %v1411 = vrot.slane %v1410, 1
      %v1412 = vadd.f32 %v1410, %v1411
      %v1413 = vadd.f32 %v1412, %v91
      %v1414 = vxor.u32 %v1413, 2147483648
      %v1415 = vmul.f32 %v1414, 1.442695
      %v1416 = vpow.pop %v1415
      %v1417 = vadd.f32 %v1416, 1.0
      %v1418 = vrcp.pop %v1417
      %v1419 = vmul.f32 1.0, %v1418
      %v1420 = vmul.f32 %v1413, %v1419
      %v1421 = vmul.f32 %v92, %v1420
      %v1422 = vsel %vm228, %v1421, 0.0
      %1423 = vadd.xlane.f32.xlu0 %v1422
      %v1424 = vpop.xlane.xlu0 %1423
      %v1425 = vadd.f32 %v1424, %v93
      %v1426 = vmul.f32 %v470, %v1425
      %v1427 = vadd.f32 %v1073, %v1426
      %1429 = vset.pattern.permute.xlu0 0
      %1430 = vperm.xlu0 %1429, %v1427
      %v1431 = vpop.permute.xlu0 %1430
      %v1433 = vmul.f32 %v1431, %v77
      %v1434 = vadd.f32 %v1433, %v78
      %v1435 = vxor.u32 %v1434, 2147483648
      %v1436 = vmul.f32 %v1435, 1.442695
      %v1437 = vpow.pop %v1436
      %v1438 = vadd.f32 %v1437, 1.0
      %v1439 = vrcp.pop %v1438
      %v1440 = vmul.f32 1.0, %v1439
      %v1441 = vmul.f32 %v1434, %v1440
      %v1442 = vlaneseq
      %v1443 = vshrl.u32 %v1442, 7
      %v1444 = vsub.s32 0, %v1443
      %v1445 = vrot.slane %v1441, %v1444
      %v1446 = vmul.f32 %v79, %v1445
      %v1447 = vmul.f32 %v80, %v1445
      %v1448 = vmul.f32 %v81, %v1445
      %v1449 = vmul.f32 %v82, %v1445
      %v1450 = vsel %vm137, %v1446, 0.0
      %1451 = vadd.xlane.f32.xlu0 %v1450
      %v1452 = vpop.xlane.xlu0 %1451
      %v1453 = vsel %vm137, %v1447, 0.0
      %1454 = vadd.xlane.f32.xlu0 %v1453
      %v1455 = vpop.xlane.xlu0 %1454
      %v1456 = vsel %vm137, %v1448, 0.0
      %1457 = vadd.xlane.f32.xlu0 %v1456
      %v1458 = vpop.xlane.xlu0 %1457
      %v1459 = vsel %vm137, %v1449, 0.0
      %1460 = vadd.xlane.f32.xlu0 %v1459
      %v1461 = vpop.xlane.xlu0 %1460
      %v1462 = vadd.f32 %v1452, %v83
      %v1463 = vadd.f32 %v1455, %v84
      %v1464 = vadd.f32 %v1458, %v85
      %v1465 = vadd.f32 %v1461, %v86
      %v1466 = vxor.u32 %v1462, 2147483648
      %v1467 = vxor.u32 %v1463, 2147483648
      %v1468 = vxor.u32 %v1464, 2147483648
      %v1469 = vxor.u32 %v1465, 2147483648
      %v1470 = vmul.f32 %v1466, 1.442695
      %v1471 = vpow.pop %v1470
      %v1472 = vmul.f32 %v1467, 1.442695
      %v1473 = vpow.pop %v1472
      %v1474 = vmul.f32 %v1468, 1.442695
      %v1475 = vpow.pop %v1474
      %v1476 = vmul.f32 %v1469, 1.442695
      %v1477 = vpow.pop %v1476
      %v1478 = vadd.f32 %v1471, 1.0
      %v1479 = vadd.f32 %v1473, 1.0
      %v1480 = vadd.f32 %v1475, 1.0
      %v1481 = vadd.f32 %v1477, 1.0
      %v1482 = vrcp.pop %v1478
      %v1483 = vmul.f32 1.0, %v1482
      %v1484 = vrcp.pop %v1479
      %v1485 = vmul.f32 1.0, %v1484
      %v1486 = vrcp.pop %v1480
      %v1487 = vmul.f32 1.0, %v1486
      %v1488 = vrcp.pop %v1481
      %v1489 = vmul.f32 1.0, %v1488
      %v1490 = vmul.f32 %v1462, %v1483
      %v1491 = vmul.f32 %v1463, %v1485
      %v1492 = vmul.f32 %v1464, %v1487
      %v1493 = vmul.f32 %v1465, %v1489
      %1495 = vset.pattern.permute.xlu0 0
      %1496 = vperm.xlu0 %1495, %v1490
      %v1497 = vpop.permute.xlu0 %1496
      %1500 = vset.pattern.permute.xlu0 0
      %1501 = vperm.xlu0 %1500, %v1491
      %v1502 = vpop.permute.xlu0 %1501
      %1505 = vset.pattern.permute.xlu0 0
      %1506 = vperm.xlu0 %1505, %v1492
      %v1507 = vpop.permute.xlu0 %1506
      %1510 = vset.pattern.permute.xlu0 0
      %1511 = vperm.xlu0 %1510, %v1493
      %v1512 = vpop.permute.xlu0 %1511
      %v1514 = vmul.f32 %v87, %v1497
      %v1515 = vmul.f32 %v88, %v1502
      %v1516 = vmul.f32 %v89, %v1507
      %v1517 = vmul.f32 %v90, %v1512
      %v1518 = vsel %vm137, %v1514, 0.0
      %v1519 = vsel %vm137, %v1515, 0.0
      %v1520 = vadd.f32 %v1518, %v1519
      %v1521 = vsel %vm137, %v1516, 0.0
      %v1522 = vadd.f32 %v1520, %v1521
      %v1523 = vsel %vm137, %v1517, 0.0
      %v1524 = vadd.f32 %v1522, %v1523
      %v1525 = vrot.slane %v1524, 4
      %v1526 = vadd.f32 %v1524, %v1525
      %v1527 = vrot.slane %v1526, 2
      %v1528 = vadd.f32 %v1526, %v1527
      %v1529 = vrot.slane %v1528, 1
      %v1530 = vadd.f32 %v1528, %v1529
      %v1531 = vadd.f32 %v1530, %v91
      %v1532 = vxor.u32 %v1531, 2147483648
      %v1533 = vmul.f32 %v1532, 1.442695
      %v1534 = vpow.pop %v1533
      %v1535 = vadd.f32 %v1534, 1.0
      %v1536 = vrcp.pop %v1535
      %v1537 = vmul.f32 1.0, %v1536
      %v1538 = vmul.f32 %v1531, %v1537
      %v1539 = vmul.f32 %v92, %v1538
      %v1540 = vsel %vm228, %v1539, 0.0
      %1541 = vadd.xlane.f32.xlu0 %v1540
      %v1542 = vpop.xlane.xlu0 %1541
      %v1543 = vadd.f32 %v1542, %v93
      %v1544 = vmul.f32 %v1307, 2.0
      %v1545 = vadd.f32 %v1189, %v1544
      %v1546 = vmul.f32 %v1425, 2.0
      %v1547 = vadd.f32 %v1545, %v1546
      %v1548 = vadd.f32 %v1547, %v1543
      %v1549 = vmul.f32 %v594, %v1548
      %v1550 = vadd.f32 %v1073, %v1549
      %1552 = vset.pattern.permute.xlu0 0
      %1553 = vperm.xlu0 %1552, %v1550
      %v1554 = vpop.permute.xlu0 %1553
      %v1556 = vmul.f32 %v1554, %v77
      %v1557 = vadd.f32 %v1556, %v78
      %v1558 = vxor.u32 %v1557, 2147483648
      %v1559 = vmul.f32 %v1558, 1.442695
      %v1560 = vpow.pop %v1559
      %v1561 = vadd.f32 %v1560, 1.0
      %v1562 = vrcp.pop %v1561
      %v1563 = vmul.f32 1.0, %v1562
      %v1564 = vmul.f32 %v1557, %v1563
      %v1565 = vlaneseq
      %v1566 = vshrl.u32 %v1565, 7
      %v1567 = vsub.s32 0, %v1566
      %v1568 = vrot.slane %v1564, %v1567
      %v1569 = vmul.f32 %v79, %v1568
      %v1570 = vmul.f32 %v80, %v1568
      %v1571 = vmul.f32 %v81, %v1568
      %v1572 = vmul.f32 %v82, %v1568
      %v1573 = vsel %vm137, %v1569, 0.0
      %1574 = vadd.xlane.f32.xlu0 %v1573
      %v1575 = vpop.xlane.xlu0 %1574
      %v1576 = vsel %vm137, %v1570, 0.0
      %1577 = vadd.xlane.f32.xlu0 %v1576
      %v1578 = vpop.xlane.xlu0 %1577
      %v1579 = vsel %vm137, %v1571, 0.0
      %1580 = vadd.xlane.f32.xlu0 %v1579
      %v1581 = vpop.xlane.xlu0 %1580
      %v1582 = vsel %vm137, %v1572, 0.0
      %1583 = vadd.xlane.f32.xlu0 %v1582
      %v1584 = vpop.xlane.xlu0 %1583
      %v1585 = vadd.f32 %v1575, %v83
      %v1586 = vadd.f32 %v1578, %v84
      %v1587 = vadd.f32 %v1581, %v85
      %v1588 = vadd.f32 %v1584, %v86
      %v1589 = vxor.u32 %v1585, 2147483648
      %v1590 = vxor.u32 %v1586, 2147483648
      %v1591 = vxor.u32 %v1587, 2147483648
      %v1592 = vxor.u32 %v1588, 2147483648
      %v1593 = vmul.f32 %v1589, 1.442695
      %v1594 = vpow.pop %v1593
      %v1595 = vmul.f32 %v1590, 1.442695
      %v1596 = vpow.pop %v1595
      %v1597 = vmul.f32 %v1591, 1.442695
      %v1598 = vpow.pop %v1597
      %v1599 = vmul.f32 %v1592, 1.442695
      %v1600 = vpow.pop %v1599
      %v1601 = vadd.f32 %v1594, 1.0
      %v1602 = vadd.f32 %v1596, 1.0
      %v1603 = vadd.f32 %v1598, 1.0
      %v1604 = vadd.f32 %v1600, 1.0
      %v1605 = vrcp.pop %v1601
      %v1606 = vmul.f32 1.0, %v1605
      %v1607 = vrcp.pop %v1602
      %v1608 = vmul.f32 1.0, %v1607
      %v1609 = vrcp.pop %v1603
      %v1610 = vmul.f32 1.0, %v1609
      %v1611 = vrcp.pop %v1604
      %v1612 = vmul.f32 1.0, %v1611
      %v1613 = vmul.f32 %v1585, %v1606
      %v1614 = vmul.f32 %v1586, %v1608
      %v1615 = vmul.f32 %v1587, %v1610
      %v1616 = vmul.f32 %v1588, %v1612
      %1618 = vset.pattern.permute.xlu0 0
      %1619 = vperm.xlu0 %1618, %v1613
      %v1620 = vpop.permute.xlu0 %1619
      %1623 = vset.pattern.permute.xlu0 0
      %1624 = vperm.xlu0 %1623, %v1614
      %v1625 = vpop.permute.xlu0 %1624
      %1628 = vset.pattern.permute.xlu0 0
      %1629 = vperm.xlu0 %1628, %v1615
      %v1630 = vpop.permute.xlu0 %1629
      %1633 = vset.pattern.permute.xlu0 0
      %1634 = vperm.xlu0 %1633, %v1616
      %v1635 = vpop.permute.xlu0 %1634
      %v1637 = vmul.f32 %v87, %v1620
      %v1638 = vmul.f32 %v88, %v1625
      %v1639 = vmul.f32 %v89, %v1630
      %v1640 = vmul.f32 %v90, %v1635
      %v1641 = vsel %vm137, %v1637, 0.0
      %v1642 = vsel %vm137, %v1638, 0.0
      %v1643 = vadd.f32 %v1641, %v1642
      %v1644 = vsel %vm137, %v1639, 0.0
      %v1645 = vadd.f32 %v1643, %v1644
      %v1646 = vsel %vm137, %v1640, 0.0
      %v1647 = vadd.f32 %v1645, %v1646
      %v1648 = vrot.slane %v1647, 4
      %v1649 = vadd.f32 %v1647, %v1648
      %v1650 = vrot.slane %v1649, 2
      %v1651 = vadd.f32 %v1649, %v1650
      %v1652 = vrot.slane %v1651, 1
      %v1653 = vadd.f32 %v1651, %v1652
      %v1654 = vadd.f32 %v1653, %v91
      %v1655 = vxor.u32 %v1654, 2147483648
      %v1656 = vmul.f32 %v1655, 1.442695
      %v1657 = vpow.pop %v1656
      %v1658 = vadd.f32 %v1657, 1.0
      %v1659 = vrcp.pop %v1658
      %v1660 = vmul.f32 1.0, %v1659
      %v1661 = vmul.f32 %v1654, %v1660
      %v1662 = vmul.f32 %v92, %v1661
      %v1663 = vsel %vm228, %v1662, 0.0
      %1664 = vadd.xlane.f32.xlu0 %v1663
      %v1665 = vpop.xlane.xlu0 %1664
      %v1666 = vadd.f32 %v1665, %v93
      %v1667 = vmul.f32 %v233, %v1666
      %v1668 = vadd.f32 %v1550, %v1667
      %1670 = vset.pattern.permute.xlu0 0
      %1671 = vperm.xlu0 %1670, %v1668
      %v1672 = vpop.permute.xlu0 %1671
      %v1674 = vmul.f32 %v1672, %v77
      %v1675 = vadd.f32 %v1674, %v78
      %v1676 = vxor.u32 %v1675, 2147483648
      %v1677 = vmul.f32 %v1676, 1.442695
      %v1678 = vpow.pop %v1677
      %v1679 = vadd.f32 %v1678, 1.0
      %v1680 = vrcp.pop %v1679
      %v1681 = vmul.f32 1.0, %v1680
      %v1682 = vmul.f32 %v1675, %v1681
      %v1683 = vlaneseq
      %v1684 = vshrl.u32 %v1683, 7
      %v1685 = vsub.s32 0, %v1684
      %v1686 = vrot.slane %v1682, %v1685
      %v1687 = vmul.f32 %v79, %v1686
      %v1688 = vmul.f32 %v80, %v1686
      %v1689 = vmul.f32 %v81, %v1686
      %v1690 = vmul.f32 %v82, %v1686
      %v1691 = vsel %vm137, %v1687, 0.0
      %1692 = vadd.xlane.f32.xlu0 %v1691
      %v1693 = vpop.xlane.xlu0 %1692
      %v1694 = vsel %vm137, %v1688, 0.0
      %1695 = vadd.xlane.f32.xlu0 %v1694
      %v1696 = vpop.xlane.xlu0 %1695
      %v1697 = vsel %vm137, %v1689, 0.0
      %1698 = vadd.xlane.f32.xlu0 %v1697
      %v1699 = vpop.xlane.xlu0 %1698
      %v1700 = vsel %vm137, %v1690, 0.0
      %1701 = vadd.xlane.f32.xlu0 %v1700
      %v1702 = vpop.xlane.xlu0 %1701
      %v1703 = vadd.f32 %v1693, %v83
      %v1704 = vadd.f32 %v1696, %v84
      %v1705 = vadd.f32 %v1699, %v85
      %v1706 = vadd.f32 %v1702, %v86
      %v1707 = vxor.u32 %v1703, 2147483648
      %v1708 = vxor.u32 %v1704, 2147483648
      %v1709 = vxor.u32 %v1705, 2147483648
      %v1710 = vxor.u32 %v1706, 2147483648
      %v1711 = vmul.f32 %v1707, 1.442695
      %v1712 = vpow.pop %v1711
      %v1713 = vmul.f32 %v1708, 1.442695
      %v1714 = vpow.pop %v1713
      %v1715 = vmul.f32 %v1709, 1.442695
      %v1716 = vpow.pop %v1715
      %v1717 = vmul.f32 %v1710, 1.442695
      %v1718 = vpow.pop %v1717
      %v1719 = vadd.f32 %v1712, 1.0
      %v1720 = vadd.f32 %v1714, 1.0
      %v1721 = vadd.f32 %v1716, 1.0
      %v1722 = vadd.f32 %v1718, 1.0
      %v1723 = vrcp.pop %v1719
      %v1724 = vmul.f32 1.0, %v1723
      %v1725 = vrcp.pop %v1720
      %v1726 = vmul.f32 1.0, %v1725
      %v1727 = vrcp.pop %v1721
      %v1728 = vmul.f32 1.0, %v1727
      %v1729 = vrcp.pop %v1722
      %v1730 = vmul.f32 1.0, %v1729
      %v1731 = vmul.f32 %v1703, %v1724
      %v1732 = vmul.f32 %v1704, %v1726
      %v1733 = vmul.f32 %v1705, %v1728
      %v1734 = vmul.f32 %v1706, %v1730
      %1736 = vset.pattern.permute.xlu0 0
      %1737 = vperm.xlu0 %1736, %v1731
      %v1738 = vpop.permute.xlu0 %1737
      %1741 = vset.pattern.permute.xlu0 0
      %1742 = vperm.xlu0 %1741, %v1732
      %v1743 = vpop.permute.xlu0 %1742
      %1746 = vset.pattern.permute.xlu0 0
      %1747 = vperm.xlu0 %1746, %v1733
      %v1748 = vpop.permute.xlu0 %1747
      %1751 = vset.pattern.permute.xlu0 0
      %1752 = vperm.xlu0 %1751, %v1734
      %v1753 = vpop.permute.xlu0 %1752
      %v1755 = vmul.f32 %v87, %v1738
      %v1756 = vmul.f32 %v88, %v1743
      %v1757 = vmul.f32 %v89, %v1748
      %v1758 = vmul.f32 %v90, %v1753
      %v1759 = vsel %vm137, %v1755, 0.0
      %v1760 = vsel %vm137, %v1756, 0.0
      %v1761 = vadd.f32 %v1759, %v1760
      %v1762 = vsel %vm137, %v1757, 0.0
      %v1763 = vadd.f32 %v1761, %v1762
      %v1764 = vsel %vm137, %v1758, 0.0
      %v1765 = vadd.f32 %v1763, %v1764
      %v1766 = vrot.slane %v1765, 4
      %v1767 = vadd.f32 %v1765, %v1766
      %v1768 = vrot.slane %v1767, 2
      %v1769 = vadd.f32 %v1767, %v1768
      %v1770 = vrot.slane %v1769, 1
      %v1771 = vadd.f32 %v1769, %v1770
      %v1772 = vadd.f32 %v1771, %v91
      %v1773 = vxor.u32 %v1772, 2147483648
      %v1774 = vmul.f32 %v1773, 1.442695
      %v1775 = vpow.pop %v1774
      %v1776 = vadd.f32 %v1775, 1.0
      %v1777 = vrcp.pop %v1776
      %v1778 = vmul.f32 1.0, %v1777
      %v1779 = vmul.f32 %v1772, %v1778
      %v1780 = vmul.f32 %v92, %v1779
      %v1781 = vsel %vm228, %v1780, 0.0
      %1782 = vadd.xlane.f32.xlu0 %v1781
      %v1783 = vpop.xlane.xlu0 %1782
      %v1784 = vadd.f32 %v1783, %v93
      %v1785 = vmul.f32 %v233, %v1784
      %v1786 = vadd.f32 %v1550, %v1785
      %1788 = vset.pattern.permute.xlu0 0
      %1789 = vperm.xlu0 %1788, %v1786
      %v1790 = vpop.permute.xlu0 %1789
      %v1792 = vmul.f32 %v1790, %v77
      %v1793 = vadd.f32 %v1792, %v78
      %v1794 = vxor.u32 %v1793, 2147483648
      %v1795 = vmul.f32 %v1794, 1.442695
      %v1796 = vpow.pop %v1795
      %v1797 = vadd.f32 %v1796, 1.0
      %v1798 = vrcp.pop %v1797
      %v1799 = vmul.f32 1.0, %v1798
      %v1800 = vmul.f32 %v1793, %v1799
      %v1801 = vlaneseq
      %v1802 = vshrl.u32 %v1801, 7
      %v1803 = vsub.s32 0, %v1802
      %v1804 = vrot.slane %v1800, %v1803
      %v1805 = vmul.f32 %v79, %v1804
      %v1806 = vmul.f32 %v80, %v1804
      %v1807 = vmul.f32 %v81, %v1804
      %v1808 = vmul.f32 %v82, %v1804
      %v1809 = vsel %vm137, %v1805, 0.0
      %1810 = vadd.xlane.f32.xlu0 %v1809
      %v1811 = vpop.xlane.xlu0 %1810
      %v1812 = vsel %vm137, %v1806, 0.0
      %1813 = vadd.xlane.f32.xlu0 %v1812
      %v1814 = vpop.xlane.xlu0 %1813
      %v1815 = vsel %vm137, %v1807, 0.0
      %1816 = vadd.xlane.f32.xlu0 %v1815
      %v1817 = vpop.xlane.xlu0 %1816
      %v1818 = vsel %vm137, %v1808, 0.0
      %1819 = vadd.xlane.f32.xlu0 %v1818
      %v1820 = vpop.xlane.xlu0 %1819
      %v1821 = vadd.f32 %v1811, %v83
      %v1822 = vadd.f32 %v1814, %v84
      %v1823 = vadd.f32 %v1817, %v85
      %v1824 = vadd.f32 %v1820, %v86
      %v1825 = vxor.u32 %v1821, 2147483648
      %v1826 = vxor.u32 %v1822, 2147483648
      %v1827 = vxor.u32 %v1823, 2147483648
      %v1828 = vxor.u32 %v1824, 2147483648
      %v1829 = vmul.f32 %v1825, 1.442695
      %v1830 = vpow.pop %v1829
      %v1831 = vmul.f32 %v1826, 1.442695
      %v1832 = vpow.pop %v1831
      %v1833 = vmul.f32 %v1827, 1.442695
      %v1834 = vpow.pop %v1833
      %v1835 = vmul.f32 %v1828, 1.442695
      %v1836 = vpow.pop %v1835
      %v1837 = vadd.f32 %v1830, 1.0
      %v1838 = vadd.f32 %v1832, 1.0
      %v1839 = vadd.f32 %v1834, 1.0
      %v1840 = vadd.f32 %v1836, 1.0
      %v1841 = vrcp.pop %v1837
      %v1842 = vmul.f32 1.0, %v1841
      %v1843 = vrcp.pop %v1838
      %v1844 = vmul.f32 1.0, %v1843
      %v1845 = vrcp.pop %v1839
      %v1846 = vmul.f32 1.0, %v1845
      %v1847 = vrcp.pop %v1840
      %v1848 = vmul.f32 1.0, %v1847
      %v1849 = vmul.f32 %v1821, %v1842
      %v1850 = vmul.f32 %v1822, %v1844
      %v1851 = vmul.f32 %v1823, %v1846
      %v1852 = vmul.f32 %v1824, %v1848
      %1854 = vset.pattern.permute.xlu0 0
      %1855 = vperm.xlu0 %1854, %v1849
      %v1856 = vpop.permute.xlu0 %1855
      %1859 = vset.pattern.permute.xlu0 0
      %1860 = vperm.xlu0 %1859, %v1850
      %v1861 = vpop.permute.xlu0 %1860
      %1864 = vset.pattern.permute.xlu0 0
      %1865 = vperm.xlu0 %1864, %v1851
      %v1866 = vpop.permute.xlu0 %1865
      %1869 = vset.pattern.permute.xlu0 0
      %1870 = vperm.xlu0 %1869, %v1852
      %v1871 = vpop.permute.xlu0 %1870
      %v1873 = vmul.f32 %v87, %v1856
      %v1874 = vmul.f32 %v88, %v1861
      %v1875 = vmul.f32 %v89, %v1866
      %v1876 = vmul.f32 %v90, %v1871
      %v1877 = vsel %vm137, %v1873, 0.0
      %v1878 = vsel %vm137, %v1874, 0.0
      %v1879 = vadd.f32 %v1877, %v1878
      %v1880 = vsel %vm137, %v1875, 0.0
      %v1881 = vadd.f32 %v1879, %v1880
      %v1882 = vsel %vm137, %v1876, 0.0
      %v1883 = vadd.f32 %v1881, %v1882
      %v1884 = vrot.slane %v1883, 4
      %v1885 = vadd.f32 %v1883, %v1884
      %v1886 = vrot.slane %v1885, 2
      %v1887 = vadd.f32 %v1885, %v1886
      %v1888 = vrot.slane %v1887, 1
      %v1889 = vadd.f32 %v1887, %v1888
      %v1890 = vadd.f32 %v1889, %v91
      %v1891 = vxor.u32 %v1890, 2147483648
      %v1892 = vmul.f32 %v1891, 1.442695
      %v1893 = vpow.pop %v1892
      %v1894 = vadd.f32 %v1893, 1.0
      %v1895 = vrcp.pop %v1894
      %v1896 = vmul.f32 1.0, %v1895
      %v1897 = vmul.f32 %v1890, %v1896
      %v1898 = vmul.f32 %v92, %v1897
      %v1899 = vsel %vm228, %v1898, 0.0
      %1900 = vadd.xlane.f32.xlu0 %v1899
      %v1901 = vpop.xlane.xlu0 %1900
      %v1902 = vadd.f32 %v1901, %v93
      %v1903 = vmul.f32 %v470, %v1902
      %v1904 = vadd.f32 %v1550, %v1903
      %1906 = vset.pattern.permute.xlu0 0
      %1907 = vperm.xlu0 %1906, %v1904
      %v1908 = vpop.permute.xlu0 %1907
      %v1910 = vmul.f32 %v1908, %v77
      %v1911 = vadd.f32 %v1910, %v78
      %v1912 = vxor.u32 %v1911, 2147483648
      %v1913 = vmul.f32 %v1912, 1.442695
      %v1914 = vpow.pop %v1913
      %v1915 = vadd.f32 %v1914, 1.0
      %v1916 = vrcp.pop %v1915
      %v1917 = vmul.f32 1.0, %v1916
      %v1918 = vmul.f32 %v1911, %v1917
      %v1919 = vlaneseq
      %v1920 = vshrl.u32 %v1919, 7
      %v1921 = vsub.s32 0, %v1920
      %v1922 = vrot.slane %v1918, %v1921
      %v1923 = vmul.f32 %v79, %v1922
      %v1924 = vmul.f32 %v80, %v1922
      %v1925 = vmul.f32 %v81, %v1922
      %v1926 = vmul.f32 %v82, %v1922
      %v1927 = vsel %vm137, %v1923, 0.0
      %1928 = vadd.xlane.f32.xlu0 %v1927
      %v1929 = vpop.xlane.xlu0 %1928
      %v1930 = vsel %vm137, %v1924, 0.0
      %1931 = vadd.xlane.f32.xlu0 %v1930
      %v1932 = vpop.xlane.xlu0 %1931
      %v1933 = vsel %vm137, %v1925, 0.0
      %1934 = vadd.xlane.f32.xlu0 %v1933
      %v1935 = vpop.xlane.xlu0 %1934
      %v1936 = vsel %vm137, %v1926, 0.0
      %1937 = vadd.xlane.f32.xlu0 %v1936
      %v1938 = vpop.xlane.xlu0 %1937
      %v1939 = vadd.f32 %v1929, %v83
      %v1940 = vadd.f32 %v1932, %v84
      %v1941 = vadd.f32 %v1935, %v85
      %v1942 = vadd.f32 %v1938, %v86
      %v1943 = vxor.u32 %v1939, 2147483648
      %v1944 = vxor.u32 %v1940, 2147483648
      %v1945 = vxor.u32 %v1941, 2147483648
      %v1946 = vxor.u32 %v1942, 2147483648
      %v1947 = vmul.f32 %v1943, 1.442695
      %v1948 = vpow.pop %v1947
      %v1949 = vmul.f32 %v1944, 1.442695
      %v1950 = vpow.pop %v1949
      %v1951 = vmul.f32 %v1945, 1.442695
      %v1952 = vpow.pop %v1951
      %v1953 = vmul.f32 %v1946, 1.442695
      %v1954 = vpow.pop %v1953
      %v1955 = vadd.f32 %v1948, 1.0
      %v1956 = vadd.f32 %v1950, 1.0
      %v1957 = vadd.f32 %v1952, 1.0
      %v1958 = vadd.f32 %v1954, 1.0
      %v1959 = vrcp.pop %v1955
      %v1960 = vmul.f32 1.0, %v1959
      %v1961 = vrcp.pop %v1956
      %v1962 = vmul.f32 1.0, %v1961
      %v1963 = vrcp.pop %v1957
      %v1964 = vmul.f32 1.0, %v1963
      %v1965 = vrcp.pop %v1958
      %v1966 = vmul.f32 1.0, %v1965
      %v1967 = vmul.f32 %v1939, %v1960
      %v1968 = vmul.f32 %v1940, %v1962
      %v1969 = vmul.f32 %v1941, %v1964
      %v1970 = vmul.f32 %v1942, %v1966
      %1972 = vset.pattern.permute.xlu0 0
      %1973 = vperm.xlu0 %1972, %v1967
      %v1974 = vpop.permute.xlu0 %1973
      %1977 = vset.pattern.permute.xlu0 0
      %1978 = vperm.xlu0 %1977, %v1968
      %v1979 = vpop.permute.xlu0 %1978
      %1982 = vset.pattern.permute.xlu0 0
      %1983 = vperm.xlu0 %1982, %v1969
      %v1984 = vpop.permute.xlu0 %1983
      %1987 = vset.pattern.permute.xlu0 0
      %1988 = vperm.xlu0 %1987, %v1970
      %v1989 = vpop.permute.xlu0 %1988
      %v1991 = vmul.f32 %v87, %v1974
      %v1992 = vmul.f32 %v88, %v1979
      %v1993 = vmul.f32 %v89, %v1984
      %v1994 = vmul.f32 %v90, %v1989
      %v1995 = vsel %vm137, %v1991, 0.0
      %v1996 = vsel %vm137, %v1992, 0.0
      %v1997 = vadd.f32 %v1995, %v1996
      %v1998 = vsel %vm137, %v1993, 0.0
      %v1999 = vadd.f32 %v1997, %v1998
      %v2000 = vsel %vm137, %v1994, 0.0
      %v2001 = vadd.f32 %v1999, %v2000
      %v2002 = vrot.slane %v2001, 4
      %v2003 = vadd.f32 %v2001, %v2002
      %v2004 = vrot.slane %v2003, 2
      %v2005 = vadd.f32 %v2003, %v2004
      %v2006 = vrot.slane %v2005, 1
      %v2007 = vadd.f32 %v2005, %v2006
      %v2008 = vadd.f32 %v2007, %v91
      %v2009 = vxor.u32 %v2008, 2147483648
      %v2010 = vmul.f32 %v2009, 1.442695
      %v2011 = vpow.pop %v2010
      %v2012 = vadd.f32 %v2011, 1.0
      %v2013 = vrcp.pop %v2012
      %v2014 = vmul.f32 1.0, %v2013
      %v2015 = vmul.f32 %v2008, %v2014
      %v2016 = vmul.f32 %v92, %v2015
      %v2017 = vsel %vm228, %v2016, 0.0
      %2018 = vadd.xlane.f32.xlu0 %v2017
      %v2019 = vpop.xlane.xlu0 %2018
      %v2020 = vadd.f32 %v2019, %v93
      %v2021 = vmul.f32 %v1784, 2.0
      %v2022 = vadd.f32 %v1666, %v2021
      %v2023 = vmul.f32 %v1902, 2.0
      %v2024 = vadd.f32 %v2022, %v2023
      %v2025 = vadd.f32 %v2024, %v2020
      %v2026 = vmul.f32 %v594, %v2025
      %v2027 = vadd.f32 %v1550, %v2026
      %2029 = vset.pattern.permute.xlu0 0
      %2030 = vperm.xlu0 %2029, %v2027
      %v2031 = vpop.permute.xlu0 %2030
      %v2033 = vmul.f32 %v2031, %v77
      %v2034 = vadd.f32 %v2033, %v78
      %v2035 = vxor.u32 %v2034, 2147483648
      %v2036 = vmul.f32 %v2035, 1.442695
      %v2037 = vpow.pop %v2036
      %v2038 = vadd.f32 %v2037, 1.0
      %v2039 = vrcp.pop %v2038
      %v2040 = vmul.f32 1.0, %v2039
      %v2041 = vmul.f32 %v2034, %v2040
      %v2042 = vlaneseq
      %v2043 = vshrl.u32 %v2042, 7
      %v2044 = vsub.s32 0, %v2043
      %v2045 = vrot.slane %v2041, %v2044
      %v2046 = vmul.f32 %v79, %v2045
      %v2047 = vmul.f32 %v80, %v2045
      %v2048 = vmul.f32 %v81, %v2045
      %v2049 = vmul.f32 %v82, %v2045
      %v2050 = vsel %vm137, %v2046, 0.0
      %2051 = vadd.xlane.f32.xlu0 %v2050
      %v2052 = vpop.xlane.xlu0 %2051
      %v2053 = vsel %vm137, %v2047, 0.0
      %2054 = vadd.xlane.f32.xlu0 %v2053
      %v2055 = vpop.xlane.xlu0 %2054
      %v2056 = vsel %vm137, %v2048, 0.0
      %2057 = vadd.xlane.f32.xlu0 %v2056
      %v2058 = vpop.xlane.xlu0 %2057
      %v2059 = vsel %vm137, %v2049, 0.0
      %2060 = vadd.xlane.f32.xlu0 %v2059
      %v2061 = vpop.xlane.xlu0 %2060
      %v2062 = vadd.f32 %v2052, %v83
      %v2063 = vadd.f32 %v2055, %v84
      %v2064 = vadd.f32 %v2058, %v85
      %v2065 = vadd.f32 %v2061, %v86
      %v2066 = vxor.u32 %v2062, 2147483648
      %v2067 = vxor.u32 %v2063, 2147483648
      %v2068 = vxor.u32 %v2064, 2147483648
      %v2069 = vxor.u32 %v2065, 2147483648
      %v2070 = vmul.f32 %v2066, 1.442695
      %v2071 = vpow.pop %v2070
      %v2072 = vmul.f32 %v2067, 1.442695
      %v2073 = vpow.pop %v2072
      %v2074 = vmul.f32 %v2068, 1.442695
      %v2075 = vpow.pop %v2074
      %v2076 = vmul.f32 %v2069, 1.442695
      %v2077 = vpow.pop %v2076
      %v2078 = vadd.f32 %v2071, 1.0
      %v2079 = vadd.f32 %v2073, 1.0
      %v2080 = vadd.f32 %v2075, 1.0
      %v2081 = vadd.f32 %v2077, 1.0
      %v2082 = vrcp.pop %v2078
      %v2083 = vmul.f32 1.0, %v2082
      %v2084 = vrcp.pop %v2079
      %v2085 = vmul.f32 1.0, %v2084
      %v2086 = vrcp.pop %v2080
      %v2087 = vmul.f32 1.0, %v2086
      %v2088 = vrcp.pop %v2081
      %v2089 = vmul.f32 1.0, %v2088
      %v2090 = vmul.f32 %v2062, %v2083
      %v2091 = vmul.f32 %v2063, %v2085
      %v2092 = vmul.f32 %v2064, %v2087
      %v2093 = vmul.f32 %v2065, %v2089
      %2095 = vset.pattern.permute.xlu0 0
      %2096 = vperm.xlu0 %2095, %v2090
      %v2097 = vpop.permute.xlu0 %2096
      %2100 = vset.pattern.permute.xlu0 0
      %2101 = vperm.xlu0 %2100, %v2091
      %v2102 = vpop.permute.xlu0 %2101
      %2105 = vset.pattern.permute.xlu0 0
      %2106 = vperm.xlu0 %2105, %v2092
      %v2107 = vpop.permute.xlu0 %2106
      %2110 = vset.pattern.permute.xlu0 0
      %2111 = vperm.xlu0 %2110, %v2093
      %v2112 = vpop.permute.xlu0 %2111
      %v2114 = vmul.f32 %v87, %v2097
      %v2115 = vmul.f32 %v88, %v2102
      %v2116 = vmul.f32 %v89, %v2107
      %v2117 = vmul.f32 %v90, %v2112
      %v2118 = vsel %vm137, %v2114, 0.0
      %v2119 = vsel %vm137, %v2115, 0.0
      %v2120 = vadd.f32 %v2118, %v2119
      %v2121 = vsel %vm137, %v2116, 0.0
      %v2122 = vadd.f32 %v2120, %v2121
      %v2123 = vsel %vm137, %v2117, 0.0
      %v2124 = vadd.f32 %v2122, %v2123
      %v2125 = vrot.slane %v2124, 4
      %v2126 = vadd.f32 %v2124, %v2125
      %v2127 = vrot.slane %v2126, 2
      %v2128 = vadd.f32 %v2126, %v2127
      %v2129 = vrot.slane %v2128, 1
      %v2130 = vadd.f32 %v2128, %v2129
      %v2131 = vadd.f32 %v2130, %v91
      %v2132 = vxor.u32 %v2131, 2147483648
      %v2133 = vmul.f32 %v2132, 1.442695
      %v2134 = vpow.pop %v2133
      %v2135 = vadd.f32 %v2134, 1.0
      %v2136 = vrcp.pop %v2135
      %v2137 = vmul.f32 1.0, %v2136
      %v2138 = vmul.f32 %v2131, %v2137
      %v2139 = vmul.f32 %v92, %v2138
      %v2140 = vsel %vm228, %v2139, 0.0
      %2141 = vadd.xlane.f32.xlu0 %v2140
      %v2142 = vpop.xlane.xlu0 %2141
      %v2143 = vadd.f32 %v2142, %v93
      %v2144 = vmul.f32 %v233, %v2143
      %v2145 = vadd.f32 %v2027, %v2144
      %2147 = vset.pattern.permute.xlu0 0
      %2148 = vperm.xlu0 %2147, %v2145
      %v2149 = vpop.permute.xlu0 %2148
      %v2151 = vmul.f32 %v2149, %v77
      %v2152 = vadd.f32 %v2151, %v78
      %v2153 = vxor.u32 %v2152, 2147483648
      %v2154 = vmul.f32 %v2153, 1.442695
      %v2155 = vpow.pop %v2154
      %v2156 = vadd.f32 %v2155, 1.0
      %v2157 = vrcp.pop %v2156
      %v2158 = vmul.f32 1.0, %v2157
      %v2159 = vmul.f32 %v2152, %v2158
      %v2160 = vlaneseq
      %v2161 = vshrl.u32 %v2160, 7
      %v2162 = vsub.s32 0, %v2161
      %v2163 = vrot.slane %v2159, %v2162
      %v2164 = vmul.f32 %v79, %v2163
      %v2165 = vmul.f32 %v80, %v2163
      %v2166 = vmul.f32 %v81, %v2163
      %v2167 = vmul.f32 %v82, %v2163
      %v2168 = vsel %vm137, %v2164, 0.0
      %2169 = vadd.xlane.f32.xlu0 %v2168
      %v2170 = vpop.xlane.xlu0 %2169
      %v2171 = vsel %vm137, %v2165, 0.0
      %2172 = vadd.xlane.f32.xlu0 %v2171
      %v2173 = vpop.xlane.xlu0 %2172
      %v2174 = vsel %vm137, %v2166, 0.0
      %2175 = vadd.xlane.f32.xlu0 %v2174
      %v2176 = vpop.xlane.xlu0 %2175
      %v2177 = vsel %vm137, %v2167, 0.0
      %2178 = vadd.xlane.f32.xlu0 %v2177
      %v2179 = vpop.xlane.xlu0 %2178
      %v2180 = vadd.f32 %v2170, %v83
      %v2181 = vadd.f32 %v2173, %v84
      %v2182 = vadd.f32 %v2176, %v85
      %v2183 = vadd.f32 %v2179, %v86
      %v2184 = vxor.u32 %v2180, 2147483648
      %v2185 = vxor.u32 %v2181, 2147483648
      %v2186 = vxor.u32 %v2182, 2147483648
      %v2187 = vxor.u32 %v2183, 2147483648
      %v2188 = vmul.f32 %v2184, 1.442695
      %v2189 = vpow.pop %v2188
      %v2190 = vmul.f32 %v2185, 1.442695
      %v2191 = vpow.pop %v2190
      %v2192 = vmul.f32 %v2186, 1.442695
      %v2193 = vpow.pop %v2192
      %v2194 = vmul.f32 %v2187, 1.442695
      %v2195 = vpow.pop %v2194
      %v2196 = vadd.f32 %v2189, 1.0
      %v2197 = vadd.f32 %v2191, 1.0
      %v2198 = vadd.f32 %v2193, 1.0
      %v2199 = vadd.f32 %v2195, 1.0
      %v2200 = vrcp.pop %v2196
      %v2201 = vmul.f32 1.0, %v2200
      %v2202 = vrcp.pop %v2197
      %v2203 = vmul.f32 1.0, %v2202
      %v2204 = vrcp.pop %v2198
      %v2205 = vmul.f32 1.0, %v2204
      %v2206 = vrcp.pop %v2199
      %v2207 = vmul.f32 1.0, %v2206
      %v2208 = vmul.f32 %v2180, %v2201
      %v2209 = vmul.f32 %v2181, %v2203
      %v2210 = vmul.f32 %v2182, %v2205
      %v2211 = vmul.f32 %v2183, %v2207
      %2213 = vset.pattern.permute.xlu0 0
      %2214 = vperm.xlu0 %2213, %v2208
      %v2215 = vpop.permute.xlu0 %2214
      %2218 = vset.pattern.permute.xlu0 0
      %2219 = vperm.xlu0 %2218, %v2209
      %v2220 = vpop.permute.xlu0 %2219
      %2223 = vset.pattern.permute.xlu0 0
      %2224 = vperm.xlu0 %2223, %v2210
      %v2225 = vpop.permute.xlu0 %2224
      %2228 = vset.pattern.permute.xlu0 0
      %2229 = vperm.xlu0 %2228, %v2211
      %v2230 = vpop.permute.xlu0 %2229
      %v2232 = vmul.f32 %v87, %v2215
      %v2233 = vmul.f32 %v88, %v2220
      %v2234 = vmul.f32 %v89, %v2225
      %v2235 = vmul.f32 %v90, %v2230
      %v2236 = vsel %vm137, %v2232, 0.0
      %v2237 = vsel %vm137, %v2233, 0.0
      %v2238 = vadd.f32 %v2236, %v2237
      %v2239 = vsel %vm137, %v2234, 0.0
      %v2240 = vadd.f32 %v2238, %v2239
      %v2241 = vsel %vm137, %v2235, 0.0
      %v2242 = vadd.f32 %v2240, %v2241
      %v2243 = vrot.slane %v2242, 4
      %v2244 = vadd.f32 %v2242, %v2243
      %v2245 = vrot.slane %v2244, 2
      %v2246 = vadd.f32 %v2244, %v2245
      %v2247 = vrot.slane %v2246, 1
      %v2248 = vadd.f32 %v2246, %v2247
      %v2249 = vadd.f32 %v2248, %v91
      %v2250 = vxor.u32 %v2249, 2147483648
      %v2251 = vmul.f32 %v2250, 1.442695
      %v2252 = vpow.pop %v2251
      %v2253 = vadd.f32 %v2252, 1.0
      %v2254 = vrcp.pop %v2253
      %v2255 = vmul.f32 1.0, %v2254
      %v2256 = vmul.f32 %v2249, %v2255
      %v2257 = vmul.f32 %v92, %v2256
      %v2258 = vsel %vm228, %v2257, 0.0
      %2259 = vadd.xlane.f32.xlu0 %v2258
      %v2260 = vpop.xlane.xlu0 %2259
      %v2261 = vadd.f32 %v2260, %v93
      %v2262 = vmul.f32 %v233, %v2261
      %v2263 = vadd.f32 %v2027, %v2262
      %2265 = vset.pattern.permute.xlu0 0
      %2266 = vperm.xlu0 %2265, %v2263
      %v2267 = vpop.permute.xlu0 %2266
      %v2269 = vmul.f32 %v2267, %v77
      %v2270 = vadd.f32 %v2269, %v78
      %v2271 = vxor.u32 %v2270, 2147483648
      %v2272 = vmul.f32 %v2271, 1.442695
      %v2273 = vpow.pop %v2272
      %v2274 = vadd.f32 %v2273, 1.0
      %v2275 = vrcp.pop %v2274
      %v2276 = vmul.f32 1.0, %v2275
      %v2277 = vmul.f32 %v2270, %v2276
      %v2278 = vlaneseq
      %v2279 = vshrl.u32 %v2278, 7
      %v2280 = vsub.s32 0, %v2279
      %v2281 = vrot.slane %v2277, %v2280
      %v2282 = vmul.f32 %v79, %v2281
      %v2283 = vmul.f32 %v80, %v2281
      %v2284 = vmul.f32 %v81, %v2281
      %v2285 = vmul.f32 %v82, %v2281
      %v2286 = vsel %vm137, %v2282, 0.0
      %2287 = vadd.xlane.f32.xlu0 %v2286
      %v2288 = vpop.xlane.xlu0 %2287
      %v2289 = vsel %vm137, %v2283, 0.0
      %2290 = vadd.xlane.f32.xlu0 %v2289
      %v2291 = vpop.xlane.xlu0 %2290
      %v2292 = vsel %vm137, %v2284, 0.0
      %2293 = vadd.xlane.f32.xlu0 %v2292
      %v2294 = vpop.xlane.xlu0 %2293
      %v2295 = vsel %vm137, %v2285, 0.0
      %2296 = vadd.xlane.f32.xlu0 %v2295
      %v2297 = vpop.xlane.xlu0 %2296
      %v2298 = vadd.f32 %v2288, %v83
      %v2299 = vadd.f32 %v2291, %v84
      %v2300 = vadd.f32 %v2294, %v85
      %v2301 = vadd.f32 %v2297, %v86
      %v2302 = vxor.u32 %v2298, 2147483648
      %v2303 = vxor.u32 %v2299, 2147483648
      %v2304 = vxor.u32 %v2300, 2147483648
      %v2305 = vxor.u32 %v2301, 2147483648
      %v2306 = vmul.f32 %v2302, 1.442695
      %v2307 = vpow.pop %v2306
      %v2308 = vmul.f32 %v2303, 1.442695
      %v2309 = vpow.pop %v2308
      %v2310 = vmul.f32 %v2304, 1.442695
      %v2311 = vpow.pop %v2310
      %v2312 = vmul.f32 %v2305, 1.442695
      %v2313 = vpow.pop %v2312
      %v2314 = vadd.f32 %v2307, 1.0
      %v2315 = vadd.f32 %v2309, 1.0
      %v2316 = vadd.f32 %v2311, 1.0
      %v2317 = vadd.f32 %v2313, 1.0
      %v2318 = vrcp.pop %v2314
      %v2319 = vmul.f32 1.0, %v2318
      %v2320 = vrcp.pop %v2315
      %v2321 = vmul.f32 1.0, %v2320
      %v2322 = vrcp.pop %v2316
      %v2323 = vmul.f32 1.0, %v2322
      %v2324 = vrcp.pop %v2317
      %v2325 = vmul.f32 1.0, %v2324
      %v2326 = vmul.f32 %v2298, %v2319
      %v2327 = vmul.f32 %v2299, %v2321
      %v2328 = vmul.f32 %v2300, %v2323
      %v2329 = vmul.f32 %v2301, %v2325
      %2331 = vset.pattern.permute.xlu0 0
      %2332 = vperm.xlu0 %2331, %v2326
      %v2333 = vpop.permute.xlu0 %2332
      %2336 = vset.pattern.permute.xlu0 0
      %2337 = vperm.xlu0 %2336, %v2327
      %v2338 = vpop.permute.xlu0 %2337
      %2341 = vset.pattern.permute.xlu0 0
      %2342 = vperm.xlu0 %2341, %v2328
      %v2343 = vpop.permute.xlu0 %2342
      %2346 = vset.pattern.permute.xlu0 0
      %2347 = vperm.xlu0 %2346, %v2329
      %v2348 = vpop.permute.xlu0 %2347
      %v2350 = vmul.f32 %v87, %v2333
      %v2351 = vmul.f32 %v88, %v2338
      %v2352 = vmul.f32 %v89, %v2343
      %v2353 = vmul.f32 %v90, %v2348
      %v2354 = vsel %vm137, %v2350, 0.0
      %v2355 = vsel %vm137, %v2351, 0.0
      %v2356 = vadd.f32 %v2354, %v2355
      %v2357 = vsel %vm137, %v2352, 0.0
      %v2358 = vadd.f32 %v2356, %v2357
      %v2359 = vsel %vm137, %v2353, 0.0
      %v2360 = vadd.f32 %v2358, %v2359
      %v2361 = vrot.slane %v2360, 4
      %v2362 = vadd.f32 %v2360, %v2361
      %v2363 = vrot.slane %v2362, 2
      %v2364 = vadd.f32 %v2362, %v2363
      %v2365 = vrot.slane %v2364, 1
      %v2366 = vadd.f32 %v2364, %v2365
      %v2367 = vadd.f32 %v2366, %v91
      %v2368 = vxor.u32 %v2367, 2147483648
      %v2369 = vmul.f32 %v2368, 1.442695
      %v2370 = vpow.pop %v2369
      %v2371 = vadd.f32 %v2370, 1.0
      %v2372 = vrcp.pop %v2371
      %v2373 = vmul.f32 1.0, %v2372
      %v2374 = vmul.f32 %v2367, %v2373
      %v2375 = vmul.f32 %v92, %v2374
      %v2376 = vsel %vm228, %v2375, 0.0
      %2377 = vadd.xlane.f32.xlu0 %v2376
      %v2378 = vpop.xlane.xlu0 %2377
      %v2379 = vadd.f32 %v2378, %v93
      %v2380 = vmul.f32 %v470, %v2379
      %v2381 = vadd.f32 %v2027, %v2380
      %2383 = vset.pattern.permute.xlu0 0
      %2384 = vperm.xlu0 %2383, %v2381
      %v2385 = vpop.permute.xlu0 %2384
      %v2387 = vmul.f32 %v2385, %v77
      %v2388 = vadd.f32 %v2387, %v78
      %v2389 = vxor.u32 %v2388, 2147483648
      %v2390 = vmul.f32 %v2389, 1.442695
      %v2391 = vpow.pop %v2390
      %v2392 = vadd.f32 %v2391, 1.0
      %v2393 = vrcp.pop %v2392
      %v2394 = vmul.f32 1.0, %v2393
      %v2395 = vmul.f32 %v2388, %v2394
      %v2396 = vlaneseq
      %v2397 = vshrl.u32 %v2396, 7
      %v2398 = vsub.s32 0, %v2397
      %v2399 = vrot.slane %v2395, %v2398
      %v2400 = vmul.f32 %v79, %v2399
      %v2401 = vmul.f32 %v80, %v2399
      %v2402 = vmul.f32 %v81, %v2399
      %v2403 = vmul.f32 %v82, %v2399
      %v2404 = vsel %vm137, %v2400, 0.0
      %2405 = vadd.xlane.f32.xlu0 %v2404
      %v2406 = vpop.xlane.xlu0 %2405
      %v2407 = vsel %vm137, %v2401, 0.0
      %2408 = vadd.xlane.f32.xlu0 %v2407
      %v2409 = vpop.xlane.xlu0 %2408
      %v2410 = vsel %vm137, %v2402, 0.0
      %2411 = vadd.xlane.f32.xlu0 %v2410
      %v2412 = vpop.xlane.xlu0 %2411
      %v2413 = vsel %vm137, %v2403, 0.0
      %2414 = vadd.xlane.f32.xlu0 %v2413
      %v2415 = vpop.xlane.xlu0 %2414
      %v2416 = vadd.f32 %v2406, %v83
      %v2417 = vadd.f32 %v2409, %v84
      %v2418 = vadd.f32 %v2412, %v85
      %v2419 = vadd.f32 %v2415, %v86
      %v2420 = vxor.u32 %v2416, 2147483648
      %v2421 = vxor.u32 %v2417, 2147483648
      %v2422 = vxor.u32 %v2418, 2147483648
      %v2423 = vxor.u32 %v2419, 2147483648
      %v2424 = vmul.f32 %v2420, 1.442695
      %v2425 = vpow.pop %v2424
      %v2426 = vmul.f32 %v2421, 1.442695
      %v2427 = vpow.pop %v2426
      %v2428 = vmul.f32 %v2422, 1.442695
      %v2429 = vpow.pop %v2428
      %v2430 = vmul.f32 %v2423, 1.442695
      %v2431 = vpow.pop %v2430
      %v2432 = vadd.f32 %v2425, 1.0
      %v2433 = vadd.f32 %v2427, 1.0
      %v2434 = vadd.f32 %v2429, 1.0
      %v2435 = vadd.f32 %v2431, 1.0
      %v2436 = vrcp.pop %v2432
      %v2437 = vmul.f32 1.0, %v2436
      %v2438 = vrcp.pop %v2433
      %v2439 = vmul.f32 1.0, %v2438
      %v2440 = vrcp.pop %v2434
      %v2441 = vmul.f32 1.0, %v2440
      %v2442 = vrcp.pop %v2435
      %v2443 = vmul.f32 1.0, %v2442
      %v2444 = vmul.f32 %v2416, %v2437
      %v2445 = vmul.f32 %v2417, %v2439
      %v2446 = vmul.f32 %v2418, %v2441
      %v2447 = vmul.f32 %v2419, %v2443
      %2449 = vset.pattern.permute.xlu0 0
      %2450 = vperm.xlu0 %2449, %v2444
      %v2451 = vpop.permute.xlu0 %2450
      %2454 = vset.pattern.permute.xlu0 0
      %2455 = vperm.xlu0 %2454, %v2445
      %v2456 = vpop.permute.xlu0 %2455
      %2459 = vset.pattern.permute.xlu0 0
      %2460 = vperm.xlu0 %2459, %v2446
      %v2461 = vpop.permute.xlu0 %2460
      %2464 = vset.pattern.permute.xlu0 0
      %2465 = vperm.xlu0 %2464, %v2447
      %v2466 = vpop.permute.xlu0 %2465
      %v2468 = vmul.f32 %v87, %v2451
      %v2469 = vmul.f32 %v88, %v2456
      %v2470 = vmul.f32 %v89, %v2461
      %v2471 = vmul.f32 %v90, %v2466
      %v2472 = vsel %vm137, %v2468, 0.0
      %v2473 = vsel %vm137, %v2469, 0.0
      %v2474 = vadd.f32 %v2472, %v2473
      %v2475 = vsel %vm137, %v2470, 0.0
      %v2476 = vadd.f32 %v2474, %v2475
      %v2477 = vsel %vm137, %v2471, 0.0
      %v2478 = vadd.f32 %v2476, %v2477
      %v2479 = vrot.slane %v2478, 4
      %v2480 = vadd.f32 %v2478, %v2479
      %v2481 = vrot.slane %v2480, 2
      %v2482 = vadd.f32 %v2480, %v2481
      %v2483 = vrot.slane %v2482, 1
      %v2484 = vadd.f32 %v2482, %v2483
      %v2485 = vadd.f32 %v2484, %v91
      %v2486 = vxor.u32 %v2485, 2147483648
      %v2487 = vmul.f32 %v2486, 1.442695
      %v2488 = vpow.pop %v2487
      %v2489 = vadd.f32 %v2488, 1.0
      %v2490 = vrcp.pop %v2489
      %v2491 = vmul.f32 1.0, %v2490
      %v2492 = vmul.f32 %v2485, %v2491
      %v2493 = vmul.f32 %v92, %v2492
      %v2494 = vsel %vm228, %v2493, 0.0
      %2495 = vadd.xlane.f32.xlu0 %v2494
      %v2496 = vpop.xlane.xlu0 %2495
      %v2497 = vadd.f32 %v2496, %v93
      %v2498 = vmul.f32 %v2261, 2.0
      %v2499 = vadd.f32 %v2143, %v2498
      %v2500 = vmul.f32 %v2379, 2.0
      %v2501 = vadd.f32 %v2499, %v2500
      %v2502 = vadd.f32 %v2501, %v2497
      %v2503 = vmul.f32 %v594, %v2502
      %v2504 = vadd.f32 %v2027, %v2503
      %2506 = vset.pattern.permute.xlu0 0
      %2507 = vperm.xlu0 %2506, %v2504
      %v2508 = vpop.permute.xlu0 %2507
      %v2510 = vmul.f32 %v2508, %v77
      %v2511 = vadd.f32 %v2510, %v78
      %v2512 = vxor.u32 %v2511, 2147483648
      %v2513 = vmul.f32 %v2512, 1.442695
      %v2514 = vpow.pop %v2513
      %v2515 = vadd.f32 %v2514, 1.0
      %v2516 = vrcp.pop %v2515
      %v2517 = vmul.f32 1.0, %v2516
      %v2518 = vmul.f32 %v2511, %v2517
      %v2519 = vlaneseq
      %v2520 = vshrl.u32 %v2519, 7
      %v2521 = vsub.s32 0, %v2520
      %v2522 = vrot.slane %v2518, %v2521
      %v2523 = vmul.f32 %v79, %v2522
      %v2524 = vmul.f32 %v80, %v2522
      %v2525 = vmul.f32 %v81, %v2522
      %v2526 = vmul.f32 %v82, %v2522
      %v2527 = vsel %vm137, %v2523, 0.0
      %2528 = vadd.xlane.f32.xlu0 %v2527
      %v2529 = vpop.xlane.xlu0 %2528
      %v2530 = vsel %vm137, %v2524, 0.0
      %2531 = vadd.xlane.f32.xlu0 %v2530
      %v2532 = vpop.xlane.xlu0 %2531
      %v2533 = vsel %vm137, %v2525, 0.0
      %2534 = vadd.xlane.f32.xlu0 %v2533
      %v2535 = vpop.xlane.xlu0 %2534
      %v2536 = vsel %vm137, %v2526, 0.0
      %2537 = vadd.xlane.f32.xlu0 %v2536
      %v2538 = vpop.xlane.xlu0 %2537
      %v2539 = vadd.f32 %v2529, %v83
      %v2540 = vadd.f32 %v2532, %v84
      %v2541 = vadd.f32 %v2535, %v85
      %v2542 = vadd.f32 %v2538, %v86
      %v2543 = vxor.u32 %v2539, 2147483648
      %v2544 = vxor.u32 %v2540, 2147483648
      %v2545 = vxor.u32 %v2541, 2147483648
      %v2546 = vxor.u32 %v2542, 2147483648
      %v2547 = vmul.f32 %v2543, 1.442695
      %v2548 = vpow.pop %v2547
      %v2549 = vmul.f32 %v2544, 1.442695
      %v2550 = vpow.pop %v2549
      %v2551 = vmul.f32 %v2545, 1.442695
      %v2552 = vpow.pop %v2551
      %v2553 = vmul.f32 %v2546, 1.442695
      %v2554 = vpow.pop %v2553
      %v2555 = vadd.f32 %v2548, 1.0
      %v2556 = vadd.f32 %v2550, 1.0
      %v2557 = vadd.f32 %v2552, 1.0
      %v2558 = vadd.f32 %v2554, 1.0
      %v2559 = vrcp.pop %v2555
      %v2560 = vmul.f32 1.0, %v2559
      %v2561 = vrcp.pop %v2556
      %v2562 = vmul.f32 1.0, %v2561
      %v2563 = vrcp.pop %v2557
      %v2564 = vmul.f32 1.0, %v2563
      %v2565 = vrcp.pop %v2558
      %v2566 = vmul.f32 1.0, %v2565
      %v2567 = vmul.f32 %v2539, %v2560
      %v2568 = vmul.f32 %v2540, %v2562
      %v2569 = vmul.f32 %v2541, %v2564
      %v2570 = vmul.f32 %v2542, %v2566
      %2572 = vset.pattern.permute.xlu0 0
      %2573 = vperm.xlu0 %2572, %v2567
      %v2574 = vpop.permute.xlu0 %2573
      %2577 = vset.pattern.permute.xlu0 0
      %2578 = vperm.xlu0 %2577, %v2568
      %v2579 = vpop.permute.xlu0 %2578
      %2582 = vset.pattern.permute.xlu0 0
      %2583 = vperm.xlu0 %2582, %v2569
      %v2584 = vpop.permute.xlu0 %2583
      %2587 = vset.pattern.permute.xlu0 0
      %2588 = vperm.xlu0 %2587, %v2570
      %v2589 = vpop.permute.xlu0 %2588
      %v2591 = vmul.f32 %v87, %v2574
      %v2592 = vmul.f32 %v88, %v2579
      %v2593 = vmul.f32 %v89, %v2584
      %v2594 = vmul.f32 %v90, %v2589
      %v2595 = vsel %vm137, %v2591, 0.0
      %v2596 = vsel %vm137, %v2592, 0.0
      %v2597 = vadd.f32 %v2595, %v2596
      %v2598 = vsel %vm137, %v2593, 0.0
      %v2599 = vadd.f32 %v2597, %v2598
      %v2600 = vsel %vm137, %v2594, 0.0
      %v2601 = vadd.f32 %v2599, %v2600
      %v2602 = vrot.slane %v2601, 4
      %v2603 = vadd.f32 %v2601, %v2602
      %v2604 = vrot.slane %v2603, 2
      %v2605 = vadd.f32 %v2603, %v2604
      %v2606 = vrot.slane %v2605, 1
      %v2607 = vadd.f32 %v2605, %v2606
      %v2608 = vadd.f32 %v2607, %v91
      %v2609 = vxor.u32 %v2608, 2147483648
      %v2610 = vmul.f32 %v2609, 1.442695
      %v2611 = vpow.pop %v2610
      %v2612 = vadd.f32 %v2611, 1.0
      %v2613 = vrcp.pop %v2612
      %v2614 = vmul.f32 1.0, %v2613
      %v2615 = vmul.f32 %v2608, %v2614
      %v2616 = vmul.f32 %v92, %v2615
      %v2617 = vsel %vm228, %v2616, 0.0
      %2618 = vadd.xlane.f32.xlu0 %v2617
      %v2619 = vpop.xlane.xlu0 %2618
      %v2620 = vadd.f32 %v2619, %v93
      %v2621 = vmul.f32 %v233, %v2620
      %v2622 = vadd.f32 %v2504, %v2621
      %2624 = vset.pattern.permute.xlu0 0
      %2625 = vperm.xlu0 %2624, %v2622
      %v2626 = vpop.permute.xlu0 %2625
      %v2628 = vmul.f32 %v2626, %v77
      %v2629 = vadd.f32 %v2628, %v78
      %v2630 = vxor.u32 %v2629, 2147483648
      %v2631 = vmul.f32 %v2630, 1.442695
      %v2632 = vpow.pop %v2631
      %v2633 = vadd.f32 %v2632, 1.0
      %v2634 = vrcp.pop %v2633
      %v2635 = vmul.f32 1.0, %v2634
      %v2636 = vmul.f32 %v2629, %v2635
      %v2637 = vlaneseq
      %v2638 = vshrl.u32 %v2637, 7
      %v2639 = vsub.s32 0, %v2638
      %v2640 = vrot.slane %v2636, %v2639
      %v2641 = vmul.f32 %v79, %v2640
      %v2642 = vmul.f32 %v80, %v2640
      %v2643 = vmul.f32 %v81, %v2640
      %v2644 = vmul.f32 %v82, %v2640
      %v2645 = vsel %vm137, %v2641, 0.0
      %2646 = vadd.xlane.f32.xlu0 %v2645
      %v2647 = vpop.xlane.xlu0 %2646
      %v2648 = vsel %vm137, %v2642, 0.0
      %2649 = vadd.xlane.f32.xlu0 %v2648
      %v2650 = vpop.xlane.xlu0 %2649
      %v2651 = vsel %vm137, %v2643, 0.0
      %2652 = vadd.xlane.f32.xlu0 %v2651
      %v2653 = vpop.xlane.xlu0 %2652
      %v2654 = vsel %vm137, %v2644, 0.0
      %2655 = vadd.xlane.f32.xlu0 %v2654
      %v2656 = vpop.xlane.xlu0 %2655
      %v2657 = vadd.f32 %v2647, %v83
      %v2658 = vadd.f32 %v2650, %v84
      %v2659 = vadd.f32 %v2653, %v85
      %v2660 = vadd.f32 %v2656, %v86
      %v2661 = vxor.u32 %v2657, 2147483648
      %v2662 = vxor.u32 %v2658, 2147483648
      %v2663 = vxor.u32 %v2659, 2147483648
      %v2664 = vxor.u32 %v2660, 2147483648
      %v2665 = vmul.f32 %v2661, 1.442695
      %v2666 = vpow.pop %v2665
      %v2667 = vmul.f32 %v2662, 1.442695
      %v2668 = vpow.pop %v2667
      %v2669 = vmul.f32 %v2663, 1.442695
      %v2670 = vpow.pop %v2669
      %v2671 = vmul.f32 %v2664, 1.442695
      %v2672 = vpow.pop %v2671
      %v2673 = vadd.f32 %v2666, 1.0
      %v2674 = vadd.f32 %v2668, 1.0
      %v2675 = vadd.f32 %v2670, 1.0
      %v2676 = vadd.f32 %v2672, 1.0
      %v2677 = vrcp.pop %v2673
      %v2678 = vmul.f32 1.0, %v2677
      %v2679 = vrcp.pop %v2674
      %v2680 = vmul.f32 1.0, %v2679
      %v2681 = vrcp.pop %v2675
      %v2682 = vmul.f32 1.0, %v2681
      %v2683 = vrcp.pop %v2676
      %v2684 = vmul.f32 1.0, %v2683
      %v2685 = vmul.f32 %v2657, %v2678
      %v2686 = vmul.f32 %v2658, %v2680
      %v2687 = vmul.f32 %v2659, %v2682
      %v2688 = vmul.f32 %v2660, %v2684
      %2690 = vset.pattern.permute.xlu0 0
      %2691 = vperm.xlu0 %2690, %v2685
      %v2692 = vpop.permute.xlu0 %2691
      %2695 = vset.pattern.permute.xlu0 0
      %2696 = vperm.xlu0 %2695, %v2686
      %v2697 = vpop.permute.xlu0 %2696
      %2700 = vset.pattern.permute.xlu0 0
      %2701 = vperm.xlu0 %2700, %v2687
      %v2702 = vpop.permute.xlu0 %2701
      %2705 = vset.pattern.permute.xlu0 0
      %2706 = vperm.xlu0 %2705, %v2688
      %v2707 = vpop.permute.xlu0 %2706
      %v2709 = vmul.f32 %v87, %v2692
      %v2710 = vmul.f32 %v88, %v2697
      %v2711 = vmul.f32 %v89, %v2702
      %v2712 = vmul.f32 %v90, %v2707
      %v2713 = vsel %vm137, %v2709, 0.0
      %v2714 = vsel %vm137, %v2710, 0.0
      %v2715 = vadd.f32 %v2713, %v2714
      %v2716 = vsel %vm137, %v2711, 0.0
      %v2717 = vadd.f32 %v2715, %v2716
      %v2718 = vsel %vm137, %v2712, 0.0
      %v2719 = vadd.f32 %v2717, %v2718
      %v2720 = vrot.slane %v2719, 4
      %v2721 = vadd.f32 %v2719, %v2720
      %v2722 = vrot.slane %v2721, 2
      %v2723 = vadd.f32 %v2721, %v2722
      %v2724 = vrot.slane %v2723, 1
      %v2725 = vadd.f32 %v2723, %v2724
      %v2726 = vadd.f32 %v2725, %v91
      %v2727 = vxor.u32 %v2726, 2147483648
      %v2728 = vmul.f32 %v2727, 1.442695
      %v2729 = vpow.pop %v2728
      %v2730 = vadd.f32 %v2729, 1.0
      %v2731 = vrcp.pop %v2730
      %v2732 = vmul.f32 1.0, %v2731
      %v2733 = vmul.f32 %v2726, %v2732
      %v2734 = vmul.f32 %v92, %v2733
      %v2735 = vsel %vm228, %v2734, 0.0
      %2736 = vadd.xlane.f32.xlu0 %v2735
      %v2737 = vpop.xlane.xlu0 %2736
      %v2738 = vadd.f32 %v2737, %v93
      %v2739 = vmul.f32 %v233, %v2738
      %v2740 = vadd.f32 %v2504, %v2739
      %2742 = vset.pattern.permute.xlu0 0
      %2743 = vperm.xlu0 %2742, %v2740
      %v2744 = vpop.permute.xlu0 %2743
      %v2746 = vmul.f32 %v2744, %v77
      %v2747 = vadd.f32 %v2746, %v78
      %v2748 = vxor.u32 %v2747, 2147483648
      %v2749 = vmul.f32 %v2748, 1.442695
      %v2750 = vpow.pop %v2749
      %v2751 = vadd.f32 %v2750, 1.0
      %v2752 = vrcp.pop %v2751
      %v2753 = vmul.f32 1.0, %v2752
      %v2754 = vmul.f32 %v2747, %v2753
      %v2755 = vlaneseq
      %v2756 = vshrl.u32 %v2755, 7
      %v2757 = vsub.s32 0, %v2756
      %v2758 = vrot.slane %v2754, %v2757
      %v2759 = vmul.f32 %v79, %v2758
      %v2760 = vmul.f32 %v80, %v2758
      %v2761 = vmul.f32 %v81, %v2758
      %v2762 = vmul.f32 %v82, %v2758
      %v2763 = vsel %vm137, %v2759, 0.0
      %2764 = vadd.xlane.f32.xlu0 %v2763
      %v2765 = vpop.xlane.xlu0 %2764
      %v2766 = vsel %vm137, %v2760, 0.0
      %2767 = vadd.xlane.f32.xlu0 %v2766
      %v2768 = vpop.xlane.xlu0 %2767
      %v2769 = vsel %vm137, %v2761, 0.0
      %2770 = vadd.xlane.f32.xlu0 %v2769
      %v2771 = vpop.xlane.xlu0 %2770
      %v2772 = vsel %vm137, %v2762, 0.0
      %2773 = vadd.xlane.f32.xlu0 %v2772
      %v2774 = vpop.xlane.xlu0 %2773
      %v2775 = vadd.f32 %v2765, %v83
      %v2776 = vadd.f32 %v2768, %v84
      %v2777 = vadd.f32 %v2771, %v85
      %v2778 = vadd.f32 %v2774, %v86
      %v2779 = vxor.u32 %v2775, 2147483648
      %v2780 = vxor.u32 %v2776, 2147483648
      %v2781 = vxor.u32 %v2777, 2147483648
      %v2782 = vxor.u32 %v2778, 2147483648
      %v2783 = vmul.f32 %v2779, 1.442695
      %v2784 = vpow.pop %v2783
      %v2785 = vmul.f32 %v2780, 1.442695
      %v2786 = vpow.pop %v2785
      %v2787 = vmul.f32 %v2781, 1.442695
      %v2788 = vpow.pop %v2787
      %v2789 = vmul.f32 %v2782, 1.442695
      %v2790 = vpow.pop %v2789
      %v2791 = vadd.f32 %v2784, 1.0
      %v2792 = vadd.f32 %v2786, 1.0
      %v2793 = vadd.f32 %v2788, 1.0
      %v2794 = vadd.f32 %v2790, 1.0
      %v2795 = vrcp.pop %v2791
      %v2796 = vmul.f32 1.0, %v2795
      %v2797 = vrcp.pop %v2792
      %v2798 = vmul.f32 1.0, %v2797
      %v2799 = vrcp.pop %v2793
      %v2800 = vmul.f32 1.0, %v2799
      %v2801 = vrcp.pop %v2794
      %v2802 = vmul.f32 1.0, %v2801
      %v2803 = vmul.f32 %v2775, %v2796
      %v2804 = vmul.f32 %v2776, %v2798
      %v2805 = vmul.f32 %v2777, %v2800
      %v2806 = vmul.f32 %v2778, %v2802
      %2808 = vset.pattern.permute.xlu0 0
      %2809 = vperm.xlu0 %2808, %v2803
      %v2810 = vpop.permute.xlu0 %2809
      %2813 = vset.pattern.permute.xlu0 0
      %2814 = vperm.xlu0 %2813, %v2804
      %v2815 = vpop.permute.xlu0 %2814
      %2818 = vset.pattern.permute.xlu0 0
      %2819 = vperm.xlu0 %2818, %v2805
      %v2820 = vpop.permute.xlu0 %2819
      %2823 = vset.pattern.permute.xlu0 0
      %2824 = vperm.xlu0 %2823, %v2806
      %v2825 = vpop.permute.xlu0 %2824
      %v2827 = vmul.f32 %v87, %v2810
      %v2828 = vmul.f32 %v88, %v2815
      %v2829 = vmul.f32 %v89, %v2820
      %v2830 = vmul.f32 %v90, %v2825
      %v2831 = vsel %vm137, %v2827, 0.0
      %v2832 = vsel %vm137, %v2828, 0.0
      %v2833 = vadd.f32 %v2831, %v2832
      %v2834 = vsel %vm137, %v2829, 0.0
      %v2835 = vadd.f32 %v2833, %v2834
      %v2836 = vsel %vm137, %v2830, 0.0
      %v2837 = vadd.f32 %v2835, %v2836
      %v2838 = vrot.slane %v2837, 4
      %v2839 = vadd.f32 %v2837, %v2838
      %v2840 = vrot.slane %v2839, 2
      %v2841 = vadd.f32 %v2839, %v2840
      %v2842 = vrot.slane %v2841, 1
      %v2843 = vadd.f32 %v2841, %v2842
      %v2844 = vadd.f32 %v2843, %v91
      %v2845 = vxor.u32 %v2844, 2147483648
      %v2846 = vmul.f32 %v2845, 1.442695
      %v2847 = vpow.pop %v2846
      %v2848 = vadd.f32 %v2847, 1.0
      %v2849 = vrcp.pop %v2848
      %v2850 = vmul.f32 1.0, %v2849
      %v2851 = vmul.f32 %v2844, %v2850
      %v2852 = vmul.f32 %v92, %v2851
      %v2853 = vsel %vm228, %v2852, 0.0
      %2854 = vadd.xlane.f32.xlu0 %v2853
      %v2855 = vpop.xlane.xlu0 %2854
      %v2856 = vadd.f32 %v2855, %v93
      %v2857 = vmul.f32 %v470, %v2856
      %v2858 = vadd.f32 %v2504, %v2857
      %2860 = vset.pattern.permute.xlu0 0
      %2861 = vperm.xlu0 %2860, %v2858
      %v2862 = vpop.permute.xlu0 %2861
      %v2864 = vmul.f32 %v2862, %v77
      %v2865 = vadd.f32 %v2864, %v78
      %v2866 = vxor.u32 %v2865, 2147483648
      %v2867 = vmul.f32 %v2866, 1.442695
      %v2868 = vpow.pop %v2867
      %v2869 = vadd.f32 %v2868, 1.0
      %v2870 = vrcp.pop %v2869
      %v2871 = vmul.f32 1.0, %v2870
      %v2872 = vmul.f32 %v2865, %v2871
      %v2873 = vlaneseq
      %v2874 = vshrl.u32 %v2873, 7
      %v2875 = vsub.s32 0, %v2874
      %v2876 = vrot.slane %v2872, %v2875
      %v2877 = vmul.f32 %v79, %v2876
      %v2878 = vmul.f32 %v80, %v2876
      %v2879 = vmul.f32 %v81, %v2876
      %v2880 = vmul.f32 %v82, %v2876
      %v2881 = vsel %vm137, %v2877, 0.0
      %2882 = vadd.xlane.f32.xlu0 %v2881
      %v2883 = vpop.xlane.xlu0 %2882
      %v2884 = vsel %vm137, %v2878, 0.0
      %2885 = vadd.xlane.f32.xlu0 %v2884
      %v2886 = vpop.xlane.xlu0 %2885
      %v2887 = vsel %vm137, %v2879, 0.0
      %2888 = vadd.xlane.f32.xlu0 %v2887
      %v2889 = vpop.xlane.xlu0 %2888
      %v2890 = vsel %vm137, %v2880, 0.0
      %2891 = vadd.xlane.f32.xlu0 %v2890
      %v2892 = vpop.xlane.xlu0 %2891
      %v2893 = vadd.f32 %v2883, %v83
      %v2894 = vadd.f32 %v2886, %v84
      %v2895 = vadd.f32 %v2889, %v85
      %v2896 = vadd.f32 %v2892, %v86
      %v2897 = vxor.u32 %v2893, 2147483648
      %v2898 = vxor.u32 %v2894, 2147483648
      %v2899 = vxor.u32 %v2895, 2147483648
      %v2900 = vxor.u32 %v2896, 2147483648
      %v2901 = vmul.f32 %v2897, 1.442695
      %v2902 = vpow.pop %v2901
      %v2903 = vmul.f32 %v2898, 1.442695
      %v2904 = vpow.pop %v2903
      %v2905 = vmul.f32 %v2899, 1.442695
      %v2906 = vpow.pop %v2905
      %v2907 = vmul.f32 %v2900, 1.442695
      %v2908 = vpow.pop %v2907
      %v2909 = vadd.f32 %v2902, 1.0
      %v2910 = vadd.f32 %v2904, 1.0
      %v2911 = vadd.f32 %v2906, 1.0
      %v2912 = vadd.f32 %v2908, 1.0
      %v2913 = vrcp.pop %v2909
      %v2914 = vmul.f32 1.0, %v2913
      %v2915 = vrcp.pop %v2910
      %v2916 = vmul.f32 1.0, %v2915
      %v2917 = vrcp.pop %v2911
      %v2918 = vmul.f32 1.0, %v2917
      %v2919 = vrcp.pop %v2912
      %v2920 = vmul.f32 1.0, %v2919
      %v2921 = vmul.f32 %v2893, %v2914
      %v2922 = vmul.f32 %v2894, %v2916
      %v2923 = vmul.f32 %v2895, %v2918
      %v2924 = vmul.f32 %v2896, %v2920
      %2926 = vset.pattern.permute.xlu0 0
      %2927 = vperm.xlu0 %2926, %v2921
      %v2928 = vpop.permute.xlu0 %2927
      %2931 = vset.pattern.permute.xlu0 0
      %2932 = vperm.xlu0 %2931, %v2922
      %v2933 = vpop.permute.xlu0 %2932
      %2936 = vset.pattern.permute.xlu0 0
      %2937 = vperm.xlu0 %2936, %v2923
      %v2938 = vpop.permute.xlu0 %2937
      %2941 = vset.pattern.permute.xlu0 0
      %2942 = vperm.xlu0 %2941, %v2924
      %v2943 = vpop.permute.xlu0 %2942
      %v2945 = vmul.f32 %v87, %v2928
      %v2946 = vmul.f32 %v88, %v2933
      %v2947 = vmul.f32 %v89, %v2938
      %v2948 = vmul.f32 %v90, %v2943
      %v2949 = vsel %vm137, %v2945, 0.0
      %v2950 = vsel %vm137, %v2946, 0.0
      %v2951 = vadd.f32 %v2949, %v2950
      %v2952 = vsel %vm137, %v2947, 0.0
      %v2953 = vadd.f32 %v2951, %v2952
      %v2954 = vsel %vm137, %v2948, 0.0
      %v2955 = vadd.f32 %v2953, %v2954
      %v2956 = vrot.slane %v2955, 4
      %v2957 = vadd.f32 %v2955, %v2956
      %v2958 = vrot.slane %v2957, 2
      %v2959 = vadd.f32 %v2957, %v2958
      %v2960 = vrot.slane %v2959, 1
      %v2961 = vadd.f32 %v2959, %v2960
      %v2962 = vadd.f32 %v2961, %v91
      %v2963 = vxor.u32 %v2962, 2147483648
      %v2964 = vmul.f32 %v2963, 1.442695
      %v2965 = vpow.pop %v2964
      %v2966 = vadd.f32 %v2965, 1.0
      %v2967 = vrcp.pop %v2966
      %v2968 = vmul.f32 1.0, %v2967
      %v2969 = vmul.f32 %v2962, %v2968
      %v2970 = vmul.f32 %v92, %v2969
      %v2971 = vsel %vm228, %v2970, 0.0
      %2972 = vadd.xlane.f32.xlu0 %v2971
      %v2973 = vpop.xlane.xlu0 %2972
      %v2974 = vadd.f32 %v2973, %v93
      %v2975 = vmul.f32 %v2738, 2.0
      %v2976 = vadd.f32 %v2620, %v2975
      %v2977 = vmul.f32 %v2856, 2.0
      %v2978 = vadd.f32 %v2976, %v2977
      %v2979 = vadd.f32 %v2978, %v2974
      %v2980 = vmul.f32 %v594, %v2979
      %v2981 = vadd.f32 %v2504, %v2980
      %2983 = vset.pattern.permute.xlu0 0
      %2984 = vperm.xlu0 %2983, %v2981
      %v2985 = vpop.permute.xlu0 %2984
      %v2987 = vmul.f32 %v2985, %v77
      %v2988 = vadd.f32 %v2987, %v78
      %v2989 = vxor.u32 %v2988, 2147483648
      %v2990 = vmul.f32 %v2989, 1.442695
      %v2991 = vpow.pop %v2990
      %v2992 = vadd.f32 %v2991, 1.0
      %v2993 = vrcp.pop %v2992
      %v2994 = vmul.f32 1.0, %v2993
      %v2995 = vmul.f32 %v2988, %v2994
      %v2996 = vlaneseq
      %v2997 = vshrl.u32 %v2996, 7
      %v2998 = vsub.s32 0, %v2997
      %v2999 = vrot.slane %v2995, %v2998
      %v3000 = vmul.f32 %v79, %v2999
      %v3001 = vmul.f32 %v80, %v2999
      %v3002 = vmul.f32 %v81, %v2999
      %v3003 = vmul.f32 %v82, %v2999
      %v3004 = vsel %vm137, %v3000, 0.0
      %3005 = vadd.xlane.f32.xlu0 %v3004
      %v3006 = vpop.xlane.xlu0 %3005
      %v3007 = vsel %vm137, %v3001, 0.0
      %3008 = vadd.xlane.f32.xlu0 %v3007
      %v3009 = vpop.xlane.xlu0 %3008
      %v3010 = vsel %vm137, %v3002, 0.0
      %3011 = vadd.xlane.f32.xlu0 %v3010
      %v3012 = vpop.xlane.xlu0 %3011
      %v3013 = vsel %vm137, %v3003, 0.0
      %3014 = vadd.xlane.f32.xlu0 %v3013
      %v3015 = vpop.xlane.xlu0 %3014
      %v3016 = vadd.f32 %v3006, %v83
      %v3017 = vadd.f32 %v3009, %v84
      %v3018 = vadd.f32 %v3012, %v85
      %v3019 = vadd.f32 %v3015, %v86
      %v3020 = vxor.u32 %v3016, 2147483648
      %v3021 = vxor.u32 %v3017, 2147483648
      %v3022 = vxor.u32 %v3018, 2147483648
      %v3023 = vxor.u32 %v3019, 2147483648
      %v3024 = vmul.f32 %v3020, 1.442695
      %v3025 = vpow.pop %v3024
      %v3026 = vmul.f32 %v3021, 1.442695
      %v3027 = vpow.pop %v3026
      %v3028 = vmul.f32 %v3022, 1.442695
      %v3029 = vpow.pop %v3028
      %v3030 = vmul.f32 %v3023, 1.442695
      %v3031 = vpow.pop %v3030
      %v3032 = vadd.f32 %v3025, 1.0
      %v3033 = vadd.f32 %v3027, 1.0
      %v3034 = vadd.f32 %v3029, 1.0
      %v3035 = vadd.f32 %v3031, 1.0
      %v3036 = vrcp.pop %v3032
      %v3037 = vmul.f32 1.0, %v3036
      %v3038 = vrcp.pop %v3033
      %v3039 = vmul.f32 1.0, %v3038
      %v3040 = vrcp.pop %v3034
      %v3041 = vmul.f32 1.0, %v3040
      %v3042 = vrcp.pop %v3035
      %v3043 = vmul.f32 1.0, %v3042
      %v3044 = vmul.f32 %v3016, %v3037
      %v3045 = vmul.f32 %v3017, %v3039
      %v3046 = vmul.f32 %v3018, %v3041
      %v3047 = vmul.f32 %v3019, %v3043
      %3049 = vset.pattern.permute.xlu0 0
      %3050 = vperm.xlu0 %3049, %v3044
      %v3051 = vpop.permute.xlu0 %3050
      %3054 = vset.pattern.permute.xlu0 0
      %3055 = vperm.xlu0 %3054, %v3045
      %v3056 = vpop.permute.xlu0 %3055
      %3059 = vset.pattern.permute.xlu0 0
      %3060 = vperm.xlu0 %3059, %v3046
      %v3061 = vpop.permute.xlu0 %3060
      %3064 = vset.pattern.permute.xlu0 0
      %3065 = vperm.xlu0 %3064, %v3047
      %v3066 = vpop.permute.xlu0 %3065
      %v3068 = vmul.f32 %v87, %v3051
      %v3069 = vmul.f32 %v88, %v3056
      %v3070 = vmul.f32 %v89, %v3061
      %v3071 = vmul.f32 %v90, %v3066
      %v3072 = vsel %vm137, %v3068, 0.0
      %v3073 = vsel %vm137, %v3069, 0.0
      %v3074 = vadd.f32 %v3072, %v3073
      %v3075 = vsel %vm137, %v3070, 0.0
      %v3076 = vadd.f32 %v3074, %v3075
      %v3077 = vsel %vm137, %v3071, 0.0
      %v3078 = vadd.f32 %v3076, %v3077
      %v3079 = vrot.slane %v3078, 4
      %v3080 = vadd.f32 %v3078, %v3079
      %v3081 = vrot.slane %v3080, 2
      %v3082 = vadd.f32 %v3080, %v3081
      %v3083 = vrot.slane %v3082, 1
      %v3084 = vadd.f32 %v3082, %v3083
      %v3085 = vadd.f32 %v3084, %v91
      %v3086 = vxor.u32 %v3085, 2147483648
      %v3087 = vmul.f32 %v3086, 1.442695
      %v3088 = vpow.pop %v3087
      %v3089 = vadd.f32 %v3088, 1.0
      %v3090 = vrcp.pop %v3089
      %v3091 = vmul.f32 1.0, %v3090
      %v3092 = vmul.f32 %v3085, %v3091
      %v3093 = vmul.f32 %v92, %v3092
      %v3094 = vsel %vm228, %v3093, 0.0
      %3095 = vadd.xlane.f32.xlu0 %v3094
      %v3096 = vpop.xlane.xlu0 %3095
      %v3097 = vadd.f32 %v3096, %v93
      %v3098 = vmul.f32 %v233, %v3097
      %v3099 = vadd.f32 %v2981, %v3098
      %3101 = vset.pattern.permute.xlu0 0
      %3102 = vperm.xlu0 %3101, %v3099
      %v3103 = vpop.permute.xlu0 %3102
      %v3105 = vmul.f32 %v3103, %v77
      %v3106 = vadd.f32 %v3105, %v78
      %v3107 = vxor.u32 %v3106, 2147483648
      %v3108 = vmul.f32 %v3107, 1.442695
      %v3109 = vpow.pop %v3108
      %v3110 = vadd.f32 %v3109, 1.0
      %v3111 = vrcp.pop %v3110
      %v3112 = vmul.f32 1.0, %v3111
      %v3113 = vmul.f32 %v3106, %v3112
      %v3114 = vlaneseq
      %v3115 = vshrl.u32 %v3114, 7
      %v3116 = vsub.s32 0, %v3115
      %v3117 = vrot.slane %v3113, %v3116
      %v3118 = vmul.f32 %v79, %v3117
      %v3119 = vmul.f32 %v80, %v3117
      %v3120 = vmul.f32 %v81, %v3117
      %v3121 = vmul.f32 %v82, %v3117
      %v3122 = vsel %vm137, %v3118, 0.0
      %3123 = vadd.xlane.f32.xlu0 %v3122
      %v3124 = vpop.xlane.xlu0 %3123
      %v3125 = vsel %vm137, %v3119, 0.0
      %3126 = vadd.xlane.f32.xlu0 %v3125
      %v3127 = vpop.xlane.xlu0 %3126
      %v3128 = vsel %vm137, %v3120, 0.0
      %3129 = vadd.xlane.f32.xlu0 %v3128
      %v3130 = vpop.xlane.xlu0 %3129
      %v3131 = vsel %vm137, %v3121, 0.0
      %3132 = vadd.xlane.f32.xlu0 %v3131
      %v3133 = vpop.xlane.xlu0 %3132
      %v3134 = vadd.f32 %v3124, %v83
      %v3135 = vadd.f32 %v3127, %v84
      %v3136 = vadd.f32 %v3130, %v85
      %v3137 = vadd.f32 %v3133, %v86
      %v3138 = vxor.u32 %v3134, 2147483648
      %v3139 = vxor.u32 %v3135, 2147483648
      %v3140 = vxor.u32 %v3136, 2147483648
      %v3141 = vxor.u32 %v3137, 2147483648
      %v3142 = vmul.f32 %v3138, 1.442695
      %v3143 = vpow.pop %v3142
      %v3144 = vmul.f32 %v3139, 1.442695
      %v3145 = vpow.pop %v3144
      %v3146 = vmul.f32 %v3140, 1.442695
      %v3147 = vpow.pop %v3146
      %v3148 = vmul.f32 %v3141, 1.442695
      %v3149 = vpow.pop %v3148
      %v3150 = vadd.f32 %v3143, 1.0
      %v3151 = vadd.f32 %v3145, 1.0
      %v3152 = vadd.f32 %v3147, 1.0
      %v3153 = vadd.f32 %v3149, 1.0
      %v3154 = vrcp.pop %v3150
      %v3155 = vmul.f32 1.0, %v3154
      %v3156 = vrcp.pop %v3151
      %v3157 = vmul.f32 1.0, %v3156
      %v3158 = vrcp.pop %v3152
      %v3159 = vmul.f32 1.0, %v3158
      %v3160 = vrcp.pop %v3153
      %v3161 = vmul.f32 1.0, %v3160
      %v3162 = vmul.f32 %v3134, %v3155
      %v3163 = vmul.f32 %v3135, %v3157
      %v3164 = vmul.f32 %v3136, %v3159
      %v3165 = vmul.f32 %v3137, %v3161
      %3167 = vset.pattern.permute.xlu0 0
      %3168 = vperm.xlu0 %3167, %v3162
      %v3169 = vpop.permute.xlu0 %3168
      %3172 = vset.pattern.permute.xlu0 0
      %3173 = vperm.xlu0 %3172, %v3163
      %v3174 = vpop.permute.xlu0 %3173
      %3177 = vset.pattern.permute.xlu0 0
      %3178 = vperm.xlu0 %3177, %v3164
      %v3179 = vpop.permute.xlu0 %3178
      %3182 = vset.pattern.permute.xlu0 0
      %3183 = vperm.xlu0 %3182, %v3165
      %v3184 = vpop.permute.xlu0 %3183
      %v3186 = vmul.f32 %v87, %v3169
      %v3187 = vmul.f32 %v88, %v3174
      %v3188 = vmul.f32 %v89, %v3179
      %v3189 = vmul.f32 %v90, %v3184
      %v3190 = vsel %vm137, %v3186, 0.0
      %v3191 = vsel %vm137, %v3187, 0.0
      %v3192 = vadd.f32 %v3190, %v3191
      %v3193 = vsel %vm137, %v3188, 0.0
      %v3194 = vadd.f32 %v3192, %v3193
      %v3195 = vsel %vm137, %v3189, 0.0
      %v3196 = vadd.f32 %v3194, %v3195
      %v3197 = vrot.slane %v3196, 4
      %v3198 = vadd.f32 %v3196, %v3197
      %v3199 = vrot.slane %v3198, 2
      %v3200 = vadd.f32 %v3198, %v3199
      %v3201 = vrot.slane %v3200, 1
      %v3202 = vadd.f32 %v3200, %v3201
      %v3203 = vadd.f32 %v3202, %v91
      %v3204 = vxor.u32 %v3203, 2147483648
      %v3205 = vmul.f32 %v3204, 1.442695
      %v3206 = vpow.pop %v3205
      %v3207 = vadd.f32 %v3206, 1.0
      %v3208 = vrcp.pop %v3207
      %v3209 = vmul.f32 1.0, %v3208
      %v3210 = vmul.f32 %v3203, %v3209
      %v3211 = vmul.f32 %v92, %v3210
      %v3212 = vsel %vm228, %v3211, 0.0
      %3213 = vadd.xlane.f32.xlu0 %v3212
      %v3214 = vpop.xlane.xlu0 %3213
      %v3215 = vadd.f32 %v3214, %v93
      %v3216 = vmul.f32 %v233, %v3215
      %v3217 = vadd.f32 %v2981, %v3216
      %3219 = vset.pattern.permute.xlu0 0
      %3220 = vperm.xlu0 %3219, %v3217
      %v3221 = vpop.permute.xlu0 %3220
      %v3223 = vmul.f32 %v3221, %v77
      %v3224 = vadd.f32 %v3223, %v78
      %v3225 = vxor.u32 %v3224, 2147483648
      %v3226 = vmul.f32 %v3225, 1.442695
      %v3227 = vpow.pop %v3226
      %v3228 = vadd.f32 %v3227, 1.0
      %v3229 = vrcp.pop %v3228
      %v3230 = vmul.f32 1.0, %v3229
      %v3231 = vmul.f32 %v3224, %v3230
      %v3232 = vlaneseq
      %v3233 = vshrl.u32 %v3232, 7
      %v3234 = vsub.s32 0, %v3233
      %v3235 = vrot.slane %v3231, %v3234
      %v3236 = vmul.f32 %v79, %v3235
      %v3237 = vmul.f32 %v80, %v3235
      %v3238 = vmul.f32 %v81, %v3235
      %v3239 = vmul.f32 %v82, %v3235
      %v3240 = vsel %vm137, %v3236, 0.0
      %3241 = vadd.xlane.f32.xlu0 %v3240
      %v3242 = vpop.xlane.xlu0 %3241
      %v3243 = vsel %vm137, %v3237, 0.0
      %3244 = vadd.xlane.f32.xlu0 %v3243
      %v3245 = vpop.xlane.xlu0 %3244
      %v3246 = vsel %vm137, %v3238, 0.0
      %3247 = vadd.xlane.f32.xlu0 %v3246
      %v3248 = vpop.xlane.xlu0 %3247
      %v3249 = vsel %vm137, %v3239, 0.0
      %3250 = vadd.xlane.f32.xlu0 %v3249
      %v3251 = vpop.xlane.xlu0 %3250
      %v3252 = vadd.f32 %v3242, %v83
      %v3253 = vadd.f32 %v3245, %v84
      %v3254 = vadd.f32 %v3248, %v85
      %v3255 = vadd.f32 %v3251, %v86
      %v3256 = vxor.u32 %v3252, 2147483648
      %v3257 = vxor.u32 %v3253, 2147483648
      %v3258 = vxor.u32 %v3254, 2147483648
      %v3259 = vxor.u32 %v3255, 2147483648
      %v3260 = vmul.f32 %v3256, 1.442695
      %v3261 = vpow.pop %v3260
      %v3262 = vmul.f32 %v3257, 1.442695
      %v3263 = vpow.pop %v3262
      %v3264 = vmul.f32 %v3258, 1.442695
      %v3265 = vpow.pop %v3264
      %v3266 = vmul.f32 %v3259, 1.442695
      %v3267 = vpow.pop %v3266
      %v3268 = vadd.f32 %v3261, 1.0
      %v3269 = vadd.f32 %v3263, 1.0
      %v3270 = vadd.f32 %v3265, 1.0
      %v3271 = vadd.f32 %v3267, 1.0
      %v3272 = vrcp.pop %v3268
      %v3273 = vmul.f32 1.0, %v3272
      %v3274 = vrcp.pop %v3269
      %v3275 = vmul.f32 1.0, %v3274
      %v3276 = vrcp.pop %v3270
      %v3277 = vmul.f32 1.0, %v3276
      %v3278 = vrcp.pop %v3271
      %v3279 = vmul.f32 1.0, %v3278
      %v3280 = vmul.f32 %v3252, %v3273
      %v3281 = vmul.f32 %v3253, %v3275
      %v3282 = vmul.f32 %v3254, %v3277
      %v3283 = vmul.f32 %v3255, %v3279
      %3285 = vset.pattern.permute.xlu0 0
      %3286 = vperm.xlu0 %3285, %v3280
      %v3287 = vpop.permute.xlu0 %3286
      %3290 = vset.pattern.permute.xlu0 0
      %3291 = vperm.xlu0 %3290, %v3281
      %v3292 = vpop.permute.xlu0 %3291
      %3295 = vset.pattern.permute.xlu0 0
      %3296 = vperm.xlu0 %3295, %v3282
      %v3297 = vpop.permute.xlu0 %3296
      %3300 = vset.pattern.permute.xlu0 0
      %3301 = vperm.xlu0 %3300, %v3283
      %v3302 = vpop.permute.xlu0 %3301
      %v3304 = vmul.f32 %v87, %v3287
      %v3305 = vmul.f32 %v88, %v3292
      %v3306 = vmul.f32 %v89, %v3297
      %v3307 = vmul.f32 %v90, %v3302
      %v3308 = vsel %vm137, %v3304, 0.0
      %v3309 = vsel %vm137, %v3305, 0.0
      %v3310 = vadd.f32 %v3308, %v3309
      %v3311 = vsel %vm137, %v3306, 0.0
      %v3312 = vadd.f32 %v3310, %v3311
      %v3313 = vsel %vm137, %v3307, 0.0
      %v3314 = vadd.f32 %v3312, %v3313
      %v3315 = vrot.slane %v3314, 4
      %v3316 = vadd.f32 %v3314, %v3315
      %v3317 = vrot.slane %v3316, 2
      %v3318 = vadd.f32 %v3316, %v3317
      %v3319 = vrot.slane %v3318, 1
      %v3320 = vadd.f32 %v3318, %v3319
      %v3321 = vadd.f32 %v3320, %v91
      %v3322 = vxor.u32 %v3321, 2147483648
      %v3323 = vmul.f32 %v3322, 1.442695
      %v3324 = vpow.pop %v3323
      %v3325 = vadd.f32 %v3324, 1.0
      %v3326 = vrcp.pop %v3325
      %v3327 = vmul.f32 1.0, %v3326
      %v3328 = vmul.f32 %v3321, %v3327
      %v3329 = vmul.f32 %v92, %v3328
      %v3330 = vsel %vm228, %v3329, 0.0
      %3331 = vadd.xlane.f32.xlu0 %v3330
      %v3332 = vpop.xlane.xlu0 %3331
      %v3333 = vadd.f32 %v3332, %v93
      %v3334 = vmul.f32 %v470, %v3333
      %v3335 = vadd.f32 %v2981, %v3334
      %3337 = vset.pattern.permute.xlu0 0
      %3338 = vperm.xlu0 %3337, %v3335
      %v3339 = vpop.permute.xlu0 %3338
      %v3341 = vmul.f32 %v3339, %v77
      %v3342 = vadd.f32 %v3341, %v78
      %v3343 = vxor.u32 %v3342, 2147483648
      %v3344 = vmul.f32 %v3343, 1.442695
      %v3345 = vpow.pop %v3344
      %v3346 = vadd.f32 %v3345, 1.0
      %v3347 = vrcp.pop %v3346
      %v3348 = vmul.f32 1.0, %v3347
      %v3349 = vmul.f32 %v3342, %v3348
      %v3350 = vlaneseq
      %v3351 = vshrl.u32 %v3350, 7
      %v3352 = vsub.s32 0, %v3351
      %v3353 = vrot.slane %v3349, %v3352
      %v3354 = vmul.f32 %v79, %v3353
      %v3355 = vmul.f32 %v80, %v3353
      %v3356 = vmul.f32 %v81, %v3353
      %v3357 = vmul.f32 %v82, %v3353
      %v3358 = vsel %vm137, %v3354, 0.0
      %3359 = vadd.xlane.f32.xlu0 %v3358
      %v3360 = vpop.xlane.xlu0 %3359
      %v3361 = vsel %vm137, %v3355, 0.0
      %3362 = vadd.xlane.f32.xlu0 %v3361
      %v3363 = vpop.xlane.xlu0 %3362
      %v3364 = vsel %vm137, %v3356, 0.0
      %3365 = vadd.xlane.f32.xlu0 %v3364
      %v3366 = vpop.xlane.xlu0 %3365
      %v3367 = vsel %vm137, %v3357, 0.0
      %3368 = vadd.xlane.f32.xlu0 %v3367
      %v3369 = vpop.xlane.xlu0 %3368
      %v3370 = vadd.f32 %v3360, %v83
      %v3371 = vadd.f32 %v3363, %v84
      %v3372 = vadd.f32 %v3366, %v85
      %v3373 = vadd.f32 %v3369, %v86
      %v3374 = vxor.u32 %v3370, 2147483648
      %v3375 = vxor.u32 %v3371, 2147483648
      %v3376 = vxor.u32 %v3372, 2147483648
      %v3377 = vxor.u32 %v3373, 2147483648
      %v3378 = vmul.f32 %v3374, 1.442695
      %v3379 = vpow.pop %v3378
      %v3380 = vmul.f32 %v3375, 1.442695
      %v3381 = vpow.pop %v3380
      %v3382 = vmul.f32 %v3376, 1.442695
      %v3383 = vpow.pop %v3382
      %v3384 = vmul.f32 %v3377, 1.442695
      %v3385 = vpow.pop %v3384
      %v3386 = vadd.f32 %v3379, 1.0
      %v3387 = vadd.f32 %v3381, 1.0
      %v3388 = vadd.f32 %v3383, 1.0
      %v3389 = vadd.f32 %v3385, 1.0
      %v3390 = vrcp.pop %v3386
      %v3391 = vmul.f32 1.0, %v3390
      %v3392 = vrcp.pop %v3387
      %v3393 = vmul.f32 1.0, %v3392
      %v3394 = vrcp.pop %v3388
      %v3395 = vmul.f32 1.0, %v3394
      %v3396 = vrcp.pop %v3389
      %v3397 = vmul.f32 1.0, %v3396
      %v3398 = vmul.f32 %v3370, %v3391
      %v3399 = vmul.f32 %v3371, %v3393
      %v3400 = vmul.f32 %v3372, %v3395
      %v3401 = vmul.f32 %v3373, %v3397
      %3403 = vset.pattern.permute.xlu0 0
      %3404 = vperm.xlu0 %3403, %v3398
      %v3405 = vpop.permute.xlu0 %3404
      %3408 = vset.pattern.permute.xlu0 0
      %3409 = vperm.xlu0 %3408, %v3399
      %v3410 = vpop.permute.xlu0 %3409
      %3413 = vset.pattern.permute.xlu0 0
      %3414 = vperm.xlu0 %3413, %v3400
      %v3415 = vpop.permute.xlu0 %3414
      %3418 = vset.pattern.permute.xlu0 0
      %3419 = vperm.xlu0 %3418, %v3401
      %v3420 = vpop.permute.xlu0 %3419
      %v3422 = vmul.f32 %v87, %v3405
      %v3423 = vmul.f32 %v88, %v3410
      %v3424 = vmul.f32 %v89, %v3415
      %v3425 = vmul.f32 %v90, %v3420
      %v3426 = vsel %vm137, %v3422, 0.0
      %v3427 = vsel %vm137, %v3423, 0.0
      %v3428 = vadd.f32 %v3426, %v3427
      %v3429 = vsel %vm137, %v3424, 0.0
      %v3430 = vadd.f32 %v3428, %v3429
      %v3431 = vsel %vm137, %v3425, 0.0
      %v3432 = vadd.f32 %v3430, %v3431
      %v3433 = vrot.slane %v3432, 4
      %v3434 = vadd.f32 %v3432, %v3433
      %v3435 = vrot.slane %v3434, 2
      %v3436 = vadd.f32 %v3434, %v3435
      %v3437 = vrot.slane %v3436, 1
      %v3438 = vadd.f32 %v3436, %v3437
      %v3439 = vadd.f32 %v3438, %v91
      %v3440 = vxor.u32 %v3439, 2147483648
      %v3441 = vmul.f32 %v3440, 1.442695
      %v3442 = vpow.pop %v3441
      %v3443 = vadd.f32 %v3442, 1.0
      %v3444 = vrcp.pop %v3443
      %v3445 = vmul.f32 1.0, %v3444
      %v3446 = vmul.f32 %v3439, %v3445
      %v3447 = vmul.f32 %v92, %v3446
      %v3448 = vsel %vm228, %v3447, 0.0
      %3449 = vadd.xlane.f32.xlu0 %v3448
      %v3450 = vpop.xlane.xlu0 %3449
      %v3451 = vadd.f32 %v3450, %v93
      %v3452 = vmul.f32 %v3215, 2.0
      %v3453 = vadd.f32 %v3097, %v3452
      %v3454 = vmul.f32 %v3333, 2.0
      %v3455 = vadd.f32 %v3453, %v3454
      %v3456 = vadd.f32 %v3455, %v3451
      %v3457 = vmul.f32 %v594, %v3456
      %v3458 = vadd.f32 %v2981, %v3457
      %3460 = vset.pattern.permute.xlu0 0
      %3461 = vperm.xlu0 %3460, %v3458
      %v3462 = vpop.permute.xlu0 %3461
      %v3464 = vmul.f32 %v3462, %v77
      %v3465 = vadd.f32 %v3464, %v78
      %v3466 = vxor.u32 %v3465, 2147483648
      %v3467 = vmul.f32 %v3466, 1.442695
      %v3468 = vpow.pop %v3467
      %v3469 = vadd.f32 %v3468, 1.0
      %v3470 = vrcp.pop %v3469
      %v3471 = vmul.f32 1.0, %v3470
      %v3472 = vmul.f32 %v3465, %v3471
      %v3473 = vlaneseq
      %v3474 = vshrl.u32 %v3473, 7
      %v3475 = vsub.s32 0, %v3474
      %v3476 = vrot.slane %v3472, %v3475
      %v3477 = vmul.f32 %v79, %v3476
      %v3478 = vmul.f32 %v80, %v3476
      %v3479 = vmul.f32 %v81, %v3476
      %v3480 = vmul.f32 %v82, %v3476
      %v3481 = vsel %vm137, %v3477, 0.0
      %3482 = vadd.xlane.f32.xlu0 %v3481
      %v3483 = vpop.xlane.xlu0 %3482
      %v3484 = vsel %vm137, %v3478, 0.0
      %3485 = vadd.xlane.f32.xlu0 %v3484
      %v3486 = vpop.xlane.xlu0 %3485
      %v3487 = vsel %vm137, %v3479, 0.0
      %3488 = vadd.xlane.f32.xlu0 %v3487
      %v3489 = vpop.xlane.xlu0 %3488
      %v3490 = vsel %vm137, %v3480, 0.0
      %3491 = vadd.xlane.f32.xlu0 %v3490
      %v3492 = vpop.xlane.xlu0 %3491
      %v3493 = vadd.f32 %v3483, %v83
      %v3494 = vadd.f32 %v3486, %v84
      %v3495 = vadd.f32 %v3489, %v85
      %v3496 = vadd.f32 %v3492, %v86
      %v3497 = vxor.u32 %v3493, 2147483648
      %v3498 = vxor.u32 %v3494, 2147483648
      %v3499 = vxor.u32 %v3495, 2147483648
      %v3500 = vxor.u32 %v3496, 2147483648
      %v3501 = vmul.f32 %v3497, 1.442695
      %v3502 = vpow.pop %v3501
      %v3503 = vmul.f32 %v3498, 1.442695
      %v3504 = vpow.pop %v3503
      %v3505 = vmul.f32 %v3499, 1.442695
      %v3506 = vpow.pop %v3505
      %v3507 = vmul.f32 %v3500, 1.442695
      %v3508 = vpow.pop %v3507
      %v3509 = vadd.f32 %v3502, 1.0
      %v3510 = vadd.f32 %v3504, 1.0
      %v3511 = vadd.f32 %v3506, 1.0
      %v3512 = vadd.f32 %v3508, 1.0
      %v3513 = vrcp.pop %v3509
      %v3514 = vmul.f32 1.0, %v3513
      %v3515 = vrcp.pop %v3510
      %v3516 = vmul.f32 1.0, %v3515
      %v3517 = vrcp.pop %v3511
      %v3518 = vmul.f32 1.0, %v3517
      %v3519 = vrcp.pop %v3512
      %v3520 = vmul.f32 1.0, %v3519
      %v3521 = vmul.f32 %v3493, %v3514
      %v3522 = vmul.f32 %v3494, %v3516
      %v3523 = vmul.f32 %v3495, %v3518
      %v3524 = vmul.f32 %v3496, %v3520
      %3526 = vset.pattern.permute.xlu0 0
      %3527 = vperm.xlu0 %3526, %v3521
      %v3528 = vpop.permute.xlu0 %3527
      %3531 = vset.pattern.permute.xlu0 0
      %3532 = vperm.xlu0 %3531, %v3522
      %v3533 = vpop.permute.xlu0 %3532
      %3536 = vset.pattern.permute.xlu0 0
      %3537 = vperm.xlu0 %3536, %v3523
      %v3538 = vpop.permute.xlu0 %3537
      %3541 = vset.pattern.permute.xlu0 0
      %3542 = vperm.xlu0 %3541, %v3524
      %v3543 = vpop.permute.xlu0 %3542
      %v3545 = vmul.f32 %v87, %v3528
      %v3546 = vmul.f32 %v88, %v3533
      %v3547 = vmul.f32 %v89, %v3538
      %v3548 = vmul.f32 %v90, %v3543
      %v3549 = vsel %vm137, %v3545, 0.0
      %v3550 = vsel %vm137, %v3546, 0.0
      %v3551 = vadd.f32 %v3549, %v3550
      %v3552 = vsel %vm137, %v3547, 0.0
      %v3553 = vadd.f32 %v3551, %v3552
      %v3554 = vsel %vm137, %v3548, 0.0
      %v3555 = vadd.f32 %v3553, %v3554
      %v3556 = vrot.slane %v3555, 4
      %v3557 = vadd.f32 %v3555, %v3556
      %v3558 = vrot.slane %v3557, 2
      %v3559 = vadd.f32 %v3557, %v3558
      %v3560 = vrot.slane %v3559, 1
      %v3561 = vadd.f32 %v3559, %v3560
      %v3562 = vadd.f32 %v3561, %v91
      %v3563 = vxor.u32 %v3562, 2147483648
      %v3564 = vmul.f32 %v3563, 1.442695
      %v3565 = vpow.pop %v3564
      %v3566 = vadd.f32 %v3565, 1.0
      %v3567 = vrcp.pop %v3566
      %v3568 = vmul.f32 1.0, %v3567
      %v3569 = vmul.f32 %v3562, %v3568
      %v3570 = vmul.f32 %v92, %v3569
      %v3571 = vsel %vm228, %v3570, 0.0
      %3572 = vadd.xlane.f32.xlu0 %v3571
      %v3573 = vpop.xlane.xlu0 %3572
      %v3574 = vadd.f32 %v3573, %v93
      %v3575 = vmul.f32 %v233, %v3574
      %v3576 = vadd.f32 %v3458, %v3575
      %3578 = vset.pattern.permute.xlu0 0
      %3579 = vperm.xlu0 %3578, %v3576
      %v3580 = vpop.permute.xlu0 %3579
      %v3582 = vmul.f32 %v3580, %v77
      %v3583 = vadd.f32 %v3582, %v78
      %v3584 = vxor.u32 %v3583, 2147483648
      %v3585 = vmul.f32 %v3584, 1.442695
      %v3586 = vpow.pop %v3585
      %v3587 = vadd.f32 %v3586, 1.0
      %v3588 = vrcp.pop %v3587
      %v3589 = vmul.f32 1.0, %v3588
      %v3590 = vmul.f32 %v3583, %v3589
      %v3591 = vlaneseq
      %v3592 = vshrl.u32 %v3591, 7
      %v3593 = vsub.s32 0, %v3592
      %v3594 = vrot.slane %v3590, %v3593
      %v3595 = vmul.f32 %v79, %v3594
      %v3596 = vmul.f32 %v80, %v3594
      %v3597 = vmul.f32 %v81, %v3594
      %v3598 = vmul.f32 %v82, %v3594
      %v3599 = vsel %vm137, %v3595, 0.0
      %3600 = vadd.xlane.f32.xlu0 %v3599
      %v3601 = vpop.xlane.xlu0 %3600
      %v3602 = vsel %vm137, %v3596, 0.0
      %3603 = vadd.xlane.f32.xlu0 %v3602
      %v3604 = vpop.xlane.xlu0 %3603
      %v3605 = vsel %vm137, %v3597, 0.0
      %3606 = vadd.xlane.f32.xlu0 %v3605
      %v3607 = vpop.xlane.xlu0 %3606
      %v3608 = vsel %vm137, %v3598, 0.0
      %3609 = vadd.xlane.f32.xlu0 %v3608
      %v3610 = vpop.xlane.xlu0 %3609
      %v3611 = vadd.f32 %v3601, %v83
      %v3612 = vadd.f32 %v3604, %v84
      %v3613 = vadd.f32 %v3607, %v85
      %v3614 = vadd.f32 %v3610, %v86
      %v3615 = vxor.u32 %v3611, 2147483648
      %v3616 = vxor.u32 %v3612, 2147483648
      %v3617 = vxor.u32 %v3613, 2147483648
      %v3618 = vxor.u32 %v3614, 2147483648
      %v3619 = vmul.f32 %v3615, 1.442695
      %v3620 = vpow.pop %v3619
      %v3621 = vmul.f32 %v3616, 1.442695
      %v3622 = vpow.pop %v3621
      %v3623 = vmul.f32 %v3617, 1.442695
      %v3624 = vpow.pop %v3623
      %v3625 = vmul.f32 %v3618, 1.442695
      %v3626 = vpow.pop %v3625
      %v3627 = vadd.f32 %v3620, 1.0
      %v3628 = vadd.f32 %v3622, 1.0
      %v3629 = vadd.f32 %v3624, 1.0
      %v3630 = vadd.f32 %v3626, 1.0
      %v3631 = vrcp.pop %v3627
      %v3632 = vmul.f32 1.0, %v3631
      %v3633 = vrcp.pop %v3628
      %v3634 = vmul.f32 1.0, %v3633
      %v3635 = vrcp.pop %v3629
      %v3636 = vmul.f32 1.0, %v3635
      %v3637 = vrcp.pop %v3630
      %v3638 = vmul.f32 1.0, %v3637
      %v3639 = vmul.f32 %v3611, %v3632
      %v3640 = vmul.f32 %v3612, %v3634
      %v3641 = vmul.f32 %v3613, %v3636
      %v3642 = vmul.f32 %v3614, %v3638
      %3644 = vset.pattern.permute.xlu0 0
      %3645 = vperm.xlu0 %3644, %v3639
      %v3646 = vpop.permute.xlu0 %3645
      %3649 = vset.pattern.permute.xlu0 0
      %3650 = vperm.xlu0 %3649, %v3640
      %v3651 = vpop.permute.xlu0 %3650
      %3654 = vset.pattern.permute.xlu0 0
      %3655 = vperm.xlu0 %3654, %v3641
      %v3656 = vpop.permute.xlu0 %3655
      %3659 = vset.pattern.permute.xlu0 0
      %3660 = vperm.xlu0 %3659, %v3642
      %v3661 = vpop.permute.xlu0 %3660
      %v3663 = vmul.f32 %v87, %v3646
      %v3664 = vmul.f32 %v88, %v3651
      %v3665 = vmul.f32 %v89, %v3656
      %v3666 = vmul.f32 %v90, %v3661
      %v3667 = vsel %vm137, %v3663, 0.0
      %v3668 = vsel %vm137, %v3664, 0.0
      %v3669 = vadd.f32 %v3667, %v3668
      %v3670 = vsel %vm137, %v3665, 0.0
      %v3671 = vadd.f32 %v3669, %v3670
      %v3672 = vsel %vm137, %v3666, 0.0
      %v3673 = vadd.f32 %v3671, %v3672
      %v3674 = vrot.slane %v3673, 4
      %v3675 = vadd.f32 %v3673, %v3674
      %v3676 = vrot.slane %v3675, 2
      %v3677 = vadd.f32 %v3675, %v3676
      %v3678 = vrot.slane %v3677, 1
      %v3679 = vadd.f32 %v3677, %v3678
      %v3680 = vadd.f32 %v3679, %v91
      %v3681 = vxor.u32 %v3680, 2147483648
      %v3682 = vmul.f32 %v3681, 1.442695
      %v3683 = vpow.pop %v3682
      %v3684 = vadd.f32 %v3683, 1.0
      %v3685 = vrcp.pop %v3684
      %v3686 = vmul.f32 1.0, %v3685
      %v3687 = vmul.f32 %v3680, %v3686
      %v3688 = vmul.f32 %v92, %v3687
      %v3689 = vsel %vm228, %v3688, 0.0
      %3690 = vadd.xlane.f32.xlu0 %v3689
      %v3691 = vpop.xlane.xlu0 %3690
      %v3692 = vadd.f32 %v3691, %v93
      %v3693 = vmul.f32 %v233, %v3692
      %v3694 = vadd.f32 %v3458, %v3693
      %3696 = vset.pattern.permute.xlu0 0
      %3697 = vperm.xlu0 %3696, %v3694
      %v3698 = vpop.permute.xlu0 %3697
      %v3700 = vmul.f32 %v3698, %v77
      %v3701 = vadd.f32 %v3700, %v78
      %v3702 = vxor.u32 %v3701, 2147483648
      %v3703 = vmul.f32 %v3702, 1.442695
      %v3704 = vpow.pop %v3703
      %v3705 = vadd.f32 %v3704, 1.0
      %v3706 = vrcp.pop %v3705
      %v3707 = vmul.f32 1.0, %v3706
      %v3708 = vmul.f32 %v3701, %v3707
      %v3709 = vlaneseq
      %v3710 = vshrl.u32 %v3709, 7
      %v3711 = vsub.s32 0, %v3710
      %v3712 = vrot.slane %v3708, %v3711
      %v3713 = vmul.f32 %v79, %v3712
      %v3714 = vmul.f32 %v80, %v3712
      %v3715 = vmul.f32 %v81, %v3712
      %v3716 = vmul.f32 %v82, %v3712
      %v3717 = vsel %vm137, %v3713, 0.0
      %3718 = vadd.xlane.f32.xlu0 %v3717
      %v3719 = vpop.xlane.xlu0 %3718
      %v3720 = vsel %vm137, %v3714, 0.0
      %3721 = vadd.xlane.f32.xlu0 %v3720
      %v3722 = vpop.xlane.xlu0 %3721
      %v3723 = vsel %vm137, %v3715, 0.0
      %3724 = vadd.xlane.f32.xlu0 %v3723
      %v3725 = vpop.xlane.xlu0 %3724
      %v3726 = vsel %vm137, %v3716, 0.0
      %3727 = vadd.xlane.f32.xlu0 %v3726
      %v3728 = vpop.xlane.xlu0 %3727
      %v3729 = vadd.f32 %v3719, %v83
      %v3730 = vadd.f32 %v3722, %v84
      %v3731 = vadd.f32 %v3725, %v85
      %v3732 = vadd.f32 %v3728, %v86
      %v3733 = vxor.u32 %v3729, 2147483648
      %v3734 = vxor.u32 %v3730, 2147483648
      %v3735 = vxor.u32 %v3731, 2147483648
      %v3736 = vxor.u32 %v3732, 2147483648
      %v3737 = vmul.f32 %v3733, 1.442695
      %v3738 = vpow.pop %v3737
      %v3739 = vmul.f32 %v3734, 1.442695
      %v3740 = vpow.pop %v3739
      %v3741 = vmul.f32 %v3735, 1.442695
      %v3742 = vpow.pop %v3741
      %v3743 = vmul.f32 %v3736, 1.442695
      %v3744 = vpow.pop %v3743
      %v3745 = vadd.f32 %v3738, 1.0
      %v3746 = vadd.f32 %v3740, 1.0
      %v3747 = vadd.f32 %v3742, 1.0
      %v3748 = vadd.f32 %v3744, 1.0
      %v3749 = vrcp.pop %v3745
      %v3750 = vmul.f32 1.0, %v3749
      %v3751 = vrcp.pop %v3746
      %v3752 = vmul.f32 1.0, %v3751
      %v3753 = vrcp.pop %v3747
      %v3754 = vmul.f32 1.0, %v3753
      %v3755 = vrcp.pop %v3748
      %v3756 = vmul.f32 1.0, %v3755
      %v3757 = vmul.f32 %v3729, %v3750
      %v3758 = vmul.f32 %v3730, %v3752
      %v3759 = vmul.f32 %v3731, %v3754
      %v3760 = vmul.f32 %v3732, %v3756
      %3762 = vset.pattern.permute.xlu0 0
      %3763 = vperm.xlu0 %3762, %v3757
      %v3764 = vpop.permute.xlu0 %3763
      %3767 = vset.pattern.permute.xlu0 0
      %3768 = vperm.xlu0 %3767, %v3758
      %v3769 = vpop.permute.xlu0 %3768
      %3772 = vset.pattern.permute.xlu0 0
      %3773 = vperm.xlu0 %3772, %v3759
      %v3774 = vpop.permute.xlu0 %3773
      %3777 = vset.pattern.permute.xlu0 0
      %3778 = vperm.xlu0 %3777, %v3760
      %v3779 = vpop.permute.xlu0 %3778
      %v3781 = vmul.f32 %v87, %v3764
      %v3782 = vmul.f32 %v88, %v3769
      %v3783 = vmul.f32 %v89, %v3774
      %v3784 = vmul.f32 %v90, %v3779
      %v3785 = vsel %vm137, %v3781, 0.0
      %v3786 = vsel %vm137, %v3782, 0.0
      %v3787 = vadd.f32 %v3785, %v3786
      %v3788 = vsel %vm137, %v3783, 0.0
      %v3789 = vadd.f32 %v3787, %v3788
      %v3790 = vsel %vm137, %v3784, 0.0
      %v3791 = vadd.f32 %v3789, %v3790
      %v3792 = vrot.slane %v3791, 4
      %v3793 = vadd.f32 %v3791, %v3792
      %v3794 = vrot.slane %v3793, 2
      %v3795 = vadd.f32 %v3793, %v3794
      %v3796 = vrot.slane %v3795, 1
      %v3797 = vadd.f32 %v3795, %v3796
      %v3798 = vadd.f32 %v3797, %v91
      %v3799 = vxor.u32 %v3798, 2147483648
      %v3800 = vmul.f32 %v3799, 1.442695
      %v3801 = vpow.pop %v3800
      %v3802 = vadd.f32 %v3801, 1.0
      %v3803 = vrcp.pop %v3802
      %v3804 = vmul.f32 1.0, %v3803
      %v3805 = vmul.f32 %v3798, %v3804
      %v3806 = vmul.f32 %v92, %v3805
      %v3807 = vsel %vm228, %v3806, 0.0
      %3808 = vadd.xlane.f32.xlu0 %v3807
      %v3809 = vpop.xlane.xlu0 %3808
      %v3810 = vadd.f32 %v3809, %v93
      %v3811 = vmul.f32 %v470, %v3810
      %v3812 = vadd.f32 %v3458, %v3811
      %3814 = vset.pattern.permute.xlu0 0
      %3815 = vperm.xlu0 %3814, %v3812
      %v3816 = vpop.permute.xlu0 %3815
      %v3818 = vmul.f32 %v3816, %v77
      %v3819 = vadd.f32 %v3818, %v78
      %v3820 = vxor.u32 %v3819, 2147483648
      %v3821 = vmul.f32 %v3820, 1.442695
      %v3822 = vpow.pop %v3821
      %v3823 = vadd.f32 %v3822, 1.0
      %v3824 = vrcp.pop %v3823
      %v3825 = vmul.f32 1.0, %v3824
      %v3826 = vmul.f32 %v3819, %v3825
      %v3827 = vlaneseq
      %v3828 = vshrl.u32 %v3827, 7
      %v3829 = vsub.s32 0, %v3828
      %v3830 = vrot.slane %v3826, %v3829
      %v3831 = vmul.f32 %v79, %v3830
      %v3832 = vmul.f32 %v80, %v3830
      %v3833 = vmul.f32 %v81, %v3830
      %v3834 = vmul.f32 %v82, %v3830
      %v3835 = vsel %vm137, %v3831, 0.0
      %3836 = vadd.xlane.f32.xlu0 %v3835
      %v3837 = vpop.xlane.xlu0 %3836
      %v3838 = vsel %vm137, %v3832, 0.0
      %3839 = vadd.xlane.f32.xlu0 %v3838
      %v3840 = vpop.xlane.xlu0 %3839
      %v3841 = vsel %vm137, %v3833, 0.0
      %3842 = vadd.xlane.f32.xlu0 %v3841
      %v3843 = vpop.xlane.xlu0 %3842
      %v3844 = vsel %vm137, %v3834, 0.0
      %3845 = vadd.xlane.f32.xlu0 %v3844
      %v3846 = vpop.xlane.xlu0 %3845
      %v3847 = vadd.f32 %v3837, %v83
      %v3848 = vadd.f32 %v3840, %v84
      %v3849 = vadd.f32 %v3843, %v85
      %v3850 = vadd.f32 %v3846, %v86
      %v3851 = vxor.u32 %v3847, 2147483648
      %v3852 = vxor.u32 %v3848, 2147483648
      %v3853 = vxor.u32 %v3849, 2147483648
      %v3854 = vxor.u32 %v3850, 2147483648
      %v3855 = vmul.f32 %v3851, 1.442695
      %v3856 = vpow.pop %v3855
      %v3857 = vmul.f32 %v3852, 1.442695
      %v3858 = vpow.pop %v3857
      %v3859 = vmul.f32 %v3853, 1.442695
      %v3860 = vpow.pop %v3859
      %v3861 = vmul.f32 %v3854, 1.442695
      %v3862 = vpow.pop %v3861
      %v3863 = vadd.f32 %v3856, 1.0
      %v3864 = vadd.f32 %v3858, 1.0
      %v3865 = vadd.f32 %v3860, 1.0
      %v3866 = vadd.f32 %v3862, 1.0
      %v3867 = vrcp.pop %v3863
      %v3868 = vmul.f32 1.0, %v3867
      %v3869 = vrcp.pop %v3864
      %v3870 = vmul.f32 1.0, %v3869
      %v3871 = vrcp.pop %v3865
      %v3872 = vmul.f32 1.0, %v3871
      %v3873 = vrcp.pop %v3866
      %v3874 = vmul.f32 1.0, %v3873
      %v3875 = vmul.f32 %v3847, %v3868
      %v3876 = vmul.f32 %v3848, %v3870
      %v3877 = vmul.f32 %v3849, %v3872
      %v3878 = vmul.f32 %v3850, %v3874
      %3880 = vset.pattern.permute.xlu0 0
      %3881 = vperm.xlu0 %3880, %v3875
      %v3882 = vpop.permute.xlu0 %3881
      %3885 = vset.pattern.permute.xlu0 0
      %3886 = vperm.xlu0 %3885, %v3876
      %v3887 = vpop.permute.xlu0 %3886
      %3890 = vset.pattern.permute.xlu0 0
      %3891 = vperm.xlu0 %3890, %v3877
      %v3892 = vpop.permute.xlu0 %3891
      %3895 = vset.pattern.permute.xlu0 0
      %3896 = vperm.xlu0 %3895, %v3878
      %v3897 = vpop.permute.xlu0 %3896
      %v3899 = vmul.f32 %v87, %v3882
      %v3900 = vmul.f32 %v88, %v3887
      %v3901 = vmul.f32 %v89, %v3892
      %v3902 = vmul.f32 %v90, %v3897
      %v3903 = vsel %vm137, %v3899, 0.0
      %v3904 = vsel %vm137, %v3900, 0.0
      %v3905 = vadd.f32 %v3903, %v3904
      %v3906 = vsel %vm137, %v3901, 0.0
      %v3907 = vadd.f32 %v3905, %v3906
      %v3908 = vsel %vm137, %v3902, 0.0
      %v3909 = vadd.f32 %v3907, %v3908
      %v3910 = vrot.slane %v3909, 4
      %v3911 = vadd.f32 %v3909, %v3910
      %v3912 = vrot.slane %v3911, 2
      %v3913 = vadd.f32 %v3911, %v3912
      %v3914 = vrot.slane %v3913, 1
      %v3915 = vadd.f32 %v3913, %v3914
      %v3916 = vadd.f32 %v3915, %v91
      %v3917 = vxor.u32 %v3916, 2147483648
      %v3918 = vmul.f32 %v3917, 1.442695
      %v3919 = vpow.pop %v3918
      %v3920 = vadd.f32 %v3919, 1.0
      %v3921 = vrcp.pop %v3920
      %v3922 = vmul.f32 1.0, %v3921
      %v3923 = vmul.f32 %v3916, %v3922
      %v3924 = vmul.f32 %v92, %v3923
      %v3925 = vsel %vm228, %v3924, 0.0
      %3926 = vadd.xlane.f32.xlu0 %v3925
      %v3927 = vpop.xlane.xlu0 %3926
      %v3928 = vadd.f32 %v3927, %v93
      %v3929 = vmul.f32 %v3692, 2.0
      %v3930 = vadd.f32 %v3574, %v3929
      %v3931 = vmul.f32 %v3810, 2.0
      %v3932 = vadd.f32 %v3930, %v3931
      %v3933 = vadd.f32 %v3932, %v3928
      %v3934 = vmul.f32 %v594, %v3933
      %v3935 = vadd.f32 %v3458, %v3934
      %3937 = vset.pattern.permute.xlu0 0
      %3938 = vperm.xlu0 %3937, %v3935
      %v3939 = vpop.permute.xlu0 %3938
      %v3941 = vmul.f32 %v3939, %v77
      %v3942 = vadd.f32 %v3941, %v78
      %v3943 = vxor.u32 %v3942, 2147483648
      %v3944 = vmul.f32 %v3943, 1.442695
      %v3945 = vpow.pop %v3944
      %v3946 = vadd.f32 %v3945, 1.0
      %v3947 = vrcp.pop %v3946
      %v3948 = vmul.f32 1.0, %v3947
      %v3949 = vmul.f32 %v3942, %v3948
      %v3950 = vlaneseq
      %v3951 = vshrl.u32 %v3950, 7
      %v3952 = vsub.s32 0, %v3951
      %v3953 = vrot.slane %v3949, %v3952
      %v3954 = vmul.f32 %v79, %v3953
      %v3955 = vmul.f32 %v80, %v3953
      %v3956 = vmul.f32 %v81, %v3953
      %v3957 = vmul.f32 %v82, %v3953
      %v3958 = vsel %vm137, %v3954, 0.0
      %3959 = vadd.xlane.f32.xlu0 %v3958
      %v3960 = vpop.xlane.xlu0 %3959
      %v3961 = vsel %vm137, %v3955, 0.0
      %3962 = vadd.xlane.f32.xlu0 %v3961
      %v3963 = vpop.xlane.xlu0 %3962
      %v3964 = vsel %vm137, %v3956, 0.0
      %3965 = vadd.xlane.f32.xlu0 %v3964
      %v3966 = vpop.xlane.xlu0 %3965
      %v3967 = vsel %vm137, %v3957, 0.0
      %3968 = vadd.xlane.f32.xlu0 %v3967
      %v3969 = vpop.xlane.xlu0 %3968
      %v3970 = vadd.f32 %v3960, %v83
      %v3971 = vadd.f32 %v3963, %v84
      %v3972 = vadd.f32 %v3966, %v85
      %v3973 = vadd.f32 %v3969, %v86
      %v3974 = vxor.u32 %v3970, 2147483648
      %v3975 = vxor.u32 %v3971, 2147483648
      %v3976 = vxor.u32 %v3972, 2147483648
      %v3977 = vxor.u32 %v3973, 2147483648
      %v3978 = vmul.f32 %v3974, 1.442695
      %v3979 = vpow.pop %v3978
      %v3980 = vmul.f32 %v3975, 1.442695
      %v3981 = vpow.pop %v3980
      %v3982 = vmul.f32 %v3976, 1.442695
      %v3983 = vpow.pop %v3982
      %v3984 = vmul.f32 %v3977, 1.442695
      %v3985 = vpow.pop %v3984
      %v3986 = vadd.f32 %v3979, 1.0
      %v3987 = vadd.f32 %v3981, 1.0
      %v3988 = vadd.f32 %v3983, 1.0
      %v3989 = vadd.f32 %v3985, 1.0
      %v3990 = vrcp.pop %v3986
      %v3991 = vmul.f32 1.0, %v3990
      %v3992 = vrcp.pop %v3987
      %v3993 = vmul.f32 1.0, %v3992
      %v3994 = vrcp.pop %v3988
      %v3995 = vmul.f32 1.0, %v3994
      %v3996 = vrcp.pop %v3989
      %v3997 = vmul.f32 1.0, %v3996
      %v3998 = vmul.f32 %v3970, %v3991
      %v3999 = vmul.f32 %v3971, %v3993
      %v4000 = vmul.f32 %v3972, %v3995
      %v4001 = vmul.f32 %v3973, %v3997
      %4003 = vset.pattern.permute.xlu0 0
      %4004 = vperm.xlu0 %4003, %v3998
      %v4005 = vpop.permute.xlu0 %4004
      %4008 = vset.pattern.permute.xlu0 0
      %4009 = vperm.xlu0 %4008, %v3999
      %v4010 = vpop.permute.xlu0 %4009
      %4013 = vset.pattern.permute.xlu0 0
      %4014 = vperm.xlu0 %4013, %v4000
      %v4015 = vpop.permute.xlu0 %4014
      %4018 = vset.pattern.permute.xlu0 0
      %4019 = vperm.xlu0 %4018, %v4001
      %v4020 = vpop.permute.xlu0 %4019
      %v4022 = vmul.f32 %v87, %v4005
      %v4023 = vmul.f32 %v88, %v4010
      %v4024 = vmul.f32 %v89, %v4015
      %v4025 = vmul.f32 %v90, %v4020
      %v4026 = vsel %vm137, %v4022, 0.0
      %v4027 = vsel %vm137, %v4023, 0.0
      %v4028 = vadd.f32 %v4026, %v4027
      %v4029 = vsel %vm137, %v4024, 0.0
      %v4030 = vadd.f32 %v4028, %v4029
      %v4031 = vsel %vm137, %v4025, 0.0
      %v4032 = vadd.f32 %v4030, %v4031
      %v4033 = vrot.slane %v4032, 4
      %v4034 = vadd.f32 %v4032, %v4033
      %v4035 = vrot.slane %v4034, 2
      %v4036 = vadd.f32 %v4034, %v4035
      %v4037 = vrot.slane %v4036, 1
      %v4038 = vadd.f32 %v4036, %v4037
      %v4039 = vadd.f32 %v4038, %v91
      %v4040 = vxor.u32 %v4039, 2147483648
      %v4041 = vmul.f32 %v4040, 1.442695
      %v4042 = vpow.pop %v4041
      %v4043 = vadd.f32 %v4042, 1.0
      %v4044 = vrcp.pop %v4043
      %v4045 = vmul.f32 1.0, %v4044
      %v4046 = vmul.f32 %v4039, %v4045
      %v4047 = vmul.f32 %v92, %v4046
      %v4048 = vsel %vm228, %v4047, 0.0
      %4049 = vadd.xlane.f32.xlu0 %v4048
      %v4050 = vpop.xlane.xlu0 %4049
      %v4051 = vadd.f32 %v4050, %v93
      %v4052 = vmul.f32 %v233, %v4051
      %v4053 = vadd.f32 %v3935, %v4052
      %4055 = vset.pattern.permute.xlu0 0
      %4056 = vperm.xlu0 %4055, %v4053
      %v4057 = vpop.permute.xlu0 %4056
      %v4059 = vmul.f32 %v4057, %v77
      %v4060 = vadd.f32 %v4059, %v78
      %v4061 = vxor.u32 %v4060, 2147483648
      %v4062 = vmul.f32 %v4061, 1.442695
      %v4063 = vpow.pop %v4062
      %v4064 = vadd.f32 %v4063, 1.0
      %v4065 = vrcp.pop %v4064
      %v4066 = vmul.f32 1.0, %v4065
      %v4067 = vmul.f32 %v4060, %v4066
      %v4068 = vlaneseq
      %v4069 = vshrl.u32 %v4068, 7
      %v4070 = vsub.s32 0, %v4069
      %v4071 = vrot.slane %v4067, %v4070
      %v4072 = vmul.f32 %v79, %v4071
      %v4073 = vmul.f32 %v80, %v4071
      %v4074 = vmul.f32 %v81, %v4071
      %v4075 = vmul.f32 %v82, %v4071
      %v4076 = vsel %vm137, %v4072, 0.0
      %4077 = vadd.xlane.f32.xlu0 %v4076
      %v4078 = vpop.xlane.xlu0 %4077
      %v4079 = vsel %vm137, %v4073, 0.0
      %4080 = vadd.xlane.f32.xlu0 %v4079
      %v4081 = vpop.xlane.xlu0 %4080
      %v4082 = vsel %vm137, %v4074, 0.0
      %4083 = vadd.xlane.f32.xlu0 %v4082
      %v4084 = vpop.xlane.xlu0 %4083
      %v4085 = vsel %vm137, %v4075, 0.0
      %4086 = vadd.xlane.f32.xlu0 %v4085
      %v4087 = vpop.xlane.xlu0 %4086
      %v4088 = vadd.f32 %v4078, %v83
      %v4089 = vadd.f32 %v4081, %v84
      %v4090 = vadd.f32 %v4084, %v85
      %v4091 = vadd.f32 %v4087, %v86
      %v4092 = vxor.u32 %v4088, 2147483648
      %v4093 = vxor.u32 %v4089, 2147483648
      %v4094 = vxor.u32 %v4090, 2147483648
      %v4095 = vxor.u32 %v4091, 2147483648
      %v4096 = vmul.f32 %v4092, 1.442695
      %v4097 = vpow.pop %v4096
      %v4098 = vmul.f32 %v4093, 1.442695
      %v4099 = vpow.pop %v4098
      %v4100 = vmul.f32 %v4094, 1.442695
      %v4101 = vpow.pop %v4100
      %v4102 = vmul.f32 %v4095, 1.442695
      %v4103 = vpow.pop %v4102
      %v4104 = vadd.f32 %v4097, 1.0
      %v4105 = vadd.f32 %v4099, 1.0
      %v4106 = vadd.f32 %v4101, 1.0
      %v4107 = vadd.f32 %v4103, 1.0
      %v4108 = vrcp.pop %v4104
      %v4109 = vmul.f32 1.0, %v4108
      %v4110 = vrcp.pop %v4105
      %v4111 = vmul.f32 1.0, %v4110
      %v4112 = vrcp.pop %v4106
      %v4113 = vmul.f32 1.0, %v4112
      %v4114 = vrcp.pop %v4107
      %v4115 = vmul.f32 1.0, %v4114
      %v4116 = vmul.f32 %v4088, %v4109
      %v4117 = vmul.f32 %v4089, %v4111
      %v4118 = vmul.f32 %v4090, %v4113
      %v4119 = vmul.f32 %v4091, %v4115
      %4121 = vset.pattern.permute.xlu0 0
      %4122 = vperm.xlu0 %4121, %v4116
      %v4123 = vpop.permute.xlu0 %4122
      %4126 = vset.pattern.permute.xlu0 0
      %4127 = vperm.xlu0 %4126, %v4117
      %v4128 = vpop.permute.xlu0 %4127
      %4131 = vset.pattern.permute.xlu0 0
      %4132 = vperm.xlu0 %4131, %v4118
      %v4133 = vpop.permute.xlu0 %4132
      %4136 = vset.pattern.permute.xlu0 0
      %4137 = vperm.xlu0 %4136, %v4119
      %v4138 = vpop.permute.xlu0 %4137
      %v4140 = vmul.f32 %v87, %v4123
      %v4141 = vmul.f32 %v88, %v4128
      %v4142 = vmul.f32 %v89, %v4133
      %v4143 = vmul.f32 %v90, %v4138
      %v4144 = vsel %vm137, %v4140, 0.0
      %v4145 = vsel %vm137, %v4141, 0.0
      %v4146 = vadd.f32 %v4144, %v4145
      %v4147 = vsel %vm137, %v4142, 0.0
      %v4148 = vadd.f32 %v4146, %v4147
      %v4149 = vsel %vm137, %v4143, 0.0
      %v4150 = vadd.f32 %v4148, %v4149
      %v4151 = vrot.slane %v4150, 4
      %v4152 = vadd.f32 %v4150, %v4151
      %v4153 = vrot.slane %v4152, 2
      %v4154 = vadd.f32 %v4152, %v4153
      %v4155 = vrot.slane %v4154, 1
      %v4156 = vadd.f32 %v4154, %v4155
      %v4157 = vadd.f32 %v4156, %v91
      %v4158 = vxor.u32 %v4157, 2147483648
      %v4159 = vmul.f32 %v4158, 1.442695
      %v4160 = vpow.pop %v4159
      %v4161 = vadd.f32 %v4160, 1.0
      %v4162 = vrcp.pop %v4161
      %v4163 = vmul.f32 1.0, %v4162
      %v4164 = vmul.f32 %v4157, %v4163
      %v4165 = vmul.f32 %v92, %v4164
      %v4166 = vsel %vm228, %v4165, 0.0
      %4167 = vadd.xlane.f32.xlu0 %v4166
      %v4168 = vpop.xlane.xlu0 %4167
      %v4169 = vadd.f32 %v4168, %v93
      %v4170 = vmul.f32 %v233, %v4169
      %v4171 = vadd.f32 %v3935, %v4170
      %4173 = vset.pattern.permute.xlu0 0
      %4174 = vperm.xlu0 %4173, %v4171
      %v4175 = vpop.permute.xlu0 %4174
      %v4177 = vmul.f32 %v4175, %v77
      %v4178 = vadd.f32 %v4177, %v78
      %v4179 = vxor.u32 %v4178, 2147483648
      %v4180 = vmul.f32 %v4179, 1.442695
      %v4181 = vpow.pop %v4180
      %v4182 = vadd.f32 %v4181, 1.0
      %v4183 = vrcp.pop %v4182
      %v4184 = vmul.f32 1.0, %v4183
      %v4185 = vmul.f32 %v4178, %v4184
      %v4186 = vlaneseq
      %v4187 = vshrl.u32 %v4186, 7
      %v4188 = vsub.s32 0, %v4187
      %v4189 = vrot.slane %v4185, %v4188
      %v4190 = vmul.f32 %v79, %v4189
      %v4191 = vmul.f32 %v80, %v4189
      %v4192 = vmul.f32 %v81, %v4189
      %v4193 = vmul.f32 %v82, %v4189
      %v4194 = vsel %vm137, %v4190, 0.0
      %4195 = vadd.xlane.f32.xlu0 %v4194
      %v4196 = vpop.xlane.xlu0 %4195
      %v4197 = vsel %vm137, %v4191, 0.0
      %4198 = vadd.xlane.f32.xlu0 %v4197
      %v4199 = vpop.xlane.xlu0 %4198
      %v4200 = vsel %vm137, %v4192, 0.0
      %4201 = vadd.xlane.f32.xlu0 %v4200
      %v4202 = vpop.xlane.xlu0 %4201
      %v4203 = vsel %vm137, %v4193, 0.0
      %4204 = vadd.xlane.f32.xlu0 %v4203
      %v4205 = vpop.xlane.xlu0 %4204
      %v4206 = vadd.f32 %v4196, %v83
      %v4207 = vadd.f32 %v4199, %v84
      %v4208 = vadd.f32 %v4202, %v85
      %v4209 = vadd.f32 %v4205, %v86
      %v4210 = vxor.u32 %v4206, 2147483648
      %v4211 = vxor.u32 %v4207, 2147483648
      %v4212 = vxor.u32 %v4208, 2147483648
      %v4213 = vxor.u32 %v4209, 2147483648
      %v4214 = vmul.f32 %v4210, 1.442695
      %v4215 = vpow.pop %v4214
      %v4216 = vmul.f32 %v4211, 1.442695
      %v4217 = vpow.pop %v4216
      %v4218 = vmul.f32 %v4212, 1.442695
      %v4219 = vpow.pop %v4218
      %v4220 = vmul.f32 %v4213, 1.442695
      %v4221 = vpow.pop %v4220
      %v4222 = vadd.f32 %v4215, 1.0
      %v4223 = vadd.f32 %v4217, 1.0
      %v4224 = vadd.f32 %v4219, 1.0
      %v4225 = vadd.f32 %v4221, 1.0
      %v4226 = vrcp.pop %v4222
      %v4227 = vmul.f32 1.0, %v4226
      %v4228 = vrcp.pop %v4223
      %v4229 = vmul.f32 1.0, %v4228
      %v4230 = vrcp.pop %v4224
      %v4231 = vmul.f32 1.0, %v4230
      %v4232 = vrcp.pop %v4225
      %v4233 = vmul.f32 1.0, %v4232
      %v4234 = vmul.f32 %v4206, %v4227
      %v4235 = vmul.f32 %v4207, %v4229
      %v4236 = vmul.f32 %v4208, %v4231
      %v4237 = vmul.f32 %v4209, %v4233
      %4239 = vset.pattern.permute.xlu0 0
      %4240 = vperm.xlu0 %4239, %v4234
      %v4241 = vpop.permute.xlu0 %4240
      %4244 = vset.pattern.permute.xlu0 0
      %4245 = vperm.xlu0 %4244, %v4235
      %v4246 = vpop.permute.xlu0 %4245
      %4249 = vset.pattern.permute.xlu0 0
      %4250 = vperm.xlu0 %4249, %v4236
      %v4251 = vpop.permute.xlu0 %4250
      %4254 = vset.pattern.permute.xlu0 0
      %4255 = vperm.xlu0 %4254, %v4237
      %v4256 = vpop.permute.xlu0 %4255
      %v4258 = vmul.f32 %v87, %v4241
      %v4259 = vmul.f32 %v88, %v4246
      %v4260 = vmul.f32 %v89, %v4251
      %v4261 = vmul.f32 %v90, %v4256
      %v4262 = vsel %vm137, %v4258, 0.0
      %v4263 = vsel %vm137, %v4259, 0.0
      %v4264 = vadd.f32 %v4262, %v4263
      %v4265 = vsel %vm137, %v4260, 0.0
      %v4266 = vadd.f32 %v4264, %v4265
      %v4267 = vsel %vm137, %v4261, 0.0
      %v4268 = vadd.f32 %v4266, %v4267
      %v4269 = vrot.slane %v4268, 4
      %v4270 = vadd.f32 %v4268, %v4269
      %v4271 = vrot.slane %v4270, 2
      %v4272 = vadd.f32 %v4270, %v4271
      %v4273 = vrot.slane %v4272, 1
      %v4274 = vadd.f32 %v4272, %v4273
      %v4275 = vadd.f32 %v4274, %v91
      %v4276 = vxor.u32 %v4275, 2147483648
      %v4277 = vmul.f32 %v4276, 1.442695
      %v4278 = vpow.pop %v4277
      %v4279 = vadd.f32 %v4278, 1.0
      %v4280 = vrcp.pop %v4279
      %v4281 = vmul.f32 1.0, %v4280
      %v4282 = vmul.f32 %v4275, %v4281
      %v4283 = vmul.f32 %v92, %v4282
      %v4284 = vsel %vm228, %v4283, 0.0
      %4285 = vadd.xlane.f32.xlu0 %v4284
      %v4286 = vpop.xlane.xlu0 %4285
      %v4287 = vadd.f32 %v4286, %v93
      %v4288 = vmul.f32 %v470, %v4287
      %v4289 = vadd.f32 %v3935, %v4288
      %4291 = vset.pattern.permute.xlu0 0
      %4292 = vperm.xlu0 %4291, %v4289
      %v4293 = vpop.permute.xlu0 %4292
      %v4295 = vmul.f32 %v4293, %v77
      %v4296 = vadd.f32 %v4295, %v78
      %v4297 = vxor.u32 %v4296, 2147483648
      %v4298 = vmul.f32 %v4297, 1.442695
      %v4299 = vpow.pop %v4298
      %v4300 = vadd.f32 %v4299, 1.0
      %v4301 = vrcp.pop %v4300
      %v4302 = vmul.f32 1.0, %v4301
      %v4303 = vmul.f32 %v4296, %v4302
      %v4304 = vlaneseq
      %v4305 = vshrl.u32 %v4304, 7
      %v4306 = vsub.s32 0, %v4305
      %v4307 = vrot.slane %v4303, %v4306
      %v4308 = vmul.f32 %v79, %v4307
      %v4309 = vmul.f32 %v80, %v4307
      %v4310 = vmul.f32 %v81, %v4307
      %v4311 = vmul.f32 %v82, %v4307
      %v4312 = vsel %vm137, %v4308, 0.0
      %4313 = vadd.xlane.f32.xlu0 %v4312
      %v4314 = vpop.xlane.xlu0 %4313
      %v4315 = vsel %vm137, %v4309, 0.0
      %4316 = vadd.xlane.f32.xlu0 %v4315
      %v4317 = vpop.xlane.xlu0 %4316
      %v4318 = vsel %vm137, %v4310, 0.0
      %4319 = vadd.xlane.f32.xlu0 %v4318
      %v4320 = vpop.xlane.xlu0 %4319
      %v4321 = vsel %vm137, %v4311, 0.0
      %4322 = vadd.xlane.f32.xlu0 %v4321
      %v4323 = vpop.xlane.xlu0 %4322
      %v4324 = vadd.f32 %v4314, %v83
      %v4325 = vadd.f32 %v4317, %v84
      %v4326 = vadd.f32 %v4320, %v85
      %v4327 = vadd.f32 %v4323, %v86
      %v4328 = vxor.u32 %v4324, 2147483648
      %v4329 = vxor.u32 %v4325, 2147483648
      %v4330 = vxor.u32 %v4326, 2147483648
      %v4331 = vxor.u32 %v4327, 2147483648
      %v4332 = vmul.f32 %v4328, 1.442695
      %v4333 = vpow.pop %v4332
      %v4334 = vmul.f32 %v4329, 1.442695
      %v4335 = vpow.pop %v4334
      %v4336 = vmul.f32 %v4330, 1.442695
      %v4337 = vpow.pop %v4336
      %v4338 = vmul.f32 %v4331, 1.442695
      %v4339 = vpow.pop %v4338
      %v4340 = vadd.f32 %v4333, 1.0
      %v4341 = vadd.f32 %v4335, 1.0
      %v4342 = vadd.f32 %v4337, 1.0
      %v4343 = vadd.f32 %v4339, 1.0
      %v4344 = vrcp.pop %v4340
      %v4345 = vmul.f32 1.0, %v4344
      %v4346 = vrcp.pop %v4341
      %v4347 = vmul.f32 1.0, %v4346
      %v4348 = vrcp.pop %v4342
      %v4349 = vmul.f32 1.0, %v4348
      %v4350 = vrcp.pop %v4343
      %v4351 = vmul.f32 1.0, %v4350
      %v4352 = vmul.f32 %v4324, %v4345
      %v4353 = vmul.f32 %v4325, %v4347
      %v4354 = vmul.f32 %v4326, %v4349
      %v4355 = vmul.f32 %v4327, %v4351
      %4357 = vset.pattern.permute.xlu0 0
      %4358 = vperm.xlu0 %4357, %v4352
      %v4359 = vpop.permute.xlu0 %4358
      %4362 = vset.pattern.permute.xlu0 0
      %4363 = vperm.xlu0 %4362, %v4353
      %v4364 = vpop.permute.xlu0 %4363
      %4367 = vset.pattern.permute.xlu0 0
      %4368 = vperm.xlu0 %4367, %v4354
      %v4369 = vpop.permute.xlu0 %4368
      %4372 = vset.pattern.permute.xlu0 0
      %4373 = vperm.xlu0 %4372, %v4355
      %v4374 = vpop.permute.xlu0 %4373
      %v4376 = vmul.f32 %v87, %v4359
      %v4377 = vmul.f32 %v88, %v4364
      %v4378 = vmul.f32 %v89, %v4369
      %v4379 = vmul.f32 %v90, %v4374
      %v4380 = vsel %vm137, %v4376, 0.0
      %v4381 = vsel %vm137, %v4377, 0.0
      %v4382 = vadd.f32 %v4380, %v4381
      %v4383 = vsel %vm137, %v4378, 0.0
      %v4384 = vadd.f32 %v4382, %v4383
      %v4385 = vsel %vm137, %v4379, 0.0
      %v4386 = vadd.f32 %v4384, %v4385
      %v4387 = vrot.slane %v4386, 4
      %v4388 = vadd.f32 %v4386, %v4387
      %v4389 = vrot.slane %v4388, 2
      %v4390 = vadd.f32 %v4388, %v4389
      %v4391 = vrot.slane %v4390, 1
      %v4392 = vadd.f32 %v4390, %v4391
      %v4393 = vadd.f32 %v4392, %v91
      %v4394 = vxor.u32 %v4393, 2147483648
      %v4395 = vmul.f32 %v4394, 1.442695
      %v4396 = vpow.pop %v4395
      %v4397 = vadd.f32 %v4396, 1.0
      %v4398 = vrcp.pop %v4397
      %v4399 = vmul.f32 1.0, %v4398
      %v4400 = vmul.f32 %v4393, %v4399
      %v4401 = vmul.f32 %v92, %v4400
      %v4402 = vsel %vm228, %v4401, 0.0
      %4403 = vadd.xlane.f32.xlu0 %v4402
      %v4404 = vpop.xlane.xlu0 %4403
      %v4405 = vadd.f32 %v4404, %v93
      %v4406 = vmul.f32 %v4169, 2.0
      %v4407 = vadd.f32 %v4051, %v4406
      %v4408 = vmul.f32 %v4287, 2.0
      %v4409 = vadd.f32 %v4407, %v4408
      %v4410 = vadd.f32 %v4409, %v4405
      %v4411 = vmul.f32 %v594, %v4410
      %v4412 = vadd.f32 %v3935, %v4411
      %4414 = vset.pattern.permute.xlu0 0
      %4415 = vperm.xlu0 %4414, %v4412
      %v4416 = vpop.permute.xlu0 %4415
      %v4418 = vmul.f32 %v4416, %v77
      %v4419 = vadd.f32 %v4418, %v78
      %v4420 = vxor.u32 %v4419, 2147483648
      %v4421 = vmul.f32 %v4420, 1.442695
      %v4422 = vpow.pop %v4421
      %v4423 = vadd.f32 %v4422, 1.0
      %v4424 = vrcp.pop %v4423
      %v4425 = vmul.f32 1.0, %v4424
      %v4426 = vmul.f32 %v4419, %v4425
      %v4427 = vlaneseq
      %v4428 = vshrl.u32 %v4427, 7
      %v4429 = vsub.s32 0, %v4428
      %v4430 = vrot.slane %v4426, %v4429
      %v4431 = vmul.f32 %v79, %v4430
      %v4432 = vmul.f32 %v80, %v4430
      %v4433 = vmul.f32 %v81, %v4430
      %v4434 = vmul.f32 %v82, %v4430
      %v4435 = vsel %vm137, %v4431, 0.0
      %4436 = vadd.xlane.f32.xlu0 %v4435
      %v4437 = vpop.xlane.xlu0 %4436
      %v4438 = vsel %vm137, %v4432, 0.0
      %4439 = vadd.xlane.f32.xlu0 %v4438
      %v4440 = vpop.xlane.xlu0 %4439
      %v4441 = vsel %vm137, %v4433, 0.0
      %4442 = vadd.xlane.f32.xlu0 %v4441
      %v4443 = vpop.xlane.xlu0 %4442
      %v4444 = vsel %vm137, %v4434, 0.0
      %4445 = vadd.xlane.f32.xlu0 %v4444
      %v4446 = vpop.xlane.xlu0 %4445
      %v4447 = vadd.f32 %v4437, %v83
      %v4448 = vadd.f32 %v4440, %v84
      %v4449 = vadd.f32 %v4443, %v85
      %v4450 = vadd.f32 %v4446, %v86
      %v4451 = vxor.u32 %v4447, 2147483648
      %v4452 = vxor.u32 %v4448, 2147483648
      %v4453 = vxor.u32 %v4449, 2147483648
      %v4454 = vxor.u32 %v4450, 2147483648
      %v4455 = vmul.f32 %v4451, 1.442695
      %v4456 = vpow.pop %v4455
      %v4457 = vmul.f32 %v4452, 1.442695
      %v4458 = vpow.pop %v4457
      %v4459 = vmul.f32 %v4453, 1.442695
      %v4460 = vpow.pop %v4459
      %v4461 = vmul.f32 %v4454, 1.442695
      %v4462 = vpow.pop %v4461
      %v4463 = vadd.f32 %v4456, 1.0
      %v4464 = vadd.f32 %v4458, 1.0
      %v4465 = vadd.f32 %v4460, 1.0
      %v4466 = vadd.f32 %v4462, 1.0
      %v4467 = vrcp.pop %v4463
      %v4468 = vmul.f32 1.0, %v4467
      %v4469 = vrcp.pop %v4464
      %v4470 = vmul.f32 1.0, %v4469
      %v4471 = vrcp.pop %v4465
      %v4472 = vmul.f32 1.0, %v4471
      %v4473 = vrcp.pop %v4466
      %v4474 = vmul.f32 1.0, %v4473
      %v4475 = vmul.f32 %v4447, %v4468
      %v4476 = vmul.f32 %v4448, %v4470
      %v4477 = vmul.f32 %v4449, %v4472
      %v4478 = vmul.f32 %v4450, %v4474
      %4480 = vset.pattern.permute.xlu0 0
      %4481 = vperm.xlu0 %4480, %v4475
      %v4482 = vpop.permute.xlu0 %4481
      %4485 = vset.pattern.permute.xlu0 0
      %4486 = vperm.xlu0 %4485, %v4476
      %v4487 = vpop.permute.xlu0 %4486
      %4490 = vset.pattern.permute.xlu0 0
      %4491 = vperm.xlu0 %4490, %v4477
      %v4492 = vpop.permute.xlu0 %4491
      %4495 = vset.pattern.permute.xlu0 0
      %4496 = vperm.xlu0 %4495, %v4478
      %v4497 = vpop.permute.xlu0 %4496
      %v4499 = vmul.f32 %v87, %v4482
      %v4500 = vmul.f32 %v88, %v4487
      %v4501 = vmul.f32 %v89, %v4492
      %v4502 = vmul.f32 %v90, %v4497
      %v4503 = vsel %vm137, %v4499, 0.0
      %v4504 = vsel %vm137, %v4500, 0.0
      %v4505 = vadd.f32 %v4503, %v4504
      %v4506 = vsel %vm137, %v4501, 0.0
      %v4507 = vadd.f32 %v4505, %v4506
      %v4508 = vsel %vm137, %v4502, 0.0
      %v4509 = vadd.f32 %v4507, %v4508
      %v4510 = vrot.slane %v4509, 4
      %v4511 = vadd.f32 %v4509, %v4510
      %v4512 = vrot.slane %v4511, 2
      %v4513 = vadd.f32 %v4511, %v4512
      %v4514 = vrot.slane %v4513, 1
      %v4515 = vadd.f32 %v4513, %v4514
      %v4516 = vadd.f32 %v4515, %v91
      %v4517 = vxor.u32 %v4516, 2147483648
      %v4518 = vmul.f32 %v4517, 1.442695
      %v4519 = vpow.pop %v4518
      %v4520 = vadd.f32 %v4519, 1.0
      %v4521 = vrcp.pop %v4520
      %v4522 = vmul.f32 1.0, %v4521
      %v4523 = vmul.f32 %v4516, %v4522
      %v4524 = vmul.f32 %v92, %v4523
      %v4525 = vsel %vm228, %v4524, 0.0
      %4526 = vadd.xlane.f32.xlu0 %v4525
      %v4527 = vpop.xlane.xlu0 %4526
      %v4528 = vadd.f32 %v4527, %v93
      %v4529 = vmul.f32 %v233, %v4528
      %v4530 = vadd.f32 %v4412, %v4529
      %4532 = vset.pattern.permute.xlu0 0
      %4533 = vperm.xlu0 %4532, %v4530
      %v4534 = vpop.permute.xlu0 %4533
      %v4536 = vmul.f32 %v4534, %v77
      %v4537 = vadd.f32 %v4536, %v78
      %v4538 = vxor.u32 %v4537, 2147483648
      %v4539 = vmul.f32 %v4538, 1.442695
      %v4540 = vpow.pop %v4539
      %v4541 = vadd.f32 %v4540, 1.0
      %v4542 = vrcp.pop %v4541
      %v4543 = vmul.f32 1.0, %v4542
      %v4544 = vmul.f32 %v4537, %v4543
      %v4545 = vlaneseq
      %v4546 = vshrl.u32 %v4545, 7
      %v4547 = vsub.s32 0, %v4546
      %v4548 = vrot.slane %v4544, %v4547
      %v4549 = vmul.f32 %v79, %v4548
      %v4550 = vmul.f32 %v80, %v4548
      %v4551 = vmul.f32 %v81, %v4548
      %v4552 = vmul.f32 %v82, %v4548
      %v4553 = vsel %vm137, %v4549, 0.0
      %4554 = vadd.xlane.f32.xlu0 %v4553
      %v4555 = vpop.xlane.xlu0 %4554
      %v4556 = vsel %vm137, %v4550, 0.0
      %4557 = vadd.xlane.f32.xlu0 %v4556
      %v4558 = vpop.xlane.xlu0 %4557
      %v4559 = vsel %vm137, %v4551, 0.0
      %4560 = vadd.xlane.f32.xlu0 %v4559
      %v4561 = vpop.xlane.xlu0 %4560
      %v4562 = vsel %vm137, %v4552, 0.0
      %4563 = vadd.xlane.f32.xlu0 %v4562
      %v4564 = vpop.xlane.xlu0 %4563
      %v4565 = vadd.f32 %v4555, %v83
      %v4566 = vadd.f32 %v4558, %v84
      %v4567 = vadd.f32 %v4561, %v85
      %v4568 = vadd.f32 %v4564, %v86
      %v4569 = vxor.u32 %v4565, 2147483648
      %v4570 = vxor.u32 %v4566, 2147483648
      %v4571 = vxor.u32 %v4567, 2147483648
      %v4572 = vxor.u32 %v4568, 2147483648
      %v4573 = vmul.f32 %v4569, 1.442695
      %v4574 = vpow.pop %v4573
      %v4575 = vmul.f32 %v4570, 1.442695
      %v4576 = vpow.pop %v4575
      %v4577 = vmul.f32 %v4571, 1.442695
      %v4578 = vpow.pop %v4577
      %v4579 = vmul.f32 %v4572, 1.442695
      %v4580 = vpow.pop %v4579
      %v4581 = vadd.f32 %v4574, 1.0
      %v4582 = vadd.f32 %v4576, 1.0
      %v4583 = vadd.f32 %v4578, 1.0
      %v4584 = vadd.f32 %v4580, 1.0
      %v4585 = vrcp.pop %v4581
      %v4586 = vmul.f32 1.0, %v4585
      %v4587 = vrcp.pop %v4582
      %v4588 = vmul.f32 1.0, %v4587
      %v4589 = vrcp.pop %v4583
      %v4590 = vmul.f32 1.0, %v4589
      %v4591 = vrcp.pop %v4584
      %v4592 = vmul.f32 1.0, %v4591
      %v4593 = vmul.f32 %v4565, %v4586
      %v4594 = vmul.f32 %v4566, %v4588
      %v4595 = vmul.f32 %v4567, %v4590
      %v4596 = vmul.f32 %v4568, %v4592
      %4598 = vset.pattern.permute.xlu0 0
      %4599 = vperm.xlu0 %4598, %v4593
      %v4600 = vpop.permute.xlu0 %4599
      %4603 = vset.pattern.permute.xlu0 0
      %4604 = vperm.xlu0 %4603, %v4594
      %v4605 = vpop.permute.xlu0 %4604
      %4608 = vset.pattern.permute.xlu0 0
      %4609 = vperm.xlu0 %4608, %v4595
      %v4610 = vpop.permute.xlu0 %4609
      %4613 = vset.pattern.permute.xlu0 0
      %4614 = vperm.xlu0 %4613, %v4596
      %v4615 = vpop.permute.xlu0 %4614
      %v4617 = vmul.f32 %v87, %v4600
      %v4618 = vmul.f32 %v88, %v4605
      %v4619 = vmul.f32 %v89, %v4610
      %v4620 = vmul.f32 %v90, %v4615
      %v4621 = vsel %vm137, %v4617, 0.0
      %v4622 = vsel %vm137, %v4618, 0.0
      %v4623 = vadd.f32 %v4621, %v4622
      %v4624 = vsel %vm137, %v4619, 0.0
      %v4625 = vadd.f32 %v4623, %v4624
      %v4626 = vsel %vm137, %v4620, 0.0
      %v4627 = vadd.f32 %v4625, %v4626
      %v4628 = vrot.slane %v4627, 4
      %v4629 = vadd.f32 %v4627, %v4628
      %v4630 = vrot.slane %v4629, 2
      %v4631 = vadd.f32 %v4629, %v4630
      %v4632 = vrot.slane %v4631, 1
      %v4633 = vadd.f32 %v4631, %v4632
      %v4634 = vadd.f32 %v4633, %v91
      %v4635 = vxor.u32 %v4634, 2147483648
      %v4636 = vmul.f32 %v4635, 1.442695
      %v4637 = vpow.pop %v4636
      %v4638 = vadd.f32 %v4637, 1.0
      %v4639 = vrcp.pop %v4638
      %v4640 = vmul.f32 1.0, %v4639
      %v4641 = vmul.f32 %v4634, %v4640
      %v4642 = vmul.f32 %v92, %v4641
      %v4643 = vsel %vm228, %v4642, 0.0
      %4644 = vadd.xlane.f32.xlu0 %v4643
      %v4645 = vpop.xlane.xlu0 %4644
      %v4646 = vadd.f32 %v4645, %v93
      %v4647 = vmul.f32 %v233, %v4646
      %v4648 = vadd.f32 %v4412, %v4647
      %4650 = vset.pattern.permute.xlu0 0
      %4651 = vperm.xlu0 %4650, %v4648
      %v4652 = vpop.permute.xlu0 %4651
      %v4654 = vmul.f32 %v4652, %v77
      %v4655 = vadd.f32 %v4654, %v78
      %v4656 = vxor.u32 %v4655, 2147483648
      %v4657 = vmul.f32 %v4656, 1.442695
      %v4658 = vpow.pop %v4657
      %v4659 = vadd.f32 %v4658, 1.0
      %v4660 = vrcp.pop %v4659
      %v4661 = vmul.f32 1.0, %v4660
      %v4662 = vmul.f32 %v4655, %v4661
      %v4663 = vlaneseq
      %v4664 = vshrl.u32 %v4663, 7
      %v4665 = vsub.s32 0, %v4664
      %v4666 = vrot.slane %v4662, %v4665
      %v4667 = vmul.f32 %v79, %v4666
      %v4668 = vmul.f32 %v80, %v4666
      %v4669 = vmul.f32 %v81, %v4666
      %v4670 = vmul.f32 %v82, %v4666
      %v4671 = vsel %vm137, %v4667, 0.0
      %4672 = vadd.xlane.f32.xlu0 %v4671
      %v4673 = vpop.xlane.xlu0 %4672
      %v4674 = vsel %vm137, %v4668, 0.0
      %4675 = vadd.xlane.f32.xlu0 %v4674
      %v4676 = vpop.xlane.xlu0 %4675
      %v4677 = vsel %vm137, %v4669, 0.0
      %4678 = vadd.xlane.f32.xlu0 %v4677
      %v4679 = vpop.xlane.xlu0 %4678
      %v4680 = vsel %vm137, %v4670, 0.0
      %4681 = vadd.xlane.f32.xlu0 %v4680
      %v4682 = vpop.xlane.xlu0 %4681
      %v4683 = vadd.f32 %v4673, %v83
      %v4684 = vadd.f32 %v4676, %v84
      %v4685 = vadd.f32 %v4679, %v85
      %v4686 = vadd.f32 %v4682, %v86
      %v4687 = vxor.u32 %v4683, 2147483648
      %v4688 = vxor.u32 %v4684, 2147483648
      %v4689 = vxor.u32 %v4685, 2147483648
      %v4690 = vxor.u32 %v4686, 2147483648
      %v4691 = vmul.f32 %v4687, 1.442695
      %v4692 = vpow.pop %v4691
      %v4693 = vmul.f32 %v4688, 1.442695
      %v4694 = vpow.pop %v4693
      %v4695 = vmul.f32 %v4689, 1.442695
      %v4696 = vpow.pop %v4695
      %v4697 = vmul.f32 %v4690, 1.442695
      %v4698 = vpow.pop %v4697
      %v4699 = vadd.f32 %v4692, 1.0
      %v4700 = vadd.f32 %v4694, 1.0
      %v4701 = vadd.f32 %v4696, 1.0
      %v4702 = vadd.f32 %v4698, 1.0
      %v4703 = vrcp.pop %v4699
      %v4704 = vmul.f32 1.0, %v4703
      %v4705 = vrcp.pop %v4700
      %v4706 = vmul.f32 1.0, %v4705
      %v4707 = vrcp.pop %v4701
      %v4708 = vmul.f32 1.0, %v4707
      %v4709 = vrcp.pop %v4702
      %v4710 = vmul.f32 1.0, %v4709
      %v4711 = vmul.f32 %v4683, %v4704
      %v4712 = vmul.f32 %v4684, %v4706
      %v4713 = vmul.f32 %v4685, %v4708
      %v4714 = vmul.f32 %v4686, %v4710
      %4716 = vset.pattern.permute.xlu0 0
      %4717 = vperm.xlu0 %4716, %v4711
      %v4718 = vpop.permute.xlu0 %4717
      %4721 = vset.pattern.permute.xlu0 0
      %4722 = vperm.xlu0 %4721, %v4712
      %v4723 = vpop.permute.xlu0 %4722
      %4726 = vset.pattern.permute.xlu0 0
      %4727 = vperm.xlu0 %4726, %v4713
      %v4728 = vpop.permute.xlu0 %4727
      %4731 = vset.pattern.permute.xlu0 0
      %4732 = vperm.xlu0 %4731, %v4714
      %v4733 = vpop.permute.xlu0 %4732
      %v4735 = vmul.f32 %v87, %v4718
      %v4736 = vmul.f32 %v88, %v4723
      %v4737 = vmul.f32 %v89, %v4728
      %v4738 = vmul.f32 %v90, %v4733
      %v4739 = vsel %vm137, %v4735, 0.0
      %v4740 = vsel %vm137, %v4736, 0.0
      %v4741 = vadd.f32 %v4739, %v4740
      %v4742 = vsel %vm137, %v4737, 0.0
      %v4743 = vadd.f32 %v4741, %v4742
      %v4744 = vsel %vm137, %v4738, 0.0
      %v4745 = vadd.f32 %v4743, %v4744
      %v4746 = vrot.slane %v4745, 4
      %v4747 = vadd.f32 %v4745, %v4746
      %v4748 = vrot.slane %v4747, 2
      %v4749 = vadd.f32 %v4747, %v4748
      %v4750 = vrot.slane %v4749, 1
      %v4751 = vadd.f32 %v4749, %v4750
      %v4752 = vadd.f32 %v4751, %v91
      %v4753 = vxor.u32 %v4752, 2147483648
      %v4754 = vmul.f32 %v4753, 1.442695
      %v4755 = vpow.pop %v4754
      %v4756 = vadd.f32 %v4755, 1.0
      %v4757 = vrcp.pop %v4756
      %v4758 = vmul.f32 1.0, %v4757
      %v4759 = vmul.f32 %v4752, %v4758
      %v4760 = vmul.f32 %v92, %v4759
      %v4761 = vsel %vm228, %v4760, 0.0
      %4762 = vadd.xlane.f32.xlu0 %v4761
      %v4763 = vpop.xlane.xlu0 %4762
      %v4764 = vadd.f32 %v4763, %v93
      %v4765 = vmul.f32 %v470, %v4764
      %v4766 = vadd.f32 %v4412, %v4765
      %4768 = vset.pattern.permute.xlu0 0
      %4769 = vperm.xlu0 %4768, %v4766
      %v4770 = vpop.permute.xlu0 %4769
      %v4772 = vmul.f32 %v4770, %v77
      %v4773 = vadd.f32 %v4772, %v78
      %v4774 = vxor.u32 %v4773, 2147483648
      %v4775 = vmul.f32 %v4774, 1.442695
      %v4776 = vpow.pop %v4775
      %v4777 = vadd.f32 %v4776, 1.0
      %v4778 = vrcp.pop %v4777
      %v4779 = vmul.f32 1.0, %v4778
      %v4780 = vmul.f32 %v4773, %v4779
      %v4781 = vlaneseq
      %v4782 = vshrl.u32 %v4781, 7
      %v4783 = vsub.s32 0, %v4782
      %v4784 = vrot.slane %v4780, %v4783
      %v4785 = vmul.f32 %v79, %v4784
      %v4786 = vmul.f32 %v80, %v4784
      %v4787 = vmul.f32 %v81, %v4784
      %v4788 = vmul.f32 %v82, %v4784
      %v4789 = vsel %vm137, %v4785, 0.0
      %4790 = vadd.xlane.f32.xlu0 %v4789
      %v4791 = vpop.xlane.xlu0 %4790
      %v4792 = vsel %vm137, %v4786, 0.0
      %4793 = vadd.xlane.f32.xlu0 %v4792
      %v4794 = vpop.xlane.xlu0 %4793
      %v4795 = vsel %vm137, %v4787, 0.0
      %4796 = vadd.xlane.f32.xlu0 %v4795
      %v4797 = vpop.xlane.xlu0 %4796
      %v4798 = vsel %vm137, %v4788, 0.0
      %4799 = vadd.xlane.f32.xlu0 %v4798
      %v4800 = vpop.xlane.xlu0 %4799
      %v4801 = vadd.f32 %v4791, %v83
      %v4802 = vadd.f32 %v4794, %v84
      %v4803 = vadd.f32 %v4797, %v85
      %v4804 = vadd.f32 %v4800, %v86
      %v4805 = vxor.u32 %v4801, 2147483648
      %v4806 = vxor.u32 %v4802, 2147483648
      %v4807 = vxor.u32 %v4803, 2147483648
      %v4808 = vxor.u32 %v4804, 2147483648
      %v4809 = vmul.f32 %v4805, 1.442695
      %v4810 = vpow.pop %v4809
      %v4811 = vmul.f32 %v4806, 1.442695
      %v4812 = vpow.pop %v4811
      %v4813 = vmul.f32 %v4807, 1.442695
      %v4814 = vpow.pop %v4813
      %v4815 = vmul.f32 %v4808, 1.442695
      %v4816 = vpow.pop %v4815
      %v4817 = vadd.f32 %v4810, 1.0
      %v4818 = vadd.f32 %v4812, 1.0
      %v4819 = vadd.f32 %v4814, 1.0
      %v4820 = vadd.f32 %v4816, 1.0
      %v4821 = vrcp.pop %v4817
      %v4822 = vmul.f32 1.0, %v4821
      %v4823 = vrcp.pop %v4818
      %v4824 = vmul.f32 1.0, %v4823
      %v4825 = vrcp.pop %v4819
      %v4826 = vmul.f32 1.0, %v4825
      %v4827 = vrcp.pop %v4820
      %v4828 = vmul.f32 1.0, %v4827
      %v4829 = vmul.f32 %v4801, %v4822
      %v4830 = vmul.f32 %v4802, %v4824
      %v4831 = vmul.f32 %v4803, %v4826
      %v4832 = vmul.f32 %v4804, %v4828
      %4834 = vset.pattern.permute.xlu0 0
      %4835 = vperm.xlu0 %4834, %v4829
      %v4836 = vpop.permute.xlu0 %4835
      %4839 = vset.pattern.permute.xlu0 0
      %4840 = vperm.xlu0 %4839, %v4830
      %v4841 = vpop.permute.xlu0 %4840
      %4844 = vset.pattern.permute.xlu0 0
      %4845 = vperm.xlu0 %4844, %v4831
      %v4846 = vpop.permute.xlu0 %4845
      %4849 = vset.pattern.permute.xlu0 0
      %4850 = vperm.xlu0 %4849, %v4832
      %v4851 = vpop.permute.xlu0 %4850
      %v4853 = vmul.f32 %v87, %v4836
      %v4854 = vmul.f32 %v88, %v4841
      %v4855 = vmul.f32 %v89, %v4846
      %v4856 = vmul.f32 %v90, %v4851
      %v4857 = vsel %vm137, %v4853, 0.0
      %v4858 = vsel %vm137, %v4854, 0.0
      %v4859 = vadd.f32 %v4857, %v4858
      %v4860 = vsel %vm137, %v4855, 0.0
      %v4861 = vadd.f32 %v4859, %v4860
      %v4862 = vsel %vm137, %v4856, 0.0
      %v4863 = vadd.f32 %v4861, %v4862
      %v4864 = vrot.slane %v4863, 4
      %v4865 = vadd.f32 %v4863, %v4864
      %v4866 = vrot.slane %v4865, 2
      %v4867 = vadd.f32 %v4865, %v4866
      %v4868 = vrot.slane %v4867, 1
      %v4869 = vadd.f32 %v4867, %v4868
      %v4870 = vadd.f32 %v4869, %v91
      %v4871 = vxor.u32 %v4870, 2147483648
      %v4872 = vmul.f32 %v4871, 1.442695
      %v4873 = vpow.pop %v4872
      %v4874 = vadd.f32 %v4873, 1.0
      %v4875 = vrcp.pop %v4874
      %v4876 = vmul.f32 1.0, %v4875
      %v4877 = vmul.f32 %v4870, %v4876
      %v4878 = vmul.f32 %v92, %v4877
      %v4879 = vsel %vm228, %v4878, 0.0
      %4880 = vadd.xlane.f32.xlu0 %v4879
      %v4881 = vpop.xlane.xlu0 %4880
      %v4882 = vadd.f32 %v4881, %v93
      %v4883 = vmul.f32 %v4646, 2.0
      %v4884 = vadd.f32 %v4528, %v4883
      %v4885 = vmul.f32 %v4764, 2.0
      %v4886 = vadd.f32 %v4884, %v4885
      %v4887 = vadd.f32 %v4886, %v4882
      %v4888 = vmul.f32 %v594, %v4887
      %v4889 = vadd.f32 %v4412, %v4888
      %4891 = vset.pattern.permute.xlu0 0
      %4892 = vperm.xlu0 %4891, %v4889
      %v4893 = vpop.permute.xlu0 %4892
      %v4895 = vmul.f32 %v4893, %v77
      %v4896 = vadd.f32 %v4895, %v78
      %v4897 = vxor.u32 %v4896, 2147483648
      %v4898 = vmul.f32 %v4897, 1.442695
      %v4899 = vpow.pop %v4898
      %v4900 = vadd.f32 %v4899, 1.0
      %v4901 = vrcp.pop %v4900
      %v4902 = vmul.f32 1.0, %v4901
      %v4903 = vmul.f32 %v4896, %v4902
      %v4904 = vlaneseq
      %v4905 = vshrl.u32 %v4904, 7
      %v4906 = vsub.s32 0, %v4905
      %v4907 = vrot.slane %v4903, %v4906
      %v4908 = vmul.f32 %v79, %v4907
      %v4909 = vmul.f32 %v80, %v4907
      %v4910 = vmul.f32 %v81, %v4907
      %v4911 = vmul.f32 %v82, %v4907
      %v4912 = vsel %vm137, %v4908, 0.0
      %4913 = vadd.xlane.f32.xlu0 %v4912
      %v4914 = vpop.xlane.xlu0 %4913
      %v4915 = vsel %vm137, %v4909, 0.0
      %4916 = vadd.xlane.f32.xlu0 %v4915
      %v4917 = vpop.xlane.xlu0 %4916
      %v4918 = vsel %vm137, %v4910, 0.0
      %4919 = vadd.xlane.f32.xlu0 %v4918
      %v4920 = vpop.xlane.xlu0 %4919
      %v4921 = vsel %vm137, %v4911, 0.0
      %4922 = vadd.xlane.f32.xlu0 %v4921
      %v4923 = vpop.xlane.xlu0 %4922
      %v4924 = vadd.f32 %v4914, %v83
      %v4925 = vadd.f32 %v4917, %v84
      %v4926 = vadd.f32 %v4920, %v85
      %v4927 = vadd.f32 %v4923, %v86
      %v4928 = vxor.u32 %v4924, 2147483648
      %v4929 = vxor.u32 %v4925, 2147483648
      %v4930 = vxor.u32 %v4926, 2147483648
      %v4931 = vxor.u32 %v4927, 2147483648
      %v4932 = vmul.f32 %v4928, 1.442695
      %v4933 = vpow.pop %v4932
      %v4934 = vmul.f32 %v4929, 1.442695
      %v4935 = vpow.pop %v4934
      %v4936 = vmul.f32 %v4930, 1.442695
      %v4937 = vpow.pop %v4936
      %v4938 = vmul.f32 %v4931, 1.442695
      %v4939 = vpow.pop %v4938
      %v4940 = vadd.f32 %v4933, 1.0
      %v4941 = vadd.f32 %v4935, 1.0
      %v4942 = vadd.f32 %v4937, 1.0
      %v4943 = vadd.f32 %v4939, 1.0
      %v4944 = vrcp.pop %v4940
      %v4945 = vmul.f32 1.0, %v4944
      %v4946 = vrcp.pop %v4941
      %v4947 = vmul.f32 1.0, %v4946
      %v4948 = vrcp.pop %v4942
      %v4949 = vmul.f32 1.0, %v4948
      %v4950 = vrcp.pop %v4943
      %v4951 = vmul.f32 1.0, %v4950
      %v4952 = vmul.f32 %v4924, %v4945
      %v4953 = vmul.f32 %v4925, %v4947
      %v4954 = vmul.f32 %v4926, %v4949
      %v4955 = vmul.f32 %v4927, %v4951
      %4957 = vset.pattern.permute.xlu0 0
      %4958 = vperm.xlu0 %4957, %v4952
      %v4959 = vpop.permute.xlu0 %4958
      %4962 = vset.pattern.permute.xlu0 0
      %4963 = vperm.xlu0 %4962, %v4953
      %v4964 = vpop.permute.xlu0 %4963
      %4967 = vset.pattern.permute.xlu0 0
      %4968 = vperm.xlu0 %4967, %v4954
      %v4969 = vpop.permute.xlu0 %4968
      %4972 = vset.pattern.permute.xlu0 0
      %4973 = vperm.xlu0 %4972, %v4955
      %v4974 = vpop.permute.xlu0 %4973
      %v4976 = vmul.f32 %v87, %v4959
      %v4977 = vmul.f32 %v88, %v4964
      %v4978 = vmul.f32 %v89, %v4969
      %v4979 = vmul.f32 %v90, %v4974
      %v4980 = vsel %vm137, %v4976, 0.0
      %v4981 = vsel %vm137, %v4977, 0.0
      %v4982 = vadd.f32 %v4980, %v4981
      %v4983 = vsel %vm137, %v4978, 0.0
      %v4984 = vadd.f32 %v4982, %v4983
      %v4985 = vsel %vm137, %v4979, 0.0
      %v4986 = vadd.f32 %v4984, %v4985
      %v4987 = vrot.slane %v4986, 4
      %v4988 = vadd.f32 %v4986, %v4987
      %v4989 = vrot.slane %v4988, 2
      %v4990 = vadd.f32 %v4988, %v4989
      %v4991 = vrot.slane %v4990, 1
      %v4992 = vadd.f32 %v4990, %v4991
      %v4993 = vadd.f32 %v4992, %v91
      %v4994 = vxor.u32 %v4993, 2147483648
      %v4995 = vmul.f32 %v4994, 1.442695
      %v4996 = vpow.pop %v4995
      %v4997 = vadd.f32 %v4996, 1.0
      %v4998 = vrcp.pop %v4997
      %v4999 = vmul.f32 1.0, %v4998
      %v5000 = vmul.f32 %v4993, %v4999
      %v5001 = vmul.f32 %v92, %v5000
      %v5002 = vsel %vm228, %v5001, 0.0
      %5003 = vadd.xlane.f32.xlu0 %v5002
      %v5004 = vpop.xlane.xlu0 %5003
      %v5005 = vadd.f32 %v5004, %v93
      %v5006 = vmul.f32 %v233, %v5005
      %v5007 = vadd.f32 %v4889, %v5006
      %5009 = vset.pattern.permute.xlu0 0
      %5010 = vperm.xlu0 %5009, %v5007
      %v5011 = vpop.permute.xlu0 %5010
      %v5013 = vmul.f32 %v5011, %v77
      %v5014 = vadd.f32 %v5013, %v78
      %v5015 = vxor.u32 %v5014, 2147483648
      %v5016 = vmul.f32 %v5015, 1.442695
      %v5017 = vpow.pop %v5016
      %v5018 = vadd.f32 %v5017, 1.0
      %v5019 = vrcp.pop %v5018
      %v5020 = vmul.f32 1.0, %v5019
      %v5021 = vmul.f32 %v5014, %v5020
      %v5022 = vlaneseq
      %v5023 = vshrl.u32 %v5022, 7
      %v5024 = vsub.s32 0, %v5023
      %v5025 = vrot.slane %v5021, %v5024
      %v5026 = vmul.f32 %v79, %v5025
      %v5027 = vmul.f32 %v80, %v5025
      %v5028 = vmul.f32 %v81, %v5025
      %v5029 = vmul.f32 %v82, %v5025
      %v5030 = vsel %vm137, %v5026, 0.0
      %5031 = vadd.xlane.f32.xlu0 %v5030
      %v5032 = vpop.xlane.xlu0 %5031
      %v5033 = vsel %vm137, %v5027, 0.0
      %5034 = vadd.xlane.f32.xlu0 %v5033
      %v5035 = vpop.xlane.xlu0 %5034
      %v5036 = vsel %vm137, %v5028, 0.0
      %5037 = vadd.xlane.f32.xlu0 %v5036
      %v5038 = vpop.xlane.xlu0 %5037
      %v5039 = vsel %vm137, %v5029, 0.0
      %5040 = vadd.xlane.f32.xlu0 %v5039
      %v5041 = vpop.xlane.xlu0 %5040
      %v5042 = vadd.f32 %v5032, %v83
      %v5043 = vadd.f32 %v5035, %v84
      %v5044 = vadd.f32 %v5038, %v85
      %v5045 = vadd.f32 %v5041, %v86
      %v5046 = vxor.u32 %v5042, 2147483648
      %v5047 = vxor.u32 %v5043, 2147483648
      %v5048 = vxor.u32 %v5044, 2147483648
      %v5049 = vxor.u32 %v5045, 2147483648
      %v5050 = vmul.f32 %v5046, 1.442695
      %v5051 = vpow.pop %v5050
      %v5052 = vmul.f32 %v5047, 1.442695
      %v5053 = vpow.pop %v5052
      %v5054 = vmul.f32 %v5048, 1.442695
      %v5055 = vpow.pop %v5054
      %v5056 = vmul.f32 %v5049, 1.442695
      %v5057 = vpow.pop %v5056
      %v5058 = vadd.f32 %v5051, 1.0
      %v5059 = vadd.f32 %v5053, 1.0
      %v5060 = vadd.f32 %v5055, 1.0
      %v5061 = vadd.f32 %v5057, 1.0
      %v5062 = vrcp.pop %v5058
      %v5063 = vmul.f32 1.0, %v5062
      %v5064 = vrcp.pop %v5059
      %v5065 = vmul.f32 1.0, %v5064
      %v5066 = vrcp.pop %v5060
      %v5067 = vmul.f32 1.0, %v5066
      %v5068 = vrcp.pop %v5061
      %v5069 = vmul.f32 1.0, %v5068
      %v5070 = vmul.f32 %v5042, %v5063
      %v5071 = vmul.f32 %v5043, %v5065
      %v5072 = vmul.f32 %v5044, %v5067
      %v5073 = vmul.f32 %v5045, %v5069
      %5075 = vset.pattern.permute.xlu0 0
      %5076 = vperm.xlu0 %5075, %v5070
      %v5077 = vpop.permute.xlu0 %5076
      %5080 = vset.pattern.permute.xlu0 0
      %5081 = vperm.xlu0 %5080, %v5071
      %v5082 = vpop.permute.xlu0 %5081
      %5085 = vset.pattern.permute.xlu0 0
      %5086 = vperm.xlu0 %5085, %v5072
      %v5087 = vpop.permute.xlu0 %5086
      %5090 = vset.pattern.permute.xlu0 0
      %5091 = vperm.xlu0 %5090, %v5073
      %v5092 = vpop.permute.xlu0 %5091
      %v5094 = vmul.f32 %v87, %v5077
      %v5095 = vmul.f32 %v88, %v5082
      %v5096 = vmul.f32 %v89, %v5087
      %v5097 = vmul.f32 %v90, %v5092
      %v5098 = vsel %vm137, %v5094, 0.0
      %v5099 = vsel %vm137, %v5095, 0.0
      %v5100 = vadd.f32 %v5098, %v5099
      %v5101 = vsel %vm137, %v5096, 0.0
      %v5102 = vadd.f32 %v5100, %v5101
      %v5103 = vsel %vm137, %v5097, 0.0
      %v5104 = vadd.f32 %v5102, %v5103
      %v5105 = vrot.slane %v5104, 4
      %v5106 = vadd.f32 %v5104, %v5105
      %v5107 = vrot.slane %v5106, 2
      %v5108 = vadd.f32 %v5106, %v5107
      %v5109 = vrot.slane %v5108, 1
      %v5110 = vadd.f32 %v5108, %v5109
      %v5111 = vadd.f32 %v5110, %v91
      %v5112 = vxor.u32 %v5111, 2147483648
      %v5113 = vmul.f32 %v5112, 1.442695
      %v5114 = vpow.pop %v5113
      %v5115 = vadd.f32 %v5114, 1.0
      %v5116 = vrcp.pop %v5115
      %v5117 = vmul.f32 1.0, %v5116
      %v5118 = vmul.f32 %v5111, %v5117
      %v5119 = vmul.f32 %v92, %v5118
      %v5120 = vsel %vm228, %v5119, 0.0
      %5121 = vadd.xlane.f32.xlu0 %v5120
      %v5122 = vpop.xlane.xlu0 %5121
      %v5123 = vadd.f32 %v5122, %v93
      %v5124 = vmul.f32 %v233, %v5123
      %v5125 = vadd.f32 %v4889, %v5124
      %5127 = vset.pattern.permute.xlu0 0
      %5128 = vperm.xlu0 %5127, %v5125
      %v5129 = vpop.permute.xlu0 %5128
      %v5131 = vmul.f32 %v5129, %v77
      %v5132 = vadd.f32 %v5131, %v78
      %v5133 = vxor.u32 %v5132, 2147483648
      %v5134 = vmul.f32 %v5133, 1.442695
      %v5135 = vpow.pop %v5134
      %v5136 = vadd.f32 %v5135, 1.0
      %v5137 = vrcp.pop %v5136
      %v5138 = vmul.f32 1.0, %v5137
      %v5139 = vmul.f32 %v5132, %v5138
      %v5140 = vlaneseq
      %v5141 = vshrl.u32 %v5140, 7
      %v5142 = vsub.s32 0, %v5141
      %v5143 = vrot.slane %v5139, %v5142
      %v5144 = vmul.f32 %v79, %v5143
      %v5145 = vmul.f32 %v80, %v5143
      %v5146 = vmul.f32 %v81, %v5143
      %v5147 = vmul.f32 %v82, %v5143
      %v5148 = vsel %vm137, %v5144, 0.0
      %5149 = vadd.xlane.f32.xlu0 %v5148
      %v5150 = vpop.xlane.xlu0 %5149
      %v5151 = vsel %vm137, %v5145, 0.0
      %5152 = vadd.xlane.f32.xlu0 %v5151
      %v5153 = vpop.xlane.xlu0 %5152
      %v5154 = vsel %vm137, %v5146, 0.0
      %5155 = vadd.xlane.f32.xlu0 %v5154
      %v5156 = vpop.xlane.xlu0 %5155
      %v5157 = vsel %vm137, %v5147, 0.0
      %5158 = vadd.xlane.f32.xlu0 %v5157
      %v5159 = vpop.xlane.xlu0 %5158
      %v5160 = vadd.f32 %v5150, %v83
      %v5161 = vadd.f32 %v5153, %v84
      %v5162 = vadd.f32 %v5156, %v85
      %v5163 = vadd.f32 %v5159, %v86
      %v5164 = vxor.u32 %v5160, 2147483648
      %v5165 = vxor.u32 %v5161, 2147483648
      %v5166 = vxor.u32 %v5162, 2147483648
      %v5167 = vxor.u32 %v5163, 2147483648
      %v5168 = vmul.f32 %v5164, 1.442695
      %v5169 = vpow.pop %v5168
      %v5170 = vmul.f32 %v5165, 1.442695
      %v5171 = vpow.pop %v5170
      %v5172 = vmul.f32 %v5166, 1.442695
      %v5173 = vpow.pop %v5172
      %v5174 = vmul.f32 %v5167, 1.442695
      %v5175 = vpow.pop %v5174
      %v5176 = vadd.f32 %v5169, 1.0
      %v5177 = vadd.f32 %v5171, 1.0
      %v5178 = vadd.f32 %v5173, 1.0
      %v5179 = vadd.f32 %v5175, 1.0
      %v5180 = vrcp.pop %v5176
      %v5181 = vmul.f32 1.0, %v5180
      %v5182 = vrcp.pop %v5177
      %v5183 = vmul.f32 1.0, %v5182
      %v5184 = vrcp.pop %v5178
      %v5185 = vmul.f32 1.0, %v5184
      %v5186 = vrcp.pop %v5179
      %v5187 = vmul.f32 1.0, %v5186
      %v5188 = vmul.f32 %v5160, %v5181
      %v5189 = vmul.f32 %v5161, %v5183
      %v5190 = vmul.f32 %v5162, %v5185
      %v5191 = vmul.f32 %v5163, %v5187
      %5193 = vset.pattern.permute.xlu0 0
      %5194 = vperm.xlu0 %5193, %v5188
      %v5195 = vpop.permute.xlu0 %5194
      %5198 = vset.pattern.permute.xlu0 0
      %5199 = vperm.xlu0 %5198, %v5189
      %v5200 = vpop.permute.xlu0 %5199
      %5203 = vset.pattern.permute.xlu0 0
      %5204 = vperm.xlu0 %5203, %v5190
      %v5205 = vpop.permute.xlu0 %5204
      %5208 = vset.pattern.permute.xlu0 0
      %5209 = vperm.xlu0 %5208, %v5191
      %v5210 = vpop.permute.xlu0 %5209
      %v5212 = vmul.f32 %v87, %v5195
      %v5213 = vmul.f32 %v88, %v5200
      %v5214 = vmul.f32 %v89, %v5205
      %v5215 = vmul.f32 %v90, %v5210
      %v5216 = vsel %vm137, %v5212, 0.0
      %v5217 = vsel %vm137, %v5213, 0.0
      %v5218 = vadd.f32 %v5216, %v5217
      %v5219 = vsel %vm137, %v5214, 0.0
      %v5220 = vadd.f32 %v5218, %v5219
      %v5221 = vsel %vm137, %v5215, 0.0
      %v5222 = vadd.f32 %v5220, %v5221
      %v5223 = vrot.slane %v5222, 4
      %v5224 = vadd.f32 %v5222, %v5223
      %v5225 = vrot.slane %v5224, 2
      %v5226 = vadd.f32 %v5224, %v5225
      %v5227 = vrot.slane %v5226, 1
      %v5228 = vadd.f32 %v5226, %v5227
      %v5229 = vadd.f32 %v5228, %v91
      %v5230 = vxor.u32 %v5229, 2147483648
      %v5231 = vmul.f32 %v5230, 1.442695
      %v5232 = vpow.pop %v5231
      %v5233 = vadd.f32 %v5232, 1.0
      %v5234 = vrcp.pop %v5233
      %v5235 = vmul.f32 1.0, %v5234
      %v5236 = vmul.f32 %v5229, %v5235
      %v5237 = vmul.f32 %v92, %v5236
      %v5238 = vsel %vm228, %v5237, 0.0
      %5239 = vadd.xlane.f32.xlu0 %v5238
      %v5240 = vpop.xlane.xlu0 %5239
      %v5241 = vadd.f32 %v5240, %v93
      %v5242 = vmul.f32 %v470, %v5241
      %v5243 = vadd.f32 %v4889, %v5242
      %5245 = vset.pattern.permute.xlu0 0
      %5246 = vperm.xlu0 %5245, %v5243
      %v5247 = vpop.permute.xlu0 %5246
      %v5249 = vmul.f32 %v5247, %v77
      %v5250 = vadd.f32 %v5249, %v78
      %v5251 = vxor.u32 %v5250, 2147483648
      %v5252 = vmul.f32 %v5251, 1.442695
      %v5253 = vpow.pop %v5252
      %v5254 = vadd.f32 %v5253, 1.0
      %v5255 = vrcp.pop %v5254
      %v5256 = vmul.f32 1.0, %v5255
      %v5257 = vmul.f32 %v5250, %v5256
      %v5258 = vlaneseq
      %v5259 = vshrl.u32 %v5258, 7
      %v5260 = vsub.s32 0, %v5259
      %v5261 = vrot.slane %v5257, %v5260
      %v5262 = vmul.f32 %v79, %v5261
      %v5263 = vmul.f32 %v80, %v5261
      %v5264 = vmul.f32 %v81, %v5261
      %v5265 = vmul.f32 %v82, %v5261
      %v5266 = vsel %vm137, %v5262, 0.0
      %5267 = vadd.xlane.f32.xlu0 %v5266
      %v5268 = vpop.xlane.xlu0 %5267
      %v5269 = vsel %vm137, %v5263, 0.0
      %5270 = vadd.xlane.f32.xlu0 %v5269
      %v5271 = vpop.xlane.xlu0 %5270
      %v5272 = vsel %vm137, %v5264, 0.0
      %5273 = vadd.xlane.f32.xlu0 %v5272
      %v5274 = vpop.xlane.xlu0 %5273
      %v5275 = vsel %vm137, %v5265, 0.0
      %5276 = vadd.xlane.f32.xlu0 %v5275
      %v5277 = vpop.xlane.xlu0 %5276
      %v5278 = vadd.f32 %v5268, %v83
      %v5279 = vadd.f32 %v5271, %v84
      %v5280 = vadd.f32 %v5274, %v85
      %v5281 = vadd.f32 %v5277, %v86
      %v5282 = vxor.u32 %v5278, 2147483648
      %v5283 = vxor.u32 %v5279, 2147483648
      %v5284 = vxor.u32 %v5280, 2147483648
      %v5285 = vxor.u32 %v5281, 2147483648
      %v5286 = vmul.f32 %v5282, 1.442695
      %v5287 = vpow.pop %v5286
      %v5288 = vmul.f32 %v5283, 1.442695
      %v5289 = vpow.pop %v5288
      %v5290 = vmul.f32 %v5284, 1.442695
      %v5291 = vpow.pop %v5290
      %v5292 = vmul.f32 %v5285, 1.442695
      %v5293 = vpow.pop %v5292
      %v5294 = vadd.f32 %v5287, 1.0
      %v5295 = vadd.f32 %v5289, 1.0
      %v5296 = vadd.f32 %v5291, 1.0
      %v5297 = vadd.f32 %v5293, 1.0
      %v5298 = vrcp.pop %v5294
      %v5299 = vmul.f32 1.0, %v5298
      %v5300 = vrcp.pop %v5295
      %v5301 = vmul.f32 1.0, %v5300
      %v5302 = vrcp.pop %v5296
      %v5303 = vmul.f32 1.0, %v5302
      %v5304 = vrcp.pop %v5297
      %v5305 = vmul.f32 1.0, %v5304
      %v5306 = vmul.f32 %v5278, %v5299
      %v5307 = vmul.f32 %v5279, %v5301
      %v5308 = vmul.f32 %v5280, %v5303
      %v5309 = vmul.f32 %v5281, %v5305
      %5311 = vset.pattern.permute.xlu0 0
      %5312 = vperm.xlu0 %5311, %v5306
      %v5313 = vpop.permute.xlu0 %5312
      %5316 = vset.pattern.permute.xlu0 0
      %5317 = vperm.xlu0 %5316, %v5307
      %v5318 = vpop.permute.xlu0 %5317
      %5321 = vset.pattern.permute.xlu0 0
      %5322 = vperm.xlu0 %5321, %v5308
      %v5323 = vpop.permute.xlu0 %5322
      %5326 = vset.pattern.permute.xlu0 0
      %5327 = vperm.xlu0 %5326, %v5309
      %v5328 = vpop.permute.xlu0 %5327
      %v5330 = vmul.f32 %v87, %v5313
      %v5331 = vmul.f32 %v88, %v5318
      %v5332 = vmul.f32 %v89, %v5323
      %v5333 = vmul.f32 %v90, %v5328
      %v5334 = vsel %vm137, %v5330, 0.0
      %v5335 = vsel %vm137, %v5331, 0.0
      %v5336 = vadd.f32 %v5334, %v5335
      %v5337 = vsel %vm137, %v5332, 0.0
      %v5338 = vadd.f32 %v5336, %v5337
      %v5339 = vsel %vm137, %v5333, 0.0
      %v5340 = vadd.f32 %v5338, %v5339
      %v5341 = vrot.slane %v5340, 4
      %v5342 = vadd.f32 %v5340, %v5341
      %v5343 = vrot.slane %v5342, 2
      %v5344 = vadd.f32 %v5342, %v5343
      %v5345 = vrot.slane %v5344, 1
      %v5346 = vadd.f32 %v5344, %v5345
      %v5347 = vadd.f32 %v5346, %v91
      %v5348 = vxor.u32 %v5347, 2147483648
      %v5349 = vmul.f32 %v5348, 1.442695
      %v5350 = vpow.pop %v5349
      %v5351 = vadd.f32 %v5350, 1.0
      %v5352 = vrcp.pop %v5351
      %v5353 = vmul.f32 1.0, %v5352
      %v5354 = vmul.f32 %v5347, %v5353
      %v5355 = vmul.f32 %v92, %v5354
      %v5356 = vsel %vm228, %v5355, 0.0
      %5357 = vadd.xlane.f32.xlu0 %v5356
      %v5358 = vpop.xlane.xlu0 %5357
      %v5359 = vadd.f32 %v5358, %v93
      %v5360 = vmul.f32 %v5123, 2.0
      %v5361 = vadd.f32 %v5005, %v5360
      %v5362 = vmul.f32 %v5241, 2.0
      %v5363 = vadd.f32 %v5361, %v5362
      %v5364 = vadd.f32 %v5363, %v5359
      %v5365 = vmul.f32 %v594, %v5364
      %v5366 = vadd.f32 %v4889, %v5365
      %5368 = vset.pattern.permute.xlu0 0
      %5369 = vperm.xlu0 %5368, %v5366
      %v5370 = vpop.permute.xlu0 %5369
      %v5372 = vmul.f32 %v5370, %v77
      %v5373 = vadd.f32 %v5372, %v78
      %v5374 = vxor.u32 %v5373, 2147483648
      %v5375 = vmul.f32 %v5374, 1.442695
      %v5376 = vpow.pop %v5375
      %v5377 = vadd.f32 %v5376, 1.0
      %v5378 = vrcp.pop %v5377
      %v5379 = vmul.f32 1.0, %v5378
      %v5380 = vmul.f32 %v5373, %v5379
      %v5381 = vlaneseq
      %v5382 = vshrl.u32 %v5381, 7
      %v5383 = vsub.s32 0, %v5382
      %v5384 = vrot.slane %v5380, %v5383
      %v5385 = vmul.f32 %v79, %v5384
      %v5386 = vmul.f32 %v80, %v5384
      %v5387 = vmul.f32 %v81, %v5384
      %v5388 = vmul.f32 %v82, %v5384
      %v5389 = vsel %vm137, %v5385, 0.0
      %5390 = vadd.xlane.f32.xlu0 %v5389
      %v5391 = vpop.xlane.xlu0 %5390
      %v5392 = vsel %vm137, %v5386, 0.0
      %5393 = vadd.xlane.f32.xlu0 %v5392
      %v5394 = vpop.xlane.xlu0 %5393
      %v5395 = vsel %vm137, %v5387, 0.0
      %5396 = vadd.xlane.f32.xlu0 %v5395
      %v5397 = vpop.xlane.xlu0 %5396
      %v5398 = vsel %vm137, %v5388, 0.0
      %5399 = vadd.xlane.f32.xlu0 %v5398
      %v5400 = vpop.xlane.xlu0 %5399
      %v5401 = vadd.f32 %v5391, %v83
      %v5402 = vadd.f32 %v5394, %v84
      %v5403 = vadd.f32 %v5397, %v85
      %v5404 = vadd.f32 %v5400, %v86
      %v5405 = vxor.u32 %v5401, 2147483648
      %v5406 = vxor.u32 %v5402, 2147483648
      %v5407 = vxor.u32 %v5403, 2147483648
      %v5408 = vxor.u32 %v5404, 2147483648
      %v5409 = vmul.f32 %v5405, 1.442695
      %v5410 = vpow.pop %v5409
      %v5411 = vmul.f32 %v5406, 1.442695
      %v5412 = vpow.pop %v5411
      %v5413 = vmul.f32 %v5407, 1.442695
      %v5414 = vpow.pop %v5413
      %v5415 = vmul.f32 %v5408, 1.442695
      %v5416 = vpow.pop %v5415
      %v5417 = vadd.f32 %v5410, 1.0
      %v5418 = vadd.f32 %v5412, 1.0
      %v5419 = vadd.f32 %v5414, 1.0
      %v5420 = vadd.f32 %v5416, 1.0
      %v5421 = vrcp.pop %v5417
      %v5422 = vmul.f32 1.0, %v5421
      %v5423 = vrcp.pop %v5418
      %v5424 = vmul.f32 1.0, %v5423
      %v5425 = vrcp.pop %v5419
      %v5426 = vmul.f32 1.0, %v5425
      %v5427 = vrcp.pop %v5420
      %v5428 = vmul.f32 1.0, %v5427
      %v5429 = vmul.f32 %v5401, %v5422
      %v5430 = vmul.f32 %v5402, %v5424
      %v5431 = vmul.f32 %v5403, %v5426
      %v5432 = vmul.f32 %v5404, %v5428
      %5434 = vset.pattern.permute.xlu0 0
      %5435 = vperm.xlu0 %5434, %v5429
      %v5436 = vpop.permute.xlu0 %5435
      %5439 = vset.pattern.permute.xlu0 0
      %5440 = vperm.xlu0 %5439, %v5430
      %v5441 = vpop.permute.xlu0 %5440
      %5444 = vset.pattern.permute.xlu0 0
      %5445 = vperm.xlu0 %5444, %v5431
      %v5446 = vpop.permute.xlu0 %5445
      %5449 = vset.pattern.permute.xlu0 0
      %5450 = vperm.xlu0 %5449, %v5432
      %v5451 = vpop.permute.xlu0 %5450
      %v5453 = vmul.f32 %v87, %v5436
      %v5454 = vmul.f32 %v88, %v5441
      %v5455 = vmul.f32 %v89, %v5446
      %v5456 = vmul.f32 %v90, %v5451
      %v5457 = vsel %vm137, %v5453, 0.0
      %v5458 = vsel %vm137, %v5454, 0.0
      %v5459 = vadd.f32 %v5457, %v5458
      %v5460 = vsel %vm137, %v5455, 0.0
      %v5461 = vadd.f32 %v5459, %v5460
      %v5462 = vsel %vm137, %v5456, 0.0
      %v5463 = vadd.f32 %v5461, %v5462
      %v5464 = vrot.slane %v5463, 4
      %v5465 = vadd.f32 %v5463, %v5464
      %v5466 = vrot.slane %v5465, 2
      %v5467 = vadd.f32 %v5465, %v5466
      %v5468 = vrot.slane %v5467, 1
      %v5469 = vadd.f32 %v5467, %v5468
      %v5470 = vadd.f32 %v5469, %v91
      %v5471 = vxor.u32 %v5470, 2147483648
      %v5472 = vmul.f32 %v5471, 1.442695
      %v5473 = vpow.pop %v5472
      %v5474 = vadd.f32 %v5473, 1.0
      %v5475 = vrcp.pop %v5474
      %v5476 = vmul.f32 1.0, %v5475
      %v5477 = vmul.f32 %v5470, %v5476
      %v5478 = vmul.f32 %v92, %v5477
      %v5479 = vsel %vm228, %v5478, 0.0
      %5480 = vadd.xlane.f32.xlu0 %v5479
      %v5481 = vpop.xlane.xlu0 %5480
      %v5482 = vadd.f32 %v5481, %v93
      %v5483 = vmul.f32 %v233, %v5482
      %v5484 = vadd.f32 %v5366, %v5483
      %5486 = vset.pattern.permute.xlu0 0
      %5487 = vperm.xlu0 %5486, %v5484
      %v5488 = vpop.permute.xlu0 %5487
      %v5490 = vmul.f32 %v5488, %v77
      %v5491 = vadd.f32 %v5490, %v78
      %v5492 = vxor.u32 %v5491, 2147483648
      %v5493 = vmul.f32 %v5492, 1.442695
      %v5494 = vpow.pop %v5493
      %v5495 = vadd.f32 %v5494, 1.0
      %v5496 = vrcp.pop %v5495
      %v5497 = vmul.f32 1.0, %v5496
      %v5498 = vmul.f32 %v5491, %v5497
      %v5499 = vlaneseq
      %v5500 = vshrl.u32 %v5499, 7
      %v5501 = vsub.s32 0, %v5500
      %v5502 = vrot.slane %v5498, %v5501
      %v5503 = vmul.f32 %v79, %v5502
      %v5504 = vmul.f32 %v80, %v5502
      %v5505 = vmul.f32 %v81, %v5502
      %v5506 = vmul.f32 %v82, %v5502
      %v5507 = vsel %vm137, %v5503, 0.0
      %5508 = vadd.xlane.f32.xlu0 %v5507
      %v5509 = vpop.xlane.xlu0 %5508
      %v5510 = vsel %vm137, %v5504, 0.0
      %5511 = vadd.xlane.f32.xlu0 %v5510
      %v5512 = vpop.xlane.xlu0 %5511
      %v5513 = vsel %vm137, %v5505, 0.0
      %5514 = vadd.xlane.f32.xlu0 %v5513
      %v5515 = vpop.xlane.xlu0 %5514
      %v5516 = vsel %vm137, %v5506, 0.0
      %5517 = vadd.xlane.f32.xlu0 %v5516
      %v5518 = vpop.xlane.xlu0 %5517
      %v5519 = vadd.f32 %v5509, %v83
      %v5520 = vadd.f32 %v5512, %v84
      %v5521 = vadd.f32 %v5515, %v85
      %v5522 = vadd.f32 %v5518, %v86
      %v5523 = vxor.u32 %v5519, 2147483648
      %v5524 = vxor.u32 %v5520, 2147483648
      %v5525 = vxor.u32 %v5521, 2147483648
      %v5526 = vxor.u32 %v5522, 2147483648
      %v5527 = vmul.f32 %v5523, 1.442695
      %v5528 = vpow.pop %v5527
      %v5529 = vmul.f32 %v5524, 1.442695
      %v5530 = vpow.pop %v5529
      %v5531 = vmul.f32 %v5525, 1.442695
      %v5532 = vpow.pop %v5531
      %v5533 = vmul.f32 %v5526, 1.442695
      %v5534 = vpow.pop %v5533
      %v5535 = vadd.f32 %v5528, 1.0
      %v5536 = vadd.f32 %v5530, 1.0
      %v5537 = vadd.f32 %v5532, 1.0
      %v5538 = vadd.f32 %v5534, 1.0
      %v5539 = vrcp.pop %v5535
      %v5540 = vmul.f32 1.0, %v5539
      %v5541 = vrcp.pop %v5536
      %v5542 = vmul.f32 1.0, %v5541
      %v5543 = vrcp.pop %v5537
      %v5544 = vmul.f32 1.0, %v5543
      %v5545 = vrcp.pop %v5538
      %v5546 = vmul.f32 1.0, %v5545
      %v5547 = vmul.f32 %v5519, %v5540
      %v5548 = vmul.f32 %v5520, %v5542
      %v5549 = vmul.f32 %v5521, %v5544
      %v5550 = vmul.f32 %v5522, %v5546
      %5552 = vset.pattern.permute.xlu0 0
      %5553 = vperm.xlu0 %5552, %v5547
      %v5554 = vpop.permute.xlu0 %5553
      %5557 = vset.pattern.permute.xlu0 0
      %5558 = vperm.xlu0 %5557, %v5548
      %v5559 = vpop.permute.xlu0 %5558
      %5562 = vset.pattern.permute.xlu0 0
      %5563 = vperm.xlu0 %5562, %v5549
      %v5564 = vpop.permute.xlu0 %5563
      %5567 = vset.pattern.permute.xlu0 0
      %5568 = vperm.xlu0 %5567, %v5550
      %v5569 = vpop.permute.xlu0 %5568
      %v5571 = vmul.f32 %v87, %v5554
      %v5572 = vmul.f32 %v88, %v5559
      %v5573 = vmul.f32 %v89, %v5564
      %v5574 = vmul.f32 %v90, %v5569
      %v5575 = vsel %vm137, %v5571, 0.0
      %v5576 = vsel %vm137, %v5572, 0.0
      %v5577 = vadd.f32 %v5575, %v5576
      %v5578 = vsel %vm137, %v5573, 0.0
      %v5579 = vadd.f32 %v5577, %v5578
      %v5580 = vsel %vm137, %v5574, 0.0
      %v5581 = vadd.f32 %v5579, %v5580
      %v5582 = vrot.slane %v5581, 4
      %v5583 = vadd.f32 %v5581, %v5582
      %v5584 = vrot.slane %v5583, 2
      %v5585 = vadd.f32 %v5583, %v5584
      %v5586 = vrot.slane %v5585, 1
      %v5587 = vadd.f32 %v5585, %v5586
      %v5588 = vadd.f32 %v5587, %v91
      %v5589 = vxor.u32 %v5588, 2147483648
      %v5590 = vmul.f32 %v5589, 1.442695
      %v5591 = vpow.pop %v5590
      %v5592 = vadd.f32 %v5591, 1.0
      %v5593 = vrcp.pop %v5592
      %v5594 = vmul.f32 1.0, %v5593
      %v5595 = vmul.f32 %v5588, %v5594
      %v5596 = vmul.f32 %v92, %v5595
      %v5597 = vsel %vm228, %v5596, 0.0
      %5598 = vadd.xlane.f32.xlu0 %v5597
      %v5599 = vpop.xlane.xlu0 %5598
      %v5600 = vadd.f32 %v5599, %v93
      %v5601 = vmul.f32 %v233, %v5600
      %v5602 = vadd.f32 %v5366, %v5601
      %5604 = vset.pattern.permute.xlu0 0
      %5605 = vperm.xlu0 %5604, %v5602
      %v5606 = vpop.permute.xlu0 %5605
      %v5608 = vmul.f32 %v5606, %v77
      %v5609 = vadd.f32 %v5608, %v78
      %v5610 = vxor.u32 %v5609, 2147483648
      %v5611 = vmul.f32 %v5610, 1.442695
      %v5612 = vpow.pop %v5611
      %v5613 = vadd.f32 %v5612, 1.0
      %v5614 = vrcp.pop %v5613
      %v5615 = vmul.f32 1.0, %v5614
      %v5616 = vmul.f32 %v5609, %v5615
      %v5617 = vlaneseq
      %v5618 = vshrl.u32 %v5617, 7
      %v5619 = vsub.s32 0, %v5618
      %v5620 = vrot.slane %v5616, %v5619
      %v5621 = vmul.f32 %v79, %v5620
      %v5622 = vmul.f32 %v80, %v5620
      %v5623 = vmul.f32 %v81, %v5620
      %v5624 = vmul.f32 %v82, %v5620
      %v5625 = vsel %vm137, %v5621, 0.0
      %5626 = vadd.xlane.f32.xlu0 %v5625
      %v5627 = vpop.xlane.xlu0 %5626
      %v5628 = vsel %vm137, %v5622, 0.0
      %5629 = vadd.xlane.f32.xlu0 %v5628
      %v5630 = vpop.xlane.xlu0 %5629
      %v5631 = vsel %vm137, %v5623, 0.0
      %5632 = vadd.xlane.f32.xlu0 %v5631
      %v5633 = vpop.xlane.xlu0 %5632
      %v5634 = vsel %vm137, %v5624, 0.0
      %5635 = vadd.xlane.f32.xlu0 %v5634
      %v5636 = vpop.xlane.xlu0 %5635
      %v5637 = vadd.f32 %v5627, %v83
      %v5638 = vadd.f32 %v5630, %v84
      %v5639 = vadd.f32 %v5633, %v85
      %v5640 = vadd.f32 %v5636, %v86
      %v5641 = vxor.u32 %v5637, 2147483648
      %v5642 = vxor.u32 %v5638, 2147483648
      %v5643 = vxor.u32 %v5639, 2147483648
      %v5644 = vxor.u32 %v5640, 2147483648
      %v5645 = vmul.f32 %v5641, 1.442695
      %v5646 = vpow.pop %v5645
      %v5647 = vmul.f32 %v5642, 1.442695
      %v5648 = vpow.pop %v5647
      %v5649 = vmul.f32 %v5643, 1.442695
      %v5650 = vpow.pop %v5649
      %v5651 = vmul.f32 %v5644, 1.442695
      %v5652 = vpow.pop %v5651
      %v5653 = vadd.f32 %v5646, 1.0
      %v5654 = vadd.f32 %v5648, 1.0
      %v5655 = vadd.f32 %v5650, 1.0
      %v5656 = vadd.f32 %v5652, 1.0
      %v5657 = vrcp.pop %v5653
      %v5658 = vmul.f32 1.0, %v5657
      %v5659 = vrcp.pop %v5654
      %v5660 = vmul.f32 1.0, %v5659
      %v5661 = vrcp.pop %v5655
      %v5662 = vmul.f32 1.0, %v5661
      %v5663 = vrcp.pop %v5656
      %v5664 = vmul.f32 1.0, %v5663
      %v5665 = vmul.f32 %v5637, %v5658
      %v5666 = vmul.f32 %v5638, %v5660
      %v5667 = vmul.f32 %v5639, %v5662
      %v5668 = vmul.f32 %v5640, %v5664
      %5670 = vset.pattern.permute.xlu0 0
      %5671 = vperm.xlu0 %5670, %v5665
      %v5672 = vpop.permute.xlu0 %5671
      %5675 = vset.pattern.permute.xlu0 0
      %5676 = vperm.xlu0 %5675, %v5666
      %v5677 = vpop.permute.xlu0 %5676
      %5680 = vset.pattern.permute.xlu0 0
      %5681 = vperm.xlu0 %5680, %v5667
      %v5682 = vpop.permute.xlu0 %5681
      %5685 = vset.pattern.permute.xlu0 0
      %5686 = vperm.xlu0 %5685, %v5668
      %v5687 = vpop.permute.xlu0 %5686
      %v5689 = vmul.f32 %v87, %v5672
      %v5690 = vmul.f32 %v88, %v5677
      %v5691 = vmul.f32 %v89, %v5682
      %v5692 = vmul.f32 %v90, %v5687
      %v5693 = vsel %vm137, %v5689, 0.0
      %v5694 = vsel %vm137, %v5690, 0.0
      %v5695 = vadd.f32 %v5693, %v5694
      %v5696 = vsel %vm137, %v5691, 0.0
      %v5697 = vadd.f32 %v5695, %v5696
      %v5698 = vsel %vm137, %v5692, 0.0
      %v5699 = vadd.f32 %v5697, %v5698
      %v5700 = vrot.slane %v5699, 4
      %v5701 = vadd.f32 %v5699, %v5700
      %v5702 = vrot.slane %v5701, 2
      %v5703 = vadd.f32 %v5701, %v5702
      %v5704 = vrot.slane %v5703, 1
      %v5705 = vadd.f32 %v5703, %v5704
      %v5706 = vadd.f32 %v5705, %v91
      %v5707 = vxor.u32 %v5706, 2147483648
      %v5708 = vmul.f32 %v5707, 1.442695
      %v5709 = vpow.pop %v5708
      %v5710 = vadd.f32 %v5709, 1.0
      %v5711 = vrcp.pop %v5710
      %v5712 = vmul.f32 1.0, %v5711
      %v5713 = vmul.f32 %v5706, %v5712
      %v5714 = vmul.f32 %v92, %v5713
      %v5715 = vsel %vm228, %v5714, 0.0
      %5716 = vadd.xlane.f32.xlu0 %v5715
      %v5717 = vpop.xlane.xlu0 %5716
      %v5718 = vadd.f32 %v5717, %v93
      %v5719 = vmul.f32 %v470, %v5718
      %v5720 = vadd.f32 %v5366, %v5719
      %5722 = vset.pattern.permute.xlu0 0
      %5723 = vperm.xlu0 %5722, %v5720
      %v5724 = vpop.permute.xlu0 %5723
      %v5726 = vmul.f32 %v5724, %v77
      %v5727 = vadd.f32 %v5726, %v78
      %v5728 = vxor.u32 %v5727, 2147483648
      %v5729 = vmul.f32 %v5728, 1.442695
      %v5730 = vpow.pop %v5729
      %v5731 = vadd.f32 %v5730, 1.0
      %v5732 = vrcp.pop %v5731
      %v5733 = vmul.f32 1.0, %v5732
      %v5734 = vmul.f32 %v5727, %v5733
      %v5735 = vlaneseq
      %v5736 = vshrl.u32 %v5735, 7
      %v5737 = vsub.s32 0, %v5736
      %v5738 = vrot.slane %v5734, %v5737
      %v5739 = vmul.f32 %v79, %v5738
      %v5740 = vmul.f32 %v80, %v5738
      %v5741 = vmul.f32 %v81, %v5738
      %v5742 = vmul.f32 %v82, %v5738
      %v5743 = vsel %vm137, %v5739, 0.0
      %5744 = vadd.xlane.f32.xlu0 %v5743
      %v5745 = vpop.xlane.xlu0 %5744
      %v5746 = vsel %vm137, %v5740, 0.0
      %5747 = vadd.xlane.f32.xlu0 %v5746
      %v5748 = vpop.xlane.xlu0 %5747
      %v5749 = vsel %vm137, %v5741, 0.0
      %5750 = vadd.xlane.f32.xlu0 %v5749
      %v5751 = vpop.xlane.xlu0 %5750
      %v5752 = vsel %vm137, %v5742, 0.0
      %5753 = vadd.xlane.f32.xlu0 %v5752
      %v5754 = vpop.xlane.xlu0 %5753
      %v5755 = vadd.f32 %v5745, %v83
      %v5756 = vadd.f32 %v5748, %v84
      %v5757 = vadd.f32 %v5751, %v85
      %v5758 = vadd.f32 %v5754, %v86
      %v5759 = vxor.u32 %v5755, 2147483648
      %v5760 = vxor.u32 %v5756, 2147483648
      %v5761 = vxor.u32 %v5757, 2147483648
      %v5762 = vxor.u32 %v5758, 2147483648
      %v5763 = vmul.f32 %v5759, 1.442695
      %v5764 = vpow.pop %v5763
      %v5765 = vmul.f32 %v5760, 1.442695
      %v5766 = vpow.pop %v5765
      %v5767 = vmul.f32 %v5761, 1.442695
      %v5768 = vpow.pop %v5767
      %v5769 = vmul.f32 %v5762, 1.442695
      %v5770 = vpow.pop %v5769
      %v5771 = vadd.f32 %v5764, 1.0
      %v5772 = vadd.f32 %v5766, 1.0
      %v5773 = vadd.f32 %v5768, 1.0
      %v5774 = vadd.f32 %v5770, 1.0
      %v5775 = vrcp.pop %v5771
      %v5776 = vmul.f32 1.0, %v5775
      %v5777 = vrcp.pop %v5772
      %v5778 = vmul.f32 1.0, %v5777
      %v5779 = vrcp.pop %v5773
      %v5780 = vmul.f32 1.0, %v5779
      %v5781 = vrcp.pop %v5774
      %v5782 = vmul.f32 1.0, %v5781
      %v5783 = vmul.f32 %v5755, %v5776
      %v5784 = vmul.f32 %v5756, %v5778
      %v5785 = vmul.f32 %v5757, %v5780
      %v5786 = vmul.f32 %v5758, %v5782
      %5788 = vset.pattern.permute.xlu0 0
      %5789 = vperm.xlu0 %5788, %v5783
      %v5790 = vpop.permute.xlu0 %5789
      %5793 = vset.pattern.permute.xlu0 0
      %5794 = vperm.xlu0 %5793, %v5784
      %v5795 = vpop.permute.xlu0 %5794
      %5798 = vset.pattern.permute.xlu0 0
      %5799 = vperm.xlu0 %5798, %v5785
      %v5800 = vpop.permute.xlu0 %5799
      %5803 = vset.pattern.permute.xlu0 0
      %5804 = vperm.xlu0 %5803, %v5786
      %v5805 = vpop.permute.xlu0 %5804
      %v5807 = vmul.f32 %v87, %v5790
      %v5808 = vmul.f32 %v88, %v5795
      %v5809 = vmul.f32 %v89, %v5800
      %v5810 = vmul.f32 %v90, %v5805
      %v5811 = vsel %vm137, %v5807, 0.0
      %v5812 = vsel %vm137, %v5808, 0.0
      %v5813 = vadd.f32 %v5811, %v5812
      %v5814 = vsel %vm137, %v5809, 0.0
      %v5815 = vadd.f32 %v5813, %v5814
      %v5816 = vsel %vm137, %v5810, 0.0
      %v5817 = vadd.f32 %v5815, %v5816
      %v5818 = vrot.slane %v5817, 4
      %v5819 = vadd.f32 %v5817, %v5818
      %v5820 = vrot.slane %v5819, 2
      %v5821 = vadd.f32 %v5819, %v5820
      %v5822 = vrot.slane %v5821, 1
      %v5823 = vadd.f32 %v5821, %v5822
      %v5824 = vadd.f32 %v5823, %v91
      %v5825 = vxor.u32 %v5824, 2147483648
      %v5826 = vmul.f32 %v5825, 1.442695
      %v5827 = vpow.pop %v5826
      %v5828 = vadd.f32 %v5827, 1.0
      %v5829 = vrcp.pop %v5828
      %v5830 = vmul.f32 1.0, %v5829
      %v5831 = vmul.f32 %v5824, %v5830
      %v5832 = vmul.f32 %v92, %v5831
      %v5833 = vsel %vm228, %v5832, 0.0
      %5834 = vadd.xlane.f32.xlu0 %v5833
      %v5835 = vpop.xlane.xlu0 %5834
      %v5836 = vadd.f32 %v5835, %v93
      %v5837 = vmul.f32 %v5600, 2.0
      %v5838 = vadd.f32 %v5482, %v5837
      %v5839 = vmul.f32 %v5718, 2.0
      %v5840 = vadd.f32 %v5838, %v5839
      %v5841 = vadd.f32 %v5840, %v5836
      %v5842 = vmul.f32 %v594, %v5841
      %v5843 = vadd.f32 %v5366, %v5842
      %5845 = vset.pattern.permute.xlu0 0
      %5846 = vperm.xlu0 %5845, %v5843
      %v5847 = vpop.permute.xlu0 %5846
      %v5849 = vmul.f32 %v5847, %v77
      %v5850 = vadd.f32 %v5849, %v78
      %v5851 = vxor.u32 %v5850, 2147483648
      %v5852 = vmul.f32 %v5851, 1.442695
      %v5853 = vpow.pop %v5852
      %v5854 = vadd.f32 %v5853, 1.0
      %v5855 = vrcp.pop %v5854
      %v5856 = vmul.f32 1.0, %v5855
      %v5857 = vmul.f32 %v5850, %v5856
      %v5858 = vlaneseq
      %v5859 = vshrl.u32 %v5858, 7
      %v5860 = vsub.s32 0, %v5859
      %v5861 = vrot.slane %v5857, %v5860
      %v5862 = vmul.f32 %v79, %v5861
      %v5863 = vmul.f32 %v80, %v5861
      %v5864 = vmul.f32 %v81, %v5861
      %v5865 = vmul.f32 %v82, %v5861
      %v5866 = vsel %vm137, %v5862, 0.0
      %5867 = vadd.xlane.f32.xlu0 %v5866
      %v5868 = vpop.xlane.xlu0 %5867
      %v5869 = vsel %vm137, %v5863, 0.0
      %5870 = vadd.xlane.f32.xlu0 %v5869
      %v5871 = vpop.xlane.xlu0 %5870
      %v5872 = vsel %vm137, %v5864, 0.0
      %5873 = vadd.xlane.f32.xlu0 %v5872
      %v5874 = vpop.xlane.xlu0 %5873
      %v5875 = vsel %vm137, %v5865, 0.0
      %5876 = vadd.xlane.f32.xlu0 %v5875
      %v5877 = vpop.xlane.xlu0 %5876
      %v5878 = vadd.f32 %v5868, %v83
      %v5879 = vadd.f32 %v5871, %v84
      %v5880 = vadd.f32 %v5874, %v85
      %v5881 = vadd.f32 %v5877, %v86
      %v5882 = vxor.u32 %v5878, 2147483648
      %v5883 = vxor.u32 %v5879, 2147483648
      %v5884 = vxor.u32 %v5880, 2147483648
      %v5885 = vxor.u32 %v5881, 2147483648
      %v5886 = vmul.f32 %v5882, 1.442695
      %v5887 = vpow.pop %v5886
      %v5888 = vmul.f32 %v5883, 1.442695
      %v5889 = vpow.pop %v5888
      %v5890 = vmul.f32 %v5884, 1.442695
      %v5891 = vpow.pop %v5890
      %v5892 = vmul.f32 %v5885, 1.442695
      %v5893 = vpow.pop %v5892
      %v5894 = vadd.f32 %v5887, 1.0
      %v5895 = vadd.f32 %v5889, 1.0
      %v5896 = vadd.f32 %v5891, 1.0
      %v5897 = vadd.f32 %v5893, 1.0
      %v5898 = vrcp.pop %v5894
      %v5899 = vmul.f32 1.0, %v5898
      %v5900 = vrcp.pop %v5895
      %v5901 = vmul.f32 1.0, %v5900
      %v5902 = vrcp.pop %v5896
      %v5903 = vmul.f32 1.0, %v5902
      %v5904 = vrcp.pop %v5897
      %v5905 = vmul.f32 1.0, %v5904
      %v5906 = vmul.f32 %v5878, %v5899
      %v5907 = vmul.f32 %v5879, %v5901
      %v5908 = vmul.f32 %v5880, %v5903
      %v5909 = vmul.f32 %v5881, %v5905
      %5911 = vset.pattern.permute.xlu0 0
      %5912 = vperm.xlu0 %5911, %v5906
      %v5913 = vpop.permute.xlu0 %5912
      %5916 = vset.pattern.permute.xlu0 0
      %5917 = vperm.xlu0 %5916, %v5907
      %v5918 = vpop.permute.xlu0 %5917
      %5921 = vset.pattern.permute.xlu0 0
      %5922 = vperm.xlu0 %5921, %v5908
      %v5923 = vpop.permute.xlu0 %5922
      %5926 = vset.pattern.permute.xlu0 0
      %5927 = vperm.xlu0 %5926, %v5909
      %v5928 = vpop.permute.xlu0 %5927
      %v5930 = vmul.f32 %v87, %v5913
      %v5931 = vmul.f32 %v88, %v5918
      %v5932 = vmul.f32 %v89, %v5923
      %v5933 = vmul.f32 %v90, %v5928
      %v5934 = vsel %vm137, %v5930, 0.0
      %v5935 = vsel %vm137, %v5931, 0.0
      %v5936 = vadd.f32 %v5934, %v5935
      %v5937 = vsel %vm137, %v5932, 0.0
      %v5938 = vadd.f32 %v5936, %v5937
      %v5939 = vsel %vm137, %v5933, 0.0
      %v5940 = vadd.f32 %v5938, %v5939
      %v5941 = vrot.slane %v5940, 4
      %v5942 = vadd.f32 %v5940, %v5941
      %v5943 = vrot.slane %v5942, 2
      %v5944 = vadd.f32 %v5942, %v5943
      %v5945 = vrot.slane %v5944, 1
      %v5946 = vadd.f32 %v5944, %v5945
      %v5947 = vadd.f32 %v5946, %v91
      %v5948 = vxor.u32 %v5947, 2147483648
      %v5949 = vmul.f32 %v5948, 1.442695
      %v5950 = vpow.pop %v5949
      %v5951 = vadd.f32 %v5950, 1.0
      %v5952 = vrcp.pop %v5951
      %v5953 = vmul.f32 1.0, %v5952
      %v5954 = vmul.f32 %v5947, %v5953
      %v5955 = vmul.f32 %v92, %v5954
      %v5956 = vsel %vm228, %v5955, 0.0
      %5957 = vadd.xlane.f32.xlu0 %v5956
      %v5958 = vpop.xlane.xlu0 %5957
      %v5959 = vadd.f32 %v5958, %v93
      %v5960 = vmul.f32 %v233, %v5959
      %v5961 = vadd.f32 %v5843, %v5960
      %5963 = vset.pattern.permute.xlu0 0
      %5964 = vperm.xlu0 %5963, %v5961
      %v5965 = vpop.permute.xlu0 %5964
      %v5967 = vmul.f32 %v5965, %v77
      %v5968 = vadd.f32 %v5967, %v78
      %v5969 = vxor.u32 %v5968, 2147483648
      %v5970 = vmul.f32 %v5969, 1.442695
      %v5971 = vpow.pop %v5970
      %v5972 = vadd.f32 %v5971, 1.0
      %v5973 = vrcp.pop %v5972
      %v5974 = vmul.f32 1.0, %v5973
      %v5975 = vmul.f32 %v5968, %v5974
      %v5976 = vlaneseq
      %v5977 = vshrl.u32 %v5976, 7
      %v5978 = vsub.s32 0, %v5977
      %v5979 = vrot.slane %v5975, %v5978
      %v5980 = vmul.f32 %v79, %v5979
      %v5981 = vmul.f32 %v80, %v5979
      %v5982 = vmul.f32 %v81, %v5979
      %v5983 = vmul.f32 %v82, %v5979
      %v5984 = vsel %vm137, %v5980, 0.0
      %5985 = vadd.xlane.f32.xlu0 %v5984
      %v5986 = vpop.xlane.xlu0 %5985
      %v5987 = vsel %vm137, %v5981, 0.0
      %5988 = vadd.xlane.f32.xlu0 %v5987
      %v5989 = vpop.xlane.xlu0 %5988
      %v5990 = vsel %vm137, %v5982, 0.0
      %5991 = vadd.xlane.f32.xlu0 %v5990
      %v5992 = vpop.xlane.xlu0 %5991
      %v5993 = vsel %vm137, %v5983, 0.0
      %5994 = vadd.xlane.f32.xlu0 %v5993
      %v5995 = vpop.xlane.xlu0 %5994
      %v5996 = vadd.f32 %v5986, %v83
      %v5997 = vadd.f32 %v5989, %v84
      %v5998 = vadd.f32 %v5992, %v85
      %v5999 = vadd.f32 %v5995, %v86
      %v6000 = vxor.u32 %v5996, 2147483648
      %v6001 = vxor.u32 %v5997, 2147483648
      %v6002 = vxor.u32 %v5998, 2147483648
      %v6003 = vxor.u32 %v5999, 2147483648
      %v6004 = vmul.f32 %v6000, 1.442695
      %v6005 = vpow.pop %v6004
      %v6006 = vmul.f32 %v6001, 1.442695
      %v6007 = vpow.pop %v6006
      %v6008 = vmul.f32 %v6002, 1.442695
      %v6009 = vpow.pop %v6008
      %v6010 = vmul.f32 %v6003, 1.442695
      %v6011 = vpow.pop %v6010
      %v6012 = vadd.f32 %v6005, 1.0
      %v6013 = vadd.f32 %v6007, 1.0
      %v6014 = vadd.f32 %v6009, 1.0
      %v6015 = vadd.f32 %v6011, 1.0
      %v6016 = vrcp.pop %v6012
      %v6017 = vmul.f32 1.0, %v6016
      %v6018 = vrcp.pop %v6013
      %v6019 = vmul.f32 1.0, %v6018
      %v6020 = vrcp.pop %v6014
      %v6021 = vmul.f32 1.0, %v6020
      %v6022 = vrcp.pop %v6015
      %v6023 = vmul.f32 1.0, %v6022
      %v6024 = vmul.f32 %v5996, %v6017
      %v6025 = vmul.f32 %v5997, %v6019
      %v6026 = vmul.f32 %v5998, %v6021
      %v6027 = vmul.f32 %v5999, %v6023
      %6029 = vset.pattern.permute.xlu0 0
      %6030 = vperm.xlu0 %6029, %v6024
      %v6031 = vpop.permute.xlu0 %6030
      %6034 = vset.pattern.permute.xlu0 0
      %6035 = vperm.xlu0 %6034, %v6025
      %v6036 = vpop.permute.xlu0 %6035
      %6039 = vset.pattern.permute.xlu0 0
      %6040 = vperm.xlu0 %6039, %v6026
      %v6041 = vpop.permute.xlu0 %6040
      %6044 = vset.pattern.permute.xlu0 0
      %6045 = vperm.xlu0 %6044, %v6027
      %v6046 = vpop.permute.xlu0 %6045
      %v6048 = vmul.f32 %v87, %v6031
      %v6049 = vmul.f32 %v88, %v6036
      %v6050 = vmul.f32 %v89, %v6041
      %v6051 = vmul.f32 %v90, %v6046
      %v6052 = vsel %vm137, %v6048, 0.0
      %v6053 = vsel %vm137, %v6049, 0.0
      %v6054 = vadd.f32 %v6052, %v6053
      %v6055 = vsel %vm137, %v6050, 0.0
      %v6056 = vadd.f32 %v6054, %v6055
      %v6057 = vsel %vm137, %v6051, 0.0
      %v6058 = vadd.f32 %v6056, %v6057
      %v6059 = vrot.slane %v6058, 4
      %v6060 = vadd.f32 %v6058, %v6059
      %v6061 = vrot.slane %v6060, 2
      %v6062 = vadd.f32 %v6060, %v6061
      %v6063 = vrot.slane %v6062, 1
      %v6064 = vadd.f32 %v6062, %v6063
      %v6065 = vadd.f32 %v6064, %v91
      %v6066 = vxor.u32 %v6065, 2147483648
      %v6067 = vmul.f32 %v6066, 1.442695
      %v6068 = vpow.pop %v6067
      %v6069 = vadd.f32 %v6068, 1.0
      %v6070 = vrcp.pop %v6069
      %v6071 = vmul.f32 1.0, %v6070
      %v6072 = vmul.f32 %v6065, %v6071
      %v6073 = vmul.f32 %v92, %v6072
      %v6074 = vsel %vm228, %v6073, 0.0
      %6075 = vadd.xlane.f32.xlu0 %v6074
      %v6076 = vpop.xlane.xlu0 %6075
      %v6077 = vadd.f32 %v6076, %v93
      %v6078 = vmul.f32 %v233, %v6077
      %v6079 = vadd.f32 %v5843, %v6078
      %6081 = vset.pattern.permute.xlu0 0
      %6082 = vperm.xlu0 %6081, %v6079
      %v6083 = vpop.permute.xlu0 %6082
      %v6085 = vmul.f32 %v6083, %v77
      %v6086 = vadd.f32 %v6085, %v78
      %v6087 = vxor.u32 %v6086, 2147483648
      %v6088 = vmul.f32 %v6087, 1.442695
      %v6089 = vpow.pop %v6088
      %v6090 = vadd.f32 %v6089, 1.0
      %v6091 = vrcp.pop %v6090
      %v6092 = vmul.f32 1.0, %v6091
      %v6093 = vmul.f32 %v6086, %v6092
      %v6094 = vlaneseq
      %v6095 = vshrl.u32 %v6094, 7
      %v6096 = vsub.s32 0, %v6095
      %v6097 = vrot.slane %v6093, %v6096
      %v6098 = vmul.f32 %v79, %v6097
      %v6099 = vmul.f32 %v80, %v6097
      %v6100 = vmul.f32 %v81, %v6097
      %v6101 = vmul.f32 %v82, %v6097
      %v6102 = vsel %vm137, %v6098, 0.0
      %6103 = vadd.xlane.f32.xlu0 %v6102
      %v6104 = vpop.xlane.xlu0 %6103
      %v6105 = vsel %vm137, %v6099, 0.0
      %6106 = vadd.xlane.f32.xlu0 %v6105
      %v6107 = vpop.xlane.xlu0 %6106
      %v6108 = vsel %vm137, %v6100, 0.0
      %6109 = vadd.xlane.f32.xlu0 %v6108
      %v6110 = vpop.xlane.xlu0 %6109
      %v6111 = vsel %vm137, %v6101, 0.0
      %6112 = vadd.xlane.f32.xlu0 %v6111
      %v6113 = vpop.xlane.xlu0 %6112
      %v6114 = vadd.f32 %v6104, %v83
      %v6115 = vadd.f32 %v6107, %v84
      %v6116 = vadd.f32 %v6110, %v85
      %v6117 = vadd.f32 %v6113, %v86
      %v6118 = vxor.u32 %v6114, 2147483648
      %v6119 = vxor.u32 %v6115, 2147483648
      %v6120 = vxor.u32 %v6116, 2147483648
      %v6121 = vxor.u32 %v6117, 2147483648
      %v6122 = vmul.f32 %v6118, 1.442695
      %v6123 = vpow.pop %v6122
      %v6124 = vmul.f32 %v6119, 1.442695
      %v6125 = vpow.pop %v6124
      %v6126 = vmul.f32 %v6120, 1.442695
      %v6127 = vpow.pop %v6126
      %v6128 = vmul.f32 %v6121, 1.442695
      %v6129 = vpow.pop %v6128
      %v6130 = vadd.f32 %v6123, 1.0
      %v6131 = vadd.f32 %v6125, 1.0
      %v6132 = vadd.f32 %v6127, 1.0
      %v6133 = vadd.f32 %v6129, 1.0
      %v6134 = vrcp.pop %v6130
      %v6135 = vmul.f32 1.0, %v6134
      %v6136 = vrcp.pop %v6131
      %v6137 = vmul.f32 1.0, %v6136
      %v6138 = vrcp.pop %v6132
      %v6139 = vmul.f32 1.0, %v6138
      %v6140 = vrcp.pop %v6133
      %v6141 = vmul.f32 1.0, %v6140
      %v6142 = vmul.f32 %v6114, %v6135
      %v6143 = vmul.f32 %v6115, %v6137
      %v6144 = vmul.f32 %v6116, %v6139
      %v6145 = vmul.f32 %v6117, %v6141
      %6147 = vset.pattern.permute.xlu0 0
      %6148 = vperm.xlu0 %6147, %v6142
      %v6149 = vpop.permute.xlu0 %6148
      %6152 = vset.pattern.permute.xlu0 0
      %6153 = vperm.xlu0 %6152, %v6143
      %v6154 = vpop.permute.xlu0 %6153
      %6157 = vset.pattern.permute.xlu0 0
      %6158 = vperm.xlu0 %6157, %v6144
      %v6159 = vpop.permute.xlu0 %6158
      %6162 = vset.pattern.permute.xlu0 0
      %6163 = vperm.xlu0 %6162, %v6145
      %v6164 = vpop.permute.xlu0 %6163
      %v6166 = vmul.f32 %v87, %v6149
      %v6167 = vmul.f32 %v88, %v6154
      %v6168 = vmul.f32 %v89, %v6159
      %v6169 = vmul.f32 %v90, %v6164
      %v6170 = vsel %vm137, %v6166, 0.0
      %v6171 = vsel %vm137, %v6167, 0.0
      %v6172 = vadd.f32 %v6170, %v6171
      %v6173 = vsel %vm137, %v6168, 0.0
      %v6174 = vadd.f32 %v6172, %v6173
      %v6175 = vsel %vm137, %v6169, 0.0
      %v6176 = vadd.f32 %v6174, %v6175
      %v6177 = vrot.slane %v6176, 4
      %v6178 = vadd.f32 %v6176, %v6177
      %v6179 = vrot.slane %v6178, 2
      %v6180 = vadd.f32 %v6178, %v6179
      %v6181 = vrot.slane %v6180, 1
      %v6182 = vadd.f32 %v6180, %v6181
      %v6183 = vadd.f32 %v6182, %v91
      %v6184 = vxor.u32 %v6183, 2147483648
      %v6185 = vmul.f32 %v6184, 1.442695
      %v6186 = vpow.pop %v6185
      %v6187 = vadd.f32 %v6186, 1.0
      %v6188 = vrcp.pop %v6187
      %v6189 = vmul.f32 1.0, %v6188
      %v6190 = vmul.f32 %v6183, %v6189
      %v6191 = vmul.f32 %v92, %v6190
      %v6192 = vsel %vm228, %v6191, 0.0
      %6193 = vadd.xlane.f32.xlu0 %v6192
      %v6194 = vpop.xlane.xlu0 %6193
      %v6195 = vadd.f32 %v6194, %v93
      %v6196 = vmul.f32 %v470, %v6195
      %v6197 = vadd.f32 %v5843, %v6196
      %6199 = vset.pattern.permute.xlu0 0
      %6200 = vperm.xlu0 %6199, %v6197
      %v6201 = vpop.permute.xlu0 %6200
      %v6203 = vmul.f32 %v6201, %v77
      %v6204 = vadd.f32 %v6203, %v78
      %v6205 = vxor.u32 %v6204, 2147483648
      %v6206 = vmul.f32 %v6205, 1.442695
      %v6207 = vpow.pop %v6206
      %v6208 = vadd.f32 %v6207, 1.0
      %v6209 = vrcp.pop %v6208
      %v6210 = vmul.f32 1.0, %v6209
      %v6211 = vmul.f32 %v6204, %v6210
      %v6212 = vlaneseq
      %v6213 = vshrl.u32 %v6212, 7
      %v6214 = vsub.s32 0, %v6213
      %v6215 = vrot.slane %v6211, %v6214
      %v6216 = vmul.f32 %v79, %v6215
      %v6217 = vmul.f32 %v80, %v6215
      %v6218 = vmul.f32 %v81, %v6215
      %v6219 = vmul.f32 %v82, %v6215
      %v6220 = vsel %vm137, %v6216, 0.0
      %6221 = vadd.xlane.f32.xlu0 %v6220
      %v6222 = vpop.xlane.xlu0 %6221
      %v6223 = vsel %vm137, %v6217, 0.0
      %6224 = vadd.xlane.f32.xlu0 %v6223
      %v6225 = vpop.xlane.xlu0 %6224
      %v6226 = vsel %vm137, %v6218, 0.0
      %6227 = vadd.xlane.f32.xlu0 %v6226
      %v6228 = vpop.xlane.xlu0 %6227
      %v6229 = vsel %vm137, %v6219, 0.0
      %6230 = vadd.xlane.f32.xlu0 %v6229
      %v6231 = vpop.xlane.xlu0 %6230
      %v6232 = vadd.f32 %v6222, %v83
      %v6233 = vadd.f32 %v6225, %v84
      %v6234 = vadd.f32 %v6228, %v85
      %v6235 = vadd.f32 %v6231, %v86
      %v6236 = vxor.u32 %v6232, 2147483648
      %v6237 = vxor.u32 %v6233, 2147483648
      %v6238 = vxor.u32 %v6234, 2147483648
      %v6239 = vxor.u32 %v6235, 2147483648
      %v6240 = vmul.f32 %v6236, 1.442695
      %v6241 = vpow.pop %v6240
      %v6242 = vmul.f32 %v6237, 1.442695
      %v6243 = vpow.pop %v6242
      %v6244 = vmul.f32 %v6238, 1.442695
      %v6245 = vpow.pop %v6244
      %v6246 = vmul.f32 %v6239, 1.442695
      %v6247 = vpow.pop %v6246
      %v6248 = vadd.f32 %v6241, 1.0
      %v6249 = vadd.f32 %v6243, 1.0
      %v6250 = vadd.f32 %v6245, 1.0
      %v6251 = vadd.f32 %v6247, 1.0
      %v6252 = vrcp.pop %v6248
      %v6253 = vmul.f32 1.0, %v6252
      %v6254 = vrcp.pop %v6249
      %v6255 = vmul.f32 1.0, %v6254
      %v6256 = vrcp.pop %v6250
      %v6257 = vmul.f32 1.0, %v6256
      %v6258 = vrcp.pop %v6251
      %v6259 = vmul.f32 1.0, %v6258
      %v6260 = vmul.f32 %v6232, %v6253
      %v6261 = vmul.f32 %v6233, %v6255
      %v6262 = vmul.f32 %v6234, %v6257
      %v6263 = vmul.f32 %v6235, %v6259
      %6265 = vset.pattern.permute.xlu0 0
      %6266 = vperm.xlu0 %6265, %v6260
      %v6267 = vpop.permute.xlu0 %6266
      %6270 = vset.pattern.permute.xlu0 0
      %6271 = vperm.xlu0 %6270, %v6261
      %v6272 = vpop.permute.xlu0 %6271
      %6275 = vset.pattern.permute.xlu0 0
      %6276 = vperm.xlu0 %6275, %v6262
      %v6277 = vpop.permute.xlu0 %6276
      %6280 = vset.pattern.permute.xlu0 0
      %6281 = vperm.xlu0 %6280, %v6263
      %v6282 = vpop.permute.xlu0 %6281
      %v6284 = vmul.f32 %v87, %v6267
      %v6285 = vmul.f32 %v88, %v6272
      %v6286 = vmul.f32 %v89, %v6277
      %v6287 = vmul.f32 %v90, %v6282
      %v6288 = vsel %vm137, %v6284, 0.0
      %v6289 = vsel %vm137, %v6285, 0.0
      %v6290 = vadd.f32 %v6288, %v6289
      %v6291 = vsel %vm137, %v6286, 0.0
      %v6292 = vadd.f32 %v6290, %v6291
      %v6293 = vsel %vm137, %v6287, 0.0
      %v6294 = vadd.f32 %v6292, %v6293
      %v6295 = vrot.slane %v6294, 4
      %v6296 = vadd.f32 %v6294, %v6295
      %v6297 = vrot.slane %v6296, 2
      %v6298 = vadd.f32 %v6296, %v6297
      %v6299 = vrot.slane %v6298, 1
      %v6300 = vadd.f32 %v6298, %v6299
      %v6301 = vadd.f32 %v6300, %v91
      %v6302 = vxor.u32 %v6301, 2147483648
      %v6303 = vmul.f32 %v6302, 1.442695
      %v6304 = vpow.pop %v6303
      %v6305 = vadd.f32 %v6304, 1.0
      %v6306 = vrcp.pop %v6305
      %v6307 = vmul.f32 1.0, %v6306
      %v6308 = vmul.f32 %v6301, %v6307
      %v6309 = vmul.f32 %v92, %v6308
      %v6310 = vsel %vm228, %v6309, 0.0
      %6311 = vadd.xlane.f32.xlu0 %v6310
      %v6312 = vpop.xlane.xlu0 %6311
      %v6313 = vadd.f32 %v6312, %v93
      %v6314 = vmul.f32 %v6077, 2.0
      %v6315 = vadd.f32 %v5959, %v6314
      %v6316 = vmul.f32 %v6195, 2.0
      %v6317 = vadd.f32 %v6315, %v6316
      %v6318 = vadd.f32 %v6317, %v6313
      %v6319 = vmul.f32 %v594, %v6318
      %v6320 = vadd.f32 %v5843, %v6319
      %6322 = vset.pattern.permute.xlu0 0
      %6323 = vperm.xlu0 %6322, %v6320
      %v6324 = vpop.permute.xlu0 %6323
      %v6326 = vmul.f32 %v6324, %v77
      %v6327 = vadd.f32 %v6326, %v78
      %v6328 = vxor.u32 %v6327, 2147483648
      %v6329 = vmul.f32 %v6328, 1.442695
      %v6330 = vpow.pop %v6329
      %v6331 = vadd.f32 %v6330, 1.0
      %v6332 = vrcp.pop %v6331
      %v6333 = vmul.f32 1.0, %v6332
      %v6334 = vmul.f32 %v6327, %v6333
      %v6335 = vlaneseq
      %v6336 = vshrl.u32 %v6335, 7
      %v6337 = vsub.s32 0, %v6336
      %v6338 = vrot.slane %v6334, %v6337
      %v6339 = vmul.f32 %v79, %v6338
      %v6340 = vmul.f32 %v80, %v6338
      %v6341 = vmul.f32 %v81, %v6338
      %v6342 = vmul.f32 %v82, %v6338
      %v6343 = vsel %vm137, %v6339, 0.0
      %6344 = vadd.xlane.f32.xlu0 %v6343
      %v6345 = vpop.xlane.xlu0 %6344
      %v6346 = vsel %vm137, %v6340, 0.0
      %6347 = vadd.xlane.f32.xlu0 %v6346
      %v6348 = vpop.xlane.xlu0 %6347
      %v6349 = vsel %vm137, %v6341, 0.0
      %6350 = vadd.xlane.f32.xlu0 %v6349
      %v6351 = vpop.xlane.xlu0 %6350
      %v6352 = vsel %vm137, %v6342, 0.0
      %6353 = vadd.xlane.f32.xlu0 %v6352
      %v6354 = vpop.xlane.xlu0 %6353
      %v6355 = vadd.f32 %v6345, %v83
      %v6356 = vadd.f32 %v6348, %v84
      %v6357 = vadd.f32 %v6351, %v85
      %v6358 = vadd.f32 %v6354, %v86
      %v6359 = vxor.u32 %v6355, 2147483648
      %v6360 = vxor.u32 %v6356, 2147483648
      %v6361 = vxor.u32 %v6357, 2147483648
      %v6362 = vxor.u32 %v6358, 2147483648
      %v6363 = vmul.f32 %v6359, 1.442695
      %v6364 = vpow.pop %v6363
      %v6365 = vmul.f32 %v6360, 1.442695
      %v6366 = vpow.pop %v6365
      %v6367 = vmul.f32 %v6361, 1.442695
      %v6368 = vpow.pop %v6367
      %v6369 = vmul.f32 %v6362, 1.442695
      %v6370 = vpow.pop %v6369
      %v6371 = vadd.f32 %v6364, 1.0
      %v6372 = vadd.f32 %v6366, 1.0
      %v6373 = vadd.f32 %v6368, 1.0
      %v6374 = vadd.f32 %v6370, 1.0
      %v6375 = vrcp.pop %v6371
      %v6376 = vmul.f32 1.0, %v6375
      %v6377 = vrcp.pop %v6372
      %v6378 = vmul.f32 1.0, %v6377
      %v6379 = vrcp.pop %v6373
      %v6380 = vmul.f32 1.0, %v6379
      %v6381 = vrcp.pop %v6374
      %v6382 = vmul.f32 1.0, %v6381
      %v6383 = vmul.f32 %v6355, %v6376
      %v6384 = vmul.f32 %v6356, %v6378
      %v6385 = vmul.f32 %v6357, %v6380
      %v6386 = vmul.f32 %v6358, %v6382
      %6388 = vset.pattern.permute.xlu0 0
      %6389 = vperm.xlu0 %6388, %v6383
      %v6390 = vpop.permute.xlu0 %6389
      %6393 = vset.pattern.permute.xlu0 0
      %6394 = vperm.xlu0 %6393, %v6384
      %v6395 = vpop.permute.xlu0 %6394
      %6398 = vset.pattern.permute.xlu0 0
      %6399 = vperm.xlu0 %6398, %v6385
      %v6400 = vpop.permute.xlu0 %6399
      %6403 = vset.pattern.permute.xlu0 0
      %6404 = vperm.xlu0 %6403, %v6386
      %v6405 = vpop.permute.xlu0 %6404
      %v6407 = vmul.f32 %v87, %v6390
      %v6408 = vmul.f32 %v88, %v6395
      %v6409 = vmul.f32 %v89, %v6400
      %v6410 = vmul.f32 %v90, %v6405
      %v6411 = vsel %vm137, %v6407, 0.0
      %v6412 = vsel %vm137, %v6408, 0.0
      %v6413 = vadd.f32 %v6411, %v6412
      %v6414 = vsel %vm137, %v6409, 0.0
      %v6415 = vadd.f32 %v6413, %v6414
      %v6416 = vsel %vm137, %v6410, 0.0
      %v6417 = vadd.f32 %v6415, %v6416
      %v6418 = vrot.slane %v6417, 4
      %v6419 = vadd.f32 %v6417, %v6418
      %v6420 = vrot.slane %v6419, 2
      %v6421 = vadd.f32 %v6419, %v6420
      %v6422 = vrot.slane %v6421, 1
      %v6423 = vadd.f32 %v6421, %v6422
      %v6424 = vadd.f32 %v6423, %v91
      %v6425 = vxor.u32 %v6424, 2147483648
      %v6426 = vmul.f32 %v6425, 1.442695
      %v6427 = vpow.pop %v6426
      %v6428 = vadd.f32 %v6427, 1.0
      %v6429 = vrcp.pop %v6428
      %v6430 = vmul.f32 1.0, %v6429
      %v6431 = vmul.f32 %v6424, %v6430
      %v6432 = vmul.f32 %v92, %v6431
      %v6433 = vsel %vm228, %v6432, 0.0
      %6434 = vadd.xlane.f32.xlu0 %v6433
      %v6435 = vpop.xlane.xlu0 %6434
      %v6436 = vadd.f32 %v6435, %v93
      %v6437 = vmul.f32 %v233, %v6436
      %v6438 = vadd.f32 %v6320, %v6437
      %6440 = vset.pattern.permute.xlu0 0
      %6441 = vperm.xlu0 %6440, %v6438
      %v6442 = vpop.permute.xlu0 %6441
      %v6444 = vmul.f32 %v6442, %v77
      %v6445 = vadd.f32 %v6444, %v78
      %v6446 = vxor.u32 %v6445, 2147483648
      %v6447 = vmul.f32 %v6446, 1.442695
      %v6448 = vpow.pop %v6447
      %v6449 = vadd.f32 %v6448, 1.0
      %v6450 = vrcp.pop %v6449
      %v6451 = vmul.f32 1.0, %v6450
      %v6452 = vmul.f32 %v6445, %v6451
      %v6453 = vlaneseq
      %v6454 = vshrl.u32 %v6453, 7
      %v6455 = vsub.s32 0, %v6454
      %v6456 = vrot.slane %v6452, %v6455
      %v6457 = vmul.f32 %v79, %v6456
      %v6458 = vmul.f32 %v80, %v6456
      %v6459 = vmul.f32 %v81, %v6456
      %v6460 = vmul.f32 %v82, %v6456
      %v6461 = vsel %vm137, %v6457, 0.0
      %6462 = vadd.xlane.f32.xlu0 %v6461
      %v6463 = vpop.xlane.xlu0 %6462
      %v6464 = vsel %vm137, %v6458, 0.0
      %6465 = vadd.xlane.f32.xlu0 %v6464
      %v6466 = vpop.xlane.xlu0 %6465
      %v6467 = vsel %vm137, %v6459, 0.0
      %6468 = vadd.xlane.f32.xlu0 %v6467
      %v6469 = vpop.xlane.xlu0 %6468
      %v6470 = vsel %vm137, %v6460, 0.0
      %6471 = vadd.xlane.f32.xlu0 %v6470
      %v6472 = vpop.xlane.xlu0 %6471
      %v6473 = vadd.f32 %v6463, %v83
      %v6474 = vadd.f32 %v6466, %v84
      %v6475 = vadd.f32 %v6469, %v85
      %v6476 = vadd.f32 %v6472, %v86
      %v6477 = vxor.u32 %v6473, 2147483648
      %v6478 = vxor.u32 %v6474, 2147483648
      %v6479 = vxor.u32 %v6475, 2147483648
      %v6480 = vxor.u32 %v6476, 2147483648
      %v6481 = vmul.f32 %v6477, 1.442695
      %v6482 = vpow.pop %v6481
      %v6483 = vmul.f32 %v6478, 1.442695
      %v6484 = vpow.pop %v6483
      %v6485 = vmul.f32 %v6479, 1.442695
      %v6486 = vpow.pop %v6485
      %v6487 = vmul.f32 %v6480, 1.442695
      %v6488 = vpow.pop %v6487
      %v6489 = vadd.f32 %v6482, 1.0
      %v6490 = vadd.f32 %v6484, 1.0
      %v6491 = vadd.f32 %v6486, 1.0
      %v6492 = vadd.f32 %v6488, 1.0
      %v6493 = vrcp.pop %v6489
      %v6494 = vmul.f32 1.0, %v6493
      %v6495 = vrcp.pop %v6490
      %v6496 = vmul.f32 1.0, %v6495
      %v6497 = vrcp.pop %v6491
      %v6498 = vmul.f32 1.0, %v6497
      %v6499 = vrcp.pop %v6492
      %v6500 = vmul.f32 1.0, %v6499
      %v6501 = vmul.f32 %v6473, %v6494
      %v6502 = vmul.f32 %v6474, %v6496
      %v6503 = vmul.f32 %v6475, %v6498
      %v6504 = vmul.f32 %v6476, %v6500
      %6506 = vset.pattern.permute.xlu0 0
      %6507 = vperm.xlu0 %6506, %v6501
      %v6508 = vpop.permute.xlu0 %6507
      %6511 = vset.pattern.permute.xlu0 0
      %6512 = vperm.xlu0 %6511, %v6502
      %v6513 = vpop.permute.xlu0 %6512
      %6516 = vset.pattern.permute.xlu0 0
      %6517 = vperm.xlu0 %6516, %v6503
      %v6518 = vpop.permute.xlu0 %6517
      %6521 = vset.pattern.permute.xlu0 0
      %6522 = vperm.xlu0 %6521, %v6504
      %v6523 = vpop.permute.xlu0 %6522
      %v6525 = vmul.f32 %v87, %v6508
      %v6526 = vmul.f32 %v88, %v6513
      %v6527 = vmul.f32 %v89, %v6518
      %v6528 = vmul.f32 %v90, %v6523
      %v6529 = vsel %vm137, %v6525, 0.0
      %v6530 = vsel %vm137, %v6526, 0.0
      %v6531 = vadd.f32 %v6529, %v6530
      %v6532 = vsel %vm137, %v6527, 0.0
      %v6533 = vadd.f32 %v6531, %v6532
      %v6534 = vsel %vm137, %v6528, 0.0
      %v6535 = vadd.f32 %v6533, %v6534
      %v6536 = vrot.slane %v6535, 4
      %v6537 = vadd.f32 %v6535, %v6536
      %v6538 = vrot.slane %v6537, 2
      %v6539 = vadd.f32 %v6537, %v6538
      %v6540 = vrot.slane %v6539, 1
      %v6541 = vadd.f32 %v6539, %v6540
      %v6542 = vadd.f32 %v6541, %v91
      %v6543 = vxor.u32 %v6542, 2147483648
      %v6544 = vmul.f32 %v6543, 1.442695
      %v6545 = vpow.pop %v6544
      %v6546 = vadd.f32 %v6545, 1.0
      %v6547 = vrcp.pop %v6546
      %v6548 = vmul.f32 1.0, %v6547
      %v6549 = vmul.f32 %v6542, %v6548
      %v6550 = vmul.f32 %v92, %v6549
      %v6551 = vsel %vm228, %v6550, 0.0
      %6552 = vadd.xlane.f32.xlu0 %v6551
      %v6553 = vpop.xlane.xlu0 %6552
      %v6554 = vadd.f32 %v6553, %v93
      %v6555 = vmul.f32 %v233, %v6554
      %v6556 = vadd.f32 %v6320, %v6555
      %6558 = vset.pattern.permute.xlu0 0
      %6559 = vperm.xlu0 %6558, %v6556
      %v6560 = vpop.permute.xlu0 %6559
      %v6562 = vmul.f32 %v6560, %v77
      %v6563 = vadd.f32 %v6562, %v78
      %v6564 = vxor.u32 %v6563, 2147483648
      %v6565 = vmul.f32 %v6564, 1.442695
      %v6566 = vpow.pop %v6565
      %v6567 = vadd.f32 %v6566, 1.0
      %v6568 = vrcp.pop %v6567
      %v6569 = vmul.f32 1.0, %v6568
      %v6570 = vmul.f32 %v6563, %v6569
      %v6571 = vlaneseq
      %v6572 = vshrl.u32 %v6571, 7
      %v6573 = vsub.s32 0, %v6572
      %v6574 = vrot.slane %v6570, %v6573
      %v6575 = vmul.f32 %v79, %v6574
      %v6576 = vmul.f32 %v80, %v6574
      %v6577 = vmul.f32 %v81, %v6574
      %v6578 = vmul.f32 %v82, %v6574
      %v6579 = vsel %vm137, %v6575, 0.0
      %6580 = vadd.xlane.f32.xlu0 %v6579
      %v6581 = vpop.xlane.xlu0 %6580
      %v6582 = vsel %vm137, %v6576, 0.0
      %6583 = vadd.xlane.f32.xlu0 %v6582
      %v6584 = vpop.xlane.xlu0 %6583
      %v6585 = vsel %vm137, %v6577, 0.0
      %6586 = vadd.xlane.f32.xlu0 %v6585
      %v6587 = vpop.xlane.xlu0 %6586
      %v6588 = vsel %vm137, %v6578, 0.0
      %6589 = vadd.xlane.f32.xlu0 %v6588
      %v6590 = vpop.xlane.xlu0 %6589
      %v6591 = vadd.f32 %v6581, %v83
      %v6592 = vadd.f32 %v6584, %v84
      %v6593 = vadd.f32 %v6587, %v85
      %v6594 = vadd.f32 %v6590, %v86
      %v6595 = vxor.u32 %v6591, 2147483648
      %v6596 = vxor.u32 %v6592, 2147483648
      %v6597 = vxor.u32 %v6593, 2147483648
      %v6598 = vxor.u32 %v6594, 2147483648
      %v6599 = vmul.f32 %v6595, 1.442695
      %v6600 = vpow.pop %v6599
      %v6601 = vmul.f32 %v6596, 1.442695
      %v6602 = vpow.pop %v6601
      %v6603 = vmul.f32 %v6597, 1.442695
      %v6604 = vpow.pop %v6603
      %v6605 = vmul.f32 %v6598, 1.442695
      %v6606 = vpow.pop %v6605
      %v6607 = vadd.f32 %v6600, 1.0
      %v6608 = vadd.f32 %v6602, 1.0
      %v6609 = vadd.f32 %v6604, 1.0
      %v6610 = vadd.f32 %v6606, 1.0
      %v6611 = vrcp.pop %v6607
      %v6612 = vmul.f32 1.0, %v6611
      %v6613 = vrcp.pop %v6608
      %v6614 = vmul.f32 1.0, %v6613
      %v6615 = vrcp.pop %v6609
      %v6616 = vmul.f32 1.0, %v6615
      %v6617 = vrcp.pop %v6610
      %v6618 = vmul.f32 1.0, %v6617
      %v6619 = vmul.f32 %v6591, %v6612
      %v6620 = vmul.f32 %v6592, %v6614
      %v6621 = vmul.f32 %v6593, %v6616
      %v6622 = vmul.f32 %v6594, %v6618
      %6624 = vset.pattern.permute.xlu0 0
      %6625 = vperm.xlu0 %6624, %v6619
      %v6626 = vpop.permute.xlu0 %6625
      %6629 = vset.pattern.permute.xlu0 0
      %6630 = vperm.xlu0 %6629, %v6620
      %v6631 = vpop.permute.xlu0 %6630
      %6634 = vset.pattern.permute.xlu0 0
      %6635 = vperm.xlu0 %6634, %v6621
      %v6636 = vpop.permute.xlu0 %6635
      %6639 = vset.pattern.permute.xlu0 0
      %6640 = vperm.xlu0 %6639, %v6622
      %v6641 = vpop.permute.xlu0 %6640
      %v6643 = vmul.f32 %v87, %v6626
      %v6644 = vmul.f32 %v88, %v6631
      %v6645 = vmul.f32 %v89, %v6636
      %v6646 = vmul.f32 %v90, %v6641
      %v6647 = vsel %vm137, %v6643, 0.0
      %v6648 = vsel %vm137, %v6644, 0.0
      %v6649 = vadd.f32 %v6647, %v6648
      %v6650 = vsel %vm137, %v6645, 0.0
      %v6651 = vadd.f32 %v6649, %v6650
      %v6652 = vsel %vm137, %v6646, 0.0
      %v6653 = vadd.f32 %v6651, %v6652
      %v6654 = vrot.slane %v6653, 4
      %v6655 = vadd.f32 %v6653, %v6654
      %v6656 = vrot.slane %v6655, 2
      %v6657 = vadd.f32 %v6655, %v6656
      %v6658 = vrot.slane %v6657, 1
      %v6659 = vadd.f32 %v6657, %v6658
      %v6660 = vadd.f32 %v6659, %v91
      %v6661 = vxor.u32 %v6660, 2147483648
      %v6662 = vmul.f32 %v6661, 1.442695
      %v6663 = vpow.pop %v6662
      %v6664 = vadd.f32 %v6663, 1.0
      %v6665 = vrcp.pop %v6664
      %v6666 = vmul.f32 1.0, %v6665
      %v6667 = vmul.f32 %v6660, %v6666
      %v6668 = vmul.f32 %v92, %v6667
      %v6669 = vsel %vm228, %v6668, 0.0
      %6670 = vadd.xlane.f32.xlu0 %v6669
      %v6671 = vpop.xlane.xlu0 %6670
      %v6672 = vadd.f32 %v6671, %v93
      %v6673 = vmul.f32 %v470, %v6672
      %v6674 = vadd.f32 %v6320, %v6673
      %6676 = vset.pattern.permute.xlu0 0
      %6677 = vperm.xlu0 %6676, %v6674
      %v6678 = vpop.permute.xlu0 %6677
      %v6680 = vmul.f32 %v6678, %v77
      %v6681 = vadd.f32 %v6680, %v78
      %v6682 = vxor.u32 %v6681, 2147483648
      %v6683 = vmul.f32 %v6682, 1.442695
      %v6684 = vpow.pop %v6683
      %v6685 = vadd.f32 %v6684, 1.0
      %v6686 = vrcp.pop %v6685
      %v6687 = vmul.f32 1.0, %v6686
      %v6688 = vmul.f32 %v6681, %v6687
      %v6689 = vlaneseq
      %v6690 = vshrl.u32 %v6689, 7
      %v6691 = vsub.s32 0, %v6690
      %v6692 = vrot.slane %v6688, %v6691
      %v6693 = vmul.f32 %v79, %v6692
      %v6694 = vmul.f32 %v80, %v6692
      %v6695 = vmul.f32 %v81, %v6692
      %v6696 = vmul.f32 %v82, %v6692
      %v6697 = vsel %vm137, %v6693, 0.0
      %6698 = vadd.xlane.f32.xlu0 %v6697
      %v6699 = vpop.xlane.xlu0 %6698
      %v6700 = vsel %vm137, %v6694, 0.0
      %6701 = vadd.xlane.f32.xlu0 %v6700
      %v6702 = vpop.xlane.xlu0 %6701
      %v6703 = vsel %vm137, %v6695, 0.0
      %6704 = vadd.xlane.f32.xlu0 %v6703
      %v6705 = vpop.xlane.xlu0 %6704
      %v6706 = vsel %vm137, %v6696, 0.0
      %6707 = vadd.xlane.f32.xlu0 %v6706
      %v6708 = vpop.xlane.xlu0 %6707
      %v6709 = vadd.f32 %v6699, %v83
      %v6710 = vadd.f32 %v6702, %v84
      %v6711 = vadd.f32 %v6705, %v85
      %v6712 = vadd.f32 %v6708, %v86
      %v6713 = vxor.u32 %v6709, 2147483648
      %v6714 = vxor.u32 %v6710, 2147483648
      %v6715 = vxor.u32 %v6711, 2147483648
      %v6716 = vxor.u32 %v6712, 2147483648
      %v6717 = vmul.f32 %v6713, 1.442695
      %v6718 = vpow.pop %v6717
      %v6719 = vmul.f32 %v6714, 1.442695
      %v6720 = vpow.pop %v6719
      %v6721 = vmul.f32 %v6715, 1.442695
      %v6722 = vpow.pop %v6721
      %v6723 = vmul.f32 %v6716, 1.442695
      %v6724 = vpow.pop %v6723
      %v6725 = vadd.f32 %v6718, 1.0
      %v6726 = vadd.f32 %v6720, 1.0
      %v6727 = vadd.f32 %v6722, 1.0
      %v6728 = vadd.f32 %v6724, 1.0
      %v6729 = vrcp.pop %v6725
      %v6730 = vmul.f32 1.0, %v6729
      %v6731 = vrcp.pop %v6726
      %v6732 = vmul.f32 1.0, %v6731
      %v6733 = vrcp.pop %v6727
      %v6734 = vmul.f32 1.0, %v6733
      %v6735 = vrcp.pop %v6728
      %v6736 = vmul.f32 1.0, %v6735
      %v6737 = vmul.f32 %v6709, %v6730
      %v6738 = vmul.f32 %v6710, %v6732
      %v6739 = vmul.f32 %v6711, %v6734
      %v6740 = vmul.f32 %v6712, %v6736
      %6742 = vset.pattern.permute.xlu0 0
      %6743 = vperm.xlu0 %6742, %v6737
      %v6744 = vpop.permute.xlu0 %6743
      %6747 = vset.pattern.permute.xlu0 0
      %6748 = vperm.xlu0 %6747, %v6738
      %v6749 = vpop.permute.xlu0 %6748
      %6752 = vset.pattern.permute.xlu0 0
      %6753 = vperm.xlu0 %6752, %v6739
      %v6754 = vpop.permute.xlu0 %6753
      %6757 = vset.pattern.permute.xlu0 0
      %6758 = vperm.xlu0 %6757, %v6740
      %v6759 = vpop.permute.xlu0 %6758
      %v6761 = vmul.f32 %v87, %v6744
      %v6762 = vmul.f32 %v88, %v6749
      %v6763 = vmul.f32 %v89, %v6754
      %v6764 = vmul.f32 %v90, %v6759
      %v6765 = vsel %vm137, %v6761, 0.0
      %v6766 = vsel %vm137, %v6762, 0.0
      %v6767 = vadd.f32 %v6765, %v6766
      %v6768 = vsel %vm137, %v6763, 0.0
      %v6769 = vadd.f32 %v6767, %v6768
      %v6770 = vsel %vm137, %v6764, 0.0
      %v6771 = vadd.f32 %v6769, %v6770
      %v6772 = vrot.slane %v6771, 4
      %v6773 = vadd.f32 %v6771, %v6772
      %v6774 = vrot.slane %v6773, 2
      %v6775 = vadd.f32 %v6773, %v6774
      %v6776 = vrot.slane %v6775, 1
      %v6777 = vadd.f32 %v6775, %v6776
      %v6778 = vadd.f32 %v6777, %v91
      %v6779 = vxor.u32 %v6778, 2147483648
      %v6780 = vmul.f32 %v6779, 1.442695
      %v6781 = vpow.pop %v6780
      %v6782 = vadd.f32 %v6781, 1.0
      %v6783 = vrcp.pop %v6782
      %v6784 = vmul.f32 1.0, %v6783
      %v6785 = vmul.f32 %v6778, %v6784
      %v6786 = vmul.f32 %v92, %v6785
      %v6787 = vsel %vm228, %v6786, 0.0
      %6788 = vadd.xlane.f32.xlu0 %v6787
      %v6789 = vpop.xlane.xlu0 %6788
      %v6790 = vadd.f32 %v6789, %v93
      %v6791 = vmul.f32 %v6554, 2.0
      %v6792 = vadd.f32 %v6436, %v6791
      %v6793 = vmul.f32 %v6672, 2.0
      %v6794 = vadd.f32 %v6792, %v6793
      %v6795 = vadd.f32 %v6794, %v6790
      %v6796 = vmul.f32 %v594, %v6795
      %v6797 = vadd.f32 %v6320, %v6796
      %6799 = vset.pattern.permute.xlu0 0
      %6800 = vperm.xlu0 %6799, %v6797
      %v6801 = vpop.permute.xlu0 %6800
      %v6803 = vmul.f32 %v6801, %v77
      %v6804 = vadd.f32 %v6803, %v78
      %v6805 = vxor.u32 %v6804, 2147483648
      %v6806 = vmul.f32 %v6805, 1.442695
      %v6807 = vpow.pop %v6806
      %v6808 = vadd.f32 %v6807, 1.0
      %v6809 = vrcp.pop %v6808
      %v6810 = vmul.f32 1.0, %v6809
      %v6811 = vmul.f32 %v6804, %v6810
      %v6812 = vlaneseq
      %v6813 = vshrl.u32 %v6812, 7
      %v6814 = vsub.s32 0, %v6813
      %v6815 = vrot.slane %v6811, %v6814
      %v6816 = vmul.f32 %v79, %v6815
      %v6817 = vmul.f32 %v80, %v6815
      %v6818 = vmul.f32 %v81, %v6815
      %v6819 = vmul.f32 %v82, %v6815
      %v6820 = vsel %vm137, %v6816, 0.0
      %6821 = vadd.xlane.f32.xlu0 %v6820
      %v6822 = vpop.xlane.xlu0 %6821
      %v6823 = vsel %vm137, %v6817, 0.0
      %6824 = vadd.xlane.f32.xlu0 %v6823
      %v6825 = vpop.xlane.xlu0 %6824
      %v6826 = vsel %vm137, %v6818, 0.0
      %6827 = vadd.xlane.f32.xlu0 %v6826
      %v6828 = vpop.xlane.xlu0 %6827
      %v6829 = vsel %vm137, %v6819, 0.0
      %6830 = vadd.xlane.f32.xlu0 %v6829
      %v6831 = vpop.xlane.xlu0 %6830
      %v6832 = vadd.f32 %v6822, %v83
      %v6833 = vadd.f32 %v6825, %v84
      %v6834 = vadd.f32 %v6828, %v85
      %v6835 = vadd.f32 %v6831, %v86
      %v6836 = vxor.u32 %v6832, 2147483648
      %v6837 = vxor.u32 %v6833, 2147483648
      %v6838 = vxor.u32 %v6834, 2147483648
      %v6839 = vxor.u32 %v6835, 2147483648
      %v6840 = vmul.f32 %v6836, 1.442695
      %v6841 = vpow.pop %v6840
      %v6842 = vmul.f32 %v6837, 1.442695
      %v6843 = vpow.pop %v6842
      %v6844 = vmul.f32 %v6838, 1.442695
      %v6845 = vpow.pop %v6844
      %v6846 = vmul.f32 %v6839, 1.442695
      %v6847 = vpow.pop %v6846
      %v6848 = vadd.f32 %v6841, 1.0
      %v6849 = vadd.f32 %v6843, 1.0
      %v6850 = vadd.f32 %v6845, 1.0
      %v6851 = vadd.f32 %v6847, 1.0
      %v6852 = vrcp.pop %v6848
      %v6853 = vmul.f32 1.0, %v6852
      %v6854 = vrcp.pop %v6849
      %v6855 = vmul.f32 1.0, %v6854
      %v6856 = vrcp.pop %v6850
      %v6857 = vmul.f32 1.0, %v6856
      %v6858 = vrcp.pop %v6851
      %v6859 = vmul.f32 1.0, %v6858
      %v6860 = vmul.f32 %v6832, %v6853
      %v6861 = vmul.f32 %v6833, %v6855
      %v6862 = vmul.f32 %v6834, %v6857
      %v6863 = vmul.f32 %v6835, %v6859
      %6865 = vset.pattern.permute.xlu0 0
      %6866 = vperm.xlu0 %6865, %v6860
      %v6867 = vpop.permute.xlu0 %6866
      %6870 = vset.pattern.permute.xlu0 0
      %6871 = vperm.xlu0 %6870, %v6861
      %v6872 = vpop.permute.xlu0 %6871
      %6875 = vset.pattern.permute.xlu0 0
      %6876 = vperm.xlu0 %6875, %v6862
      %v6877 = vpop.permute.xlu0 %6876
      %6880 = vset.pattern.permute.xlu0 0
      %6881 = vperm.xlu0 %6880, %v6863
      %v6882 = vpop.permute.xlu0 %6881
      %v6884 = vmul.f32 %v87, %v6867
      %v6885 = vmul.f32 %v88, %v6872
      %v6886 = vmul.f32 %v89, %v6877
      %v6887 = vmul.f32 %v90, %v6882
      %v6888 = vsel %vm137, %v6884, 0.0
      %v6889 = vsel %vm137, %v6885, 0.0
      %v6890 = vadd.f32 %v6888, %v6889
      %v6891 = vsel %vm137, %v6886, 0.0
      %v6892 = vadd.f32 %v6890, %v6891
      %v6893 = vsel %vm137, %v6887, 0.0
      %v6894 = vadd.f32 %v6892, %v6893
      %v6895 = vrot.slane %v6894, 4
      %v6896 = vadd.f32 %v6894, %v6895
      %v6897 = vrot.slane %v6896, 2
      %v6898 = vadd.f32 %v6896, %v6897
      %v6899 = vrot.slane %v6898, 1
      %v6900 = vadd.f32 %v6898, %v6899
      %v6901 = vadd.f32 %v6900, %v91
      %v6902 = vxor.u32 %v6901, 2147483648
      %v6903 = vmul.f32 %v6902, 1.442695
      %v6904 = vpow.pop %v6903
      %v6905 = vadd.f32 %v6904, 1.0
      %v6906 = vrcp.pop %v6905
      %v6907 = vmul.f32 1.0, %v6906
      %v6908 = vmul.f32 %v6901, %v6907
      %v6909 = vmul.f32 %v92, %v6908
      %v6910 = vsel %vm228, %v6909, 0.0
      %6911 = vadd.xlane.f32.xlu0 %v6910
      %v6912 = vpop.xlane.xlu0 %6911
      %v6913 = vadd.f32 %v6912, %v93
      %v6914 = vmul.f32 %v233, %v6913
      %v6915 = vadd.f32 %v6797, %v6914
      %6917 = vset.pattern.permute.xlu0 0
      %6918 = vperm.xlu0 %6917, %v6915
      %v6919 = vpop.permute.xlu0 %6918
      %v6921 = vmul.f32 %v6919, %v77
      %v6922 = vadd.f32 %v6921, %v78
      %v6923 = vxor.u32 %v6922, 2147483648
      %v6924 = vmul.f32 %v6923, 1.442695
      %v6925 = vpow.pop %v6924
      %v6926 = vadd.f32 %v6925, 1.0
      %v6927 = vrcp.pop %v6926
      %v6928 = vmul.f32 1.0, %v6927
      %v6929 = vmul.f32 %v6922, %v6928
      %v6930 = vlaneseq
      %v6931 = vshrl.u32 %v6930, 7
      %v6932 = vsub.s32 0, %v6931
      %v6933 = vrot.slane %v6929, %v6932
      %v6934 = vmul.f32 %v79, %v6933
      %v6935 = vmul.f32 %v80, %v6933
      %v6936 = vmul.f32 %v81, %v6933
      %v6937 = vmul.f32 %v82, %v6933
      %v6938 = vsel %vm137, %v6934, 0.0
      %6939 = vadd.xlane.f32.xlu0 %v6938
      %v6940 = vpop.xlane.xlu0 %6939
      %v6941 = vsel %vm137, %v6935, 0.0
      %6942 = vadd.xlane.f32.xlu0 %v6941
      %v6943 = vpop.xlane.xlu0 %6942
      %v6944 = vsel %vm137, %v6936, 0.0
      %6945 = vadd.xlane.f32.xlu0 %v6944
      %v6946 = vpop.xlane.xlu0 %6945
      %v6947 = vsel %vm137, %v6937, 0.0
      %6948 = vadd.xlane.f32.xlu0 %v6947
      %v6949 = vpop.xlane.xlu0 %6948
      %v6950 = vadd.f32 %v6940, %v83
      %v6951 = vadd.f32 %v6943, %v84
      %v6952 = vadd.f32 %v6946, %v85
      %v6953 = vadd.f32 %v6949, %v86
      %v6954 = vxor.u32 %v6950, 2147483648
      %v6955 = vxor.u32 %v6951, 2147483648
      %v6956 = vxor.u32 %v6952, 2147483648
      %v6957 = vxor.u32 %v6953, 2147483648
      %v6958 = vmul.f32 %v6954, 1.442695
      %v6959 = vpow.pop %v6958
      %v6960 = vmul.f32 %v6955, 1.442695
      %v6961 = vpow.pop %v6960
      %v6962 = vmul.f32 %v6956, 1.442695
      %v6963 = vpow.pop %v6962
      %v6964 = vmul.f32 %v6957, 1.442695
      %v6965 = vpow.pop %v6964
      %v6966 = vadd.f32 %v6959, 1.0
      %v6967 = vadd.f32 %v6961, 1.0
      %v6968 = vadd.f32 %v6963, 1.0
      %v6969 = vadd.f32 %v6965, 1.0
      %v6970 = vrcp.pop %v6966
      %v6971 = vmul.f32 1.0, %v6970
      %v6972 = vrcp.pop %v6967
      %v6973 = vmul.f32 1.0, %v6972
      %v6974 = vrcp.pop %v6968
      %v6975 = vmul.f32 1.0, %v6974
      %v6976 = vrcp.pop %v6969
      %v6977 = vmul.f32 1.0, %v6976
      %v6978 = vmul.f32 %v6950, %v6971
      %v6979 = vmul.f32 %v6951, %v6973
      %v6980 = vmul.f32 %v6952, %v6975
      %v6981 = vmul.f32 %v6953, %v6977
      %6983 = vset.pattern.permute.xlu0 0
      %6984 = vperm.xlu0 %6983, %v6978
      %v6985 = vpop.permute.xlu0 %6984
      %6988 = vset.pattern.permute.xlu0 0
      %6989 = vperm.xlu0 %6988, %v6979
      %v6990 = vpop.permute.xlu0 %6989
      %6993 = vset.pattern.permute.xlu0 0
      %6994 = vperm.xlu0 %6993, %v6980
      %v6995 = vpop.permute.xlu0 %6994
      %6998 = vset.pattern.permute.xlu0 0
      %6999 = vperm.xlu0 %6998, %v6981
      %v7000 = vpop.permute.xlu0 %6999
      %v7002 = vmul.f32 %v87, %v6985
      %v7003 = vmul.f32 %v88, %v6990
      %v7004 = vmul.f32 %v89, %v6995
      %v7005 = vmul.f32 %v90, %v7000
      %v7006 = vsel %vm137, %v7002, 0.0
      %v7007 = vsel %vm137, %v7003, 0.0
      %v7008 = vadd.f32 %v7006, %v7007
      %v7009 = vsel %vm137, %v7004, 0.0
      %v7010 = vadd.f32 %v7008, %v7009
      %v7011 = vsel %vm137, %v7005, 0.0
      %v7012 = vadd.f32 %v7010, %v7011
      %v7013 = vrot.slane %v7012, 4
      %v7014 = vadd.f32 %v7012, %v7013
      %v7015 = vrot.slane %v7014, 2
      %v7016 = vadd.f32 %v7014, %v7015
      %v7017 = vrot.slane %v7016, 1
      %v7018 = vadd.f32 %v7016, %v7017
      %v7019 = vadd.f32 %v7018, %v91
      %v7020 = vxor.u32 %v7019, 2147483648
      %v7021 = vmul.f32 %v7020, 1.442695
      %v7022 = vpow.pop %v7021
      %v7023 = vadd.f32 %v7022, 1.0
      %v7024 = vrcp.pop %v7023
      %v7025 = vmul.f32 1.0, %v7024
      %v7026 = vmul.f32 %v7019, %v7025
      %v7027 = vmul.f32 %v92, %v7026
      %v7028 = vsel %vm228, %v7027, 0.0
      %7029 = vadd.xlane.f32.xlu0 %v7028
      %v7030 = vpop.xlane.xlu0 %7029
      %v7031 = vadd.f32 %v7030, %v93
      %v7032 = vmul.f32 %v233, %v7031
      %v7033 = vadd.f32 %v6797, %v7032
      %7035 = vset.pattern.permute.xlu0 0
      %7036 = vperm.xlu0 %7035, %v7033
      %v7037 = vpop.permute.xlu0 %7036
      %v7039 = vmul.f32 %v7037, %v77
      %v7040 = vadd.f32 %v7039, %v78
      %v7041 = vxor.u32 %v7040, 2147483648
      %v7042 = vmul.f32 %v7041, 1.442695
      %v7043 = vpow.pop %v7042
      %v7044 = vadd.f32 %v7043, 1.0
      %v7045 = vrcp.pop %v7044
      %v7046 = vmul.f32 1.0, %v7045
      %v7047 = vmul.f32 %v7040, %v7046
      %v7048 = vlaneseq
      %v7049 = vshrl.u32 %v7048, 7
      %v7050 = vsub.s32 0, %v7049
      %v7051 = vrot.slane %v7047, %v7050
      %v7052 = vmul.f32 %v79, %v7051
      %v7053 = vmul.f32 %v80, %v7051
      %v7054 = vmul.f32 %v81, %v7051
      %v7055 = vmul.f32 %v82, %v7051
      %v7056 = vsel %vm137, %v7052, 0.0
      %7057 = vadd.xlane.f32.xlu0 %v7056
      %v7058 = vpop.xlane.xlu0 %7057
      %v7059 = vsel %vm137, %v7053, 0.0
      %7060 = vadd.xlane.f32.xlu0 %v7059
      %v7061 = vpop.xlane.xlu0 %7060
      %v7062 = vsel %vm137, %v7054, 0.0
      %7063 = vadd.xlane.f32.xlu0 %v7062
      %v7064 = vpop.xlane.xlu0 %7063
      %v7065 = vsel %vm137, %v7055, 0.0
      %7066 = vadd.xlane.f32.xlu0 %v7065
      %v7067 = vpop.xlane.xlu0 %7066
      %v7068 = vadd.f32 %v7058, %v83
      %v7069 = vadd.f32 %v7061, %v84
      %v7070 = vadd.f32 %v7064, %v85
      %v7071 = vadd.f32 %v7067, %v86
      %v7072 = vxor.u32 %v7068, 2147483648
      %v7073 = vxor.u32 %v7069, 2147483648
      %v7074 = vxor.u32 %v7070, 2147483648
      %v7075 = vxor.u32 %v7071, 2147483648
      %v7076 = vmul.f32 %v7072, 1.442695
      %v7077 = vpow.pop %v7076
      %v7078 = vmul.f32 %v7073, 1.442695
      %v7079 = vpow.pop %v7078
      %v7080 = vmul.f32 %v7074, 1.442695
      %v7081 = vpow.pop %v7080
      %v7082 = vmul.f32 %v7075, 1.442695
      %v7083 = vpow.pop %v7082
      %v7084 = vadd.f32 %v7077, 1.0
      %v7085 = vadd.f32 %v7079, 1.0
      %v7086 = vadd.f32 %v7081, 1.0
      %v7087 = vadd.f32 %v7083, 1.0
      %v7088 = vrcp.pop %v7084
      %v7089 = vmul.f32 1.0, %v7088
      %v7090 = vrcp.pop %v7085
      %v7091 = vmul.f32 1.0, %v7090
      %v7092 = vrcp.pop %v7086
      %v7093 = vmul.f32 1.0, %v7092
      %v7094 = vrcp.pop %v7087
      %v7095 = vmul.f32 1.0, %v7094
      %v7096 = vmul.f32 %v7068, %v7089
      %v7097 = vmul.f32 %v7069, %v7091
      %v7098 = vmul.f32 %v7070, %v7093
      %v7099 = vmul.f32 %v7071, %v7095
      %7101 = vset.pattern.permute.xlu0 0
      %7102 = vperm.xlu0 %7101, %v7096
      %v7103 = vpop.permute.xlu0 %7102
      %7106 = vset.pattern.permute.xlu0 0
      %7107 = vperm.xlu0 %7106, %v7097
      %v7108 = vpop.permute.xlu0 %7107
      %7111 = vset.pattern.permute.xlu0 0
      %7112 = vperm.xlu0 %7111, %v7098
      %v7113 = vpop.permute.xlu0 %7112
      %7116 = vset.pattern.permute.xlu0 0
      %7117 = vperm.xlu0 %7116, %v7099
      %v7118 = vpop.permute.xlu0 %7117
      %v7120 = vmul.f32 %v87, %v7103
      %v7121 = vmul.f32 %v88, %v7108
      %v7122 = vmul.f32 %v89, %v7113
      %v7123 = vmul.f32 %v90, %v7118
      %v7124 = vsel %vm137, %v7120, 0.0
      %v7125 = vsel %vm137, %v7121, 0.0
      %v7126 = vadd.f32 %v7124, %v7125
      %v7127 = vsel %vm137, %v7122, 0.0
      %v7128 = vadd.f32 %v7126, %v7127
      %v7129 = vsel %vm137, %v7123, 0.0
      %v7130 = vadd.f32 %v7128, %v7129
      %v7131 = vrot.slane %v7130, 4
      %v7132 = vadd.f32 %v7130, %v7131
      %v7133 = vrot.slane %v7132, 2
      %v7134 = vadd.f32 %v7132, %v7133
      %v7135 = vrot.slane %v7134, 1
      %v7136 = vadd.f32 %v7134, %v7135
      %v7137 = vadd.f32 %v7136, %v91
      %v7138 = vxor.u32 %v7137, 2147483648
      %v7139 = vmul.f32 %v7138, 1.442695
      %v7140 = vpow.pop %v7139
      %v7141 = vadd.f32 %v7140, 1.0
      %v7142 = vrcp.pop %v7141
      %v7143 = vmul.f32 1.0, %v7142
      %v7144 = vmul.f32 %v7137, %v7143
      %v7145 = vmul.f32 %v92, %v7144
      %v7146 = vsel %vm228, %v7145, 0.0
      %7147 = vadd.xlane.f32.xlu0 %v7146
      %v7148 = vpop.xlane.xlu0 %7147
      %v7149 = vadd.f32 %v7148, %v93
      %v7150 = vmul.f32 %v470, %v7149
      %v7151 = vadd.f32 %v6797, %v7150
      %7153 = vset.pattern.permute.xlu0 0
      %7154 = vperm.xlu0 %7153, %v7151
      %v7155 = vpop.permute.xlu0 %7154
      %v7157 = vmul.f32 %v7155, %v77
      %v7158 = vadd.f32 %v7157, %v78
      %v7159 = vxor.u32 %v7158, 2147483648
      %v7160 = vmul.f32 %v7159, 1.442695
      %v7161 = vpow.pop %v7160
      %v7162 = vadd.f32 %v7161, 1.0
      %v7163 = vrcp.pop %v7162
      %v7164 = vmul.f32 1.0, %v7163
      %v7165 = vmul.f32 %v7158, %v7164
      %v7166 = vlaneseq
      %v7167 = vshrl.u32 %v7166, 7
      %v7168 = vsub.s32 0, %v7167
      %v7169 = vrot.slane %v7165, %v7168
      %v7170 = vmul.f32 %v79, %v7169
      %v7171 = vmul.f32 %v80, %v7169
      %v7172 = vmul.f32 %v81, %v7169
      %v7173 = vmul.f32 %v82, %v7169
      %v7174 = vsel %vm137, %v7170, 0.0
      %7175 = vadd.xlane.f32.xlu0 %v7174
      %v7176 = vpop.xlane.xlu0 %7175
      %v7177 = vsel %vm137, %v7171, 0.0
      %7178 = vadd.xlane.f32.xlu0 %v7177
      %v7179 = vpop.xlane.xlu0 %7178
      %v7180 = vsel %vm137, %v7172, 0.0
      %7181 = vadd.xlane.f32.xlu0 %v7180
      %v7182 = vpop.xlane.xlu0 %7181
      %v7183 = vsel %vm137, %v7173, 0.0
      %7184 = vadd.xlane.f32.xlu0 %v7183
      %v7185 = vpop.xlane.xlu0 %7184
      %v7186 = vadd.f32 %v7176, %v83
      %v7187 = vadd.f32 %v7179, %v84
      %v7188 = vadd.f32 %v7182, %v85
      %v7189 = vadd.f32 %v7185, %v86
      %v7190 = vxor.u32 %v7186, 2147483648
      %v7191 = vxor.u32 %v7187, 2147483648
      %v7192 = vxor.u32 %v7188, 2147483648
      %v7193 = vxor.u32 %v7189, 2147483648
      %v7194 = vmul.f32 %v7190, 1.442695
      %v7195 = vpow.pop %v7194
      %v7196 = vmul.f32 %v7191, 1.442695
      %v7197 = vpow.pop %v7196
      %v7198 = vmul.f32 %v7192, 1.442695
      %v7199 = vpow.pop %v7198
      %v7200 = vmul.f32 %v7193, 1.442695
      %v7201 = vpow.pop %v7200
      %v7202 = vadd.f32 %v7195, 1.0
      %v7203 = vadd.f32 %v7197, 1.0
      %v7204 = vadd.f32 %v7199, 1.0
      %v7205 = vadd.f32 %v7201, 1.0
      %v7206 = vrcp.pop %v7202
      %v7207 = vmul.f32 1.0, %v7206
      %v7208 = vrcp.pop %v7203
      %v7209 = vmul.f32 1.0, %v7208
      %v7210 = vrcp.pop %v7204
      %v7211 = vmul.f32 1.0, %v7210
      %v7212 = vrcp.pop %v7205
      %v7213 = vmul.f32 1.0, %v7212
      %v7214 = vmul.f32 %v7186, %v7207
      %v7215 = vmul.f32 %v7187, %v7209
      %v7216 = vmul.f32 %v7188, %v7211
      %v7217 = vmul.f32 %v7189, %v7213
      %7219 = vset.pattern.permute.xlu0 0
      %7220 = vperm.xlu0 %7219, %v7214
      %v7221 = vpop.permute.xlu0 %7220
      %7224 = vset.pattern.permute.xlu0 0
      %7225 = vperm.xlu0 %7224, %v7215
      %v7226 = vpop.permute.xlu0 %7225
      %7229 = vset.pattern.permute.xlu0 0
      %7230 = vperm.xlu0 %7229, %v7216
      %v7231 = vpop.permute.xlu0 %7230
      %7234 = vset.pattern.permute.xlu0 0
      %7235 = vperm.xlu0 %7234, %v7217
      %v7236 = vpop.permute.xlu0 %7235
      %v7238 = vmul.f32 %v87, %v7221
      %v7239 = vmul.f32 %v88, %v7226
      %v7240 = vmul.f32 %v89, %v7231
      %v7241 = vmul.f32 %v90, %v7236
      %v7242 = vsel %vm137, %v7238, 0.0
      %v7243 = vsel %vm137, %v7239, 0.0
      %v7244 = vadd.f32 %v7242, %v7243
      %v7245 = vsel %vm137, %v7240, 0.0
      %v7246 = vadd.f32 %v7244, %v7245
      %v7247 = vsel %vm137, %v7241, 0.0
      %v7248 = vadd.f32 %v7246, %v7247
      %v7249 = vrot.slane %v7248, 4
      %v7250 = vadd.f32 %v7248, %v7249
      %v7251 = vrot.slane %v7250, 2
      %v7252 = vadd.f32 %v7250, %v7251
      %v7253 = vrot.slane %v7252, 1
      %v7254 = vadd.f32 %v7252, %v7253
      %v7255 = vadd.f32 %v7254, %v91
      %v7256 = vxor.u32 %v7255, 2147483648
      %v7257 = vmul.f32 %v7256, 1.442695
      %v7258 = vpow.pop %v7257
      %v7259 = vadd.f32 %v7258, 1.0
      %v7260 = vrcp.pop %v7259
      %v7261 = vmul.f32 1.0, %v7260
      %v7262 = vmul.f32 %v7255, %v7261
      %v7263 = vmul.f32 %v92, %v7262
      %v7264 = vsel %vm228, %v7263, 0.0
      %7265 = vadd.xlane.f32.xlu0 %v7264
      %v7266 = vpop.xlane.xlu0 %7265
      %v7267 = vadd.f32 %v7266, %v93
      %v7268 = vmul.f32 %v7031, 2.0
      %v7269 = vadd.f32 %v6913, %v7268
      %v7270 = vmul.f32 %v7149, 2.0
      %v7271 = vadd.f32 %v7269, %v7270
      %v7272 = vadd.f32 %v7271, %v7267
      %v7273 = vmul.f32 %v594, %v7272
      %v7274 = vadd.f32 %v6797, %v7273
      %7276 = vset.pattern.permute.xlu0 0
      %7277 = vperm.xlu0 %7276, %v7274
      %v7278 = vpop.permute.xlu0 %7277
      %v7280 = vmul.f32 %v7278, %v77
      %v7281 = vadd.f32 %v7280, %v78
      %v7282 = vxor.u32 %v7281, 2147483648
      %v7283 = vmul.f32 %v7282, 1.442695
      %v7284 = vpow.pop %v7283
      %v7285 = vadd.f32 %v7284, 1.0
      %v7286 = vrcp.pop %v7285
      %v7287 = vmul.f32 1.0, %v7286
      %v7288 = vmul.f32 %v7281, %v7287
      %v7289 = vlaneseq
      %v7290 = vshrl.u32 %v7289, 7
      %v7291 = vsub.s32 0, %v7290
      %v7292 = vrot.slane %v7288, %v7291
      %v7293 = vmul.f32 %v79, %v7292
      %v7294 = vmul.f32 %v80, %v7292
      %v7295 = vmul.f32 %v81, %v7292
      %v7296 = vmul.f32 %v82, %v7292
      %v7297 = vsel %vm137, %v7293, 0.0
      %7298 = vadd.xlane.f32.xlu0 %v7297
      %v7299 = vpop.xlane.xlu0 %7298
      %v7300 = vsel %vm137, %v7294, 0.0
      %7301 = vadd.xlane.f32.xlu0 %v7300
      %v7302 = vpop.xlane.xlu0 %7301
      %v7303 = vsel %vm137, %v7295, 0.0
      %7304 = vadd.xlane.f32.xlu0 %v7303
      %v7305 = vpop.xlane.xlu0 %7304
      %v7306 = vsel %vm137, %v7296, 0.0
      %7307 = vadd.xlane.f32.xlu0 %v7306
      %v7308 = vpop.xlane.xlu0 %7307
      %v7309 = vadd.f32 %v7299, %v83
      %v7310 = vadd.f32 %v7302, %v84
      %v7311 = vadd.f32 %v7305, %v85
      %v7312 = vadd.f32 %v7308, %v86
      %v7313 = vxor.u32 %v7309, 2147483648
      %v7314 = vxor.u32 %v7310, 2147483648
      %v7315 = vxor.u32 %v7311, 2147483648
      %v7316 = vxor.u32 %v7312, 2147483648
      %v7317 = vmul.f32 %v7313, 1.442695
      %v7318 = vpow.pop %v7317
      %v7319 = vmul.f32 %v7314, 1.442695
      %v7320 = vpow.pop %v7319
      %v7321 = vmul.f32 %v7315, 1.442695
      %v7322 = vpow.pop %v7321
      %v7323 = vmul.f32 %v7316, 1.442695
      %v7324 = vpow.pop %v7323
      %v7325 = vadd.f32 %v7318, 1.0
      %v7326 = vadd.f32 %v7320, 1.0
      %v7327 = vadd.f32 %v7322, 1.0
      %v7328 = vadd.f32 %v7324, 1.0
      %v7329 = vrcp.pop %v7325
      %v7330 = vmul.f32 1.0, %v7329
      %v7331 = vrcp.pop %v7326
      %v7332 = vmul.f32 1.0, %v7331
      %v7333 = vrcp.pop %v7327
      %v7334 = vmul.f32 1.0, %v7333
      %v7335 = vrcp.pop %v7328
      %v7336 = vmul.f32 1.0, %v7335
      %v7337 = vmul.f32 %v7309, %v7330
      %v7338 = vmul.f32 %v7310, %v7332
      %v7339 = vmul.f32 %v7311, %v7334
      %v7340 = vmul.f32 %v7312, %v7336
      %7342 = vset.pattern.permute.xlu0 0
      %7343 = vperm.xlu0 %7342, %v7337
      %v7344 = vpop.permute.xlu0 %7343
      %7347 = vset.pattern.permute.xlu0 0
      %7348 = vperm.xlu0 %7347, %v7338
      %v7349 = vpop.permute.xlu0 %7348
      %7352 = vset.pattern.permute.xlu0 0
      %7353 = vperm.xlu0 %7352, %v7339
      %v7354 = vpop.permute.xlu0 %7353
      %7357 = vset.pattern.permute.xlu0 0
      %7358 = vperm.xlu0 %7357, %v7340
      %v7359 = vpop.permute.xlu0 %7358
      %v7361 = vmul.f32 %v87, %v7344
      %v7362 = vmul.f32 %v88, %v7349
      %v7363 = vmul.f32 %v89, %v7354
      %v7364 = vmul.f32 %v90, %v7359
      %v7365 = vsel %vm137, %v7361, 0.0
      %v7366 = vsel %vm137, %v7362, 0.0
      %v7367 = vadd.f32 %v7365, %v7366
      %v7368 = vsel %vm137, %v7363, 0.0
      %v7369 = vadd.f32 %v7367, %v7368
      %v7370 = vsel %vm137, %v7364, 0.0
      %v7371 = vadd.f32 %v7369, %v7370
      %v7372 = vrot.slane %v7371, 4
      %v7373 = vadd.f32 %v7371, %v7372
      %v7374 = vrot.slane %v7373, 2
      %v7375 = vadd.f32 %v7373, %v7374
      %v7376 = vrot.slane %v7375, 1
      %v7377 = vadd.f32 %v7375, %v7376
      %v7378 = vadd.f32 %v7377, %v91
      %v7379 = vxor.u32 %v7378, 2147483648
      %v7380 = vmul.f32 %v7379, 1.442695
      %v7381 = vpow.pop %v7380
      %v7382 = vadd.f32 %v7381, 1.0
      %v7383 = vrcp.pop %v7382
      %v7384 = vmul.f32 1.0, %v7383
      %v7385 = vmul.f32 %v7378, %v7384
      %v7386 = vmul.f32 %v92, %v7385
      %v7387 = vsel %vm228, %v7386, 0.0
      %7388 = vadd.xlane.f32.xlu0 %v7387
      %v7389 = vpop.xlane.xlu0 %7388
      %v7390 = vadd.f32 %v7389, %v93
      %v7391 = vmul.f32 %v233, %v7390
      %v7392 = vadd.f32 %v7274, %v7391
      %7394 = vset.pattern.permute.xlu0 0
      %7395 = vperm.xlu0 %7394, %v7392
      %v7396 = vpop.permute.xlu0 %7395
      %v7398 = vmul.f32 %v7396, %v77
      %v7399 = vadd.f32 %v7398, %v78
      %v7400 = vxor.u32 %v7399, 2147483648
      %v7401 = vmul.f32 %v7400, 1.442695
      %v7402 = vpow.pop %v7401
      %v7403 = vadd.f32 %v7402, 1.0
      %v7404 = vrcp.pop %v7403
      %v7405 = vmul.f32 1.0, %v7404
      %v7406 = vmul.f32 %v7399, %v7405
      %v7407 = vlaneseq
      %v7408 = vshrl.u32 %v7407, 7
      %v7409 = vsub.s32 0, %v7408
      %v7410 = vrot.slane %v7406, %v7409
      %v7411 = vmul.f32 %v79, %v7410
      %v7412 = vmul.f32 %v80, %v7410
      %v7413 = vmul.f32 %v81, %v7410
      %v7414 = vmul.f32 %v82, %v7410
      %v7415 = vsel %vm137, %v7411, 0.0
      %7416 = vadd.xlane.f32.xlu0 %v7415
      %v7417 = vpop.xlane.xlu0 %7416
      %v7418 = vsel %vm137, %v7412, 0.0
      %7419 = vadd.xlane.f32.xlu0 %v7418
      %v7420 = vpop.xlane.xlu0 %7419
      %v7421 = vsel %vm137, %v7413, 0.0
      %7422 = vadd.xlane.f32.xlu0 %v7421
      %v7423 = vpop.xlane.xlu0 %7422
      %v7424 = vsel %vm137, %v7414, 0.0
      %7425 = vadd.xlane.f32.xlu0 %v7424
      %v7426 = vpop.xlane.xlu0 %7425
      %v7427 = vadd.f32 %v7417, %v83
      %v7428 = vadd.f32 %v7420, %v84
      %v7429 = vadd.f32 %v7423, %v85
      %v7430 = vadd.f32 %v7426, %v86
      %v7431 = vxor.u32 %v7427, 2147483648
      %v7432 = vxor.u32 %v7428, 2147483648
      %v7433 = vxor.u32 %v7429, 2147483648
      %v7434 = vxor.u32 %v7430, 2147483648
      %v7435 = vmul.f32 %v7431, 1.442695
      %v7436 = vpow.pop %v7435
      %v7437 = vmul.f32 %v7432, 1.442695
      %v7438 = vpow.pop %v7437
      %v7439 = vmul.f32 %v7433, 1.442695
      %v7440 = vpow.pop %v7439
      %v7441 = vmul.f32 %v7434, 1.442695
      %v7442 = vpow.pop %v7441
      %v7443 = vadd.f32 %v7436, 1.0
      %v7444 = vadd.f32 %v7438, 1.0
      %v7445 = vadd.f32 %v7440, 1.0
      %v7446 = vadd.f32 %v7442, 1.0
      %v7447 = vrcp.pop %v7443
      %v7448 = vmul.f32 1.0, %v7447
      %v7449 = vrcp.pop %v7444
      %v7450 = vmul.f32 1.0, %v7449
      %v7451 = vrcp.pop %v7445
      %v7452 = vmul.f32 1.0, %v7451
      %v7453 = vrcp.pop %v7446
      %v7454 = vmul.f32 1.0, %v7453
      %v7455 = vmul.f32 %v7427, %v7448
      %v7456 = vmul.f32 %v7428, %v7450
      %v7457 = vmul.f32 %v7429, %v7452
      %v7458 = vmul.f32 %v7430, %v7454
      %7460 = vset.pattern.permute.xlu0 0
      %7461 = vperm.xlu0 %7460, %v7455
      %v7462 = vpop.permute.xlu0 %7461
      %7465 = vset.pattern.permute.xlu0 0
      %7466 = vperm.xlu0 %7465, %v7456
      %v7467 = vpop.permute.xlu0 %7466
      %7470 = vset.pattern.permute.xlu0 0
      %7471 = vperm.xlu0 %7470, %v7457
      %v7472 = vpop.permute.xlu0 %7471
      %7475 = vset.pattern.permute.xlu0 0
      %7476 = vperm.xlu0 %7475, %v7458
      %v7477 = vpop.permute.xlu0 %7476
      %v7479 = vmul.f32 %v87, %v7462
      %v7480 = vmul.f32 %v88, %v7467
      %v7481 = vmul.f32 %v89, %v7472
      %v7482 = vmul.f32 %v90, %v7477
      %v7483 = vsel %vm137, %v7479, 0.0
      %v7484 = vsel %vm137, %v7480, 0.0
      %v7485 = vadd.f32 %v7483, %v7484
      %v7486 = vsel %vm137, %v7481, 0.0
      %v7487 = vadd.f32 %v7485, %v7486
      %v7488 = vsel %vm137, %v7482, 0.0
      %v7489 = vadd.f32 %v7487, %v7488
      %v7490 = vrot.slane %v7489, 4
      %v7491 = vadd.f32 %v7489, %v7490
      %v7492 = vrot.slane %v7491, 2
      %v7493 = vadd.f32 %v7491, %v7492
      %v7494 = vrot.slane %v7493, 1
      %v7495 = vadd.f32 %v7493, %v7494
      %v7496 = vadd.f32 %v7495, %v91
      %v7497 = vxor.u32 %v7496, 2147483648
      %v7498 = vmul.f32 %v7497, 1.442695
      %v7499 = vpow.pop %v7498
      %v7500 = vadd.f32 %v7499, 1.0
      %v7501 = vrcp.pop %v7500
      %v7502 = vmul.f32 1.0, %v7501
      %v7503 = vmul.f32 %v7496, %v7502
      %v7504 = vmul.f32 %v92, %v7503
      %v7505 = vsel %vm228, %v7504, 0.0
      %7506 = vadd.xlane.f32.xlu0 %v7505
      %v7507 = vpop.xlane.xlu0 %7506
      %v7508 = vadd.f32 %v7507, %v93
      %v7509 = vmul.f32 %v233, %v7508
      %v7510 = vadd.f32 %v7274, %v7509
      %7512 = vset.pattern.permute.xlu0 0
      %7513 = vperm.xlu0 %7512, %v7510
      %v7514 = vpop.permute.xlu0 %7513
      %v7516 = vmul.f32 %v7514, %v77
      %v7517 = vadd.f32 %v7516, %v78
      %v7518 = vxor.u32 %v7517, 2147483648
      %v7519 = vmul.f32 %v7518, 1.442695
      %v7520 = vpow.pop %v7519
      %v7521 = vadd.f32 %v7520, 1.0
      %v7522 = vrcp.pop %v7521
      %v7523 = vmul.f32 1.0, %v7522
      %v7524 = vmul.f32 %v7517, %v7523
      %v7525 = vlaneseq
      %v7526 = vshrl.u32 %v7525, 7
      %v7527 = vsub.s32 0, %v7526
      %v7528 = vrot.slane %v7524, %v7527
      %v7529 = vmul.f32 %v79, %v7528
      %v7530 = vmul.f32 %v80, %v7528
      %v7531 = vmul.f32 %v81, %v7528
      %v7532 = vmul.f32 %v82, %v7528
      %v7533 = vsel %vm137, %v7529, 0.0
      %7534 = vadd.xlane.f32.xlu0 %v7533
      %v7535 = vpop.xlane.xlu0 %7534
      %v7536 = vsel %vm137, %v7530, 0.0
      %7537 = vadd.xlane.f32.xlu0 %v7536
      %v7538 = vpop.xlane.xlu0 %7537
      %v7539 = vsel %vm137, %v7531, 0.0
      %7540 = vadd.xlane.f32.xlu0 %v7539
      %v7541 = vpop.xlane.xlu0 %7540
      %v7542 = vsel %vm137, %v7532, 0.0
      %7543 = vadd.xlane.f32.xlu0 %v7542
      %v7544 = vpop.xlane.xlu0 %7543
      %v7545 = vadd.f32 %v7535, %v83
      %v7546 = vadd.f32 %v7538, %v84
      %v7547 = vadd.f32 %v7541, %v85
      %v7548 = vadd.f32 %v7544, %v86
      %v7549 = vxor.u32 %v7545, 2147483648
      %v7550 = vxor.u32 %v7546, 2147483648
      %v7551 = vxor.u32 %v7547, 2147483648
      %v7552 = vxor.u32 %v7548, 2147483648
      %v7553 = vmul.f32 %v7549, 1.442695
      %v7554 = vpow.pop %v7553
      %v7555 = vmul.f32 %v7550, 1.442695
      %v7556 = vpow.pop %v7555
      %v7557 = vmul.f32 %v7551, 1.442695
      %v7558 = vpow.pop %v7557
      %v7559 = vmul.f32 %v7552, 1.442695
      %v7560 = vpow.pop %v7559
      %v7561 = vadd.f32 %v7554, 1.0
      %v7562 = vadd.f32 %v7556, 1.0
      %v7563 = vadd.f32 %v7558, 1.0
      %v7564 = vadd.f32 %v7560, 1.0
      %v7565 = vrcp.pop %v7561
      %v7566 = vmul.f32 1.0, %v7565
      %v7567 = vrcp.pop %v7562
      %v7568 = vmul.f32 1.0, %v7567
      %v7569 = vrcp.pop %v7563
      %v7570 = vmul.f32 1.0, %v7569
      %v7571 = vrcp.pop %v7564
      %v7572 = vmul.f32 1.0, %v7571
      %v7573 = vmul.f32 %v7545, %v7566
      %v7574 = vmul.f32 %v7546, %v7568
      %v7575 = vmul.f32 %v7547, %v7570
      %v7576 = vmul.f32 %v7548, %v7572
      %7578 = vset.pattern.permute.xlu0 0
      %7579 = vperm.xlu0 %7578, %v7573
      %v7580 = vpop.permute.xlu0 %7579
      %7583 = vset.pattern.permute.xlu0 0
      %7584 = vperm.xlu0 %7583, %v7574
      %v7585 = vpop.permute.xlu0 %7584
      %7588 = vset.pattern.permute.xlu0 0
      %7589 = vperm.xlu0 %7588, %v7575
      %v7590 = vpop.permute.xlu0 %7589
      %7593 = vset.pattern.permute.xlu0 0
      %7594 = vperm.xlu0 %7593, %v7576
      %v7595 = vpop.permute.xlu0 %7594
      %v7597 = vmul.f32 %v87, %v7580
      %v7598 = vmul.f32 %v88, %v7585
      %v7599 = vmul.f32 %v89, %v7590
      %v7600 = vmul.f32 %v90, %v7595
      %v7601 = vsel %vm137, %v7597, 0.0
      %v7602 = vsel %vm137, %v7598, 0.0
      %v7603 = vadd.f32 %v7601, %v7602
      %v7604 = vsel %vm137, %v7599, 0.0
      %v7605 = vadd.f32 %v7603, %v7604
      %v7606 = vsel %vm137, %v7600, 0.0
      %v7607 = vadd.f32 %v7605, %v7606
      %v7608 = vrot.slane %v7607, 4
      %v7609 = vadd.f32 %v7607, %v7608
      %v7610 = vrot.slane %v7609, 2
      %v7611 = vadd.f32 %v7609, %v7610
      %v7612 = vrot.slane %v7611, 1
      %v7613 = vadd.f32 %v7611, %v7612
      %v7614 = vadd.f32 %v7613, %v91
      %v7615 = vxor.u32 %v7614, 2147483648
      %v7616 = vmul.f32 %v7615, 1.442695
      %v7617 = vpow.pop %v7616
      %v7618 = vadd.f32 %v7617, 1.0
      %v7619 = vrcp.pop %v7618
      %v7620 = vmul.f32 1.0, %v7619
      %v7621 = vmul.f32 %v7614, %v7620
      %v7622 = vmul.f32 %v92, %v7621
      %v7623 = vsel %vm228, %v7622, 0.0
      %7624 = vadd.xlane.f32.xlu0 %v7623
      %v7625 = vpop.xlane.xlu0 %7624
      %v7626 = vadd.f32 %v7625, %v93
      %v7627 = vmul.f32 %v470, %v7626
      %v7628 = vadd.f32 %v7274, %v7627
      %7630 = vset.pattern.permute.xlu0 0
      %7631 = vperm.xlu0 %7630, %v7628
      %v7632 = vpop.permute.xlu0 %7631
      %v7634 = vmul.f32 %v7632, %v77
      %v7635 = vadd.f32 %v7634, %v78
      %v7636 = vxor.u32 %v7635, 2147483648
      %v7637 = vmul.f32 %v7636, 1.442695
      %v7638 = vpow.pop %v7637
      %v7639 = vadd.f32 %v7638, 1.0
      %v7640 = vrcp.pop %v7639
      %v7641 = vmul.f32 1.0, %v7640
      %v7642 = vmul.f32 %v7635, %v7641
      %v7643 = vlaneseq
      %v7644 = vshrl.u32 %v7643, 7
      %v7645 = vsub.s32 0, %v7644
      %v7646 = vrot.slane %v7642, %v7645
      %v7647 = vmul.f32 %v79, %v7646
      %v7648 = vmul.f32 %v80, %v7646
      %v7649 = vmul.f32 %v81, %v7646
      %v7650 = vmul.f32 %v82, %v7646
      %v7651 = vsel %vm137, %v7647, 0.0
      %7652 = vadd.xlane.f32.xlu0 %v7651
      %v7653 = vpop.xlane.xlu0 %7652
      %v7654 = vsel %vm137, %v7648, 0.0
      %7655 = vadd.xlane.f32.xlu0 %v7654
      %v7656 = vpop.xlane.xlu0 %7655
      %v7657 = vsel %vm137, %v7649, 0.0
      %7658 = vadd.xlane.f32.xlu0 %v7657
      %v7659 = vpop.xlane.xlu0 %7658
      %v7660 = vsel %vm137, %v7650, 0.0
      %7661 = vadd.xlane.f32.xlu0 %v7660
      %v7662 = vpop.xlane.xlu0 %7661
      %v7663 = vadd.f32 %v7653, %v83
      %v7664 = vadd.f32 %v7656, %v84
      %v7665 = vadd.f32 %v7659, %v85
      %v7666 = vadd.f32 %v7662, %v86
      %v7667 = vxor.u32 %v7663, 2147483648
      %v7668 = vxor.u32 %v7664, 2147483648
      %v7669 = vxor.u32 %v7665, 2147483648
      %v7670 = vxor.u32 %v7666, 2147483648
      %v7671 = vmul.f32 %v7667, 1.442695
      %v7672 = vpow.pop %v7671
      %v7673 = vmul.f32 %v7668, 1.442695
      %v7674 = vpow.pop %v7673
      %v7675 = vmul.f32 %v7669, 1.442695
      %v7676 = vpow.pop %v7675
      %v7677 = vmul.f32 %v7670, 1.442695
      %v7678 = vpow.pop %v7677
      %v7679 = vadd.f32 %v7672, 1.0
      %v7680 = vadd.f32 %v7674, 1.0
      %v7681 = vadd.f32 %v7676, 1.0
      %v7682 = vadd.f32 %v7678, 1.0
      %v7683 = vrcp.pop %v7679
      %v7684 = vmul.f32 1.0, %v7683
      %v7685 = vrcp.pop %v7680
      %v7686 = vmul.f32 1.0, %v7685
      %v7687 = vrcp.pop %v7681
      %v7688 = vmul.f32 1.0, %v7687
      %v7689 = vrcp.pop %v7682
      %v7690 = vmul.f32 1.0, %v7689
      %v7691 = vmul.f32 %v7663, %v7684
      %v7692 = vmul.f32 %v7664, %v7686
      %v7693 = vmul.f32 %v7665, %v7688
      %v7694 = vmul.f32 %v7666, %v7690
      %7696 = vset.pattern.permute.xlu0 0
      %7697 = vperm.xlu0 %7696, %v7691
      %v7698 = vpop.permute.xlu0 %7697
      %7701 = vset.pattern.permute.xlu0 0
      %7702 = vperm.xlu0 %7701, %v7692
      %v7703 = vpop.permute.xlu0 %7702
      %7706 = vset.pattern.permute.xlu0 0
      %7707 = vperm.xlu0 %7706, %v7693
      %v7708 = vpop.permute.xlu0 %7707
      %7711 = vset.pattern.permute.xlu0 0
      %7712 = vperm.xlu0 %7711, %v7694
      %v7713 = vpop.permute.xlu0 %7712
      %v7715 = vmul.f32 %v87, %v7698
      %v7716 = vmul.f32 %v88, %v7703
      %v7717 = vmul.f32 %v89, %v7708
      %v7718 = vmul.f32 %v90, %v7713
      %v7719 = vsel %vm137, %v7715, 0.0
      %v7720 = vsel %vm137, %v7716, 0.0
      %v7721 = vadd.f32 %v7719, %v7720
      %v7722 = vsel %vm137, %v7717, 0.0
      %v7723 = vadd.f32 %v7721, %v7722
      %v7724 = vsel %vm137, %v7718, 0.0
      %v7725 = vadd.f32 %v7723, %v7724
      %v7726 = vrot.slane %v7725, 4
      %v7727 = vadd.f32 %v7725, %v7726
      %v7728 = vrot.slane %v7727, 2
      %v7729 = vadd.f32 %v7727, %v7728
      %v7730 = vrot.slane %v7729, 1
      %v7731 = vadd.f32 %v7729, %v7730
      %v7732 = vadd.f32 %v7731, %v91
      %v7733 = vxor.u32 %v7732, 2147483648
      %v7734 = vmul.f32 %v7733, 1.442695
      %v7735 = vpow.pop %v7734
      %v7736 = vadd.f32 %v7735, 1.0
      %v7737 = vrcp.pop %v7736
      %v7738 = vmul.f32 1.0, %v7737
      %v7739 = vmul.f32 %v7732, %v7738
      %v7740 = vmul.f32 %v92, %v7739
      %v7741 = vsel %vm228, %v7740, 0.0
      %7742 = vadd.xlane.f32.xlu0 %v7741
      %v7743 = vpop.xlane.xlu0 %7742
      %v7744 = vadd.f32 %v7743, %v93
      %v7745 = vmul.f32 %v7508, 2.0
      %v7746 = vadd.f32 %v7390, %v7745
      %v7747 = vmul.f32 %v7626, 2.0
      %v7748 = vadd.f32 %v7746, %v7747
      %v7749 = vadd.f32 %v7748, %v7744
      %v7750 = vmul.f32 %v594, %v7749
      %v7751 = vadd.f32 %v7274, %v7750
    $region58: #{tpu_custom_call.1} parent=1 // loop_footer
      %s101 = sadd.s32 1, %s97
    $region59: #{tpu_custom_call.1} parent=1 // loop_footer_branch
      %96 = sbr.rel target = $region55
    $region60: #{tpu_custom_call.1} parent=1 // loop_exit
      _
    %s7752 = sld [smem:[#allocation3 + $0x7]]
    %v7753 = vstv %s7752
    %v7754 = vadd.f32 %v102, %v7753
    %vm7755 = vcmp.eq.s32.totalorder %v95, 7
    %s7756 = vtos %v7754
    %v7757 = vstv %s7756
    %v7758 = vsel %vm7755, %v7757, %v103
    %7759 = vst [vmem:[#allocation10] sm:$0x1] %v7758
    // Predicated region
    $region61: #{tpu_custom_call.1} parent=1 // pred_check
      _
    $region62: #{tpu_custom_call.1} parent=1 // pred_check_branch
      %7761 = sbr.rel (0) target = $region64
    $region63: #{tpu_custom_call.1} parent=1 // pred_region
      %s7763 = ssub.s32 16, 16
      %7764 = vsyncadd [#allocation5], %s7763
      %s7766 = sshll.u32 [#allocation10], 4
      %s7767 = int_to_ptr.vmem [resolvable:$true] %s7766
      %7769 = dma.vmem_to_hbm [thread:$0]  %s7767, 16, %s10, [#allocation5]
    $region64: #{tpu_custom_call.1} parent=1 // pred_fallthru
      _
    // Predicated region
    $region65: #{tpu_custom_call.1} parent=1 // pred_check
      _
    $region66: #{tpu_custom_call.1} parent=1 // pred_check_branch
      %7771 = sbr.rel (0) target = $region68
    $region67: #{tpu_custom_call.1} parent=1 // pred_region
      %7772 = dma.done [#allocation5], 16
    $region68: #{tpu_custom_call.1} parent=1 // pred_fallthru
      _
    %7773 = vsyncpa [#allocation4], 1
    %7774 = vsyncpa [#allocation5], 1
    %7775 = vsyncpa [#allocation6], 1
    %7776 = vsyncpa [#allocation8], 1

</llo_original>
